<compile_context>
chip_gen: v5e
topology: v5e:2x2
jax: 0.10.0
libtpu: 0.0.40
codegen_flags: <defaults>
</compile_context>

<pallas_src>
import math
from functools import partial

import jax
import jax.numpy as jnp
from jax.experimental import pallas as pl
from jax.experimental.pallas import tpu as pltpu


def _voting_kernel(x_ref, p_ref, o_ref, acc_ref, *, inv_voting_size, precision):
    """One (tile_m, tile_k) @ (tile_k, kO) MXU step with f32 accumulation."""
    kk = pl.program_id(1)

    @pl.when(kk == 0)
    def _():
        acc_ref[...] = jnp.zeros_like(acc_ref)

    acc_ref[...] += jnp.dot(
        x_ref[...], p_ref[...],
        preferred_element_type=jnp.float32, precision=precision)

    @pl.when(kk == pl.num_programs(1) - 1)
    def _():
        o_ref[...] = (acc_ref[...] * inv_voting_size).astype(o_ref.dtype)


def _sublane_pack(dtype) -> int:
    # Native second-minor packing: 8 rows (f32), 16 (bf16), 32 (int8/fp8).
    return max(8, 32 // jnp.dtype(dtype).itemsize)


def _vmem_budget() -> tuple[int, int]:
    """(per-step tile budget, vmem_limit_bytes), derived from the generation."""
    try:
        cap = int(pltpu.get_tpu_info().vmem_capacity_bytes)
    except Exception:  # unknown device / interpret mode: assume v7x-sized VMEM
        cap = 64 * 1024 * 1024
    # v7x (64 MiB): limit 48 MiB, budget 24 MiB.  v5e/v6e (128 MiB): 96 / 48 MiB.
    limit = max(min((cap * 3) // 4, 96 * 1024 * 1024), 32 * 1024 * 1024)
    return limit // 2, limit


def _choose_tiles(m, kL, kO, itemsize, sub, budget):
    """Pick (tile_m, tile_k).  tile_k == kL keeps P resident; otherwise the
    contraction is tiled with tile_k dividing kL exactly (no garbage in sums)."""
    if 2 * kL * kO * itemsize <= budget // 2:
        tile_k = kL
    else:
        tk_cap = max(128, ((budget // 2) // (2 * kO * itemsize)) // 128 * 128)
        n_k = pl.cdiv(kL, tk_cap)
        while kL % n_k or (kL // n_k) % 128:
            n_k += 1  # terminates: n_k == kL // 128 always works (kL % 128 == 0)
        tile_k = kL // n_k

    # Per-step VMEM accounting (conservative: everything double-buffered):
    #   2*tile_m*tile_k (x) + 2*tile_k*kO (P) + 2*tile_m*kO (out)  [x itemsize]
    #   + 4*tile_m*kO (f32 accumulator)                           <= budget
    denom = 2 * tile_k * itemsize + 2 * kO * itemsize + 4 * kO
    avail = budget - 2 * tile_k * kO * itemsize
    tile_m = min(max(sub, avail // denom), 2048)
    if m >= 2 * sub:  # guarantee >= 2 grid steps (v7x megacore sharding)
        tile_m = min(tile_m, pl.cdiv(pl.cdiv(m, 2), sub) * sub)
    if m <= sub:
        tile_m = m                      # tiny batch: one full block
    else:
        tile_m = max(8, (min(tile_m, m) // sub) * sub)
    return tile_m, tile_k


def _voting_matmul(x_folded, P, *, voting_size, precision):
    """Returns (x_folded @ P) / voting_size for x_folded (m, kL), P (kL, kO)."""
    m, kL = x_folded.shape
    kO = P.shape[1]

    # Keep every block's sublane dim >= 8; only triggers for tiny folded
    # batches (< 8 rows => < 8*kL elements), so this pad is negligible.
    m_alloc = m
    if m < 8:
        x_folded = jnp.pad(x_folded, ((0, 8 - m), (0, 0)))
        m_alloc = 8

    itemsize = jnp.dtype(x_folded.dtype).itemsize
    sub = _sublane_pack(x_folded.dtype)
    budget, vmem_limit = _vmem_budget()
    tile_m, tile_k = _choose_tiles(m_alloc, kL, kO, itemsize, sub, budget)
    m_steps = pl.cdiv(m_alloc, tile_m)   # partial last block handled by Pallas
    k_steps = kL // tile_k

    def build_call(single_buffer_p, use_precision):
        kernel = partial(_voting_kernel,
                         inv_voting_size=1.0 / voting_size,
                         precision=precision if use_precision else None)
        p_kwargs = {"pipeline_mode": pl.Buffered(1)} if single_buffer_p else {}
        return pl.pallas_call(
            kernel,
            out_shape=jax.ShapeDtypeStruct((m_alloc, kO), x_folded.dtype),
            grid=(m_steps, k_steps),
            in_specs=[
                pl.BlockSpec((tile_m, tile_k), lambda i, kk: (i, kk)),
                # Invariant when k_steps == 1 -> DMA'd once; streamed otherwise.
                pl.BlockSpec((tile_k, kO), lambda i, kk: (kk, 0), **p_kwargs),
            ],
            out_specs=pl.BlockSpec((tile_m, kO), lambda i, kk: (i, 0)),
            scratch_shapes=[pltpu.VMEM((tile_m, kO), jnp.float32)],
            compiler_params=pltpu.CompilerParams(
                dimension_semantics=("parallel", "arbitrary"),
                vmem_limit_bytes=vmem_limit,
            ),
        )

    # Attempt order: single-buffered resident P + explicit precision first, then
    # progressively fall back to the plain, previously-validated configuration
    # (covers installs where pipeline_mode / HIGHEST-precision dots differ).
    attempts = []
    if k_steps == 1:
        attempts.append((True, True))
    attempts += [(False, True), (False, False)]
    last_err = None
    for sb, up in attempts:
        try:
            y = build_call(sb, up)(x_folded, P)
            return y if m_alloc == m else y[:m]
        except Exception as err:  # eager-mode fallback only
            last_err = err
    raise last_err


def _fold_factor(L, out):
    # Smallest power-of-two row fold making both the folded input row (k*L) and
    # the folded output row (k*out) multiples of 128 lanes.
    a = 128 // math.gcd(L, 128)     # input-lane density
    b = 128 // math.gcd(out, 128)   # output-lane density: never drop below this
    k = max(a, b)
    # Keep the folded row modest (cheap resident P), but never below b: losing
    # output-lane density (masked vst) costs far more than the extra contraction
    # work, which the K grid axis handles for large L anyway.
    while k > b and k * L > 16384:
        k //= 2
    return k


def _pooling_matrix(L, out, voting_size, k, dtype):
    # Block-diagonal 0/1 matrix of shape (k*L, k*out): entry (r, c) is 1 iff
    # input lane r belongs to the same folded sample and the same voting group
    # as output lane c.  Exact even in bf16; constant-folds under jit.
    kL, kO = k * L, k * out
    r = jnp.arange(kL, dtype=jnp.int32)
    c = jnp.arange(kO, dtype=jnp.int32)
    same_sample = (r[:, None] // L) == (c[None, :] // out)
    same_group = ((r[:, None] % L) // voting_size) == (c[None, :] % out)
    return (same_sample & same_group).astype(dtype)


def voting_layer(x: jax.Array, voting_size: int = 10) -> jax.Array:
    """Pallas TPU VotingLayer.forward: (N, L) -> (N, L // voting_size)."""
    N, L = x.shape
    assert L % voting_size == 0, "last dim must be divisible by voting_size"
    out = L // voting_size
    dtype = x.dtype
    precision = (jax.lax.Precision.HIGHEST
                 if jnp.dtype(dtype) == jnp.float32 else None)

    k = _fold_factor(L, out)
    kL = k * L
    P = _pooling_matrix(L, out, voting_size, k, dtype)

    n_main = (N // k) * k            # largest fold-aligned prefix
    rem = N - n_main
    pieces = []
    if n_main:
        # Free row-major reshape; no copy at all when rem == 0 (the common
        # case).  tile_m remainders inside the call use Pallas partial-last-
        # block handling, so there is no whole-array pad and no output slice.
        x_main = x if rem == 0 else x[:n_main]
        y_main = _voting_matmul(x_main.reshape(n_main // k, kL), P,
                                voting_size=voting_size, precision=precision)
        pieces.append(y_main.reshape(n_main, out))
    if rem:
        # <= k-1 leftover rows: pad just this tiny tail up to one fold of k rows.
        tail = jnp.pad(x[n_main:], ((0, k - rem), (0, 0)))
        y_tail = _voting_matmul(tail.reshape(1, kL), P,
                                voting_size=voting_size, precision=precision)
        pieces.append(y_tail.reshape(k, out)[:rem])
    return pieces[0] if len(pieces) == 1 else jnp.concatenate(pieces, axis=0)


if __name__ == "__main__":
    key = jax.random.PRNGKey(0)
    voting_size = 10
    num_classes = 8
    N = 2
    L = num_classes * voting_size     # 80

    x = jax.random.normal(key, (N, L), dtype=jnp.float32)

    y = jax.block_until_ready(voting_layer(x, voting_size))

    # Pure-JAX reference of F.avg_pool1d(x.unsqueeze(1), v, v).squeeze(1)
    y_ref = x.reshape(N, num_classes, voting_size).mean(axis=-1)

    assert y.shape == (N, num_classes), y.shape
    assert jnp.allclose(y, y_ref, atol=1e-5, rtol=1e-5), "mismatch vs reference"

    print("KERNEL_OK")
</pallas_src>

<mosaic_0001>
module attributes {stable_mosaic.version = 11 : i64} {
  func.func @_voting_kernel(%arg0: i32, %arg1: i32, %arg2: memref<8x1280xf32, #tpu.memory_space<vmem>>, %arg3: memref<1280x128xf32, #tpu.memory_space<vmem>>, %arg4: memref<8x128xf32, #tpu.memory_space<vmem>>, %arg5: memref<8x128xf32, #tpu.memory_space<vmem>>) attributes {dimension_semantics = [#tpu.dimension_semantics<parallel>, #tpu.dimension_semantics<arbitrary>], iteration_bounds = array<i64: 1, 1>, scalar_prefetch = 0 : i64, scratch_operands = 1 : i64, tpu.core_type = #tpu.core_type<tc>, window_params = [{transform_indices = @transform_0, window_bounds = array<i64: 8, 1280>}, {pipeline_mode = #tpu.pipeline_mode<synchronous>, transform_indices = @transform_1, window_bounds = array<i64: 1280, 128>}, {transform_indices = @transform_2, window_bounds = array<i64: 8, 128>}]} {
    %c0_i32 = arith.constant 0 : i32
    %0 = arith.cmpi eq, %arg1, %c0_i32 : i32
    %1 = arith.extui %0 : i1 to i32
    %c0_i32_0 = arith.constant 0 : i32
    %2 = arith.cmpi ne, %1, %c0_i32_0 : i32
    scf.if %2 {
      %cst_10 = arith.constant 0.000000e+00 : f32
      %12 = vector.broadcast %cst_10 : f32 to vector<8x128xf32>
      %c0_11 = arith.constant 0 : index
      %c0_12 = arith.constant 0 : index
      %13 = vector.load %arg5[%c0_11, %c0_12] : memref<8x128xf32, #tpu.memory_space<vmem>>, vector<8x128xf32>
      tpu.vector_store %arg5[%c0_11, %c0_12], %12 {strides = array<i32>} : memref<8x128xf32, #tpu.memory_space<vmem>>, vector<8x128xf32>,
    } else {
    }
    %c0 = arith.constant 0 : index
    %c0_1 = arith.constant 0 : index
    %3 = vector.load %arg5[%c0, %c0_1] : memref<8x128xf32, #tpu.memory_space<vmem>>, vector<8x128xf32>
    %c0_2 = arith.constant 0 : index
    %c0_3 = arith.constant 0 : index
    %4 = vector.load %arg2[%c0_2, %c0_3] : memref<8x1280xf32, #tpu.memory_space<vmem>>, vector<8x1280xf32>
    %c0_4 = arith.constant 0 : index
    %c0_5 = arith.constant 0 : index
    %5 = vector.load %arg3[%c0_4, %c0_5] : memref<1280x128xf32, #tpu.memory_space<vmem>>, vector<1280x128xf32>
    %cst = arith.constant dense<0.000000e+00> : vector<8x128xf32>
    %6 = tpu.matmul %4, %5, %cst {dimension_numbers = #tpu.dot_dimension_numbers<[1], [0], [0], [1], [0, 0, 1, 1], [], []>, precision = #tpu.contract_precision<fp32>} : vector<8x1280xf32>, vector<1280x128xf32>, vector<8x128xf32> -> vector<8x128xf32>
    %7 = arith.addf %3, %6 : vector<8x128xf32>
    %c0_6 = arith.constant 0 : index
    %c0_7 = arith.constant 0 : index
    %8 = vector.load %arg5[%c0_6, %c0_7] : memref<8x128xf32, #tpu.memory_space<vmem>>, vector<8x128xf32>
    tpu.vector_store %arg5[%c0_6, %c0_7], %7 {strides = array<i32>} : memref<8x128xf32, #tpu.memory_space<vmem>>, vector<8x128xf32>,
    %c0_i32_8 = arith.constant 0 : i32
    %9 = arith.cmpi eq, %arg1, %c0_i32_8 : i32
    %10 = arith.extui %9 : i1 to i32
    %c0_i32_9 = arith.constant 0 : i32
    %11 = arith.cmpi ne, %10, %c0_i32_9 : i32
    scf.if %11 {
      %c0_10 = arith.constant 0 : index
      %c0_11 = arith.constant 0 : index
      %12 = vector.load %arg5[%c0_10, %c0_11] : memref<8x128xf32, #tpu.memory_space<vmem>>, vector<8x128xf32>
      %cst_12 = arith.constant 1.000000e-01 : f32
      %13 = vector.broadcast %cst_12 : f32 to vector<8x128xf32>
      %14 = arith.mulf %12, %13 : vector<8x128xf32>
      %c0_13 = arith.constant 0 : index
      %c0_14 = arith.constant 0 : index
      %15 = vector.load %arg4[%c0_13, %c0_14] : memref<8x128xf32, #tpu.memory_space<vmem>>, vector<8x128xf32>
      tpu.vector_store %arg4[%c0_13, %c0_14], %14 {strides = array<i32>} : memref<8x128xf32, #tpu.memory_space<vmem>>, vector<8x128xf32>,
    } else {
    }
    return
  }
  func.func @transform_0(%arg0: i32, %arg1: i32) -> (i32, i32) {
    %c0_i32 = arith.constant 0 : i32
    return %arg0, %arg1 : i32, i32
  }
  func.func @transform_1(%arg0: i32, %arg1: i32) -> (i32, i32) {
    %c0_i32 = arith.constant 0 : i32
    %c0_i32_0 = arith.constant 0 : i32
    return %arg1, %c0_i32 : i32, i32
  }
  func.func @transform_2(%arg0: i32, %arg1: i32) -> (i32, i32) {
    %c0_i32 = arith.constant 0 : i32
    %c0_i32_0 = arith.constant 0 : i32
    return %arg0, %c0_i32 : i32, i32
  }
}

module attributes {stable_mosaic.version = 11 : i64} {
  func.func @_voting_kernel(%arg0: i32, %arg1: i32, %arg2: memref<8x1280xf32, #tpu.memory_space<vmem>>, %arg3: memref<1280x128xf32, #tpu.memory_space<vmem>>, %arg4: memref<8x128xf32, #tpu.memory_space<vmem>>, %arg5: memref<8x128xf32, #tpu.memory_space<vmem>>) attributes {dimension_semantics = [#tpu.dimension_semantics<parallel>, #tpu.dimension_semantics<arbitrary>], iteration_bounds = array<i64: 1, 1>, scalar_prefetch = 0 : i64, scratch_operands = 1 : i64, tpu.core_type = #tpu.core_type<tc>, window_params = [{transform_indices = @transform_0, window_bounds = array<i64: 8, 1280>}, {transform_indices = @transform_1, window_bounds = array<i64: 1280, 128>}, {transform_indices = @transform_2, window_bounds = array<i64: 8, 128>}]} {
    %c0_i32 = arith.constant 0 : i32
    %0 = arith.cmpi eq, %arg1, %c0_i32 : i32
    %1 = arith.extui %0 : i1 to i32
    %c0_i32_0 = arith.constant 0 : i32
    %2 = arith.cmpi ne, %1, %c0_i32_0 : i32
    scf.if %2 {
      %cst_10 = arith.constant 0.000000e+00 : f32
      %12 = vector.broadcast %cst_10 : f32 to vector<8x128xf32>
      %c0_11 = arith.constant 0 : index
      %c0_12 = arith.constant 0 : index
      %13 = vector.load %arg5[%c0_11, %c0_12] : memref<8x128xf32, #tpu.memory_space<vmem>>, vector<8x128xf32>
      tpu.vector_store %arg5[%c0_11, %c0_12], %12 {strides = array<i32>} : memref<8x128xf32, #tpu.memory_space<vmem>>, vector<8x128xf32>,
    } else {
    }
    %c0 = arith.constant 0 : index
    %c0_1 = arith.constant 0 : index
    %3 = vector.load %arg5[%c0, %c0_1] : memref<8x128xf32, #tpu.memory_space<vmem>>, vector<8x128xf32>
    %c0_2 = arith.constant 0 : index
    %c0_3 = arith.constant 0 : index
    %4 = vector.load %arg2[%c0_2, %c0_3] : memref<8x1280xf32, #tpu.memory_space<vmem>>, vector<8x1280xf32>
    %c0_4 = arith.constant 0 : index
    %c0_5 = arith.constant 0 : index
    %5 = vector.load %arg3[%c0_4, %c0_5] : memref<1280x128xf32, #tpu.memory_space<vmem>>, vector<1280x128xf32>
    %cst = arith.constant dense<0.000000e+00> : vector<8x128xf32>
    %6 = tpu.matmul %4, %5, %cst {dimension_numbers = #tpu.dot_dimension_numbers<[1], [0], [0], [1], [0, 0, 1, 1], [], []>, precision = #tpu.contract_precision<fp32>} : vector<8x1280xf32>, vector<1280x128xf32>, vector<8x128xf32> -> vector<8x128xf32>
    %7 = arith.addf %3, %6 : vector<8x128xf32>
    %c0_6 = arith.constant 0 : index
    %c0_7 = arith.constant 0 : index
    %8 = vector.load %arg5[%c0_6, %c0_7] : memref<8x128xf32, #tpu.memory_space<vmem>>, vector<8x128xf32>
    tpu.vector_store %arg5[%c0_6, %c0_7], %7 {strides = array<i32>} : memref<8x128xf32, #tpu.memory_space<vmem>>, vector<8x128xf32>,
    %c0_i32_8 = arith.constant 0 : i32
    %9 = arith.cmpi eq, %arg1, %c0_i32_8 : i32
    %10 = arith.extui %9 : i1 to i32
    %c0_i32_9 = arith.constant 0 : i32
    %11 = arith.cmpi ne, %10, %c0_i32_9 : i32
    scf.if %11 {
      %c0_10 = arith.constant 0 : index
      %c0_11 = arith.constant 0 : index
      %12 = vector.load %arg5[%c0_10, %c0_11] : memref<8x128xf32, #tpu.memory_space<vmem>>, vector<8x128xf32>
      %cst_12 = arith.constant 1.000000e-01 : f32
      %13 = vector.broadcast %cst_12 : f32 to vector<8x128xf32>
      %14 = arith.mulf %12, %13 : vector<8x128xf32>
      %c0_13 = arith.constant 0 : index
      %c0_14 = arith.constant 0 : index
      %15 = vector.load %arg4[%c0_13, %c0_14] : memref<8x128xf32, #tpu.memory_space<vmem>>, vector<8x128xf32>
      tpu.vector_store %arg4[%c0_13, %c0_14], %14 {strides = array<i32>} : memref<8x128xf32, #tpu.memory_space<vmem>>, vector<8x128xf32>,
    } else {
    }
    return
  }
  func.func @transform_0(%arg0: i32, %arg1: i32) -> (i32, i32) {
    %c0_i32 = arith.constant 0 : i32
    return %arg0, %arg1 : i32, i32
  }
  func.func @transform_1(%arg0: i32, %arg1: i32) -> (i32, i32) {
    %c0_i32 = arith.constant 0 : i32
    %c0_i32_0 = arith.constant 0 : i32
    return %arg1, %c0_i32 : i32, i32
  }
  func.func @transform_2(%arg0: i32, %arg1: i32) -> (i32, i32) {
    %c0_i32 = arith.constant 0 : i32
    %c0_i32_0 = arith.constant 0 : i32
    return %arg0, %c0_i32 : i32, i32
  }
}

module attributes {stable_mosaic.version = 11 : i64} {
  func.func @_voting_kernel(%arg0: i32, %arg1: i32, %arg2: memref<8x1280xf32, #tpu.memory_space<vmem>>, %arg3: memref<1280x128xf32, #tpu.memory_space<vmem>>, %arg4: memref<8x128xf32, #tpu.memory_space<vmem>>, %arg5: memref<8x128xf32, #tpu.memory_space<vmem>>) attributes {dimension_semantics = [#tpu.dimension_semantics<parallel>, #tpu.dimension_semantics<arbitrary>], iteration_bounds = array<i64: 1, 1>, scalar_prefetch = 0 : i64, scratch_operands = 1 : i64, tpu.core_type = #tpu.core_type<tc>, window_params = [{transform_indices = @transform_0, window_bounds = array<i64: 8, 1280>}, {transform_indices = @transform_1, window_bounds = array<i64: 1280, 128>}, {transform_indices = @transform_2, window_bounds = array<i64: 8, 128>}]} {
    %c0_i32 = arith.constant 0 : i32
    %0 = arith.cmpi eq, %arg1, %c0_i32 : i32
    %1 = arith.extui %0 : i1 to i32
    %c0_i32_0 = arith.constant 0 : i32
    %2 = arith.cmpi ne, %1, %c0_i32_0 : i32
    scf.if %2 {
      %cst_10 = arith.constant 0.000000e+00 : f32
      %12 = vector.broadcast %cst_10 : f32 to vector<8x128xf32>
      %c0_11 = arith.constant 0 : index
      %c0_12 = arith.constant 0 : index
      %13 = vector.load %arg5[%c0_11, %c0_12] : memref<8x128xf32, #tpu.memory_space<vmem>>, vector<8x128xf32>
      tpu.vector_store %arg5[%c0_11, %c0_12], %12 {strides = array<i32>} : memref<8x128xf32, #tpu.memory_space<vmem>>, vector<8x128xf32>,
    } else {
    }
    %c0 = arith.constant 0 : index
    %c0_1 = arith.constant 0 : index
    %3 = vector.load %arg5[%c0, %c0_1] : memref<8x128xf32, #tpu.memory_space<vmem>>, vector<8x128xf32>
    %c0_2 = arith.constant 0 : index
    %c0_3 = arith.constant 0 : index
    %4 = vector.load %arg2[%c0_2, %c0_3] : memref<8x1280xf32, #tpu.memory_space<vmem>>, vector<8x1280xf32>
    %c0_4 = arith.constant 0 : index
    %c0_5 = arith.constant 0 : index
    %5 = vector.load %arg3[%c0_4, %c0_5] : memref<1280x128xf32, #tpu.memory_space<vmem>>, vector<1280x128xf32>
    %cst = arith.constant dense<0.000000e+00> : vector<8x128xf32>
    %6 = tpu.matmul %4, %5, %cst {dimension_numbers = #tpu.dot_dimension_numbers<[1], [0], [0], [1], [0, 0, 1, 1], [], []>} : vector<8x1280xf32>, vector<1280x128xf32>, vector<8x128xf32> -> vector<8x128xf32>
    %7 = arith.addf %3, %6 : vector<8x128xf32>
    %c0_6 = arith.constant 0 : index
    %c0_7 = arith.constant 0 : index
    %8 = vector.load %arg5[%c0_6, %c0_7] : memref<8x128xf32, #tpu.memory_space<vmem>>, vector<8x128xf32>
    tpu.vector_store %arg5[%c0_6, %c0_7], %7 {strides = array<i32>} : memref<8x128xf32, #tpu.memory_space<vmem>>, vector<8x128xf32>,
    %c0_i32_8 = arith.constant 0 : i32
    %9 = arith.cmpi eq, %arg1, %c0_i32_8 : i32
    %10 = arith.extui %9 : i1 to i32
    %c0_i32_9 = arith.constant 0 : i32
    %11 = arith.cmpi ne, %10, %c0_i32_9 : i32
    scf.if %11 {
      %c0_10 = arith.constant 0 : index
      %c0_11 = arith.constant 0 : index
      %12 = vector.load %arg5[%c0_10, %c0_11] : memref<8x128xf32, #tpu.memory_space<vmem>>, vector<8x128xf32>
      %cst_12 = arith.constant 1.000000e-01 : f32
      %13 = vector.broadcast %cst_12 : f32 to vector<8x128xf32>
      %14 = arith.mulf %12, %13 : vector<8x128xf32>
      %c0_13 = arith.constant 0 : index
      %c0_14 = arith.constant 0 : index
      %15 = vector.load %arg4[%c0_13, %c0_14] : memref<8x128xf32, #tpu.memory_space<vmem>>, vector<8x128xf32>
      tpu.vector_store %arg4[%c0_13, %c0_14], %14 {strides = array<i32>} : memref<8x128xf32, #tpu.memory_space<vmem>>, vector<8x128xf32>,
    } else {
    }
    return
  }
  func.func @transform_0(%arg0: i32, %arg1: i32) -> (i32, i32) {
    %c0_i32 = arith.constant 0 : i32
    return %arg0, %arg1 : i32, i32
  }
  func.func @transform_1(%arg0: i32, %arg1: i32) -> (i32, i32) {
    %c0_i32 = arith.constant 0 : i32
    %c0_i32_0 = arith.constant 0 : i32
    return %arg1, %c0_i32 : i32, i32
  }
  func.func @transform_2(%arg0: i32, %arg1: i32) -> (i32, i32) {
    %c0_i32 = arith.constant 0 : i32
    %c0_i32_0 = arith.constant 0 : i32
    return %arg0, %c0_i32 : i32, i32
  }
}

</mosaic_0001>

<llo_original>
// kernel: tpu_custom_call.1
$region0: #{tpu_custom_call.1}
  #allocation0 [shape = 'u32[]', space=smem, size = 0x4, offset = 0x4, fixed_abs, tag = 'smem constant byte address 0x4 - core index']
  #allocation1 [shape = 'u32[72,128]{1,0:T(1,128)}', space=vmem, size = 0x9000, scoped, tag = 'internal scratch']
  #allocation2 [shape = 'f32[8,128]{1,0:T(8,128)}', space=vmem, size = 0x1000, scoped, tag = 'scratch operand']
  %s0 = inlined_call_operand.hbm [shape: f32[8,1280], index: 0, kind: input, shape index: {}]
  %s1 = inlined_call_operand.hbm [shape: f32[1280,128], index: 1, kind: input, shape index: {}]
  %s2 = inlined_call_operand.hbm [shape: f32[8,128], index: 2, kind: output, shape index: {}]
  %s3 = sld [smem:[#allocation0]]
  $region34: #{tpu_custom_call.1} parent=0
    _
  %s5 = ssub.s32 1, %s3
  %s6 = scalar_select 0, %s5, %s3
  $region1: #{tpu_custom_call.1} parent=0
    #allocation3 [shape = 'u8[40960]{0}', space=vmem, size = 0xa000, scoped, tag = 'input window, operand 0, single buffered']
    #allocation4 [shape = 's32[1]{0}', space=sflag, size = 0x4, scoped, tag = 'scoped memory for tpu_custom_call.1']
    #allocation5 [shape = 's32[1]{0}', space=sflag, size = 0x4, scoped, tag = 'scoped memory for tpu_custom_call.1']
    #allocation6 [shape = 'u8[655360]{0}', space=vmem, size = 0xa0000, scoped, tag = 'input window, operand 1, single buffered']
    #allocation7 [shape = 's32[1]{0}', space=sflag, size = 0x4, scoped, tag = 'scoped memory for tpu_custom_call.1']
    #allocation8 [shape = 'u8[4096]{0}', space=vmem, size = 0x1000, scoped, tag = 'output window, operand 0, single buffered']
    %7 = vsyncpa [#allocation4], 0
    %8 = vsyncpa [#allocation7], 0
    %9 = vsyncpa [#allocation5], 0
    // Predicated region
    $region2: #{tpu_custom_call.1} parent=1 // pred_check
      _
    $region3: #{tpu_custom_call.1} parent=1 // pred_check_branch
      %11 = sbr.rel (0) target = $region5
    $region4: #{tpu_custom_call.1} parent=1 // pred_region
      %13 = vsyncadd [#allocation4], 0
      %s15 = sshll.u32 %s0, 4
      %s16 = int_to_ptr.hbm [resolvable:$true] %s15
      %s17 = sshll.u32 [#allocation3], 4
      %s18 = int_to_ptr.vmem [resolvable:$true] %s17
      %20 = dma.hbm_to_vmem [thread:$0]  %s16, 1280, %s18, [#allocation4]
    $region5: #{tpu_custom_call.1} parent=1 // pred_fallthru
      _
    // Predicated region
    $region6: #{tpu_custom_call.1} parent=1 // pred_check
      _
    $region7: #{tpu_custom_call.1} parent=1 // pred_check_branch
      %22 = sbr.rel (0) target = $region9
    $region8: #{tpu_custom_call.1} parent=1 // pred_region
      %24 = vsyncadd [#allocation7], 0
      %s25 = sshll.u32 %s1, 4
      %s26 = int_to_ptr.hbm [resolvable:$true] %s25
      %s27 = sshll.u32 [#allocation6], 4
      %s28 = int_to_ptr.vmem [resolvable:$true] %s27
      %33 = dma.hbm_to_vmem [thread:$0]  %s26, 20480, %s28, [#allocation7], 128, 128, 8
    $region9: #{tpu_custom_call.1} parent=1 // pred_fallthru
      _
    // Predicated region
    $region10: #{tpu_custom_call.1} parent=1 // pred_check
      _
    $region11: #{tpu_custom_call.1} parent=1 // pred_check_branch
      %35 = sbr.rel (0) target = $region13
    $region12: #{tpu_custom_call.1} parent=1 // pred_region
      %37 = dma.done [#allocation4], 1280
    $region13: #{tpu_custom_call.1} parent=1 // pred_fallthru
      _
    // Predicated region
    $region14: #{tpu_custom_call.1} parent=1 // pred_check
      _
    $region15: #{tpu_custom_call.1} parent=1 // pred_check_branch
      %39 = sbr.rel (0) target = $region17
    $region16: #{tpu_custom_call.1} parent=1 // pred_region
      %41 = dma.done [#allocation7], 20480
    $region17: #{tpu_custom_call.1} parent=1 // pred_fallthru
      _
    %p42 = scmp.eq.s32.totalorder 0, 0
    // Predicated region
    $region18: #{tpu_custom_call.1} parent=1 // pred_check
      %p43 = pneg %p42
    $region19: #{tpu_custom_call.1} parent=1 // pred_check_branch
      %45 = sbr.rel (%p43) target = $region21
    $region20: #{tpu_custom_call.1} parent=1 // pred_region
      %46 = vst [vmem:[#allocation2] sm:$0xff] 0.0
    $region21: #{tpu_custom_call.1} parent=1 // pred_fallthru
      _
    %v47 = vld [vmem:[#allocation2] sm:$0xff]
    %v48 = vld [vmem:[#allocation3] sm:$0xff]
    %v49 = vld [vmem:[#allocation3 + $0x8] sm:$0xff]
    %v50 = vld [vmem:[#allocation3 + $0x10] sm:$0xff]
    %v51 = vld [vmem:[#allocation3 + $0x18] sm:$0xff]
    %v52 = vld [vmem:[#allocation3 + $0x20] sm:$0xff]
    %v53 = vld [vmem:[#allocation3 + $0x28] sm:$0xff]
    %v54 = vld [vmem:[#allocation3 + $0x30] sm:$0xff]
    %v55 = vld [vmem:[#allocation3 + $0x38] sm:$0xff]
    %v56 = vld [vmem:[#allocation3 + $0x40] sm:$0xff]
    %v57 = vld [vmem:[#allocation3 + $0x48] sm:$0xff]
    %v58 = vld [vmem:[#allocation6] sm:$0xff]
    %v59 = vld [vmem:[#allocation6 + $0x8] sm:$0xff]
    %v60 = vld [vmem:[#allocation6 + $0x10] sm:$0xff]
    %v61 = vld [vmem:[#allocation6 + $0x18] sm:$0xff]
    %v62 = vld [vmem:[#allocation6 + $0x20] sm:$0xff]
    %v63 = vld [vmem:[#allocation6 + $0x28] sm:$0xff]
    %v64 = vld [vmem:[#allocation6 + $0x30] sm:$0xff]
    %v65 = vld [vmem:[#allocation6 + $0x38] sm:$0xff]
    %v66 = vld [vmem:[#allocation6 + $0x40] sm:$0xff]
    %v67 = vld [vmem:[#allocation6 + $0x48] sm:$0xff]
    %v68 = vld [vmem:[#allocation6 + $0x50] sm:$0xff]
    %v69 = vld [vmem:[#allocation6 + $0x58] sm:$0xff]
    %v70 = vld [vmem:[#allocation6 + $0x60] sm:$0xff]
    %v71 = vld [vmem:[#allocation6 + $0x68] sm:$0xff]
    %v72 = vld [vmem:[#allocation6 + $0x70] sm:$0xff]
    %v73 = vld [vmem:[#allocation6 + $0x78] sm:$0xff]
    %v74 = vld [vmem:[#allocation6 + $0x80] sm:$0xff]
    %v75 = vld [vmem:[#allocation6 + $0x88] sm:$0xff]
    %v76 = vld [vmem:[#allocation6 + $0x90] sm:$0xff]
    %v77 = vld [vmem:[#allocation6 + $0x98] sm:$0xff]
    %v78 = vld [vmem:[#allocation6 + $0xa0] sm:$0xff]
    %v79 = vld [vmem:[#allocation6 + $0xa8] sm:$0xff]
    %v80 = vld [vmem:[#allocation6 + $0xb0] sm:$0xff]
    %v81 = vld [vmem:[#allocation6 + $0xb8] sm:$0xff]
    %v82 = vld [vmem:[#allocation6 + $0xc0] sm:$0xff]
    %v83 = vld [vmem:[#allocation6 + $0xc8] sm:$0xff]
    %v84 = vld [vmem:[#allocation6 + $0xd0] sm:$0xff]
    %v85 = vld [vmem:[#allocation6 + $0xd8] sm:$0xff]
    %v86 = vld [vmem:[#allocation6 + $0xe0] sm:$0xff]
    %v87 = vld [vmem:[#allocation6 + $0xe8] sm:$0xff]
    %v88 = vld [vmem:[#allocation6 + $0xf0] sm:$0xff]
    %v89 = vld [vmem:[#allocation6 + $0xf8] sm:$0xff]
    %v90 = vld [vmem:[#allocation6 + $0x100] sm:$0xff]
    %v91 = vld [vmem:[#allocation6 + $0x108] sm:$0xff]
    %v92 = vld [vmem:[#allocation6 + $0x110] sm:$0xff]
    %v93 = vld [vmem:[#allocation6 + $0x118] sm:$0xff]
    %v94 = vld [vmem:[#allocation6 + $0x120] sm:$0xff]
    %v95 = vld [vmem:[#allocation6 + $0x128] sm:$0xff]
    %v96 = vld [vmem:[#allocation6 + $0x130] sm:$0xff]
    %v97 = vld [vmem:[#allocation6 + $0x138] sm:$0xff]
    %v98 = vld [vmem:[#allocation6 + $0x140] sm:$0xff]
    %v99 = vld [vmem:[#allocation6 + $0x148] sm:$0xff]
    %v100 = vld [vmem:[#allocation6 + $0x150] sm:$0xff]
    %v101 = vld [vmem:[#allocation6 + $0x158] sm:$0xff]
    %v102 = vld [vmem:[#allocation6 + $0x160] sm:$0xff]
    %v103 = vld [vmem:[#allocation6 + $0x168] sm:$0xff]
    %v104 = vld [vmem:[#allocation6 + $0x170] sm:$0xff]
    %v105 = vld [vmem:[#allocation6 + $0x178] sm:$0xff]
    %v106 = vld [vmem:[#allocation6 + $0x180] sm:$0xff]
    %v107 = vld [vmem:[#allocation6 + $0x188] sm:$0xff]
    %v108 = vld [vmem:[#allocation6 + $0x190] sm:$0xff]
    %v109 = vld [vmem:[#allocation6 + $0x198] sm:$0xff]
    %v110 = vld [vmem:[#allocation6 + $0x1a0] sm:$0xff]
    %v111 = vld [vmem:[#allocation6 + $0x1a8] sm:$0xff]
    %v112 = vld [vmem:[#allocation6 + $0x1b0] sm:$0xff]
    %v113 = vld [vmem:[#allocation6 + $0x1b8] sm:$0xff]
    %v114 = vld [vmem:[#allocation6 + $0x1c0] sm:$0xff]
    %v115 = vld [vmem:[#allocation6 + $0x1c8] sm:$0xff]
    %v116 = vld [vmem:[#allocation6 + $0x1d0] sm:$0xff]
    %v117 = vld [vmem:[#allocation6 + $0x1d8] sm:$0xff]
    %v118 = vld [vmem:[#allocation6 + $0x1e0] sm:$0xff]
    %v119 = vld [vmem:[#allocation6 + $0x1e8] sm:$0xff]
    %v120 = vld [vmem:[#allocation6 + $0x1f0] sm:$0xff]
    %v121 = vld [vmem:[#allocation6 + $0x1f8] sm:$0xff]
    %v122 = vld [vmem:[#allocation6 + $0x200] sm:$0xff]
    %v123 = vld [vmem:[#allocation6 + $0x208] sm:$0xff]
    %v124 = vld [vmem:[#allocation6 + $0x210] sm:$0xff]
    %v125 = vld [vmem:[#allocation6 + $0x218] sm:$0xff]
    %v126 = vld [vmem:[#allocation6 + $0x220] sm:$0xff]
    %v127 = vld [vmem:[#allocation6 + $0x228] sm:$0xff]
    %v128 = vld [vmem:[#allocation6 + $0x230] sm:$0xff]
    %v129 = vld [vmem:[#allocation6 + $0x238] sm:$0xff]
    %v130 = vld [vmem:[#allocation6 + $0x240] sm:$0xff]
    %v131 = vld [vmem:[#allocation6 + $0x248] sm:$0xff]
    %v132 = vld [vmem:[#allocation6 + $0x250] sm:$0xff]
    %v133 = vld [vmem:[#allocation6 + $0x258] sm:$0xff]
    %v134 = vld [vmem:[#allocation6 + $0x260] sm:$0xff]
    %v135 = vld [vmem:[#allocation6 + $0x268] sm:$0xff]
    %v136 = vld [vmem:[#allocation6 + $0x270] sm:$0xff]
    %v137 = vld [vmem:[#allocation6 + $0x278] sm:$0xff]
    %v138 = vld [vmem:[#allocation6 + $0x280] sm:$0xff]
    %v139 = vld [vmem:[#allocation6 + $0x288] sm:$0xff]
    %v140 = vld [vmem:[#allocation6 + $0x290] sm:$0xff]
    %v141 = vld [vmem:[#allocation6 + $0x298] sm:$0xff]
    %v142 = vld [vmem:[#allocation6 + $0x2a0] sm:$0xff]
    %v143 = vld [vmem:[#allocation6 + $0x2a8] sm:$0xff]
    %v144 = vld [vmem:[#allocation6 + $0x2b0] sm:$0xff]
    %v145 = vld [vmem:[#allocation6 + $0x2b8] sm:$0xff]
    %v146 = vld [vmem:[#allocation6 + $0x2c0] sm:$0xff]
    %v147 = vld [vmem:[#allocation6 + $0x2c8] sm:$0xff]
    %v148 = vld [vmem:[#allocation6 + $0x2d0] sm:$0xff]
    %v149 = vld [vmem:[#allocation6 + $0x2d8] sm:$0xff]
    %v150 = vld [vmem:[#allocation6 + $0x2e0] sm:$0xff]
    %v151 = vld [vmem:[#allocation6 + $0x2e8] sm:$0xff]
    %v152 = vld [vmem:[#allocation6 + $0x2f0] sm:$0xff]
    %v153 = vld [vmem:[#allocation6 + $0x2f8] sm:$0xff]
    %v154 = vld [vmem:[#allocation6 + $0x300] sm:$0xff]
    %v155 = vld [vmem:[#allocation6 + $0x308] sm:$0xff]
    %v156 = vld [vmem:[#allocation6 + $0x310] sm:$0xff]
    %v157 = vld [vmem:[#allocation6 + $0x318] sm:$0xff]
    %v158 = vld [vmem:[#allocation6 + $0x320] sm:$0xff]
    %v159 = vld [vmem:[#allocation6 + $0x328] sm:$0xff]
    %v160 = vld [vmem:[#allocation6 + $0x330] sm:$0xff]
    %v161 = vld [vmem:[#allocation6 + $0x338] sm:$0xff]
    %v162 = vld [vmem:[#allocation6 + $0x340] sm:$0xff]
    %v163 = vld [vmem:[#allocation6 + $0x348] sm:$0xff]
    %v164 = vld [vmem:[#allocation6 + $0x350] sm:$0xff]
    %v165 = vld [vmem:[#allocation6 + $0x358] sm:$0xff]
    %v166 = vld [vmem:[#allocation6 + $0x360] sm:$0xff]
    %v167 = vld [vmem:[#allocation6 + $0x368] sm:$0xff]
    %v168 = vld [vmem:[#allocation6 + $0x370] sm:$0xff]
    %v169 = vld [vmem:[#allocation6 + $0x378] sm:$0xff]
    %v170 = vld [vmem:[#allocation6 + $0x380] sm:$0xff]
    %v171 = vld [vmem:[#allocation6 + $0x388] sm:$0xff]
    %v172 = vld [vmem:[#allocation6 + $0x390] sm:$0xff]
    %v173 = vld [vmem:[#allocation6 + $0x398] sm:$0xff]
    %v174 = vld [vmem:[#allocation6 + $0x3a0] sm:$0xff]
    %v175 = vld [vmem:[#allocation6 + $0x3a8] sm:$0xff]
    %v176 = vld [vmem:[#allocation6 + $0x3b0] sm:$0xff]
    %v177 = vld [vmem:[#allocation6 + $0x3b8] sm:$0xff]
    %v178 = vld [vmem:[#allocation6 + $0x3c0] sm:$0xff]
    %v179 = vld [vmem:[#allocation6 + $0x3c8] sm:$0xff]
    %v180 = vld [vmem:[#allocation6 + $0x3d0] sm:$0xff]
    %v181 = vld [vmem:[#allocation6 + $0x3d8] sm:$0xff]
    %v182 = vld [vmem:[#allocation6 + $0x3e0] sm:$0xff]
    %v183 = vld [vmem:[#allocation6 + $0x3e8] sm:$0xff]
    %v184 = vld [vmem:[#allocation6 + $0x3f0] sm:$0xff]
    %v185 = vld [vmem:[#allocation6 + $0x3f8] sm:$0xff]
    %v186 = vld [vmem:[#allocation6 + $0x400] sm:$0xff]
    %v187 = vld [vmem:[#allocation6 + $0x408] sm:$0xff]
    %v188 = vld [vmem:[#allocation6 + $0x410] sm:$0xff]
    %v189 = vld [vmem:[#allocation6 + $0x418] sm:$0xff]
    %v190 = vld [vmem:[#allocation6 + $0x420] sm:$0xff]
    %v191 = vld [vmem:[#allocation6 + $0x428] sm:$0xff]
    %v192 = vld [vmem:[#allocation6 + $0x430] sm:$0xff]
    %v193 = vld [vmem:[#allocation6 + $0x438] sm:$0xff]
    %v194 = vld [vmem:[#allocation6 + $0x440] sm:$0xff]
    %v195 = vld [vmem:[#allocation6 + $0x448] sm:$0xff]
    %v196 = vld [vmem:[#allocation6 + $0x450] sm:$0xff]
    %v197 = vld [vmem:[#allocation6 + $0x458] sm:$0xff]
    %v198 = vld [vmem:[#allocation6 + $0x460] sm:$0xff]
    %v199 = vld [vmem:[#allocation6 + $0x468] sm:$0xff]
    %v200 = vld [vmem:[#allocation6 + $0x470] sm:$0xff]
    %v201 = vld [vmem:[#allocation6 + $0x478] sm:$0xff]
    %v202 = vld [vmem:[#allocation6 + $0x480] sm:$0xff]
    %v203 = vld [vmem:[#allocation6 + $0x488] sm:$0xff]
    %v204 = vld [vmem:[#allocation6 + $0x490] sm:$0xff]
    %v205 = vld [vmem:[#allocation6 + $0x498] sm:$0xff]
    %v206 = vld [vmem:[#allocation6 + $0x4a0] sm:$0xff]
    %v207 = vld [vmem:[#allocation6 + $0x4a8] sm:$0xff]
    %v208 = vld [vmem:[#allocation6 + $0x4b0] sm:$0xff]
    %v209 = vld [vmem:[#allocation6 + $0x4b8] sm:$0xff]
    %v210 = vld [vmem:[#allocation6 + $0x4c0] sm:$0xff]
    %v211 = vld [vmem:[#allocation6 + $0x4c8] sm:$0xff]
    %v212 = vld [vmem:[#allocation6 + $0x4d0] sm:$0xff]
    %v213 = vld [vmem:[#allocation6 + $0x4d8] sm:$0xff]
    %v214 = vld [vmem:[#allocation6 + $0x4e0] sm:$0xff]
    %v215 = vld [vmem:[#allocation6 + $0x4e8] sm:$0xff]
    %v216 = vld [vmem:[#allocation6 + $0x4f0] sm:$0xff]
    %v217 = vld [vmem:[#allocation6 + $0x4f8] sm:$0xff]
    %v218 = vand.u32 %v73, 4294901760
    %219 = vmatpush.msra.mxu0 %v218
    %v220 = vand.u32 %v72, 4294901760
    %221 = vmatpush.msra.mxu0 %v220
    %v222 = vand.u32 %v71, 4294901760
    %223 = vmatpush.msra.mxu0 %v222
    %v224 = vand.u32 %v70, 4294901760
    %225 = vmatpush.msra.mxu0 %v224
    %v226 = vand.u32 %v69, 4294901760
    %227 = vmatpush.msra.mxu0 %v226
    %v228 = vand.u32 %v68, 4294901760
    %229 = vmatpush.msra.mxu0 %v228
    %v230 = vand.u32 %v67, 4294901760
    %231 = vmatpush.msra.mxu0 %v230
    %v232 = vand.u32 %v66, 4294901760
    %233 = vmatpush.msra.mxu0 %v232
    %v234 = vand.u32 %v65, 4294901760
    %235 = vmatpush.msra.mxu0 %v234
    %v236 = vand.u32 %v64, 4294901760
    %237 = vmatpush.msra.mxu0 %v236
    %v238 = vand.u32 %v63, 4294901760
    %239 = vmatpush.msra.mxu0 %v238
    %v240 = vand.u32 %v62, 4294901760
    %241 = vmatpush.msra.mxu0 %v240
    %v242 = vand.u32 %v61, 4294901760
    %243 = vmatpush.msra.mxu0 %v242
    %v244 = vand.u32 %v60, 4294901760
    %245 = vmatpush.msra.mxu0 %v244
    %v246 = vand.u32 %v59, 4294901760
    %247 = vmatpush.msra.mxu0 %v246
    %v248 = vand.u32 %v58, 4294901760
    %249 = vmatpush.msra.mxu0 %v248
    %v250 = vand.u32 %v48, 4294901760
    %v251 = vsub.f32 %v48, %v250
    %v252 = vand.u32 %v251, 4294901760
    %v253 = vsub.f32 %v251, %v252
    %v254 = vand.u32 %v253, 4294901760
    %255 = vmatmul.f32.gmra.mxu0 %v254
    %v256 = vpop.f32.mrf.mxu0
    %v257 = vadd.f32 0.0, %v256
    %258 = vdwg.mxu0
    %v259 = vand.u32 %v73, 4294901760
    %v260 = vsub.f32 %v73, %v259
    %v261 = vand.u32 %v260, 4294901760
    %v262 = vsub.f32 %v260, %v261
    %v263 = vand.u32 %v262, 4294901760
    %264 = vmatpush.msra.mxu0 %v263
    %v265 = vand.u32 %v72, 4294901760
    %v266 = vsub.f32 %v72, %v265
    %v267 = vand.u32 %v266, 4294901760
    %v268 = vsub.f32 %v266, %v267
    %v269 = vand.u32 %v268, 4294901760
    %270 = vmatpush.msra.mxu0 %v269
    %v271 = vand.u32 %v71, 4294901760
    %v272 = vsub.f32 %v71, %v271
    %v273 = vand.u32 %v272, 4294901760
    %v274 = vsub.f32 %v272, %v273
    %v275 = vand.u32 %v274, 4294901760
    %276 = vmatpush.msra.mxu0 %v275
    %v277 = vand.u32 %v70, 4294901760
    %v278 = vsub.f32 %v70, %v277
    %v279 = vand.u32 %v278, 4294901760
    %v280 = vsub.f32 %v278, %v279
    %v281 = vand.u32 %v280, 4294901760
    %282 = vmatpush.msra.mxu0 %v281
    %v283 = vand.u32 %v69, 4294901760
    %v284 = vsub.f32 %v69, %v283
    %v285 = vand.u32 %v284, 4294901760
    %v286 = vsub.f32 %v284, %v285
    %v287 = vand.u32 %v286, 4294901760
    %288 = vmatpush.msra.mxu0 %v287
    %v289 = vand.u32 %v68, 4294901760
    %v290 = vsub.f32 %v68, %v289
    %v291 = vand.u32 %v290, 4294901760
    %v292 = vsub.f32 %v290, %v291
    %v293 = vand.u32 %v292, 4294901760
    %294 = vmatpush.msra.mxu0 %v293
    %v295 = vand.u32 %v67, 4294901760
    %v296 = vsub.f32 %v67, %v295
    %v297 = vand.u32 %v296, 4294901760
    %v298 = vsub.f32 %v296, %v297
    %v299 = vand.u32 %v298, 4294901760
    %300 = vmatpush.msra.mxu0 %v299
    %v301 = vand.u32 %v66, 4294901760
    %v302 = vsub.f32 %v66, %v301
    %v303 = vand.u32 %v302, 4294901760
    %v304 = vsub.f32 %v302, %v303
    %v305 = vand.u32 %v304, 4294901760
    %306 = vmatpush.msra.mxu0 %v305
    %v307 = vand.u32 %v65, 4294901760
    %v308 = vsub.f32 %v65, %v307
    %v309 = vand.u32 %v308, 4294901760
    %v310 = vsub.f32 %v308, %v309
    %v311 = vand.u32 %v310, 4294901760
    %312 = vmatpush.msra.mxu0 %v311
    %v313 = vand.u32 %v64, 4294901760
    %v314 = vsub.f32 %v64, %v313
    %v315 = vand.u32 %v314, 4294901760
    %v316 = vsub.f32 %v314, %v315
    %v317 = vand.u32 %v316, 4294901760
    %318 = vmatpush.msra.mxu0 %v317
    %v319 = vand.u32 %v63, 4294901760
    %v320 = vsub.f32 %v63, %v319
    %v321 = vand.u32 %v320, 4294901760
    %v322 = vsub.f32 %v320, %v321
    %v323 = vand.u32 %v322, 4294901760
    %324 = vmatpush.msra.mxu0 %v323
    %v325 = vand.u32 %v62, 4294901760
    %v326 = vsub.f32 %v62, %v325
    %v327 = vand.u32 %v326, 4294901760
    %v328 = vsub.f32 %v326, %v327
    %v329 = vand.u32 %v328, 4294901760
    %330 = vmatpush.msra.mxu0 %v329
    %v331 = vand.u32 %v61, 4294901760
    %v332 = vsub.f32 %v61, %v331
    %v333 = vand.u32 %v332, 4294901760
    %v334 = vsub.f32 %v332, %v333
    %v335 = vand.u32 %v334, 4294901760
    %336 = vmatpush.msra.mxu0 %v335
    %v337 = vand.u32 %v60, 4294901760
    %v338 = vsub.f32 %v60, %v337
    %v339 = vand.u32 %v338, 4294901760
    %v340 = vsub.f32 %v338, %v339
    %v341 = vand.u32 %v340, 4294901760
    %342 = vmatpush.msra.mxu0 %v341
    %v343 = vand.u32 %v59, 4294901760
    %v344 = vsub.f32 %v59, %v343
    %v345 = vand.u32 %v344, 4294901760
    %v346 = vsub.f32 %v344, %v345
    %v347 = vand.u32 %v346, 4294901760
    %348 = vmatpush.msra.mxu0 %v347
    %v349 = vand.u32 %v58, 4294901760
    %v350 = vsub.f32 %v58, %v349
    %v351 = vand.u32 %v350, 4294901760
    %v352 = vsub.f32 %v350, %v351
    %v353 = vand.u32 %v352, 4294901760
    %354 = vmatpush.msra.mxu0 %v353
    %v355 = vand.u32 %v48, 4294901760
    %356 = vmatmul.f32.gmra.mxu0 %v355
    %v357 = vpop.f32.mrf.mxu0
    %v358 = vadd.f32 %v257, %v357
    %359 = vdwg.mxu0
    %v360 = vand.u32 %v73, 4294901760
    %v361 = vsub.f32 %v73, %v360
    %362 = vmatpush.msra.mxu0 %v361
    %v363 = vand.u32 %v72, 4294901760
    %v364 = vsub.f32 %v72, %v363
    %365 = vmatpush.msra.mxu0 %v364
    %v366 = vand.u32 %v71, 4294901760
    %v367 = vsub.f32 %v71, %v366
    %368 = vmatpush.msra.mxu0 %v367
    %v369 = vand.u32 %v70, 4294901760
    %v370 = vsub.f32 %v70, %v369
    %371 = vmatpush.msra.mxu0 %v370
    %v372 = vand.u32 %v69, 4294901760
    %v373 = vsub.f32 %v69, %v372
    %374 = vmatpush.msra.mxu0 %v373
    %v375 = vand.u32 %v68, 4294901760
    %v376 = vsub.f32 %v68, %v375
    %377 = vmatpush.msra.mxu0 %v376
    %v378 = vand.u32 %v67, 4294901760
    %v379 = vsub.f32 %v67, %v378
    %380 = vmatpush.msra.mxu0 %v379
    %v381 = vand.u32 %v66, 4294901760
    %v382 = vsub.f32 %v66, %v381
    %383 = vmatpush.msra.mxu0 %v382
    %v384 = vand.u32 %v65, 4294901760
    %v385 = vsub.f32 %v65, %v384
    %386 = vmatpush.msra.mxu0 %v385
    %v387 = vand.u32 %v64, 4294901760
    %v388 = vsub.f32 %v64, %v387
    %389 = vmatpush.msra.mxu0 %v388
    %v390 = vand.u32 %v63, 4294901760
    %v391 = vsub.f32 %v63, %v390
    %392 = vmatpush.msra.mxu0 %v391
    %v393 = vand.u32 %v62, 4294901760
    %v394 = vsub.f32 %v62, %v393
    %395 = vmatpush.msra.mxu0 %v394
    %v396 = vand.u32 %v61, 4294901760
    %v397 = vsub.f32 %v61, %v396
    %398 = vmatpush.msra.mxu0 %v397
    %v399 = vand.u32 %v60, 4294901760
    %v400 = vsub.f32 %v60, %v399
    %401 = vmatpush.msra.mxu0 %v400
    %v402 = vand.u32 %v59, 4294901760
    %v403 = vsub.f32 %v59, %v402
    %404 = vmatpush.msra.mxu0 %v403
    %v405 = vand.u32 %v58, 4294901760
    %v406 = vsub.f32 %v58, %v405
    %407 = vmatpush.msra.mxu0 %v406
    %v408 = vand.u32 %v48, 4294901760
    %v409 = vsub.f32 %v48, %v408
    %410 = vmatmul.f32.gmra.mxu0 %v409
    %v411 = vpop.f32.mrf.mxu0
    %v412 = vadd.f32 %v358, %v411
    %413 = vdwg.mxu0
    %v414 = vand.u32 %v73, 4294901760
    %415 = vmatpush.msra.mxu0 %v414
    %v416 = vand.u32 %v72, 4294901760
    %417 = vmatpush.msra.mxu0 %v416
    %v418 = vand.u32 %v71, 4294901760
    %419 = vmatpush.msra.mxu0 %v418
    %v420 = vand.u32 %v70, 4294901760
    %421 = vmatpush.msra.mxu0 %v420
    %v422 = vand.u32 %v69, 4294901760
    %423 = vmatpush.msra.mxu0 %v422
    %v424 = vand.u32 %v68, 4294901760
    %425 = vmatpush.msra.mxu0 %v424
    %v426 = vand.u32 %v67, 4294901760
    %427 = vmatpush.msra.mxu0 %v426
    %v428 = vand.u32 %v66, 4294901760
    %429 = vmatpush.msra.mxu0 %v428
    %v430 = vand.u32 %v65, 4294901760
    %431 = vmatpush.msra.mxu0 %v430
    %v432 = vand.u32 %v64, 4294901760
    %433 = vmatpush.msra.mxu0 %v432
    %v434 = vand.u32 %v63, 4294901760
    %435 = vmatpush.msra.mxu0 %v434
    %v436 = vand.u32 %v62, 4294901760
    %437 = vmatpush.msra.mxu0 %v436
    %v438 = vand.u32 %v61, 4294901760
    %439 = vmatpush.msra.mxu0 %v438
    %v440 = vand.u32 %v60, 4294901760
    %441 = vmatpush.msra.mxu0 %v440
    %v442 = vand.u32 %v59, 4294901760
    %443 = vmatpush.msra.mxu0 %v442
    %v444 = vand.u32 %v58, 4294901760
    %445 = vmatpush.msra.mxu0 %v444
    %v446 = vand.u32 %v48, 4294901760
    %v447 = vsub.f32 %v48, %v446
    %v448 = vand.u32 %v447, 4294901760
    %449 = vmatmul.f32.gmra.mxu0 %v448
    %v450 = vpop.f32.mrf.mxu0
    %v451 = vadd.f32 %v412, %v450
    %452 = vdwg.mxu0
    %v453 = vand.u32 %v73, 4294901760
    %v454 = vsub.f32 %v73, %v453
    %v455 = vand.u32 %v454, 4294901760
    %456 = vmatpush.msra.mxu0 %v455
    %v457 = vand.u32 %v72, 4294901760
    %v458 = vsub.f32 %v72, %v457
    %v459 = vand.u32 %v458, 4294901760
    %460 = vmatpush.msra.mxu0 %v459
    %v461 = vand.u32 %v71, 4294901760
    %v462 = vsub.f32 %v71, %v461
    %v463 = vand.u32 %v462, 4294901760
    %464 = vmatpush.msra.mxu0 %v463
    %v465 = vand.u32 %v70, 4294901760
    %v466 = vsub.f32 %v70, %v465
    %v467 = vand.u32 %v466, 4294901760
    %468 = vmatpush.msra.mxu0 %v467
    %v469 = vand.u32 %v69, 4294901760
    %v470 = vsub.f32 %v69, %v469
    %v471 = vand.u32 %v470, 4294901760
    %472 = vmatpush.msra.mxu0 %v471
    %v473 = vand.u32 %v68, 4294901760
    %v474 = vsub.f32 %v68, %v473
    %v475 = vand.u32 %v474, 4294901760
    %476 = vmatpush.msra.mxu0 %v475
    %v477 = vand.u32 %v67, 4294901760
    %v478 = vsub.f32 %v67, %v477
    %v479 = vand.u32 %v478, 4294901760
    %480 = vmatpush.msra.mxu0 %v479
    %v481 = vand.u32 %v66, 4294901760
    %v482 = vsub.f32 %v66, %v481
    %v483 = vand.u32 %v482, 4294901760
    %484 = vmatpush.msra.mxu0 %v483
    %v485 = vand.u32 %v65, 4294901760
    %v486 = vsub.f32 %v65, %v485
    %v487 = vand.u32 %v486, 4294901760
    %488 = vmatpush.msra.mxu0 %v487
    %v489 = vand.u32 %v64, 4294901760
    %v490 = vsub.f32 %v64, %v489
    %v491 = vand.u32 %v490, 4294901760
    %492 = vmatpush.msra.mxu0 %v491
    %v493 = vand.u32 %v63, 4294901760
    %v494 = vsub.f32 %v63, %v493
    %v495 = vand.u32 %v494, 4294901760
    %496 = vmatpush.msra.mxu0 %v495
    %v497 = vand.u32 %v62, 4294901760
    %v498 = vsub.f32 %v62, %v497
    %v499 = vand.u32 %v498, 4294901760
    %500 = vmatpush.msra.mxu0 %v499
    %v501 = vand.u32 %v61, 4294901760
    %v502 = vsub.f32 %v61, %v501
    %v503 = vand.u32 %v502, 4294901760
    %504 = vmatpush.msra.mxu0 %v503
    %v505 = vand.u32 %v60, 4294901760
    %v506 = vsub.f32 %v60, %v505
    %v507 = vand.u32 %v506, 4294901760
    %508 = vmatpush.msra.mxu0 %v507
    %v509 = vand.u32 %v59, 4294901760
    %v510 = vsub.f32 %v59, %v509
    %v511 = vand.u32 %v510, 4294901760
    %512 = vmatpush.msra.mxu0 %v511
    %v513 = vand.u32 %v58, 4294901760
    %v514 = vsub.f32 %v58, %v513
    %v515 = vand.u32 %v514, 4294901760
    %516 = vmatpush.msra.mxu0 %v515
    %v517 = vand.u32 %v48, 4294901760
    %518 = vmatmul.f32.gmra.mxu0 %v517
    %v519 = vpop.f32.mrf.mxu0
    %v520 = vadd.f32 %v451, %v519
    %521 = vdwg.mxu0
    %v522 = vand.u32 %v73, 4294901760
    %523 = vmatpush.msra.mxu0 %v522
    %v524 = vand.u32 %v72, 4294901760
    %525 = vmatpush.msra.mxu0 %v524
    %v526 = vand.u32 %v71, 4294901760
    %527 = vmatpush.msra.mxu0 %v526
    %v528 = vand.u32 %v70, 4294901760
    %529 = vmatpush.msra.mxu0 %v528
    %v530 = vand.u32 %v69, 4294901760
    %531 = vmatpush.msra.mxu0 %v530
    %v532 = vand.u32 %v68, 4294901760
    %533 = vmatpush.msra.mxu0 %v532
    %v534 = vand.u32 %v67, 4294901760
    %535 = vmatpush.msra.mxu0 %v534
    %v536 = vand.u32 %v66, 4294901760
    %537 = vmatpush.msra.mxu0 %v536
    %v538 = vand.u32 %v65, 4294901760
    %539 = vmatpush.msra.mxu0 %v538
    %v540 = vand.u32 %v64, 4294901760
    %541 = vmatpush.msra.mxu0 %v540
    %v542 = vand.u32 %v63, 4294901760
    %543 = vmatpush.msra.mxu0 %v542
    %v544 = vand.u32 %v62, 4294901760
    %545 = vmatpush.msra.mxu0 %v544
    %v546 = vand.u32 %v61, 4294901760
    %547 = vmatpush.msra.mxu0 %v546
    %v548 = vand.u32 %v60, 4294901760
    %549 = vmatpush.msra.mxu0 %v548
    %v550 = vand.u32 %v59, 4294901760
    %551 = vmatpush.msra.mxu0 %v550
    %v552 = vand.u32 %v58, 4294901760
    %553 = vmatpush.msra.mxu0 %v552
    %v554 = vand.u32 %v48, 4294901760
    %555 = vmatmul.f32.gmra.mxu0 %v554
    %v556 = vpop.f32.mrf.mxu0
    %v557 = vadd.f32 %v520, %v556
    %558 = vdwg.mxu0
    %v559 = vand.u32 %v89, 4294901760
    %560 = vmatpush.msra.mxu0 %v559
    %v561 = vand.u32 %v88, 4294901760
    %562 = vmatpush.msra.mxu0 %v561
    %v563 = vand.u32 %v87, 4294901760
    %564 = vmatpush.msra.mxu0 %v563
    %v565 = vand.u32 %v86, 4294901760
    %566 = vmatpush.msra.mxu0 %v565
    %v567 = vand.u32 %v85, 4294901760
    %568 = vmatpush.msra.mxu0 %v567
    %v569 = vand.u32 %v84, 4294901760
    %570 = vmatpush.msra.mxu0 %v569
    %v571 = vand.u32 %v83, 4294901760
    %572 = vmatpush.msra.mxu0 %v571
    %v573 = vand.u32 %v82, 4294901760
    %574 = vmatpush.msra.mxu0 %v573
    %v575 = vand.u32 %v81, 4294901760
    %576 = vmatpush.msra.mxu0 %v575
    %v577 = vand.u32 %v80, 4294901760
    %578 = vmatpush.msra.mxu0 %v577
    %v579 = vand.u32 %v79, 4294901760
    %580 = vmatpush.msra.mxu0 %v579
    %v581 = vand.u32 %v78, 4294901760
    %582 = vmatpush.msra.mxu0 %v581
    %v583 = vand.u32 %v77, 4294901760
    %584 = vmatpush.msra.mxu0 %v583
    %v585 = vand.u32 %v76, 4294901760
    %586 = vmatpush.msra.mxu0 %v585
    %v587 = vand.u32 %v75, 4294901760
    %588 = vmatpush.msra.mxu0 %v587
    %v589 = vand.u32 %v74, 4294901760
    %590 = vmatpush.msra.mxu0 %v589
    %v591 = vand.u32 %v49, 4294901760
    %v592 = vsub.f32 %v49, %v591
    %v593 = vand.u32 %v592, 4294901760
    %v594 = vsub.f32 %v592, %v593
    %v595 = vand.u32 %v594, 4294901760
    %596 = vmatmul.f32.gmra.mxu0 %v595
    %v597 = vpop.f32.mrf.mxu0
    %v598 = vadd.f32 %v557, %v597
    %599 = vdwg.mxu0
    %v600 = vand.u32 %v89, 4294901760
    %v601 = vsub.f32 %v89, %v600
    %v602 = vand.u32 %v601, 4294901760
    %v603 = vsub.f32 %v601, %v602
    %v604 = vand.u32 %v603, 4294901760
    %605 = vmatpush.msra.mxu0 %v604
    %v606 = vand.u32 %v88, 4294901760
    %v607 = vsub.f32 %v88, %v606
    %v608 = vand.u32 %v607, 4294901760
    %v609 = vsub.f32 %v607, %v608
    %v610 = vand.u32 %v609, 4294901760
    %611 = vmatpush.msra.mxu0 %v610
    %v612 = vand.u32 %v87, 4294901760
    %v613 = vsub.f32 %v87, %v612
    %v614 = vand.u32 %v613, 4294901760
    %v615 = vsub.f32 %v613, %v614
    %v616 = vand.u32 %v615, 4294901760
    %617 = vmatpush.msra.mxu0 %v616
    %v618 = vand.u32 %v86, 4294901760
    %v619 = vsub.f32 %v86, %v618
    %v620 = vand.u32 %v619, 4294901760
    %v621 = vsub.f32 %v619, %v620
    %v622 = vand.u32 %v621, 4294901760
    %623 = vmatpush.msra.mxu0 %v622
    %v624 = vand.u32 %v85, 4294901760
    %v625 = vsub.f32 %v85, %v624
    %v626 = vand.u32 %v625, 4294901760
    %v627 = vsub.f32 %v625, %v626
    %v628 = vand.u32 %v627, 4294901760
    %629 = vmatpush.msra.mxu0 %v628
    %v630 = vand.u32 %v84, 4294901760
    %v631 = vsub.f32 %v84, %v630
    %v632 = vand.u32 %v631, 4294901760
    %v633 = vsub.f32 %v631, %v632
    %v634 = vand.u32 %v633, 4294901760
    %635 = vmatpush.msra.mxu0 %v634
    %v636 = vand.u32 %v83, 4294901760
    %v637 = vsub.f32 %v83, %v636
    %v638 = vand.u32 %v637, 4294901760
    %v639 = vsub.f32 %v637, %v638
    %v640 = vand.u32 %v639, 4294901760
    %641 = vmatpush.msra.mxu0 %v640
    %v642 = vand.u32 %v82, 4294901760
    %v643 = vsub.f32 %v82, %v642
    %v644 = vand.u32 %v643, 4294901760
    %v645 = vsub.f32 %v643, %v644
    %v646 = vand.u32 %v645, 4294901760
    %647 = vmatpush.msra.mxu0 %v646
    %v648 = vand.u32 %v81, 4294901760
    %v649 = vsub.f32 %v81, %v648
    %v650 = vand.u32 %v649, 4294901760
    %v651 = vsub.f32 %v649, %v650
    %v652 = vand.u32 %v651, 4294901760
    %653 = vmatpush.msra.mxu0 %v652
    %v654 = vand.u32 %v80, 4294901760
    %v655 = vsub.f32 %v80, %v654
    %v656 = vand.u32 %v655, 4294901760
    %v657 = vsub.f32 %v655, %v656
    %v658 = vand.u32 %v657, 4294901760
    %659 = vmatpush.msra.mxu0 %v658
    %v660 = vand.u32 %v79, 4294901760
    %v661 = vsub.f32 %v79, %v660
    %v662 = vand.u32 %v661, 4294901760
    %v663 = vsub.f32 %v661, %v662
    %v664 = vand.u32 %v663, 4294901760
    %665 = vmatpush.msra.mxu0 %v664
    %v666 = vand.u32 %v78, 4294901760
    %v667 = vsub.f32 %v78, %v666
    %v668 = vand.u32 %v667, 4294901760
    %v669 = vsub.f32 %v667, %v668
    %v670 = vand.u32 %v669, 4294901760
    %671 = vmatpush.msra.mxu0 %v670
    %v672 = vand.u32 %v77, 4294901760
    %v673 = vsub.f32 %v77, %v672
    %v674 = vand.u32 %v673, 4294901760
    %v675 = vsub.f32 %v673, %v674
    %v676 = vand.u32 %v675, 4294901760
    %677 = vmatpush.msra.mxu0 %v676
    %v678 = vand.u32 %v76, 4294901760
    %v679 = vsub.f32 %v76, %v678
    %v680 = vand.u32 %v679, 4294901760
    %v681 = vsub.f32 %v679, %v680
    %v682 = vand.u32 %v681, 4294901760
    %683 = vmatpush.msra.mxu0 %v682
    %v684 = vand.u32 %v75, 4294901760
    %v685 = vsub.f32 %v75, %v684
    %v686 = vand.u32 %v685, 4294901760
    %v687 = vsub.f32 %v685, %v686
    %v688 = vand.u32 %v687, 4294901760
    %689 = vmatpush.msra.mxu0 %v688
    %v690 = vand.u32 %v74, 4294901760
    %v691 = vsub.f32 %v74, %v690
    %v692 = vand.u32 %v691, 4294901760
    %v693 = vsub.f32 %v691, %v692
    %v694 = vand.u32 %v693, 4294901760
    %695 = vmatpush.msra.mxu0 %v694
    %v696 = vand.u32 %v49, 4294901760
    %697 = vmatmul.f32.gmra.mxu0 %v696
    %v698 = vpop.f32.mrf.mxu0
    %v699 = vadd.f32 %v598, %v698
    %700 = vdwg.mxu0
    %v701 = vand.u32 %v89, 4294901760
    %v702 = vsub.f32 %v89, %v701
    %703 = vmatpush.msra.mxu0 %v702
    %v704 = vand.u32 %v88, 4294901760
    %v705 = vsub.f32 %v88, %v704
    %706 = vmatpush.msra.mxu0 %v705
    %v707 = vand.u32 %v87, 4294901760
    %v708 = vsub.f32 %v87, %v707
    %709 = vmatpush.msra.mxu0 %v708
    %v710 = vand.u32 %v86, 4294901760
    %v711 = vsub.f32 %v86, %v710
    %712 = vmatpush.msra.mxu0 %v711
    %v713 = vand.u32 %v85, 4294901760
    %v714 = vsub.f32 %v85, %v713
    %715 = vmatpush.msra.mxu0 %v714
    %v716 = vand.u32 %v84, 4294901760
    %v717 = vsub.f32 %v84, %v716
    %718 = vmatpush.msra.mxu0 %v717
    %v719 = vand.u32 %v83, 4294901760
    %v720 = vsub.f32 %v83, %v719
    %721 = vmatpush.msra.mxu0 %v720
    %v722 = vand.u32 %v82, 4294901760
    %v723 = vsub.f32 %v82, %v722
    %724 = vmatpush.msra.mxu0 %v723
    %v725 = vand.u32 %v81, 4294901760
    %v726 = vsub.f32 %v81, %v725
    %727 = vmatpush.msra.mxu0 %v726
    %v728 = vand.u32 %v80, 4294901760
    %v729 = vsub.f32 %v80, %v728
    %730 = vmatpush.msra.mxu0 %v729
    %v731 = vand.u32 %v79, 4294901760
    %v732 = vsub.f32 %v79, %v731
    %733 = vmatpush.msra.mxu0 %v732
    %v734 = vand.u32 %v78, 4294901760
    %v735 = vsub.f32 %v78, %v734
    %736 = vmatpush.msra.mxu0 %v735
    %v737 = vand.u32 %v77, 4294901760
    %v738 = vsub.f32 %v77, %v737
    %739 = vmatpush.msra.mxu0 %v738
    %v740 = vand.u32 %v76, 4294901760
    %v741 = vsub.f32 %v76, %v740
    %742 = vmatpush.msra.mxu0 %v741
    %v743 = vand.u32 %v75, 4294901760
    %v744 = vsub.f32 %v75, %v743
    %745 = vmatpush.msra.mxu0 %v744
    %v746 = vand.u32 %v74, 4294901760
    %v747 = vsub.f32 %v74, %v746
    %748 = vmatpush.msra.mxu0 %v747
    %v749 = vand.u32 %v49, 4294901760
    %v750 = vsub.f32 %v49, %v749
    %751 = vmatmul.f32.gmra.mxu0 %v750
    %v752 = vpop.f32.mrf.mxu0
    %v753 = vadd.f32 %v699, %v752
    %754 = vdwg.mxu0
    %v755 = vand.u32 %v89, 4294901760
    %756 = vmatpush.msra.mxu0 %v755
    %v757 = vand.u32 %v88, 4294901760
    %758 = vmatpush.msra.mxu0 %v757
    %v759 = vand.u32 %v87, 4294901760
    %760 = vmatpush.msra.mxu0 %v759
    %v761 = vand.u32 %v86, 4294901760
    %762 = vmatpush.msra.mxu0 %v761
    %v763 = vand.u32 %v85, 4294901760
    %764 = vmatpush.msra.mxu0 %v763
    %v765 = vand.u32 %v84, 4294901760
    %766 = vmatpush.msra.mxu0 %v765
    %v767 = vand.u32 %v83, 4294901760
    %768 = vmatpush.msra.mxu0 %v767
    %v769 = vand.u32 %v82, 4294901760
    %770 = vmatpush.msra.mxu0 %v769
    %v771 = vand.u32 %v81, 4294901760
    %772 = vmatpush.msra.mxu0 %v771
    %v773 = vand.u32 %v80, 4294901760
    %774 = vmatpush.msra.mxu0 %v773
    %v775 = vand.u32 %v79, 4294901760
    %776 = vmatpush.msra.mxu0 %v775
    %v777 = vand.u32 %v78, 4294901760
    %778 = vmatpush.msra.mxu0 %v777
    %v779 = vand.u32 %v77, 4294901760
    %780 = vmatpush.msra.mxu0 %v779
    %v781 = vand.u32 %v76, 4294901760
    %782 = vmatpush.msra.mxu0 %v781
    %v783 = vand.u32 %v75, 4294901760
    %784 = vmatpush.msra.mxu0 %v783
    %v785 = vand.u32 %v74, 4294901760
    %786 = vmatpush.msra.mxu0 %v785
    %v787 = vand.u32 %v49, 4294901760
    %v788 = vsub.f32 %v49, %v787
    %v789 = vand.u32 %v788, 4294901760
    %790 = vmatmul.f32.gmra.mxu0 %v789
    %v791 = vpop.f32.mrf.mxu0
    %v792 = vadd.f32 %v753, %v791
    %793 = vdwg.mxu0
    %v794 = vand.u32 %v89, 4294901760
    %v795 = vsub.f32 %v89, %v794
    %v796 = vand.u32 %v795, 4294901760
    %797 = vmatpush.msra.mxu0 %v796
    %v798 = vand.u32 %v88, 4294901760
    %v799 = vsub.f32 %v88, %v798
    %v800 = vand.u32 %v799, 4294901760
    %801 = vmatpush.msra.mxu0 %v800
    %v802 = vand.u32 %v87, 4294901760
    %v803 = vsub.f32 %v87, %v802
    %v804 = vand.u32 %v803, 4294901760
    %805 = vmatpush.msra.mxu0 %v804
    %v806 = vand.u32 %v86, 4294901760
    %v807 = vsub.f32 %v86, %v806
    %v808 = vand.u32 %v807, 4294901760
    %809 = vmatpush.msra.mxu0 %v808
    %v810 = vand.u32 %v85, 4294901760
    %v811 = vsub.f32 %v85, %v810
    %v812 = vand.u32 %v811, 4294901760
    %813 = vmatpush.msra.mxu0 %v812
    %v814 = vand.u32 %v84, 4294901760
    %v815 = vsub.f32 %v84, %v814
    %v816 = vand.u32 %v815, 4294901760
    %817 = vmatpush.msra.mxu0 %v816
    %v818 = vand.u32 %v83, 4294901760
    %v819 = vsub.f32 %v83, %v818
    %v820 = vand.u32 %v819, 4294901760
    %821 = vmatpush.msra.mxu0 %v820
    %v822 = vand.u32 %v82, 4294901760
    %v823 = vsub.f32 %v82, %v822
    %v824 = vand.u32 %v823, 4294901760
    %825 = vmatpush.msra.mxu0 %v824
    %v826 = vand.u32 %v81, 4294901760
    %v827 = vsub.f32 %v81, %v826
    %v828 = vand.u32 %v827, 4294901760
    %829 = vmatpush.msra.mxu0 %v828
    %v830 = vand.u32 %v80, 4294901760
    %v831 = vsub.f32 %v80, %v830
    %v832 = vand.u32 %v831, 4294901760
    %833 = vmatpush.msra.mxu0 %v832
    %v834 = vand.u32 %v79, 4294901760
    %v835 = vsub.f32 %v79, %v834
    %v836 = vand.u32 %v835, 4294901760
    %837 = vmatpush.msra.mxu0 %v836
    %v838 = vand.u32 %v78, 4294901760
    %v839 = vsub.f32 %v78, %v838
    %v840 = vand.u32 %v839, 4294901760
    %841 = vmatpush.msra.mxu0 %v840
    %v842 = vand.u32 %v77, 4294901760
    %v843 = vsub.f32 %v77, %v842
    %v844 = vand.u32 %v843, 4294901760
    %845 = vmatpush.msra.mxu0 %v844
    %v846 = vand.u32 %v76, 4294901760
    %v847 = vsub.f32 %v76, %v846
    %v848 = vand.u32 %v847, 4294901760
    %849 = vmatpush.msra.mxu0 %v848
    %v850 = vand.u32 %v75, 4294901760
    %v851 = vsub.f32 %v75, %v850
    %v852 = vand.u32 %v851, 4294901760
    %853 = vmatpush.msra.mxu0 %v852
    %v854 = vand.u32 %v74, 4294901760
    %v855 = vsub.f32 %v74, %v854
    %v856 = vand.u32 %v855, 4294901760
    %857 = vmatpush.msra.mxu0 %v856
    %v858 = vand.u32 %v49, 4294901760
    %859 = vmatmul.f32.gmra.mxu0 %v858
    %v860 = vpop.f32.mrf.mxu0
    %v861 = vadd.f32 %v792, %v860
    %862 = vdwg.mxu0
    %v863 = vand.u32 %v89, 4294901760
    %864 = vmatpush.msra.mxu0 %v863
    %v865 = vand.u32 %v88, 4294901760
    %866 = vmatpush.msra.mxu0 %v865
    %v867 = vand.u32 %v87, 4294901760
    %868 = vmatpush.msra.mxu0 %v867
    %v869 = vand.u32 %v86, 4294901760
    %870 = vmatpush.msra.mxu0 %v869
    %v871 = vand.u32 %v85, 4294901760
    %872 = vmatpush.msra.mxu0 %v871
    %v873 = vand.u32 %v84, 4294901760
    %874 = vmatpush.msra.mxu0 %v873
    %v875 = vand.u32 %v83, 4294901760
    %876 = vmatpush.msra.mxu0 %v875
    %v877 = vand.u32 %v82, 4294901760
    %878 = vmatpush.msra.mxu0 %v877
    %v879 = vand.u32 %v81, 4294901760
    %880 = vmatpush.msra.mxu0 %v879
    %v881 = vand.u32 %v80, 4294901760
    %882 = vmatpush.msra.mxu0 %v881
    %v883 = vand.u32 %v79, 4294901760
    %884 = vmatpush.msra.mxu0 %v883
    %v885 = vand.u32 %v78, 4294901760
    %886 = vmatpush.msra.mxu0 %v885
    %v887 = vand.u32 %v77, 4294901760
    %888 = vmatpush.msra.mxu0 %v887
    %v889 = vand.u32 %v76, 4294901760
    %890 = vmatpush.msra.mxu0 %v889
    %v891 = vand.u32 %v75, 4294901760
    %892 = vmatpush.msra.mxu0 %v891
    %v893 = vand.u32 %v74, 4294901760
    %894 = vmatpush.msra.mxu0 %v893
    %v895 = vand.u32 %v49, 4294901760
    %896 = vmatmul.f32.gmra.mxu0 %v895
    %v897 = vpop.f32.mrf.mxu0
    %v898 = vadd.f32 %v861, %v897
    %899 = vdwg.mxu0
    %v900 = vand.u32 %v105, 4294901760
    %901 = vmatpush.msra.mxu0 %v900
    %v902 = vand.u32 %v104, 4294901760
    %903 = vmatpush.msra.mxu0 %v902
    %v904 = vand.u32 %v103, 4294901760
    %905 = vmatpush.msra.mxu0 %v904
    %v906 = vand.u32 %v102, 4294901760
    %907 = vmatpush.msra.mxu0 %v906
    %v908 = vand.u32 %v101, 4294901760
    %909 = vmatpush.msra.mxu0 %v908
    %v910 = vand.u32 %v100, 4294901760
    %911 = vmatpush.msra.mxu0 %v910
    %v912 = vand.u32 %v99, 4294901760
    %913 = vmatpush.msra.mxu0 %v912
    %v914 = vand.u32 %v98, 4294901760
    %915 = vmatpush.msra.mxu0 %v914
    %v916 = vand.u32 %v97, 4294901760
    %917 = vmatpush.msra.mxu0 %v916
    %v918 = vand.u32 %v96, 4294901760
    %919 = vmatpush.msra.mxu0 %v918
    %v920 = vand.u32 %v95, 4294901760
    %921 = vmatpush.msra.mxu0 %v920
    %v922 = vand.u32 %v94, 4294901760
    %923 = vmatpush.msra.mxu0 %v922
    %v924 = vand.u32 %v93, 4294901760
    %925 = vmatpush.msra.mxu0 %v924
    %v926 = vand.u32 %v92, 4294901760
    %927 = vmatpush.msra.mxu0 %v926
    %v928 = vand.u32 %v91, 4294901760
    %929 = vmatpush.msra.mxu0 %v928
    %v930 = vand.u32 %v90, 4294901760
    %931 = vmatpush.msra.mxu0 %v930
    %v932 = vand.u32 %v50, 4294901760
    %v933 = vsub.f32 %v50, %v932
    %v934 = vand.u32 %v933, 4294901760
    %v935 = vsub.f32 %v933, %v934
    %v936 = vand.u32 %v935, 4294901760
    %937 = vmatmul.f32.gmra.mxu0 %v936
    %v938 = vpop.f32.mrf.mxu0
    %v939 = vadd.f32 %v898, %v938
    %940 = vdwg.mxu0
    %v941 = vand.u32 %v105, 4294901760
    %v942 = vsub.f32 %v105, %v941
    %v943 = vand.u32 %v942, 4294901760
    %v944 = vsub.f32 %v942, %v943
    %v945 = vand.u32 %v944, 4294901760
    %946 = vmatpush.msra.mxu0 %v945
    %v947 = vand.u32 %v104, 4294901760
    %v948 = vsub.f32 %v104, %v947
    %v949 = vand.u32 %v948, 4294901760
    %v950 = vsub.f32 %v948, %v949
    %v951 = vand.u32 %v950, 4294901760
    %952 = vmatpush.msra.mxu0 %v951
    %v953 = vand.u32 %v103, 4294901760
    %v954 = vsub.f32 %v103, %v953
    %v955 = vand.u32 %v954, 4294901760
    %v956 = vsub.f32 %v954, %v955
    %v957 = vand.u32 %v956, 4294901760
    %958 = vmatpush.msra.mxu0 %v957
    %v959 = vand.u32 %v102, 4294901760
    %v960 = vsub.f32 %v102, %v959
    %v961 = vand.u32 %v960, 4294901760
    %v962 = vsub.f32 %v960, %v961
    %v963 = vand.u32 %v962, 4294901760
    %964 = vmatpush.msra.mxu0 %v963
    %v965 = vand.u32 %v101, 4294901760
    %v966 = vsub.f32 %v101, %v965
    %v967 = vand.u32 %v966, 4294901760
    %v968 = vsub.f32 %v966, %v967
    %v969 = vand.u32 %v968, 4294901760
    %970 = vmatpush.msra.mxu0 %v969
    %v971 = vand.u32 %v100, 4294901760
    %v972 = vsub.f32 %v100, %v971
    %v973 = vand.u32 %v972, 4294901760
    %v974 = vsub.f32 %v972, %v973
    %v975 = vand.u32 %v974, 4294901760
    %976 = vmatpush.msra.mxu0 %v975
    %v977 = vand.u32 %v99, 4294901760
    %v978 = vsub.f32 %v99, %v977
    %v979 = vand.u32 %v978, 4294901760
    %v980 = vsub.f32 %v978, %v979
    %v981 = vand.u32 %v980, 4294901760
    %982 = vmatpush.msra.mxu0 %v981
    %v983 = vand.u32 %v98, 4294901760
    %v984 = vsub.f32 %v98, %v983
    %v985 = vand.u32 %v984, 4294901760
    %v986 = vsub.f32 %v984, %v985
    %v987 = vand.u32 %v986, 4294901760
    %988 = vmatpush.msra.mxu0 %v987
    %v989 = vand.u32 %v97, 4294901760
    %v990 = vsub.f32 %v97, %v989
    %v991 = vand.u32 %v990, 4294901760
    %v992 = vsub.f32 %v990, %v991
    %v993 = vand.u32 %v992, 4294901760
    %994 = vmatpush.msra.mxu0 %v993
    %v995 = vand.u32 %v96, 4294901760
    %v996 = vsub.f32 %v96, %v995
    %v997 = vand.u32 %v996, 4294901760
    %v998 = vsub.f32 %v996, %v997
    %v999 = vand.u32 %v998, 4294901760
    %1000 = vmatpush.msra.mxu0 %v999
    %v1001 = vand.u32 %v95, 4294901760
    %v1002 = vsub.f32 %v95, %v1001
    %v1003 = vand.u32 %v1002, 4294901760
    %v1004 = vsub.f32 %v1002, %v1003
    %v1005 = vand.u32 %v1004, 4294901760
    %1006 = vmatpush.msra.mxu0 %v1005
    %v1007 = vand.u32 %v94, 4294901760
    %v1008 = vsub.f32 %v94, %v1007
    %v1009 = vand.u32 %v1008, 4294901760
    %v1010 = vsub.f32 %v1008, %v1009
    %v1011 = vand.u32 %v1010, 4294901760
    %1012 = vmatpush.msra.mxu0 %v1011
    %v1013 = vand.u32 %v93, 4294901760
    %v1014 = vsub.f32 %v93, %v1013
    %v1015 = vand.u32 %v1014, 4294901760
    %v1016 = vsub.f32 %v1014, %v1015
    %v1017 = vand.u32 %v1016, 4294901760
    %1018 = vmatpush.msra.mxu0 %v1017
    %v1019 = vand.u32 %v92, 4294901760
    %v1020 = vsub.f32 %v92, %v1019
    %v1021 = vand.u32 %v1020, 4294901760
    %v1022 = vsub.f32 %v1020, %v1021
    %v1023 = vand.u32 %v1022, 4294901760
    %1024 = vmatpush.msra.mxu0 %v1023
    %v1025 = vand.u32 %v91, 4294901760
    %v1026 = vsub.f32 %v91, %v1025
    %v1027 = vand.u32 %v1026, 4294901760
    %v1028 = vsub.f32 %v1026, %v1027
    %v1029 = vand.u32 %v1028, 4294901760
    %1030 = vmatpush.msra.mxu0 %v1029
    %v1031 = vand.u32 %v90, 4294901760
    %v1032 = vsub.f32 %v90, %v1031
    %v1033 = vand.u32 %v1032, 4294901760
    %v1034 = vsub.f32 %v1032, %v1033
    %v1035 = vand.u32 %v1034, 4294901760
    %1036 = vmatpush.msra.mxu0 %v1035
    %v1037 = vand.u32 %v50, 4294901760
    %1038 = vmatmul.f32.gmra.mxu0 %v1037
    %v1039 = vpop.f32.mrf.mxu0
    %v1040 = vadd.f32 %v939, %v1039
    %1041 = vdwg.mxu0
    %v1042 = vand.u32 %v105, 4294901760
    %v1043 = vsub.f32 %v105, %v1042
    %1044 = vmatpush.msra.mxu0 %v1043
    %v1045 = vand.u32 %v104, 4294901760
    %v1046 = vsub.f32 %v104, %v1045
    %1047 = vmatpush.msra.mxu0 %v1046
    %v1048 = vand.u32 %v103, 4294901760
    %v1049 = vsub.f32 %v103, %v1048
    %1050 = vmatpush.msra.mxu0 %v1049
    %v1051 = vand.u32 %v102, 4294901760
    %v1052 = vsub.f32 %v102, %v1051
    %1053 = vmatpush.msra.mxu0 %v1052
    %v1054 = vand.u32 %v101, 4294901760
    %v1055 = vsub.f32 %v101, %v1054
    %1056 = vmatpush.msra.mxu0 %v1055
    %v1057 = vand.u32 %v100, 4294901760
    %v1058 = vsub.f32 %v100, %v1057
    %1059 = vmatpush.msra.mxu0 %v1058
    %v1060 = vand.u32 %v99, 4294901760
    %v1061 = vsub.f32 %v99, %v1060
    %1062 = vmatpush.msra.mxu0 %v1061
    %v1063 = vand.u32 %v98, 4294901760
    %v1064 = vsub.f32 %v98, %v1063
    %1065 = vmatpush.msra.mxu0 %v1064
    %v1066 = vand.u32 %v97, 4294901760
    %v1067 = vsub.f32 %v97, %v1066
    %1068 = vmatpush.msra.mxu0 %v1067
    %v1069 = vand.u32 %v96, 4294901760
    %v1070 = vsub.f32 %v96, %v1069
    %1071 = vmatpush.msra.mxu0 %v1070
    %v1072 = vand.u32 %v95, 4294901760
    %v1073 = vsub.f32 %v95, %v1072
    %1074 = vmatpush.msra.mxu0 %v1073
    %v1075 = vand.u32 %v94, 4294901760
    %v1076 = vsub.f32 %v94, %v1075
    %1077 = vmatpush.msra.mxu0 %v1076
    %v1078 = vand.u32 %v93, 4294901760
    %v1079 = vsub.f32 %v93, %v1078
    %1080 = vmatpush.msra.mxu0 %v1079
    %v1081 = vand.u32 %v92, 4294901760
    %v1082 = vsub.f32 %v92, %v1081
    %1083 = vmatpush.msra.mxu0 %v1082
    %v1084 = vand.u32 %v91, 4294901760
    %v1085 = vsub.f32 %v91, %v1084
    %1086 = vmatpush.msra.mxu0 %v1085
    %v1087 = vand.u32 %v90, 4294901760
    %v1088 = vsub.f32 %v90, %v1087
    %1089 = vmatpush.msra.mxu0 %v1088
    %v1090 = vand.u32 %v50, 4294901760
    %v1091 = vsub.f32 %v50, %v1090
    %1092 = vmatmul.f32.gmra.mxu0 %v1091
    %v1093 = vpop.f32.mrf.mxu0
    %v1094 = vadd.f32 %v1040, %v1093
    %1095 = vdwg.mxu0
    %v1096 = vand.u32 %v105, 4294901760
    %1097 = vmatpush.msra.mxu0 %v1096
    %v1098 = vand.u32 %v104, 4294901760
    %1099 = vmatpush.msra.mxu0 %v1098
    %v1100 = vand.u32 %v103, 4294901760
    %1101 = vmatpush.msra.mxu0 %v1100
    %v1102 = vand.u32 %v102, 4294901760
    %1103 = vmatpush.msra.mxu0 %v1102
    %v1104 = vand.u32 %v101, 4294901760
    %1105 = vmatpush.msra.mxu0 %v1104
    %v1106 = vand.u32 %v100, 4294901760
    %1107 = vmatpush.msra.mxu0 %v1106
    %v1108 = vand.u32 %v99, 4294901760
    %1109 = vmatpush.msra.mxu0 %v1108
    %v1110 = vand.u32 %v98, 4294901760
    %1111 = vmatpush.msra.mxu0 %v1110
    %v1112 = vand.u32 %v97, 4294901760
    %1113 = vmatpush.msra.mxu0 %v1112
    %v1114 = vand.u32 %v96, 4294901760
    %1115 = vmatpush.msra.mxu0 %v1114
    %v1116 = vand.u32 %v95, 4294901760
    %1117 = vmatpush.msra.mxu0 %v1116
    %v1118 = vand.u32 %v94, 4294901760
    %1119 = vmatpush.msra.mxu0 %v1118
    %v1120 = vand.u32 %v93, 4294901760
    %1121 = vmatpush.msra.mxu0 %v1120
    %v1122 = vand.u32 %v92, 4294901760
    %1123 = vmatpush.msra.mxu0 %v1122
    %v1124 = vand.u32 %v91, 4294901760
    %1125 = vmatpush.msra.mxu0 %v1124
    %v1126 = vand.u32 %v90, 4294901760
    %1127 = vmatpush.msra.mxu0 %v1126
    %v1128 = vand.u32 %v50, 4294901760
    %v1129 = vsub.f32 %v50, %v1128
    %v1130 = vand.u32 %v1129, 4294901760
    %1131 = vmatmul.f32.gmra.mxu0 %v1130
    %v1132 = vpop.f32.mrf.mxu0
    %v1133 = vadd.f32 %v1094, %v1132
    %1134 = vdwg.mxu0
    %v1135 = vand.u32 %v105, 4294901760
    %v1136 = vsub.f32 %v105, %v1135
    %v1137 = vand.u32 %v1136, 4294901760
    %1138 = vmatpush.msra.mxu0 %v1137
    %v1139 = vand.u32 %v104, 4294901760
    %v1140 = vsub.f32 %v104, %v1139
    %v1141 = vand.u32 %v1140, 4294901760
    %1142 = vmatpush.msra.mxu0 %v1141
    %v1143 = vand.u32 %v103, 4294901760
    %v1144 = vsub.f32 %v103, %v1143
    %v1145 = vand.u32 %v1144, 4294901760
    %1146 = vmatpush.msra.mxu0 %v1145
    %v1147 = vand.u32 %v102, 4294901760
    %v1148 = vsub.f32 %v102, %v1147
    %v1149 = vand.u32 %v1148, 4294901760
    %1150 = vmatpush.msra.mxu0 %v1149
    %v1151 = vand.u32 %v101, 4294901760
    %v1152 = vsub.f32 %v101, %v1151
    %v1153 = vand.u32 %v1152, 4294901760
    %1154 = vmatpush.msra.mxu0 %v1153
    %v1155 = vand.u32 %v100, 4294901760
    %v1156 = vsub.f32 %v100, %v1155
    %v1157 = vand.u32 %v1156, 4294901760
    %1158 = vmatpush.msra.mxu0 %v1157
    %v1159 = vand.u32 %v99, 4294901760
    %v1160 = vsub.f32 %v99, %v1159
    %v1161 = vand.u32 %v1160, 4294901760
    %1162 = vmatpush.msra.mxu0 %v1161
    %v1163 = vand.u32 %v98, 4294901760
    %v1164 = vsub.f32 %v98, %v1163
    %v1165 = vand.u32 %v1164, 4294901760
    %1166 = vmatpush.msra.mxu0 %v1165
    %v1167 = vand.u32 %v97, 4294901760
    %v1168 = vsub.f32 %v97, %v1167
    %v1169 = vand.u32 %v1168, 4294901760
    %1170 = vmatpush.msra.mxu0 %v1169
    %v1171 = vand.u32 %v96, 4294901760
    %v1172 = vsub.f32 %v96, %v1171
    %v1173 = vand.u32 %v1172, 4294901760
    %1174 = vmatpush.msra.mxu0 %v1173
    %v1175 = vand.u32 %v95, 4294901760
    %v1176 = vsub.f32 %v95, %v1175
    %v1177 = vand.u32 %v1176, 4294901760
    %1178 = vmatpush.msra.mxu0 %v1177
    %v1179 = vand.u32 %v94, 4294901760
    %v1180 = vsub.f32 %v94, %v1179
    %v1181 = vand.u32 %v1180, 4294901760
    %1182 = vmatpush.msra.mxu0 %v1181
    %v1183 = vand.u32 %v93, 4294901760
    %v1184 = vsub.f32 %v93, %v1183
    %v1185 = vand.u32 %v1184, 4294901760
    %1186 = vmatpush.msra.mxu0 %v1185
    %v1187 = vand.u32 %v92, 4294901760
    %v1188 = vsub.f32 %v92, %v1187
    %v1189 = vand.u32 %v1188, 4294901760
    %1190 = vmatpush.msra.mxu0 %v1189
    %v1191 = vand.u32 %v91, 4294901760
    %v1192 = vsub.f32 %v91, %v1191
    %v1193 = vand.u32 %v1192, 4294901760
    %1194 = vmatpush.msra.mxu0 %v1193
    %v1195 = vand.u32 %v90, 4294901760
    %v1196 = vsub.f32 %v90, %v1195
    %v1197 = vand.u32 %v1196, 4294901760
    %1198 = vmatpush.msra.mxu0 %v1197
    %v1199 = vand.u32 %v50, 4294901760
    %1200 = vmatmul.f32.gmra.mxu0 %v1199
    %v1201 = vpop.f32.mrf.mxu0
    %v1202 = vadd.f32 %v1133, %v1201
    %1203 = vdwg.mxu0
    %v1204 = vand.u32 %v105, 4294901760
    %1205 = vmatpush.msra.mxu0 %v1204
    %v1206 = vand.u32 %v104, 4294901760
    %1207 = vmatpush.msra.mxu0 %v1206
    %v1208 = vand.u32 %v103, 4294901760
    %1209 = vmatpush.msra.mxu0 %v1208
    %v1210 = vand.u32 %v102, 4294901760
    %1211 = vmatpush.msra.mxu0 %v1210
    %v1212 = vand.u32 %v101, 4294901760
    %1213 = vmatpush.msra.mxu0 %v1212
    %v1214 = vand.u32 %v100, 4294901760
    %1215 = vmatpush.msra.mxu0 %v1214
    %v1216 = vand.u32 %v99, 4294901760
    %1217 = vmatpush.msra.mxu0 %v1216
    %v1218 = vand.u32 %v98, 4294901760
    %1219 = vmatpush.msra.mxu0 %v1218
    %v1220 = vand.u32 %v97, 4294901760
    %1221 = vmatpush.msra.mxu0 %v1220
    %v1222 = vand.u32 %v96, 4294901760
    %1223 = vmatpush.msra.mxu0 %v1222
    %v1224 = vand.u32 %v95, 4294901760
    %1225 = vmatpush.msra.mxu0 %v1224
    %v1226 = vand.u32 %v94, 4294901760
    %1227 = vmatpush.msra.mxu0 %v1226
    %v1228 = vand.u32 %v93, 4294901760
    %1229 = vmatpush.msra.mxu0 %v1228
    %v1230 = vand.u32 %v92, 4294901760
    %1231 = vmatpush.msra.mxu0 %v1230
    %v1232 = vand.u32 %v91, 4294901760
    %1233 = vmatpush.msra.mxu0 %v1232
    %v1234 = vand.u32 %v90, 4294901760
    %1235 = vmatpush.msra.mxu0 %v1234
    %v1236 = vand.u32 %v50, 4294901760
    %1237 = vmatmul.f32.gmra.mxu0 %v1236
    %v1238 = vpop.f32.mrf.mxu0
    %v1239 = vadd.f32 %v1202, %v1238
    %1240 = vdwg.mxu0
    %v1241 = vand.u32 %v121, 4294901760
    %1242 = vmatpush.msra.mxu0 %v1241
    %v1243 = vand.u32 %v120, 4294901760
    %1244 = vmatpush.msra.mxu0 %v1243
    %v1245 = vand.u32 %v119, 4294901760
    %1246 = vmatpush.msra.mxu0 %v1245
    %v1247 = vand.u32 %v118, 4294901760
    %1248 = vmatpush.msra.mxu0 %v1247
    %v1249 = vand.u32 %v117, 4294901760
    %1250 = vmatpush.msra.mxu0 %v1249
    %v1251 = vand.u32 %v116, 4294901760
    %1252 = vmatpush.msra.mxu0 %v1251
    %v1253 = vand.u32 %v115, 4294901760
    %1254 = vmatpush.msra.mxu0 %v1253
    %v1255 = vand.u32 %v114, 4294901760
    %1256 = vmatpush.msra.mxu0 %v1255
    %v1257 = vand.u32 %v113, 4294901760
    %1258 = vmatpush.msra.mxu0 %v1257
    %v1259 = vand.u32 %v112, 4294901760
    %1260 = vmatpush.msra.mxu0 %v1259
    %v1261 = vand.u32 %v111, 4294901760
    %1262 = vmatpush.msra.mxu0 %v1261
    %v1263 = vand.u32 %v110, 4294901760
    %1264 = vmatpush.msra.mxu0 %v1263
    %v1265 = vand.u32 %v109, 4294901760
    %1266 = vmatpush.msra.mxu0 %v1265
    %v1267 = vand.u32 %v108, 4294901760
    %1268 = vmatpush.msra.mxu0 %v1267
    %v1269 = vand.u32 %v107, 4294901760
    %1270 = vmatpush.msra.mxu0 %v1269
    %v1271 = vand.u32 %v106, 4294901760
    %1272 = vmatpush.msra.mxu0 %v1271
    %v1273 = vand.u32 %v51, 4294901760
    %v1274 = vsub.f32 %v51, %v1273
    %v1275 = vand.u32 %v1274, 4294901760
    %v1276 = vsub.f32 %v1274, %v1275
    %v1277 = vand.u32 %v1276, 4294901760
    %1278 = vmatmul.f32.gmra.mxu0 %v1277
    %v1279 = vpop.f32.mrf.mxu0
    %v1280 = vadd.f32 %v1239, %v1279
    %1281 = vdwg.mxu0
    %v1282 = vand.u32 %v121, 4294901760
    %v1283 = vsub.f32 %v121, %v1282
    %v1284 = vand.u32 %v1283, 4294901760
    %v1285 = vsub.f32 %v1283, %v1284
    %v1286 = vand.u32 %v1285, 4294901760
    %1287 = vmatpush.msra.mxu0 %v1286
    %v1288 = vand.u32 %v120, 4294901760
    %v1289 = vsub.f32 %v120, %v1288
    %v1290 = vand.u32 %v1289, 4294901760
    %v1291 = vsub.f32 %v1289, %v1290
    %v1292 = vand.u32 %v1291, 4294901760
    %1293 = vmatpush.msra.mxu0 %v1292
    %v1294 = vand.u32 %v119, 4294901760
    %v1295 = vsub.f32 %v119, %v1294
    %v1296 = vand.u32 %v1295, 4294901760
    %v1297 = vsub.f32 %v1295, %v1296
    %v1298 = vand.u32 %v1297, 4294901760
    %1299 = vmatpush.msra.mxu0 %v1298
    %v1300 = vand.u32 %v118, 4294901760
    %v1301 = vsub.f32 %v118, %v1300
    %v1302 = vand.u32 %v1301, 4294901760
    %v1303 = vsub.f32 %v1301, %v1302
    %v1304 = vand.u32 %v1303, 4294901760
    %1305 = vmatpush.msra.mxu0 %v1304
    %v1306 = vand.u32 %v117, 4294901760
    %v1307 = vsub.f32 %v117, %v1306
    %v1308 = vand.u32 %v1307, 4294901760
    %v1309 = vsub.f32 %v1307, %v1308
    %v1310 = vand.u32 %v1309, 4294901760
    %1311 = vmatpush.msra.mxu0 %v1310
    %v1312 = vand.u32 %v116, 4294901760
    %v1313 = vsub.f32 %v116, %v1312
    %v1314 = vand.u32 %v1313, 4294901760
    %v1315 = vsub.f32 %v1313, %v1314
    %v1316 = vand.u32 %v1315, 4294901760
    %1317 = vmatpush.msra.mxu0 %v1316
    %v1318 = vand.u32 %v115, 4294901760
    %v1319 = vsub.f32 %v115, %v1318
    %v1320 = vand.u32 %v1319, 4294901760
    %v1321 = vsub.f32 %v1319, %v1320
    %v1322 = vand.u32 %v1321, 4294901760
    %1323 = vmatpush.msra.mxu0 %v1322
    %v1324 = vand.u32 %v114, 4294901760
    %v1325 = vsub.f32 %v114, %v1324
    %v1326 = vand.u32 %v1325, 4294901760
    %v1327 = vsub.f32 %v1325, %v1326
    %v1328 = vand.u32 %v1327, 4294901760
    %1329 = vmatpush.msra.mxu0 %v1328
    %v1330 = vand.u32 %v113, 4294901760
    %v1331 = vsub.f32 %v113, %v1330
    %v1332 = vand.u32 %v1331, 4294901760
    %v1333 = vsub.f32 %v1331, %v1332
    %v1334 = vand.u32 %v1333, 4294901760
    %1335 = vmatpush.msra.mxu0 %v1334
    %v1336 = vand.u32 %v112, 4294901760
    %v1337 = vsub.f32 %v112, %v1336
    %v1338 = vand.u32 %v1337, 4294901760
    %v1339 = vsub.f32 %v1337, %v1338
    %v1340 = vand.u32 %v1339, 4294901760
    %1341 = vmatpush.msra.mxu0 %v1340
    %v1342 = vand.u32 %v111, 4294901760
    %v1343 = vsub.f32 %v111, %v1342
    %v1344 = vand.u32 %v1343, 4294901760
    %v1345 = vsub.f32 %v1343, %v1344
    %v1346 = vand.u32 %v1345, 4294901760
    %1347 = vmatpush.msra.mxu0 %v1346
    %v1348 = vand.u32 %v110, 4294901760
    %v1349 = vsub.f32 %v110, %v1348
    %v1350 = vand.u32 %v1349, 4294901760
    %v1351 = vsub.f32 %v1349, %v1350
    %v1352 = vand.u32 %v1351, 4294901760
    %1353 = vmatpush.msra.mxu0 %v1352
    %v1354 = vand.u32 %v109, 4294901760
    %v1355 = vsub.f32 %v109, %v1354
    %v1356 = vand.u32 %v1355, 4294901760
    %v1357 = vsub.f32 %v1355, %v1356
    %v1358 = vand.u32 %v1357, 4294901760
    %1359 = vmatpush.msra.mxu0 %v1358
    %v1360 = vand.u32 %v108, 4294901760
    %v1361 = vsub.f32 %v108, %v1360
    %v1362 = vand.u32 %v1361, 4294901760
    %v1363 = vsub.f32 %v1361, %v1362
    %v1364 = vand.u32 %v1363, 4294901760
    %1365 = vmatpush.msra.mxu0 %v1364
    %v1366 = vand.u32 %v107, 4294901760
    %v1367 = vsub.f32 %v107, %v1366
    %v1368 = vand.u32 %v1367, 4294901760
    %v1369 = vsub.f32 %v1367, %v1368
    %v1370 = vand.u32 %v1369, 4294901760
    %1371 = vmatpush.msra.mxu0 %v1370
    %v1372 = vand.u32 %v106, 4294901760
    %v1373 = vsub.f32 %v106, %v1372
    %v1374 = vand.u32 %v1373, 4294901760
    %v1375 = vsub.f32 %v1373, %v1374
    %v1376 = vand.u32 %v1375, 4294901760
    %1377 = vmatpush.msra.mxu0 %v1376
    %v1378 = vand.u32 %v51, 4294901760
    %1379 = vmatmul.f32.gmra.mxu0 %v1378
    %v1380 = vpop.f32.mrf.mxu0
    %v1381 = vadd.f32 %v1280, %v1380
    %1382 = vdwg.mxu0
    %v1383 = vand.u32 %v121, 4294901760
    %v1384 = vsub.f32 %v121, %v1383
    %1385 = vmatpush.msra.mxu0 %v1384
    %v1386 = vand.u32 %v120, 4294901760
    %v1387 = vsub.f32 %v120, %v1386
    %1388 = vmatpush.msra.mxu0 %v1387
    %v1389 = vand.u32 %v119, 4294901760
    %v1390 = vsub.f32 %v119, %v1389
    %1391 = vmatpush.msra.mxu0 %v1390
    %v1392 = vand.u32 %v118, 4294901760
    %v1393 = vsub.f32 %v118, %v1392
    %1394 = vmatpush.msra.mxu0 %v1393
    %v1395 = vand.u32 %v117, 4294901760
    %v1396 = vsub.f32 %v117, %v1395
    %1397 = vmatpush.msra.mxu0 %v1396
    %v1398 = vand.u32 %v116, 4294901760
    %v1399 = vsub.f32 %v116, %v1398
    %1400 = vmatpush.msra.mxu0 %v1399
    %v1401 = vand.u32 %v115, 4294901760
    %v1402 = vsub.f32 %v115, %v1401
    %1403 = vmatpush.msra.mxu0 %v1402
    %v1404 = vand.u32 %v114, 4294901760
    %v1405 = vsub.f32 %v114, %v1404
    %1406 = vmatpush.msra.mxu0 %v1405
    %v1407 = vand.u32 %v113, 4294901760
    %v1408 = vsub.f32 %v113, %v1407
    %1409 = vmatpush.msra.mxu0 %v1408
    %v1410 = vand.u32 %v112, 4294901760
    %v1411 = vsub.f32 %v112, %v1410
    %1412 = vmatpush.msra.mxu0 %v1411
    %v1413 = vand.u32 %v111, 4294901760
    %v1414 = vsub.f32 %v111, %v1413
    %1415 = vmatpush.msra.mxu0 %v1414
    %v1416 = vand.u32 %v110, 4294901760
    %v1417 = vsub.f32 %v110, %v1416
    %1418 = vmatpush.msra.mxu0 %v1417
    %v1419 = vand.u32 %v109, 4294901760
    %v1420 = vsub.f32 %v109, %v1419
    %1421 = vmatpush.msra.mxu0 %v1420
    %v1422 = vand.u32 %v108, 4294901760
    %v1423 = vsub.f32 %v108, %v1422
    %1424 = vmatpush.msra.mxu0 %v1423
    %v1425 = vand.u32 %v107, 4294901760
    %v1426 = vsub.f32 %v107, %v1425
    %1427 = vmatpush.msra.mxu0 %v1426
    %v1428 = vand.u32 %v106, 4294901760
    %v1429 = vsub.f32 %v106, %v1428
    %1430 = vmatpush.msra.mxu0 %v1429
    %v1431 = vand.u32 %v51, 4294901760
    %v1432 = vsub.f32 %v51, %v1431
    %1433 = vmatmul.f32.gmra.mxu0 %v1432
    %v1434 = vpop.f32.mrf.mxu0
    %v1435 = vadd.f32 %v1381, %v1434
    %1436 = vdwg.mxu0
    %v1437 = vand.u32 %v121, 4294901760
    %1438 = vmatpush.msra.mxu0 %v1437
    %v1439 = vand.u32 %v120, 4294901760
    %1440 = vmatpush.msra.mxu0 %v1439
    %v1441 = vand.u32 %v119, 4294901760
    %1442 = vmatpush.msra.mxu0 %v1441
    %v1443 = vand.u32 %v118, 4294901760
    %1444 = vmatpush.msra.mxu0 %v1443
    %v1445 = vand.u32 %v117, 4294901760
    %1446 = vmatpush.msra.mxu0 %v1445
    %v1447 = vand.u32 %v116, 4294901760
    %1448 = vmatpush.msra.mxu0 %v1447
    %v1449 = vand.u32 %v115, 4294901760
    %1450 = vmatpush.msra.mxu0 %v1449
    %v1451 = vand.u32 %v114, 4294901760
    %1452 = vmatpush.msra.mxu0 %v1451
    %v1453 = vand.u32 %v113, 4294901760
    %1454 = vmatpush.msra.mxu0 %v1453
    %v1455 = vand.u32 %v112, 4294901760
    %1456 = vmatpush.msra.mxu0 %v1455
    %v1457 = vand.u32 %v111, 4294901760
    %1458 = vmatpush.msra.mxu0 %v1457
    %v1459 = vand.u32 %v110, 4294901760
    %1460 = vmatpush.msra.mxu0 %v1459
    %v1461 = vand.u32 %v109, 4294901760
    %1462 = vmatpush.msra.mxu0 %v1461
    %v1463 = vand.u32 %v108, 4294901760
    %1464 = vmatpush.msra.mxu0 %v1463
    %v1465 = vand.u32 %v107, 4294901760
    %1466 = vmatpush.msra.mxu0 %v1465
    %v1467 = vand.u32 %v106, 4294901760
    %1468 = vmatpush.msra.mxu0 %v1467
    %v1469 = vand.u32 %v51, 4294901760
    %v1470 = vsub.f32 %v51, %v1469
    %v1471 = vand.u32 %v1470, 4294901760
    %1472 = vmatmul.f32.gmra.mxu0 %v1471
    %v1473 = vpop.f32.mrf.mxu0
    %v1474 = vadd.f32 %v1435, %v1473
    %1475 = vdwg.mxu0
    %v1476 = vand.u32 %v121, 4294901760
    %v1477 = vsub.f32 %v121, %v1476
    %v1478 = vand.u32 %v1477, 4294901760
    %1479 = vmatpush.msra.mxu0 %v1478
    %v1480 = vand.u32 %v120, 4294901760
    %v1481 = vsub.f32 %v120, %v1480
    %v1482 = vand.u32 %v1481, 4294901760
    %1483 = vmatpush.msra.mxu0 %v1482
    %v1484 = vand.u32 %v119, 4294901760
    %v1485 = vsub.f32 %v119, %v1484
    %v1486 = vand.u32 %v1485, 4294901760
    %1487 = vmatpush.msra.mxu0 %v1486
    %v1488 = vand.u32 %v118, 4294901760
    %v1489 = vsub.f32 %v118, %v1488
    %v1490 = vand.u32 %v1489, 4294901760
    %1491 = vmatpush.msra.mxu0 %v1490
    %v1492 = vand.u32 %v117, 4294901760
    %v1493 = vsub.f32 %v117, %v1492
    %v1494 = vand.u32 %v1493, 4294901760
    %1495 = vmatpush.msra.mxu0 %v1494
    %v1496 = vand.u32 %v116, 4294901760
    %v1497 = vsub.f32 %v116, %v1496
    %v1498 = vand.u32 %v1497, 4294901760
    %1499 = vmatpush.msra.mxu0 %v1498
    %v1500 = vand.u32 %v115, 4294901760
    %v1501 = vsub.f32 %v115, %v1500
    %v1502 = vand.u32 %v1501, 4294901760
    %1503 = vmatpush.msra.mxu0 %v1502
    %v1504 = vand.u32 %v114, 4294901760
    %v1505 = vsub.f32 %v114, %v1504
    %v1506 = vand.u32 %v1505, 4294901760
    %1507 = vmatpush.msra.mxu0 %v1506
    %v1508 = vand.u32 %v113, 4294901760
    %v1509 = vsub.f32 %v113, %v1508
    %v1510 = vand.u32 %v1509, 4294901760
    %1511 = vmatpush.msra.mxu0 %v1510
    %v1512 = vand.u32 %v112, 4294901760
    %v1513 = vsub.f32 %v112, %v1512
    %v1514 = vand.u32 %v1513, 4294901760
    %1515 = vmatpush.msra.mxu0 %v1514
    %v1516 = vand.u32 %v111, 4294901760
    %v1517 = vsub.f32 %v111, %v1516
    %v1518 = vand.u32 %v1517, 4294901760
    %1519 = vmatpush.msra.mxu0 %v1518
    %v1520 = vand.u32 %v110, 4294901760
    %v1521 = vsub.f32 %v110, %v1520
    %v1522 = vand.u32 %v1521, 4294901760
    %1523 = vmatpush.msra.mxu0 %v1522
    %v1524 = vand.u32 %v109, 4294901760
    %v1525 = vsub.f32 %v109, %v1524
    %v1526 = vand.u32 %v1525, 4294901760
    %1527 = vmatpush.msra.mxu0 %v1526
    %v1528 = vand.u32 %v108, 4294901760
    %v1529 = vsub.f32 %v108, %v1528
    %v1530 = vand.u32 %v1529, 4294901760
    %1531 = vmatpush.msra.mxu0 %v1530
    %v1532 = vand.u32 %v107, 4294901760
    %v1533 = vsub.f32 %v107, %v1532
    %v1534 = vand.u32 %v1533, 4294901760
    %1535 = vmatpush.msra.mxu0 %v1534
    %v1536 = vand.u32 %v106, 4294901760
    %v1537 = vsub.f32 %v106, %v1536
    %v1538 = vand.u32 %v1537, 4294901760
    %1539 = vmatpush.msra.mxu0 %v1538
    %v1540 = vand.u32 %v51, 4294901760
    %1541 = vmatmul.f32.gmra.mxu0 %v1540
    %v1542 = vpop.f32.mrf.mxu0
    %v1543 = vadd.f32 %v1474, %v1542
    %1544 = vdwg.mxu0
    %v1545 = vand.u32 %v121, 4294901760
    %1546 = vmatpush.msra.mxu0 %v1545
    %v1547 = vand.u32 %v120, 4294901760
    %1548 = vmatpush.msra.mxu0 %v1547
    %v1549 = vand.u32 %v119, 4294901760
    %1550 = vmatpush.msra.mxu0 %v1549
    %v1551 = vand.u32 %v118, 4294901760
    %1552 = vmatpush.msra.mxu0 %v1551
    %v1553 = vand.u32 %v117, 4294901760
    %1554 = vmatpush.msra.mxu0 %v1553
    %v1555 = vand.u32 %v116, 4294901760
    %1556 = vmatpush.msra.mxu0 %v1555
    %v1557 = vand.u32 %v115, 4294901760
    %1558 = vmatpush.msra.mxu0 %v1557
    %v1559 = vand.u32 %v114, 4294901760
    %1560 = vmatpush.msra.mxu0 %v1559
    %v1561 = vand.u32 %v113, 4294901760
    %1562 = vmatpush.msra.mxu0 %v1561
    %v1563 = vand.u32 %v112, 4294901760
    %1564 = vmatpush.msra.mxu0 %v1563
    %v1565 = vand.u32 %v111, 4294901760
    %1566 = vmatpush.msra.mxu0 %v1565
    %v1567 = vand.u32 %v110, 4294901760
    %1568 = vmatpush.msra.mxu0 %v1567
    %v1569 = vand.u32 %v109, 4294901760
    %1570 = vmatpush.msra.mxu0 %v1569
    %v1571 = vand.u32 %v108, 4294901760
    %1572 = vmatpush.msra.mxu0 %v1571
    %v1573 = vand.u32 %v107, 4294901760
    %1574 = vmatpush.msra.mxu0 %v1573
    %v1575 = vand.u32 %v106, 4294901760
    %1576 = vmatpush.msra.mxu0 %v1575
    %v1577 = vand.u32 %v51, 4294901760
    %1578 = vmatmul.f32.gmra.mxu0 %v1577
    %v1579 = vpop.f32.mrf.mxu0
    %v1580 = vadd.f32 %v1543, %v1579
    %1581 = vdwg.mxu0
    %v1582 = vand.u32 %v137, 4294901760
    %1583 = vmatpush.msra.mxu0 %v1582
    %v1584 = vand.u32 %v136, 4294901760
    %1585 = vmatpush.msra.mxu0 %v1584
    %v1586 = vand.u32 %v135, 4294901760
    %1587 = vmatpush.msra.mxu0 %v1586
    %v1588 = vand.u32 %v134, 4294901760
    %1589 = vmatpush.msra.mxu0 %v1588
    %v1590 = vand.u32 %v133, 4294901760
    %1591 = vmatpush.msra.mxu0 %v1590
    %v1592 = vand.u32 %v132, 4294901760
    %1593 = vmatpush.msra.mxu0 %v1592
    %v1594 = vand.u32 %v131, 4294901760
    %1595 = vmatpush.msra.mxu0 %v1594
    %v1596 = vand.u32 %v130, 4294901760
    %1597 = vmatpush.msra.mxu0 %v1596
    %v1598 = vand.u32 %v129, 4294901760
    %1599 = vmatpush.msra.mxu0 %v1598
    %v1600 = vand.u32 %v128, 4294901760
    %1601 = vmatpush.msra.mxu0 %v1600
    %v1602 = vand.u32 %v127, 4294901760
    %1603 = vmatpush.msra.mxu0 %v1602
    %v1604 = vand.u32 %v126, 4294901760
    %1605 = vmatpush.msra.mxu0 %v1604
    %v1606 = vand.u32 %v125, 4294901760
    %1607 = vmatpush.msra.mxu0 %v1606
    %v1608 = vand.u32 %v124, 4294901760
    %1609 = vmatpush.msra.mxu0 %v1608
    %v1610 = vand.u32 %v123, 4294901760
    %1611 = vmatpush.msra.mxu0 %v1610
    %v1612 = vand.u32 %v122, 4294901760
    %1613 = vmatpush.msra.mxu0 %v1612
    %v1614 = vand.u32 %v52, 4294901760
    %v1615 = vsub.f32 %v52, %v1614
    %v1616 = vand.u32 %v1615, 4294901760
    %v1617 = vsub.f32 %v1615, %v1616
    %v1618 = vand.u32 %v1617, 4294901760
    %1619 = vmatmul.f32.gmra.mxu0 %v1618
    %v1620 = vpop.f32.mrf.mxu0
    %v1621 = vadd.f32 %v1580, %v1620
    %1622 = vdwg.mxu0
    %v1623 = vand.u32 %v137, 4294901760
    %v1624 = vsub.f32 %v137, %v1623
    %v1625 = vand.u32 %v1624, 4294901760
    %v1626 = vsub.f32 %v1624, %v1625
    %v1627 = vand.u32 %v1626, 4294901760
    %1628 = vmatpush.msra.mxu0 %v1627
    %v1629 = vand.u32 %v136, 4294901760
    %v1630 = vsub.f32 %v136, %v1629
    %v1631 = vand.u32 %v1630, 4294901760
    %v1632 = vsub.f32 %v1630, %v1631
    %v1633 = vand.u32 %v1632, 4294901760
    %1634 = vmatpush.msra.mxu0 %v1633
    %v1635 = vand.u32 %v135, 4294901760
    %v1636 = vsub.f32 %v135, %v1635
    %v1637 = vand.u32 %v1636, 4294901760
    %v1638 = vsub.f32 %v1636, %v1637
    %v1639 = vand.u32 %v1638, 4294901760
    %1640 = vmatpush.msra.mxu0 %v1639
    %v1641 = vand.u32 %v134, 4294901760
    %v1642 = vsub.f32 %v134, %v1641
    %v1643 = vand.u32 %v1642, 4294901760
    %v1644 = vsub.f32 %v1642, %v1643
    %v1645 = vand.u32 %v1644, 4294901760
    %1646 = vmatpush.msra.mxu0 %v1645
    %v1647 = vand.u32 %v133, 4294901760
    %v1648 = vsub.f32 %v133, %v1647
    %v1649 = vand.u32 %v1648, 4294901760
    %v1650 = vsub.f32 %v1648, %v1649
    %v1651 = vand.u32 %v1650, 4294901760
    %1652 = vmatpush.msra.mxu0 %v1651
    %v1653 = vand.u32 %v132, 4294901760
    %v1654 = vsub.f32 %v132, %v1653
    %v1655 = vand.u32 %v1654, 4294901760
    %v1656 = vsub.f32 %v1654, %v1655
    %v1657 = vand.u32 %v1656, 4294901760
    %1658 = vmatpush.msra.mxu0 %v1657
    %v1659 = vand.u32 %v131, 4294901760
    %v1660 = vsub.f32 %v131, %v1659
    %v1661 = vand.u32 %v1660, 4294901760
    %v1662 = vsub.f32 %v1660, %v1661
    %v1663 = vand.u32 %v1662, 4294901760
    %1664 = vmatpush.msra.mxu0 %v1663
    %v1665 = vand.u32 %v130, 4294901760
    %v1666 = vsub.f32 %v130, %v1665
    %v1667 = vand.u32 %v1666, 4294901760
    %v1668 = vsub.f32 %v1666, %v1667
    %v1669 = vand.u32 %v1668, 4294901760
    %1670 = vmatpush.msra.mxu0 %v1669
    %v1671 = vand.u32 %v129, 4294901760
    %v1672 = vsub.f32 %v129, %v1671
    %v1673 = vand.u32 %v1672, 4294901760
    %v1674 = vsub.f32 %v1672, %v1673
    %v1675 = vand.u32 %v1674, 4294901760
    %1676 = vmatpush.msra.mxu0 %v1675
    %v1677 = vand.u32 %v128, 4294901760
    %v1678 = vsub.f32 %v128, %v1677
    %v1679 = vand.u32 %v1678, 4294901760
    %v1680 = vsub.f32 %v1678, %v1679
    %v1681 = vand.u32 %v1680, 4294901760
    %1682 = vmatpush.msra.mxu0 %v1681
    %v1683 = vand.u32 %v127, 4294901760
    %v1684 = vsub.f32 %v127, %v1683
    %v1685 = vand.u32 %v1684, 4294901760
    %v1686 = vsub.f32 %v1684, %v1685
    %v1687 = vand.u32 %v1686, 4294901760
    %1688 = vmatpush.msra.mxu0 %v1687
    %v1689 = vand.u32 %v126, 4294901760
    %v1690 = vsub.f32 %v126, %v1689
    %v1691 = vand.u32 %v1690, 4294901760
    %v1692 = vsub.f32 %v1690, %v1691
    %v1693 = vand.u32 %v1692, 4294901760
    %1694 = vmatpush.msra.mxu0 %v1693
    %v1695 = vand.u32 %v125, 4294901760
    %v1696 = vsub.f32 %v125, %v1695
    %v1697 = vand.u32 %v1696, 4294901760
    %v1698 = vsub.f32 %v1696, %v1697
    %v1699 = vand.u32 %v1698, 4294901760
    %1700 = vmatpush.msra.mxu0 %v1699
    %v1701 = vand.u32 %v124, 4294901760
    %v1702 = vsub.f32 %v124, %v1701
    %v1703 = vand.u32 %v1702, 4294901760
    %v1704 = vsub.f32 %v1702, %v1703
    %v1705 = vand.u32 %v1704, 4294901760
    %1706 = vmatpush.msra.mxu0 %v1705
    %v1707 = vand.u32 %v123, 4294901760
    %v1708 = vsub.f32 %v123, %v1707
    %v1709 = vand.u32 %v1708, 4294901760
    %v1710 = vsub.f32 %v1708, %v1709
    %v1711 = vand.u32 %v1710, 4294901760
    %1712 = vmatpush.msra.mxu0 %v1711
    %v1713 = vand.u32 %v122, 4294901760
    %v1714 = vsub.f32 %v122, %v1713
    %v1715 = vand.u32 %v1714, 4294901760
    %v1716 = vsub.f32 %v1714, %v1715
    %v1717 = vand.u32 %v1716, 4294901760
    %1718 = vmatpush.msra.mxu0 %v1717
    %v1719 = vand.u32 %v52, 4294901760
    %1720 = vmatmul.f32.gmra.mxu0 %v1719
    %v1721 = vpop.f32.mrf.mxu0
    %v1722 = vadd.f32 %v1621, %v1721
    %1723 = vdwg.mxu0
    %v1724 = vand.u32 %v137, 4294901760
    %v1725 = vsub.f32 %v137, %v1724
    %1726 = vmatpush.msra.mxu0 %v1725
    %v1727 = vand.u32 %v136, 4294901760
    %v1728 = vsub.f32 %v136, %v1727
    %1729 = vmatpush.msra.mxu0 %v1728
    %v1730 = vand.u32 %v135, 4294901760
    %v1731 = vsub.f32 %v135, %v1730
    %1732 = vmatpush.msra.mxu0 %v1731
    %v1733 = vand.u32 %v134, 4294901760
    %v1734 = vsub.f32 %v134, %v1733
    %1735 = vmatpush.msra.mxu0 %v1734
    %v1736 = vand.u32 %v133, 4294901760
    %v1737 = vsub.f32 %v133, %v1736
    %1738 = vmatpush.msra.mxu0 %v1737
    %v1739 = vand.u32 %v132, 4294901760
    %v1740 = vsub.f32 %v132, %v1739
    %1741 = vmatpush.msra.mxu0 %v1740
    %v1742 = vand.u32 %v131, 4294901760
    %v1743 = vsub.f32 %v131, %v1742
    %1744 = vmatpush.msra.mxu0 %v1743
    %v1745 = vand.u32 %v130, 4294901760
    %v1746 = vsub.f32 %v130, %v1745
    %1747 = vmatpush.msra.mxu0 %v1746
    %v1748 = vand.u32 %v129, 4294901760
    %v1749 = vsub.f32 %v129, %v1748
    %1750 = vmatpush.msra.mxu0 %v1749
    %v1751 = vand.u32 %v128, 4294901760
    %v1752 = vsub.f32 %v128, %v1751
    %1753 = vmatpush.msra.mxu0 %v1752
    %v1754 = vand.u32 %v127, 4294901760
    %v1755 = vsub.f32 %v127, %v1754
    %1756 = vmatpush.msra.mxu0 %v1755
    %v1757 = vand.u32 %v126, 4294901760
    %v1758 = vsub.f32 %v126, %v1757
    %1759 = vmatpush.msra.mxu0 %v1758
    %v1760 = vand.u32 %v125, 4294901760
    %v1761 = vsub.f32 %v125, %v1760
    %1762 = vmatpush.msra.mxu0 %v1761
    %v1763 = vand.u32 %v124, 4294901760
    %v1764 = vsub.f32 %v124, %v1763
    %1765 = vmatpush.msra.mxu0 %v1764
    %v1766 = vand.u32 %v123, 4294901760
    %v1767 = vsub.f32 %v123, %v1766
    %1768 = vmatpush.msra.mxu0 %v1767
    %v1769 = vand.u32 %v122, 4294901760
    %v1770 = vsub.f32 %v122, %v1769
    %1771 = vmatpush.msra.mxu0 %v1770
    %v1772 = vand.u32 %v52, 4294901760
    %v1773 = vsub.f32 %v52, %v1772
    %1774 = vmatmul.f32.gmra.mxu0 %v1773
    %v1775 = vpop.f32.mrf.mxu0
    %v1776 = vadd.f32 %v1722, %v1775
    %1777 = vdwg.mxu0
    %v1778 = vand.u32 %v137, 4294901760
    %1779 = vmatpush.msra.mxu0 %v1778
    %v1780 = vand.u32 %v136, 4294901760
    %1781 = vmatpush.msra.mxu0 %v1780
    %v1782 = vand.u32 %v135, 4294901760
    %1783 = vmatpush.msra.mxu0 %v1782
    %v1784 = vand.u32 %v134, 4294901760
    %1785 = vmatpush.msra.mxu0 %v1784
    %v1786 = vand.u32 %v133, 4294901760
    %1787 = vmatpush.msra.mxu0 %v1786
    %v1788 = vand.u32 %v132, 4294901760
    %1789 = vmatpush.msra.mxu0 %v1788
    %v1790 = vand.u32 %v131, 4294901760
    %1791 = vmatpush.msra.mxu0 %v1790
    %v1792 = vand.u32 %v130, 4294901760
    %1793 = vmatpush.msra.mxu0 %v1792
    %v1794 = vand.u32 %v129, 4294901760
    %1795 = vmatpush.msra.mxu0 %v1794
    %v1796 = vand.u32 %v128, 4294901760
    %1797 = vmatpush.msra.mxu0 %v1796
    %v1798 = vand.u32 %v127, 4294901760
    %1799 = vmatpush.msra.mxu0 %v1798
    %v1800 = vand.u32 %v126, 4294901760
    %1801 = vmatpush.msra.mxu0 %v1800
    %v1802 = vand.u32 %v125, 4294901760
    %1803 = vmatpush.msra.mxu0 %v1802
    %v1804 = vand.u32 %v124, 4294901760
    %1805 = vmatpush.msra.mxu0 %v1804
    %v1806 = vand.u32 %v123, 4294901760
    %1807 = vmatpush.msra.mxu0 %v1806
    %v1808 = vand.u32 %v122, 4294901760
    %1809 = vmatpush.msra.mxu0 %v1808
    %v1810 = vand.u32 %v52, 4294901760
    %v1811 = vsub.f32 %v52, %v1810
    %v1812 = vand.u32 %v1811, 4294901760
    %1813 = vmatmul.f32.gmra.mxu0 %v1812
    %v1814 = vpop.f32.mrf.mxu0
    %v1815 = vadd.f32 %v1776, %v1814
    %1816 = vdwg.mxu0
    %v1817 = vand.u32 %v137, 4294901760
    %v1818 = vsub.f32 %v137, %v1817
    %v1819 = vand.u32 %v1818, 4294901760
    %1820 = vmatpush.msra.mxu0 %v1819
    %v1821 = vand.u32 %v136, 4294901760
    %v1822 = vsub.f32 %v136, %v1821
    %v1823 = vand.u32 %v1822, 4294901760
    %1824 = vmatpush.msra.mxu0 %v1823
    %v1825 = vand.u32 %v135, 4294901760
    %v1826 = vsub.f32 %v135, %v1825
    %v1827 = vand.u32 %v1826, 4294901760
    %1828 = vmatpush.msra.mxu0 %v1827
    %v1829 = vand.u32 %v134, 4294901760
    %v1830 = vsub.f32 %v134, %v1829
    %v1831 = vand.u32 %v1830, 4294901760
    %1832 = vmatpush.msra.mxu0 %v1831
    %v1833 = vand.u32 %v133, 4294901760
    %v1834 = vsub.f32 %v133, %v1833
    %v1835 = vand.u32 %v1834, 4294901760
    %1836 = vmatpush.msra.mxu0 %v1835
    %v1837 = vand.u32 %v132, 4294901760
    %v1838 = vsub.f32 %v132, %v1837
    %v1839 = vand.u32 %v1838, 4294901760
    %1840 = vmatpush.msra.mxu0 %v1839
    %v1841 = vand.u32 %v131, 4294901760
    %v1842 = vsub.f32 %v131, %v1841
    %v1843 = vand.u32 %v1842, 4294901760
    %1844 = vmatpush.msra.mxu0 %v1843
    %v1845 = vand.u32 %v130, 4294901760
    %v1846 = vsub.f32 %v130, %v1845
    %v1847 = vand.u32 %v1846, 4294901760
    %1848 = vmatpush.msra.mxu0 %v1847
    %v1849 = vand.u32 %v129, 4294901760
    %v1850 = vsub.f32 %v129, %v1849
    %v1851 = vand.u32 %v1850, 4294901760
    %1852 = vmatpush.msra.mxu0 %v1851
    %v1853 = vand.u32 %v128, 4294901760
    %v1854 = vsub.f32 %v128, %v1853
    %v1855 = vand.u32 %v1854, 4294901760
    %1856 = vmatpush.msra.mxu0 %v1855
    %v1857 = vand.u32 %v127, 4294901760
    %v1858 = vsub.f32 %v127, %v1857
    %v1859 = vand.u32 %v1858, 4294901760
    %1860 = vmatpush.msra.mxu0 %v1859
    %v1861 = vand.u32 %v126, 4294901760
    %v1862 = vsub.f32 %v126, %v1861
    %v1863 = vand.u32 %v1862, 4294901760
    %1864 = vmatpush.msra.mxu0 %v1863
    %v1865 = vand.u32 %v125, 4294901760
    %v1866 = vsub.f32 %v125, %v1865
    %v1867 = vand.u32 %v1866, 4294901760
    %1868 = vmatpush.msra.mxu0 %v1867
    %v1869 = vand.u32 %v124, 4294901760
    %v1870 = vsub.f32 %v124, %v1869
    %v1871 = vand.u32 %v1870, 4294901760
    %1872 = vmatpush.msra.mxu0 %v1871
    %v1873 = vand.u32 %v123, 4294901760
    %v1874 = vsub.f32 %v123, %v1873
    %v1875 = vand.u32 %v1874, 4294901760
    %1876 = vmatpush.msra.mxu0 %v1875
    %v1877 = vand.u32 %v122, 4294901760
    %v1878 = vsub.f32 %v122, %v1877
    %v1879 = vand.u32 %v1878, 4294901760
    %1880 = vmatpush.msra.mxu0 %v1879
    %v1881 = vand.u32 %v52, 4294901760
    %1882 = vmatmul.f32.gmra.mxu0 %v1881
    %v1883 = vpop.f32.mrf.mxu0
    %v1884 = vadd.f32 %v1815, %v1883
    %1885 = vdwg.mxu0
    %v1886 = vand.u32 %v137, 4294901760
    %1887 = vmatpush.msra.mxu0 %v1886
    %v1888 = vand.u32 %v136, 4294901760
    %1889 = vmatpush.msra.mxu0 %v1888
    %v1890 = vand.u32 %v135, 4294901760
    %1891 = vmatpush.msra.mxu0 %v1890
    %v1892 = vand.u32 %v134, 4294901760
    %1893 = vmatpush.msra.mxu0 %v1892
    %v1894 = vand.u32 %v133, 4294901760
    %1895 = vmatpush.msra.mxu0 %v1894
    %v1896 = vand.u32 %v132, 4294901760
    %1897 = vmatpush.msra.mxu0 %v1896
    %v1898 = vand.u32 %v131, 4294901760
    %1899 = vmatpush.msra.mxu0 %v1898
    %v1900 = vand.u32 %v130, 4294901760
    %1901 = vmatpush.msra.mxu0 %v1900
    %v1902 = vand.u32 %v129, 4294901760
    %1903 = vmatpush.msra.mxu0 %v1902
    %v1904 = vand.u32 %v128, 4294901760
    %1905 = vmatpush.msra.mxu0 %v1904
    %v1906 = vand.u32 %v127, 4294901760
    %1907 = vmatpush.msra.mxu0 %v1906
    %v1908 = vand.u32 %v126, 4294901760
    %1909 = vmatpush.msra.mxu0 %v1908
    %v1910 = vand.u32 %v125, 4294901760
    %1911 = vmatpush.msra.mxu0 %v1910
    %v1912 = vand.u32 %v124, 4294901760
    %1913 = vmatpush.msra.mxu0 %v1912
    %v1914 = vand.u32 %v123, 4294901760
    %1915 = vmatpush.msra.mxu0 %v1914
    %v1916 = vand.u32 %v122, 4294901760
    %1917 = vmatpush.msra.mxu0 %v1916
    %v1918 = vand.u32 %v52, 4294901760
    %1919 = vmatmul.f32.gmra.mxu0 %v1918
    %v1920 = vpop.f32.mrf.mxu0
    %v1921 = vadd.f32 %v1884, %v1920
    %1922 = vdwg.mxu0
    %v1923 = vand.u32 %v153, 4294901760
    %1924 = vmatpush.msra.mxu0 %v1923
    %v1925 = vand.u32 %v152, 4294901760
    %1926 = vmatpush.msra.mxu0 %v1925
    %v1927 = vand.u32 %v151, 4294901760
    %1928 = vmatpush.msra.mxu0 %v1927
    %v1929 = vand.u32 %v150, 4294901760
    %1930 = vmatpush.msra.mxu0 %v1929
    %v1931 = vand.u32 %v149, 4294901760
    %1932 = vmatpush.msra.mxu0 %v1931
    %v1933 = vand.u32 %v148, 4294901760
    %1934 = vmatpush.msra.mxu0 %v1933
    %v1935 = vand.u32 %v147, 4294901760
    %1936 = vmatpush.msra.mxu0 %v1935
    %v1937 = vand.u32 %v146, 4294901760
    %1938 = vmatpush.msra.mxu0 %v1937
    %v1939 = vand.u32 %v145, 4294901760
    %1940 = vmatpush.msra.mxu0 %v1939
    %v1941 = vand.u32 %v144, 4294901760
    %1942 = vmatpush.msra.mxu0 %v1941
    %v1943 = vand.u32 %v143, 4294901760
    %1944 = vmatpush.msra.mxu0 %v1943
    %v1945 = vand.u32 %v142, 4294901760
    %1946 = vmatpush.msra.mxu0 %v1945
    %v1947 = vand.u32 %v141, 4294901760
    %1948 = vmatpush.msra.mxu0 %v1947
    %v1949 = vand.u32 %v140, 4294901760
    %1950 = vmatpush.msra.mxu0 %v1949
    %v1951 = vand.u32 %v139, 4294901760
    %1952 = vmatpush.msra.mxu0 %v1951
    %v1953 = vand.u32 %v138, 4294901760
    %1954 = vmatpush.msra.mxu0 %v1953
    %v1955 = vand.u32 %v53, 4294901760
    %v1956 = vsub.f32 %v53, %v1955
    %v1957 = vand.u32 %v1956, 4294901760
    %v1958 = vsub.f32 %v1956, %v1957
    %v1959 = vand.u32 %v1958, 4294901760
    %1960 = vmatmul.f32.gmra.mxu0 %v1959
    %v1961 = vpop.f32.mrf.mxu0
    %v1962 = vadd.f32 %v1921, %v1961
    %1963 = vdwg.mxu0
    %v1964 = vand.u32 %v153, 4294901760
    %v1965 = vsub.f32 %v153, %v1964
    %v1966 = vand.u32 %v1965, 4294901760
    %v1967 = vsub.f32 %v1965, %v1966
    %v1968 = vand.u32 %v1967, 4294901760
    %1969 = vmatpush.msra.mxu0 %v1968
    %v1970 = vand.u32 %v152, 4294901760
    %v1971 = vsub.f32 %v152, %v1970
    %v1972 = vand.u32 %v1971, 4294901760
    %v1973 = vsub.f32 %v1971, %v1972
    %v1974 = vand.u32 %v1973, 4294901760
    %1975 = vmatpush.msra.mxu0 %v1974
    %v1976 = vand.u32 %v151, 4294901760
    %v1977 = vsub.f32 %v151, %v1976
    %v1978 = vand.u32 %v1977, 4294901760
    %v1979 = vsub.f32 %v1977, %v1978
    %v1980 = vand.u32 %v1979, 4294901760
    %1981 = vmatpush.msra.mxu0 %v1980
    %v1982 = vand.u32 %v150, 4294901760
    %v1983 = vsub.f32 %v150, %v1982
    %v1984 = vand.u32 %v1983, 4294901760
    %v1985 = vsub.f32 %v1983, %v1984
    %v1986 = vand.u32 %v1985, 4294901760
    %1987 = vmatpush.msra.mxu0 %v1986
    %v1988 = vand.u32 %v149, 4294901760
    %v1989 = vsub.f32 %v149, %v1988
    %v1990 = vand.u32 %v1989, 4294901760
    %v1991 = vsub.f32 %v1989, %v1990
    %v1992 = vand.u32 %v1991, 4294901760
    %1993 = vmatpush.msra.mxu0 %v1992
    %v1994 = vand.u32 %v148, 4294901760
    %v1995 = vsub.f32 %v148, %v1994
    %v1996 = vand.u32 %v1995, 4294901760
    %v1997 = vsub.f32 %v1995, %v1996
    %v1998 = vand.u32 %v1997, 4294901760
    %1999 = vmatpush.msra.mxu0 %v1998
    %v2000 = vand.u32 %v147, 4294901760
    %v2001 = vsub.f32 %v147, %v2000
    %v2002 = vand.u32 %v2001, 4294901760
    %v2003 = vsub.f32 %v2001, %v2002
    %v2004 = vand.u32 %v2003, 4294901760
    %2005 = vmatpush.msra.mxu0 %v2004
    %v2006 = vand.u32 %v146, 4294901760
    %v2007 = vsub.f32 %v146, %v2006
    %v2008 = vand.u32 %v2007, 4294901760
    %v2009 = vsub.f32 %v2007, %v2008
    %v2010 = vand.u32 %v2009, 4294901760
    %2011 = vmatpush.msra.mxu0 %v2010
    %v2012 = vand.u32 %v145, 4294901760
    %v2013 = vsub.f32 %v145, %v2012
    %v2014 = vand.u32 %v2013, 4294901760
    %v2015 = vsub.f32 %v2013, %v2014
    %v2016 = vand.u32 %v2015, 4294901760
    %2017 = vmatpush.msra.mxu0 %v2016
    %v2018 = vand.u32 %v144, 4294901760
    %v2019 = vsub.f32 %v144, %v2018
    %v2020 = vand.u32 %v2019, 4294901760
    %v2021 = vsub.f32 %v2019, %v2020
    %v2022 = vand.u32 %v2021, 4294901760
    %2023 = vmatpush.msra.mxu0 %v2022
    %v2024 = vand.u32 %v143, 4294901760
    %v2025 = vsub.f32 %v143, %v2024
    %v2026 = vand.u32 %v2025, 4294901760
    %v2027 = vsub.f32 %v2025, %v2026
    %v2028 = vand.u32 %v2027, 4294901760
    %2029 = vmatpush.msra.mxu0 %v2028
    %v2030 = vand.u32 %v142, 4294901760
    %v2031 = vsub.f32 %v142, %v2030
    %v2032 = vand.u32 %v2031, 4294901760
    %v2033 = vsub.f32 %v2031, %v2032
    %v2034 = vand.u32 %v2033, 4294901760
    %2035 = vmatpush.msra.mxu0 %v2034
    %v2036 = vand.u32 %v141, 4294901760
    %v2037 = vsub.f32 %v141, %v2036
    %v2038 = vand.u32 %v2037, 4294901760
    %v2039 = vsub.f32 %v2037, %v2038
    %v2040 = vand.u32 %v2039, 4294901760
    %2041 = vmatpush.msra.mxu0 %v2040
    %v2042 = vand.u32 %v140, 4294901760
    %v2043 = vsub.f32 %v140, %v2042
    %v2044 = vand.u32 %v2043, 4294901760
    %v2045 = vsub.f32 %v2043, %v2044
    %v2046 = vand.u32 %v2045, 4294901760
    %2047 = vmatpush.msra.mxu0 %v2046
    %v2048 = vand.u32 %v139, 4294901760
    %v2049 = vsub.f32 %v139, %v2048
    %v2050 = vand.u32 %v2049, 4294901760
    %v2051 = vsub.f32 %v2049, %v2050
    %v2052 = vand.u32 %v2051, 4294901760
    %2053 = vmatpush.msra.mxu0 %v2052
    %v2054 = vand.u32 %v138, 4294901760
    %v2055 = vsub.f32 %v138, %v2054
    %v2056 = vand.u32 %v2055, 4294901760
    %v2057 = vsub.f32 %v2055, %v2056
    %v2058 = vand.u32 %v2057, 4294901760
    %2059 = vmatpush.msra.mxu0 %v2058
    %v2060 = vand.u32 %v53, 4294901760
    %2061 = vmatmul.f32.gmra.mxu0 %v2060
    %v2062 = vpop.f32.mrf.mxu0
    %v2063 = vadd.f32 %v1962, %v2062
    %2064 = vdwg.mxu0
    %v2065 = vand.u32 %v153, 4294901760
    %v2066 = vsub.f32 %v153, %v2065
    %2067 = vmatpush.msra.mxu0 %v2066
    %v2068 = vand.u32 %v152, 4294901760
    %v2069 = vsub.f32 %v152, %v2068
    %2070 = vmatpush.msra.mxu0 %v2069
    %v2071 = vand.u32 %v151, 4294901760
    %v2072 = vsub.f32 %v151, %v2071
    %2073 = vmatpush.msra.mxu0 %v2072
    %v2074 = vand.u32 %v150, 4294901760
    %v2075 = vsub.f32 %v150, %v2074
    %2076 = vmatpush.msra.mxu0 %v2075
    %v2077 = vand.u32 %v149, 4294901760
    %v2078 = vsub.f32 %v149, %v2077
    %2079 = vmatpush.msra.mxu0 %v2078
    %v2080 = vand.u32 %v148, 4294901760
    %v2081 = vsub.f32 %v148, %v2080
    %2082 = vmatpush.msra.mxu0 %v2081
    %v2083 = vand.u32 %v147, 4294901760
    %v2084 = vsub.f32 %v147, %v2083
    %2085 = vmatpush.msra.mxu0 %v2084
    %v2086 = vand.u32 %v146, 4294901760
    %v2087 = vsub.f32 %v146, %v2086
    %2088 = vmatpush.msra.mxu0 %v2087
    %v2089 = vand.u32 %v145, 4294901760
    %v2090 = vsub.f32 %v145, %v2089
    %2091 = vmatpush.msra.mxu0 %v2090
    %v2092 = vand.u32 %v144, 4294901760
    %v2093 = vsub.f32 %v144, %v2092
    %2094 = vmatpush.msra.mxu0 %v2093
    %v2095 = vand.u32 %v143, 4294901760
    %v2096 = vsub.f32 %v143, %v2095
    %2097 = vmatpush.msra.mxu0 %v2096
    %v2098 = vand.u32 %v142, 4294901760
    %v2099 = vsub.f32 %v142, %v2098
    %2100 = vmatpush.msra.mxu0 %v2099
    %v2101 = vand.u32 %v141, 4294901760
    %v2102 = vsub.f32 %v141, %v2101
    %2103 = vmatpush.msra.mxu0 %v2102
    %v2104 = vand.u32 %v140, 4294901760
    %v2105 = vsub.f32 %v140, %v2104
    %2106 = vmatpush.msra.mxu0 %v2105
    %v2107 = vand.u32 %v139, 4294901760
    %v2108 = vsub.f32 %v139, %v2107
    %2109 = vmatpush.msra.mxu0 %v2108
    %v2110 = vand.u32 %v138, 4294901760
    %v2111 = vsub.f32 %v138, %v2110
    %2112 = vmatpush.msra.mxu0 %v2111
    %v2113 = vand.u32 %v53, 4294901760
    %v2114 = vsub.f32 %v53, %v2113
    %2115 = vmatmul.f32.gmra.mxu0 %v2114
    %v2116 = vpop.f32.mrf.mxu0
    %v2117 = vadd.f32 %v2063, %v2116
    %2118 = vdwg.mxu0
    %v2119 = vand.u32 %v153, 4294901760
    %2120 = vmatpush.msra.mxu0 %v2119
    %v2121 = vand.u32 %v152, 4294901760
    %2122 = vmatpush.msra.mxu0 %v2121
    %v2123 = vand.u32 %v151, 4294901760
    %2124 = vmatpush.msra.mxu0 %v2123
    %v2125 = vand.u32 %v150, 4294901760
    %2126 = vmatpush.msra.mxu0 %v2125
    %v2127 = vand.u32 %v149, 4294901760
    %2128 = vmatpush.msra.mxu0 %v2127
    %v2129 = vand.u32 %v148, 4294901760
    %2130 = vmatpush.msra.mxu0 %v2129
    %v2131 = vand.u32 %v147, 4294901760
    %2132 = vmatpush.msra.mxu0 %v2131
    %v2133 = vand.u32 %v146, 4294901760
    %2134 = vmatpush.msra.mxu0 %v2133
    %v2135 = vand.u32 %v145, 4294901760
    %2136 = vmatpush.msra.mxu0 %v2135
    %v2137 = vand.u32 %v144, 4294901760
    %2138 = vmatpush.msra.mxu0 %v2137
    %v2139 = vand.u32 %v143, 4294901760
    %2140 = vmatpush.msra.mxu0 %v2139
    %v2141 = vand.u32 %v142, 4294901760
    %2142 = vmatpush.msra.mxu0 %v2141
    %v2143 = vand.u32 %v141, 4294901760
    %2144 = vmatpush.msra.mxu0 %v2143
    %v2145 = vand.u32 %v140, 4294901760
    %2146 = vmatpush.msra.mxu0 %v2145
    %v2147 = vand.u32 %v139, 4294901760
    %2148 = vmatpush.msra.mxu0 %v2147
    %v2149 = vand.u32 %v138, 4294901760
    %2150 = vmatpush.msra.mxu0 %v2149
    %v2151 = vand.u32 %v53, 4294901760
    %v2152 = vsub.f32 %v53, %v2151
    %v2153 = vand.u32 %v2152, 4294901760
    %2154 = vmatmul.f32.gmra.mxu0 %v2153
    %v2155 = vpop.f32.mrf.mxu0
    %v2156 = vadd.f32 %v2117, %v2155
    %2157 = vdwg.mxu0
    %v2158 = vand.u32 %v153, 4294901760
    %v2159 = vsub.f32 %v153, %v2158
    %v2160 = vand.u32 %v2159, 4294901760
    %2161 = vmatpush.msra.mxu0 %v2160
    %v2162 = vand.u32 %v152, 4294901760
    %v2163 = vsub.f32 %v152, %v2162
    %v2164 = vand.u32 %v2163, 4294901760
    %2165 = vmatpush.msra.mxu0 %v2164
    %v2166 = vand.u32 %v151, 4294901760
    %v2167 = vsub.f32 %v151, %v2166
    %v2168 = vand.u32 %v2167, 4294901760
    %2169 = vmatpush.msra.mxu0 %v2168
    %v2170 = vand.u32 %v150, 4294901760
    %v2171 = vsub.f32 %v150, %v2170
    %v2172 = vand.u32 %v2171, 4294901760
    %2173 = vmatpush.msra.mxu0 %v2172
    %v2174 = vand.u32 %v149, 4294901760
    %v2175 = vsub.f32 %v149, %v2174
    %v2176 = vand.u32 %v2175, 4294901760
    %2177 = vmatpush.msra.mxu0 %v2176
    %v2178 = vand.u32 %v148, 4294901760
    %v2179 = vsub.f32 %v148, %v2178
    %v2180 = vand.u32 %v2179, 4294901760
    %2181 = vmatpush.msra.mxu0 %v2180
    %v2182 = vand.u32 %v147, 4294901760
    %v2183 = vsub.f32 %v147, %v2182
    %v2184 = vand.u32 %v2183, 4294901760
    %2185 = vmatpush.msra.mxu0 %v2184
    %v2186 = vand.u32 %v146, 4294901760
    %v2187 = vsub.f32 %v146, %v2186
    %v2188 = vand.u32 %v2187, 4294901760
    %2189 = vmatpush.msra.mxu0 %v2188
    %v2190 = vand.u32 %v145, 4294901760
    %v2191 = vsub.f32 %v145, %v2190
    %v2192 = vand.u32 %v2191, 4294901760
    %2193 = vmatpush.msra.mxu0 %v2192
    %v2194 = vand.u32 %v144, 4294901760
    %v2195 = vsub.f32 %v144, %v2194
    %v2196 = vand.u32 %v2195, 4294901760
    %2197 = vmatpush.msra.mxu0 %v2196
    %v2198 = vand.u32 %v143, 4294901760
    %v2199 = vsub.f32 %v143, %v2198
    %v2200 = vand.u32 %v2199, 4294901760
    %2201 = vmatpush.msra.mxu0 %v2200
    %v2202 = vand.u32 %v142, 4294901760
    %v2203 = vsub.f32 %v142, %v2202
    %v2204 = vand.u32 %v2203, 4294901760
    %2205 = vmatpush.msra.mxu0 %v2204
    %v2206 = vand.u32 %v141, 4294901760
    %v2207 = vsub.f32 %v141, %v2206
    %v2208 = vand.u32 %v2207, 4294901760
    %2209 = vmatpush.msra.mxu0 %v2208
    %v2210 = vand.u32 %v140, 4294901760
    %v2211 = vsub.f32 %v140, %v2210
    %v2212 = vand.u32 %v2211, 4294901760
    %2213 = vmatpush.msra.mxu0 %v2212
    %v2214 = vand.u32 %v139, 4294901760
    %v2215 = vsub.f32 %v139, %v2214
    %v2216 = vand.u32 %v2215, 4294901760
    %2217 = vmatpush.msra.mxu0 %v2216
    %v2218 = vand.u32 %v138, 4294901760
    %v2219 = vsub.f32 %v138, %v2218
    %v2220 = vand.u32 %v2219, 4294901760
    %2221 = vmatpush.msra.mxu0 %v2220
    %v2222 = vand.u32 %v53, 4294901760
    %2223 = vmatmul.f32.gmra.mxu0 %v2222
    %v2224 = vpop.f32.mrf.mxu0
    %v2225 = vadd.f32 %v2156, %v2224
    %2226 = vdwg.mxu0
    %v2227 = vand.u32 %v153, 4294901760
    %2228 = vmatpush.msra.mxu0 %v2227
    %v2229 = vand.u32 %v152, 4294901760
    %2230 = vmatpush.msra.mxu0 %v2229
    %v2231 = vand.u32 %v151, 4294901760
    %2232 = vmatpush.msra.mxu0 %v2231
    %v2233 = vand.u32 %v150, 4294901760
    %2234 = vmatpush.msra.mxu0 %v2233
    %v2235 = vand.u32 %v149, 4294901760
    %2236 = vmatpush.msra.mxu0 %v2235
    %v2237 = vand.u32 %v148, 4294901760
    %2238 = vmatpush.msra.mxu0 %v2237
    %v2239 = vand.u32 %v147, 4294901760
    %2240 = vmatpush.msra.mxu0 %v2239
    %v2241 = vand.u32 %v146, 4294901760
    %2242 = vmatpush.msra.mxu0 %v2241
    %v2243 = vand.u32 %v145, 4294901760
    %2244 = vmatpush.msra.mxu0 %v2243
    %v2245 = vand.u32 %v144, 4294901760
    %2246 = vmatpush.msra.mxu0 %v2245
    %v2247 = vand.u32 %v143, 4294901760
    %2248 = vmatpush.msra.mxu0 %v2247
    %v2249 = vand.u32 %v142, 4294901760
    %2250 = vmatpush.msra.mxu0 %v2249
    %v2251 = vand.u32 %v141, 4294901760
    %2252 = vmatpush.msra.mxu0 %v2251
    %v2253 = vand.u32 %v140, 4294901760
    %2254 = vmatpush.msra.mxu0 %v2253
    %v2255 = vand.u32 %v139, 4294901760
    %2256 = vmatpush.msra.mxu0 %v2255
    %v2257 = vand.u32 %v138, 4294901760
    %2258 = vmatpush.msra.mxu0 %v2257
    %v2259 = vand.u32 %v53, 4294901760
    %2260 = vmatmul.f32.gmra.mxu0 %v2259
    %v2261 = vpop.f32.mrf.mxu0
    %v2262 = vadd.f32 %v2225, %v2261
    %2263 = vdwg.mxu0
    %v2264 = vand.u32 %v169, 4294901760
    %2265 = vmatpush.msra.mxu0 %v2264
    %v2266 = vand.u32 %v168, 4294901760
    %2267 = vmatpush.msra.mxu0 %v2266
    %v2268 = vand.u32 %v167, 4294901760
    %2269 = vmatpush.msra.mxu0 %v2268
    %v2270 = vand.u32 %v166, 4294901760
    %2271 = vmatpush.msra.mxu0 %v2270
    %v2272 = vand.u32 %v165, 4294901760
    %2273 = vmatpush.msra.mxu0 %v2272
    %v2274 = vand.u32 %v164, 4294901760
    %2275 = vmatpush.msra.mxu0 %v2274
    %v2276 = vand.u32 %v163, 4294901760
    %2277 = vmatpush.msra.mxu0 %v2276
    %v2278 = vand.u32 %v162, 4294901760
    %2279 = vmatpush.msra.mxu0 %v2278
    %v2280 = vand.u32 %v161, 4294901760
    %2281 = vmatpush.msra.mxu0 %v2280
    %v2282 = vand.u32 %v160, 4294901760
    %2283 = vmatpush.msra.mxu0 %v2282
    %v2284 = vand.u32 %v159, 4294901760
    %2285 = vmatpush.msra.mxu0 %v2284
    %v2286 = vand.u32 %v158, 4294901760
    %2287 = vmatpush.msra.mxu0 %v2286
    %v2288 = vand.u32 %v157, 4294901760
    %2289 = vmatpush.msra.mxu0 %v2288
    %v2290 = vand.u32 %v156, 4294901760
    %2291 = vmatpush.msra.mxu0 %v2290
    %v2292 = vand.u32 %v155, 4294901760
    %2293 = vmatpush.msra.mxu0 %v2292
    %v2294 = vand.u32 %v154, 4294901760
    %2295 = vmatpush.msra.mxu0 %v2294
    %v2296 = vand.u32 %v54, 4294901760
    %v2297 = vsub.f32 %v54, %v2296
    %v2298 = vand.u32 %v2297, 4294901760
    %v2299 = vsub.f32 %v2297, %v2298
    %v2300 = vand.u32 %v2299, 4294901760
    %2301 = vmatmul.f32.gmra.mxu0 %v2300
    %v2302 = vpop.f32.mrf.mxu0
    %v2303 = vadd.f32 %v2262, %v2302
    %2304 = vdwg.mxu0
    %v2305 = vand.u32 %v169, 4294901760
    %v2306 = vsub.f32 %v169, %v2305
    %v2307 = vand.u32 %v2306, 4294901760
    %v2308 = vsub.f32 %v2306, %v2307
    %v2309 = vand.u32 %v2308, 4294901760
    %2310 = vmatpush.msra.mxu0 %v2309
    %v2311 = vand.u32 %v168, 4294901760
    %v2312 = vsub.f32 %v168, %v2311
    %v2313 = vand.u32 %v2312, 4294901760
    %v2314 = vsub.f32 %v2312, %v2313
    %v2315 = vand.u32 %v2314, 4294901760
    %2316 = vmatpush.msra.mxu0 %v2315
    %v2317 = vand.u32 %v167, 4294901760
    %v2318 = vsub.f32 %v167, %v2317
    %v2319 = vand.u32 %v2318, 4294901760
    %v2320 = vsub.f32 %v2318, %v2319
    %v2321 = vand.u32 %v2320, 4294901760
    %2322 = vmatpush.msra.mxu0 %v2321
    %v2323 = vand.u32 %v166, 4294901760
    %v2324 = vsub.f32 %v166, %v2323
    %v2325 = vand.u32 %v2324, 4294901760
    %v2326 = vsub.f32 %v2324, %v2325
    %v2327 = vand.u32 %v2326, 4294901760
    %2328 = vmatpush.msra.mxu0 %v2327
    %v2329 = vand.u32 %v165, 4294901760
    %v2330 = vsub.f32 %v165, %v2329
    %v2331 = vand.u32 %v2330, 4294901760
    %v2332 = vsub.f32 %v2330, %v2331
    %v2333 = vand.u32 %v2332, 4294901760
    %2334 = vmatpush.msra.mxu0 %v2333
    %v2335 = vand.u32 %v164, 4294901760
    %v2336 = vsub.f32 %v164, %v2335
    %v2337 = vand.u32 %v2336, 4294901760
    %v2338 = vsub.f32 %v2336, %v2337
    %v2339 = vand.u32 %v2338, 4294901760
    %2340 = vmatpush.msra.mxu0 %v2339
    %v2341 = vand.u32 %v163, 4294901760
    %v2342 = vsub.f32 %v163, %v2341
    %v2343 = vand.u32 %v2342, 4294901760
    %v2344 = vsub.f32 %v2342, %v2343
    %v2345 = vand.u32 %v2344, 4294901760
    %2346 = vmatpush.msra.mxu0 %v2345
    %v2347 = vand.u32 %v162, 4294901760
    %v2348 = vsub.f32 %v162, %v2347
    %v2349 = vand.u32 %v2348, 4294901760
    %v2350 = vsub.f32 %v2348, %v2349
    %v2351 = vand.u32 %v2350, 4294901760
    %2352 = vmatpush.msra.mxu0 %v2351
    %v2353 = vand.u32 %v161, 4294901760
    %v2354 = vsub.f32 %v161, %v2353
    %v2355 = vand.u32 %v2354, 4294901760
    %v2356 = vsub.f32 %v2354, %v2355
    %v2357 = vand.u32 %v2356, 4294901760
    %2358 = vmatpush.msra.mxu0 %v2357
    %v2359 = vand.u32 %v160, 4294901760
    %v2360 = vsub.f32 %v160, %v2359
    %v2361 = vand.u32 %v2360, 4294901760
    %v2362 = vsub.f32 %v2360, %v2361
    %v2363 = vand.u32 %v2362, 4294901760
    %2364 = vmatpush.msra.mxu0 %v2363
    %v2365 = vand.u32 %v159, 4294901760
    %v2366 = vsub.f32 %v159, %v2365
    %v2367 = vand.u32 %v2366, 4294901760
    %v2368 = vsub.f32 %v2366, %v2367
    %v2369 = vand.u32 %v2368, 4294901760
    %2370 = vmatpush.msra.mxu0 %v2369
    %v2371 = vand.u32 %v158, 4294901760
    %v2372 = vsub.f32 %v158, %v2371
    %v2373 = vand.u32 %v2372, 4294901760
    %v2374 = vsub.f32 %v2372, %v2373
    %v2375 = vand.u32 %v2374, 4294901760
    %2376 = vmatpush.msra.mxu0 %v2375
    %v2377 = vand.u32 %v157, 4294901760
    %v2378 = vsub.f32 %v157, %v2377
    %v2379 = vand.u32 %v2378, 4294901760
    %v2380 = vsub.f32 %v2378, %v2379
    %v2381 = vand.u32 %v2380, 4294901760
    %2382 = vmatpush.msra.mxu0 %v2381
    %v2383 = vand.u32 %v156, 4294901760
    %v2384 = vsub.f32 %v156, %v2383
    %v2385 = vand.u32 %v2384, 4294901760
    %v2386 = vsub.f32 %v2384, %v2385
    %v2387 = vand.u32 %v2386, 4294901760
    %2388 = vmatpush.msra.mxu0 %v2387
    %v2389 = vand.u32 %v155, 4294901760
    %v2390 = vsub.f32 %v155, %v2389
    %v2391 = vand.u32 %v2390, 4294901760
    %v2392 = vsub.f32 %v2390, %v2391
    %v2393 = vand.u32 %v2392, 4294901760
    %2394 = vmatpush.msra.mxu0 %v2393
    %v2395 = vand.u32 %v154, 4294901760
    %v2396 = vsub.f32 %v154, %v2395
    %v2397 = vand.u32 %v2396, 4294901760
    %v2398 = vsub.f32 %v2396, %v2397
    %v2399 = vand.u32 %v2398, 4294901760
    %2400 = vmatpush.msra.mxu0 %v2399
    %v2401 = vand.u32 %v54, 4294901760
    %2402 = vmatmul.f32.gmra.mxu0 %v2401
    %v2403 = vpop.f32.mrf.mxu0
    %v2404 = vadd.f32 %v2303, %v2403
    %2405 = vdwg.mxu0
    %v2406 = vand.u32 %v169, 4294901760
    %v2407 = vsub.f32 %v169, %v2406
    %2408 = vmatpush.msra.mxu0 %v2407
    %v2409 = vand.u32 %v168, 4294901760
    %v2410 = vsub.f32 %v168, %v2409
    %2411 = vmatpush.msra.mxu0 %v2410
    %v2412 = vand.u32 %v167, 4294901760
    %v2413 = vsub.f32 %v167, %v2412
    %2414 = vmatpush.msra.mxu0 %v2413
    %v2415 = vand.u32 %v166, 4294901760
    %v2416 = vsub.f32 %v166, %v2415
    %2417 = vmatpush.msra.mxu0 %v2416
    %v2418 = vand.u32 %v165, 4294901760
    %v2419 = vsub.f32 %v165, %v2418
    %2420 = vmatpush.msra.mxu0 %v2419
    %v2421 = vand.u32 %v164, 4294901760
    %v2422 = vsub.f32 %v164, %v2421
    %2423 = vmatpush.msra.mxu0 %v2422
    %v2424 = vand.u32 %v163, 4294901760
    %v2425 = vsub.f32 %v163, %v2424
    %2426 = vmatpush.msra.mxu0 %v2425
    %v2427 = vand.u32 %v162, 4294901760
    %v2428 = vsub.f32 %v162, %v2427
    %2429 = vmatpush.msra.mxu0 %v2428
    %v2430 = vand.u32 %v161, 4294901760
    %v2431 = vsub.f32 %v161, %v2430
    %2432 = vmatpush.msra.mxu0 %v2431
    %v2433 = vand.u32 %v160, 4294901760
    %v2434 = vsub.f32 %v160, %v2433
    %2435 = vmatpush.msra.mxu0 %v2434
    %v2436 = vand.u32 %v159, 4294901760
    %v2437 = vsub.f32 %v159, %v2436
    %2438 = vmatpush.msra.mxu0 %v2437
    %v2439 = vand.u32 %v158, 4294901760
    %v2440 = vsub.f32 %v158, %v2439
    %2441 = vmatpush.msra.mxu0 %v2440
    %v2442 = vand.u32 %v157, 4294901760
    %v2443 = vsub.f32 %v157, %v2442
    %2444 = vmatpush.msra.mxu0 %v2443
    %v2445 = vand.u32 %v156, 4294901760
    %v2446 = vsub.f32 %v156, %v2445
    %2447 = vmatpush.msra.mxu0 %v2446
    %v2448 = vand.u32 %v155, 4294901760
    %v2449 = vsub.f32 %v155, %v2448
    %2450 = vmatpush.msra.mxu0 %v2449
    %v2451 = vand.u32 %v154, 4294901760
    %v2452 = vsub.f32 %v154, %v2451
    %2453 = vmatpush.msra.mxu0 %v2452
    %v2454 = vand.u32 %v54, 4294901760
    %v2455 = vsub.f32 %v54, %v2454
    %2456 = vmatmul.f32.gmra.mxu0 %v2455
    %v2457 = vpop.f32.mrf.mxu0
    %v2458 = vadd.f32 %v2404, %v2457
    %2459 = vdwg.mxu0
    %v2460 = vand.u32 %v169, 4294901760
    %2461 = vmatpush.msra.mxu0 %v2460
    %v2462 = vand.u32 %v168, 4294901760
    %2463 = vmatpush.msra.mxu0 %v2462
    %v2464 = vand.u32 %v167, 4294901760
    %2465 = vmatpush.msra.mxu0 %v2464
    %v2466 = vand.u32 %v166, 4294901760
    %2467 = vmatpush.msra.mxu0 %v2466
    %v2468 = vand.u32 %v165, 4294901760
    %2469 = vmatpush.msra.mxu0 %v2468
    %v2470 = vand.u32 %v164, 4294901760
    %2471 = vmatpush.msra.mxu0 %v2470
    %v2472 = vand.u32 %v163, 4294901760
    %2473 = vmatpush.msra.mxu0 %v2472
    %v2474 = vand.u32 %v162, 4294901760
    %2475 = vmatpush.msra.mxu0 %v2474
    %v2476 = vand.u32 %v161, 4294901760
    %2477 = vmatpush.msra.mxu0 %v2476
    %v2478 = vand.u32 %v160, 4294901760
    %2479 = vmatpush.msra.mxu0 %v2478
    %v2480 = vand.u32 %v159, 4294901760
    %2481 = vmatpush.msra.mxu0 %v2480
    %v2482 = vand.u32 %v158, 4294901760
    %2483 = vmatpush.msra.mxu0 %v2482
    %v2484 = vand.u32 %v157, 4294901760
    %2485 = vmatpush.msra.mxu0 %v2484
    %v2486 = vand.u32 %v156, 4294901760
    %2487 = vmatpush.msra.mxu0 %v2486
    %v2488 = vand.u32 %v155, 4294901760
    %2489 = vmatpush.msra.mxu0 %v2488
    %v2490 = vand.u32 %v154, 4294901760
    %2491 = vmatpush.msra.mxu0 %v2490
    %v2492 = vand.u32 %v54, 4294901760
    %v2493 = vsub.f32 %v54, %v2492
    %v2494 = vand.u32 %v2493, 4294901760
    %2495 = vmatmul.f32.gmra.mxu0 %v2494
    %v2496 = vpop.f32.mrf.mxu0
    %v2497 = vadd.f32 %v2458, %v2496
    %2498 = vdwg.mxu0
    %v2499 = vand.u32 %v169, 4294901760
    %v2500 = vsub.f32 %v169, %v2499
    %v2501 = vand.u32 %v2500, 4294901760
    %2502 = vmatpush.msra.mxu0 %v2501
    %v2503 = vand.u32 %v168, 4294901760
    %v2504 = vsub.f32 %v168, %v2503
    %v2505 = vand.u32 %v2504, 4294901760
    %2506 = vmatpush.msra.mxu0 %v2505
    %v2507 = vand.u32 %v167, 4294901760
    %v2508 = vsub.f32 %v167, %v2507
    %v2509 = vand.u32 %v2508, 4294901760
    %2510 = vmatpush.msra.mxu0 %v2509
    %v2511 = vand.u32 %v166, 4294901760
    %v2512 = vsub.f32 %v166, %v2511
    %v2513 = vand.u32 %v2512, 4294901760
    %2514 = vmatpush.msra.mxu0 %v2513
    %v2515 = vand.u32 %v165, 4294901760
    %v2516 = vsub.f32 %v165, %v2515
    %v2517 = vand.u32 %v2516, 4294901760
    %2518 = vmatpush.msra.mxu0 %v2517
    %v2519 = vand.u32 %v164, 4294901760
    %v2520 = vsub.f32 %v164, %v2519
    %v2521 = vand.u32 %v2520, 4294901760
    %2522 = vmatpush.msra.mxu0 %v2521
    %v2523 = vand.u32 %v163, 4294901760
    %v2524 = vsub.f32 %v163, %v2523
    %v2525 = vand.u32 %v2524, 4294901760
    %2526 = vmatpush.msra.mxu0 %v2525
    %v2527 = vand.u32 %v162, 4294901760
    %v2528 = vsub.f32 %v162, %v2527
    %v2529 = vand.u32 %v2528, 4294901760
    %2530 = vmatpush.msra.mxu0 %v2529
    %v2531 = vand.u32 %v161, 4294901760
    %v2532 = vsub.f32 %v161, %v2531
    %v2533 = vand.u32 %v2532, 4294901760
    %2534 = vmatpush.msra.mxu0 %v2533
    %v2535 = vand.u32 %v160, 4294901760
    %v2536 = vsub.f32 %v160, %v2535
    %v2537 = vand.u32 %v2536, 4294901760
    %2538 = vmatpush.msra.mxu0 %v2537
    %v2539 = vand.u32 %v159, 4294901760
    %v2540 = vsub.f32 %v159, %v2539
    %v2541 = vand.u32 %v2540, 4294901760
    %2542 = vmatpush.msra.mxu0 %v2541
    %v2543 = vand.u32 %v158, 4294901760
    %v2544 = vsub.f32 %v158, %v2543
    %v2545 = vand.u32 %v2544, 4294901760
    %2546 = vmatpush.msra.mxu0 %v2545
    %v2547 = vand.u32 %v157, 4294901760
    %v2548 = vsub.f32 %v157, %v2547
    %v2549 = vand.u32 %v2548, 4294901760
    %2550 = vmatpush.msra.mxu0 %v2549
    %v2551 = vand.u32 %v156, 4294901760
    %v2552 = vsub.f32 %v156, %v2551
    %v2553 = vand.u32 %v2552, 4294901760
    %2554 = vmatpush.msra.mxu0 %v2553
    %v2555 = vand.u32 %v155, 4294901760
    %v2556 = vsub.f32 %v155, %v2555
    %v2557 = vand.u32 %v2556, 4294901760
    %2558 = vmatpush.msra.mxu0 %v2557
    %v2559 = vand.u32 %v154, 4294901760
    %v2560 = vsub.f32 %v154, %v2559
    %v2561 = vand.u32 %v2560, 4294901760
    %2562 = vmatpush.msra.mxu0 %v2561
    %v2563 = vand.u32 %v54, 4294901760
    %2564 = vmatmul.f32.gmra.mxu0 %v2563
    %v2565 = vpop.f32.mrf.mxu0
    %v2566 = vadd.f32 %v2497, %v2565
    %2567 = vdwg.mxu0
    %v2568 = vand.u32 %v169, 4294901760
    %2569 = vmatpush.msra.mxu0 %v2568
    %v2570 = vand.u32 %v168, 4294901760
    %2571 = vmatpush.msra.mxu0 %v2570
    %v2572 = vand.u32 %v167, 4294901760
    %2573 = vmatpush.msra.mxu0 %v2572
    %v2574 = vand.u32 %v166, 4294901760
    %2575 = vmatpush.msra.mxu0 %v2574
    %v2576 = vand.u32 %v165, 4294901760
    %2577 = vmatpush.msra.mxu0 %v2576
    %v2578 = vand.u32 %v164, 4294901760
    %2579 = vmatpush.msra.mxu0 %v2578
    %v2580 = vand.u32 %v163, 4294901760
    %2581 = vmatpush.msra.mxu0 %v2580
    %v2582 = vand.u32 %v162, 4294901760
    %2583 = vmatpush.msra.mxu0 %v2582
    %v2584 = vand.u32 %v161, 4294901760
    %2585 = vmatpush.msra.mxu0 %v2584
    %v2586 = vand.u32 %v160, 4294901760
    %2587 = vmatpush.msra.mxu0 %v2586
    %v2588 = vand.u32 %v159, 4294901760
    %2589 = vmatpush.msra.mxu0 %v2588
    %v2590 = vand.u32 %v158, 4294901760
    %2591 = vmatpush.msra.mxu0 %v2590
    %v2592 = vand.u32 %v157, 4294901760
    %2593 = vmatpush.msra.mxu0 %v2592
    %v2594 = vand.u32 %v156, 4294901760
    %2595 = vmatpush.msra.mxu0 %v2594
    %v2596 = vand.u32 %v155, 4294901760
    %2597 = vmatpush.msra.mxu0 %v2596
    %v2598 = vand.u32 %v154, 4294901760
    %2599 = vmatpush.msra.mxu0 %v2598
    %v2600 = vand.u32 %v54, 4294901760
    %2601 = vmatmul.f32.gmra.mxu0 %v2600
    %v2602 = vpop.f32.mrf.mxu0
    %v2603 = vadd.f32 %v2566, %v2602
    %2604 = vdwg.mxu0
    %v2605 = vand.u32 %v185, 4294901760
    %2606 = vmatpush.msra.mxu0 %v2605
    %v2607 = vand.u32 %v184, 4294901760
    %2608 = vmatpush.msra.mxu0 %v2607
    %v2609 = vand.u32 %v183, 4294901760
    %2610 = vmatpush.msra.mxu0 %v2609
    %v2611 = vand.u32 %v182, 4294901760
    %2612 = vmatpush.msra.mxu0 %v2611
    %v2613 = vand.u32 %v181, 4294901760
    %2614 = vmatpush.msra.mxu0 %v2613
    %v2615 = vand.u32 %v180, 4294901760
    %2616 = vmatpush.msra.mxu0 %v2615
    %v2617 = vand.u32 %v179, 4294901760
    %2618 = vmatpush.msra.mxu0 %v2617
    %v2619 = vand.u32 %v178, 4294901760
    %2620 = vmatpush.msra.mxu0 %v2619
    %v2621 = vand.u32 %v177, 4294901760
    %2622 = vmatpush.msra.mxu0 %v2621
    %v2623 = vand.u32 %v176, 4294901760
    %2624 = vmatpush.msra.mxu0 %v2623
    %v2625 = vand.u32 %v175, 4294901760
    %2626 = vmatpush.msra.mxu0 %v2625
    %v2627 = vand.u32 %v174, 4294901760
    %2628 = vmatpush.msra.mxu0 %v2627
    %v2629 = vand.u32 %v173, 4294901760
    %2630 = vmatpush.msra.mxu0 %v2629
    %v2631 = vand.u32 %v172, 4294901760
    %2632 = vmatpush.msra.mxu0 %v2631
    %v2633 = vand.u32 %v171, 4294901760
    %2634 = vmatpush.msra.mxu0 %v2633
    %v2635 = vand.u32 %v170, 4294901760
    %2636 = vmatpush.msra.mxu0 %v2635
    %v2637 = vand.u32 %v55, 4294901760
    %v2638 = vsub.f32 %v55, %v2637
    %v2639 = vand.u32 %v2638, 4294901760
    %v2640 = vsub.f32 %v2638, %v2639
    %v2641 = vand.u32 %v2640, 4294901760
    %2642 = vmatmul.f32.gmra.mxu0 %v2641
    %v2643 = vpop.f32.mrf.mxu0
    %v2644 = vadd.f32 %v2603, %v2643
    %2645 = vdwg.mxu0
    %v2646 = vand.u32 %v185, 4294901760
    %v2647 = vsub.f32 %v185, %v2646
    %v2648 = vand.u32 %v2647, 4294901760
    %v2649 = vsub.f32 %v2647, %v2648
    %v2650 = vand.u32 %v2649, 4294901760
    %2651 = vmatpush.msra.mxu0 %v2650
    %v2652 = vand.u32 %v184, 4294901760
    %v2653 = vsub.f32 %v184, %v2652
    %v2654 = vand.u32 %v2653, 4294901760
    %v2655 = vsub.f32 %v2653, %v2654
    %v2656 = vand.u32 %v2655, 4294901760
    %2657 = vmatpush.msra.mxu0 %v2656
    %v2658 = vand.u32 %v183, 4294901760
    %v2659 = vsub.f32 %v183, %v2658
    %v2660 = vand.u32 %v2659, 4294901760
    %v2661 = vsub.f32 %v2659, %v2660
    %v2662 = vand.u32 %v2661, 4294901760
    %2663 = vmatpush.msra.mxu0 %v2662
    %v2664 = vand.u32 %v182, 4294901760
    %v2665 = vsub.f32 %v182, %v2664
    %v2666 = vand.u32 %v2665, 4294901760
    %v2667 = vsub.f32 %v2665, %v2666
    %v2668 = vand.u32 %v2667, 4294901760
    %2669 = vmatpush.msra.mxu0 %v2668
    %v2670 = vand.u32 %v181, 4294901760
    %v2671 = vsub.f32 %v181, %v2670
    %v2672 = vand.u32 %v2671, 4294901760
    %v2673 = vsub.f32 %v2671, %v2672
    %v2674 = vand.u32 %v2673, 4294901760
    %2675 = vmatpush.msra.mxu0 %v2674
    %v2676 = vand.u32 %v180, 4294901760
    %v2677 = vsub.f32 %v180, %v2676
    %v2678 = vand.u32 %v2677, 4294901760
    %v2679 = vsub.f32 %v2677, %v2678
    %v2680 = vand.u32 %v2679, 4294901760
    %2681 = vmatpush.msra.mxu0 %v2680
    %v2682 = vand.u32 %v179, 4294901760
    %v2683 = vsub.f32 %v179, %v2682
    %v2684 = vand.u32 %v2683, 4294901760
    %v2685 = vsub.f32 %v2683, %v2684
    %v2686 = vand.u32 %v2685, 4294901760
    %2687 = vmatpush.msra.mxu0 %v2686
    %v2688 = vand.u32 %v178, 4294901760
    %v2689 = vsub.f32 %v178, %v2688
    %v2690 = vand.u32 %v2689, 4294901760
    %v2691 = vsub.f32 %v2689, %v2690
    %v2692 = vand.u32 %v2691, 4294901760
    %2693 = vmatpush.msra.mxu0 %v2692
    %v2694 = vand.u32 %v177, 4294901760
    %v2695 = vsub.f32 %v177, %v2694
    %v2696 = vand.u32 %v2695, 4294901760
    %v2697 = vsub.f32 %v2695, %v2696
    %v2698 = vand.u32 %v2697, 4294901760
    %2699 = vmatpush.msra.mxu0 %v2698
    %v2700 = vand.u32 %v176, 4294901760
    %v2701 = vsub.f32 %v176, %v2700
    %v2702 = vand.u32 %v2701, 4294901760
    %v2703 = vsub.f32 %v2701, %v2702
    %v2704 = vand.u32 %v2703, 4294901760
    %2705 = vmatpush.msra.mxu0 %v2704
    %v2706 = vand.u32 %v175, 4294901760
    %v2707 = vsub.f32 %v175, %v2706
    %v2708 = vand.u32 %v2707, 4294901760
    %v2709 = vsub.f32 %v2707, %v2708
    %v2710 = vand.u32 %v2709, 4294901760
    %2711 = vmatpush.msra.mxu0 %v2710
    %v2712 = vand.u32 %v174, 4294901760
    %v2713 = vsub.f32 %v174, %v2712
    %v2714 = vand.u32 %v2713, 4294901760
    %v2715 = vsub.f32 %v2713, %v2714
    %v2716 = vand.u32 %v2715, 4294901760
    %2717 = vmatpush.msra.mxu0 %v2716
    %v2718 = vand.u32 %v173, 4294901760
    %v2719 = vsub.f32 %v173, %v2718
    %v2720 = vand.u32 %v2719, 4294901760
    %v2721 = vsub.f32 %v2719, %v2720
    %v2722 = vand.u32 %v2721, 4294901760
    %2723 = vmatpush.msra.mxu0 %v2722
    %v2724 = vand.u32 %v172, 4294901760
    %v2725 = vsub.f32 %v172, %v2724
    %v2726 = vand.u32 %v2725, 4294901760
    %v2727 = vsub.f32 %v2725, %v2726
    %v2728 = vand.u32 %v2727, 4294901760
    %2729 = vmatpush.msra.mxu0 %v2728
    %v2730 = vand.u32 %v171, 4294901760
    %v2731 = vsub.f32 %v171, %v2730
    %v2732 = vand.u32 %v2731, 4294901760
    %v2733 = vsub.f32 %v2731, %v2732
    %v2734 = vand.u32 %v2733, 4294901760
    %2735 = vmatpush.msra.mxu0 %v2734
    %v2736 = vand.u32 %v170, 4294901760
    %v2737 = vsub.f32 %v170, %v2736
    %v2738 = vand.u32 %v2737, 4294901760
    %v2739 = vsub.f32 %v2737, %v2738
    %v2740 = vand.u32 %v2739, 4294901760
    %2741 = vmatpush.msra.mxu0 %v2740
    %v2742 = vand.u32 %v55, 4294901760
    %2743 = vmatmul.f32.gmra.mxu0 %v2742
    %v2744 = vpop.f32.mrf.mxu0
    %v2745 = vadd.f32 %v2644, %v2744
    %2746 = vdwg.mxu0
    %v2747 = vand.u32 %v185, 4294901760
    %v2748 = vsub.f32 %v185, %v2747
    %2749 = vmatpush.msra.mxu0 %v2748
    %v2750 = vand.u32 %v184, 4294901760
    %v2751 = vsub.f32 %v184, %v2750
    %2752 = vmatpush.msra.mxu0 %v2751
    %v2753 = vand.u32 %v183, 4294901760
    %v2754 = vsub.f32 %v183, %v2753
    %2755 = vmatpush.msra.mxu0 %v2754
    %v2756 = vand.u32 %v182, 4294901760
    %v2757 = vsub.f32 %v182, %v2756
    %2758 = vmatpush.msra.mxu0 %v2757
    %v2759 = vand.u32 %v181, 4294901760
    %v2760 = vsub.f32 %v181, %v2759
    %2761 = vmatpush.msra.mxu0 %v2760
    %v2762 = vand.u32 %v180, 4294901760
    %v2763 = vsub.f32 %v180, %v2762
    %2764 = vmatpush.msra.mxu0 %v2763
    %v2765 = vand.u32 %v179, 4294901760
    %v2766 = vsub.f32 %v179, %v2765
    %2767 = vmatpush.msra.mxu0 %v2766
    %v2768 = vand.u32 %v178, 4294901760
    %v2769 = vsub.f32 %v178, %v2768
    %2770 = vmatpush.msra.mxu0 %v2769
    %v2771 = vand.u32 %v177, 4294901760
    %v2772 = vsub.f32 %v177, %v2771
    %2773 = vmatpush.msra.mxu0 %v2772
    %v2774 = vand.u32 %v176, 4294901760
    %v2775 = vsub.f32 %v176, %v2774
    %2776 = vmatpush.msra.mxu0 %v2775
    %v2777 = vand.u32 %v175, 4294901760
    %v2778 = vsub.f32 %v175, %v2777
    %2779 = vmatpush.msra.mxu0 %v2778
    %v2780 = vand.u32 %v174, 4294901760
    %v2781 = vsub.f32 %v174, %v2780
    %2782 = vmatpush.msra.mxu0 %v2781
    %v2783 = vand.u32 %v173, 4294901760
    %v2784 = vsub.f32 %v173, %v2783
    %2785 = vmatpush.msra.mxu0 %v2784
    %v2786 = vand.u32 %v172, 4294901760
    %v2787 = vsub.f32 %v172, %v2786
    %2788 = vmatpush.msra.mxu0 %v2787
    %v2789 = vand.u32 %v171, 4294901760
    %v2790 = vsub.f32 %v171, %v2789
    %2791 = vmatpush.msra.mxu0 %v2790
    %v2792 = vand.u32 %v170, 4294901760
    %v2793 = vsub.f32 %v170, %v2792
    %2794 = vmatpush.msra.mxu0 %v2793
    %v2795 = vand.u32 %v55, 4294901760
    %v2796 = vsub.f32 %v55, %v2795
    %2797 = vmatmul.f32.gmra.mxu0 %v2796
    %v2798 = vpop.f32.mrf.mxu0
    %v2799 = vadd.f32 %v2745, %v2798
    %2800 = vdwg.mxu0
    %v2801 = vand.u32 %v185, 4294901760
    %2802 = vmatpush.msra.mxu0 %v2801
    %v2803 = vand.u32 %v184, 4294901760
    %2804 = vmatpush.msra.mxu0 %v2803
    %v2805 = vand.u32 %v183, 4294901760
    %2806 = vmatpush.msra.mxu0 %v2805
    %v2807 = vand.u32 %v182, 4294901760
    %2808 = vmatpush.msra.mxu0 %v2807
    %v2809 = vand.u32 %v181, 4294901760
    %2810 = vmatpush.msra.mxu0 %v2809
    %v2811 = vand.u32 %v180, 4294901760
    %2812 = vmatpush.msra.mxu0 %v2811
    %v2813 = vand.u32 %v179, 4294901760
    %2814 = vmatpush.msra.mxu0 %v2813
    %v2815 = vand.u32 %v178, 4294901760
    %2816 = vmatpush.msra.mxu0 %v2815
    %v2817 = vand.u32 %v177, 4294901760
    %2818 = vmatpush.msra.mxu0 %v2817
    %v2819 = vand.u32 %v176, 4294901760
    %2820 = vmatpush.msra.mxu0 %v2819
    %v2821 = vand.u32 %v175, 4294901760
    %2822 = vmatpush.msra.mxu0 %v2821
    %v2823 = vand.u32 %v174, 4294901760
    %2824 = vmatpush.msra.mxu0 %v2823
    %v2825 = vand.u32 %v173, 4294901760
    %2826 = vmatpush.msra.mxu0 %v2825
    %v2827 = vand.u32 %v172, 4294901760
    %2828 = vmatpush.msra.mxu0 %v2827
    %v2829 = vand.u32 %v171, 4294901760
    %2830 = vmatpush.msra.mxu0 %v2829
    %v2831 = vand.u32 %v170, 4294901760
    %2832 = vmatpush.msra.mxu0 %v2831
    %v2833 = vand.u32 %v55, 4294901760
    %v2834 = vsub.f32 %v55, %v2833
    %v2835 = vand.u32 %v2834, 4294901760
    %2836 = vmatmul.f32.gmra.mxu0 %v2835
    %v2837 = vpop.f32.mrf.mxu0
    %v2838 = vadd.f32 %v2799, %v2837
    %2839 = vdwg.mxu0
    %v2840 = vand.u32 %v185, 4294901760
    %v2841 = vsub.f32 %v185, %v2840
    %v2842 = vand.u32 %v2841, 4294901760
    %2843 = vmatpush.msra.mxu0 %v2842
    %v2844 = vand.u32 %v184, 4294901760
    %v2845 = vsub.f32 %v184, %v2844
    %v2846 = vand.u32 %v2845, 4294901760
    %2847 = vmatpush.msra.mxu0 %v2846
    %v2848 = vand.u32 %v183, 4294901760
    %v2849 = vsub.f32 %v183, %v2848
    %v2850 = vand.u32 %v2849, 4294901760
    %2851 = vmatpush.msra.mxu0 %v2850
    %v2852 = vand.u32 %v182, 4294901760
    %v2853 = vsub.f32 %v182, %v2852
    %v2854 = vand.u32 %v2853, 4294901760
    %2855 = vmatpush.msra.mxu0 %v2854
    %v2856 = vand.u32 %v181, 4294901760
    %v2857 = vsub.f32 %v181, %v2856
    %v2858 = vand.u32 %v2857, 4294901760
    %2859 = vmatpush.msra.mxu0 %v2858
    %v2860 = vand.u32 %v180, 4294901760
    %v2861 = vsub.f32 %v180, %v2860
    %v2862 = vand.u32 %v2861, 4294901760
    %2863 = vmatpush.msra.mxu0 %v2862
    %v2864 = vand.u32 %v179, 4294901760
    %v2865 = vsub.f32 %v179, %v2864
    %v2866 = vand.u32 %v2865, 4294901760
    %2867 = vmatpush.msra.mxu0 %v2866
    %v2868 = vand.u32 %v178, 4294901760
    %v2869 = vsub.f32 %v178, %v2868
    %v2870 = vand.u32 %v2869, 4294901760
    %2871 = vmatpush.msra.mxu0 %v2870
    %v2872 = vand.u32 %v177, 4294901760
    %v2873 = vsub.f32 %v177, %v2872
    %v2874 = vand.u32 %v2873, 4294901760
    %2875 = vmatpush.msra.mxu0 %v2874
    %v2876 = vand.u32 %v176, 4294901760
    %v2877 = vsub.f32 %v176, %v2876
    %v2878 = vand.u32 %v2877, 4294901760
    %2879 = vmatpush.msra.mxu0 %v2878
    %v2880 = vand.u32 %v175, 4294901760
    %v2881 = vsub.f32 %v175, %v2880
    %v2882 = vand.u32 %v2881, 4294901760
    %2883 = vmatpush.msra.mxu0 %v2882
    %v2884 = vand.u32 %v174, 4294901760
    %v2885 = vsub.f32 %v174, %v2884
    %v2886 = vand.u32 %v2885, 4294901760
    %2887 = vmatpush.msra.mxu0 %v2886
    %v2888 = vand.u32 %v173, 4294901760
    %v2889 = vsub.f32 %v173, %v2888
    %v2890 = vand.u32 %v2889, 4294901760
    %2891 = vmatpush.msra.mxu0 %v2890
    %v2892 = vand.u32 %v172, 4294901760
    %v2893 = vsub.f32 %v172, %v2892
    %v2894 = vand.u32 %v2893, 4294901760
    %2895 = vmatpush.msra.mxu0 %v2894
    %v2896 = vand.u32 %v171, 4294901760
    %v2897 = vsub.f32 %v171, %v2896
    %v2898 = vand.u32 %v2897, 4294901760
    %2899 = vmatpush.msra.mxu0 %v2898
    %v2900 = vand.u32 %v170, 4294901760
    %v2901 = vsub.f32 %v170, %v2900
    %v2902 = vand.u32 %v2901, 4294901760
    %2903 = vmatpush.msra.mxu0 %v2902
    %v2904 = vand.u32 %v55, 4294901760
    %2905 = vmatmul.f32.gmra.mxu0 %v2904
    %v2906 = vpop.f32.mrf.mxu0
    %v2907 = vadd.f32 %v2838, %v2906
    %2908 = vdwg.mxu0
    %v2909 = vand.u32 %v185, 4294901760
    %2910 = vmatpush.msra.mxu0 %v2909
    %v2911 = vand.u32 %v184, 4294901760
    %2912 = vmatpush.msra.mxu0 %v2911
    %v2913 = vand.u32 %v183, 4294901760
    %2914 = vmatpush.msra.mxu0 %v2913
    %v2915 = vand.u32 %v182, 4294901760
    %2916 = vmatpush.msra.mxu0 %v2915
    %v2917 = vand.u32 %v181, 4294901760
    %2918 = vmatpush.msra.mxu0 %v2917
    %v2919 = vand.u32 %v180, 4294901760
    %2920 = vmatpush.msra.mxu0 %v2919
    %v2921 = vand.u32 %v179, 4294901760
    %2922 = vmatpush.msra.mxu0 %v2921
    %v2923 = vand.u32 %v178, 4294901760
    %2924 = vmatpush.msra.mxu0 %v2923
    %v2925 = vand.u32 %v177, 4294901760
    %2926 = vmatpush.msra.mxu0 %v2925
    %v2927 = vand.u32 %v176, 4294901760
    %2928 = vmatpush.msra.mxu0 %v2927
    %v2929 = vand.u32 %v175, 4294901760
    %2930 = vmatpush.msra.mxu0 %v2929
    %v2931 = vand.u32 %v174, 4294901760
    %2932 = vmatpush.msra.mxu0 %v2931
    %v2933 = vand.u32 %v173, 4294901760
    %2934 = vmatpush.msra.mxu0 %v2933
    %v2935 = vand.u32 %v172, 4294901760
    %2936 = vmatpush.msra.mxu0 %v2935
    %v2937 = vand.u32 %v171, 4294901760
    %2938 = vmatpush.msra.mxu0 %v2937
    %v2939 = vand.u32 %v170, 4294901760
    %2940 = vmatpush.msra.mxu0 %v2939
    %v2941 = vand.u32 %v55, 4294901760
    %2942 = vmatmul.f32.gmra.mxu0 %v2941
    %v2943 = vpop.f32.mrf.mxu0
    %v2944 = vadd.f32 %v2907, %v2943
    %2945 = vdwg.mxu0
    %v2946 = vand.u32 %v201, 4294901760
    %2947 = vmatpush.msra.mxu0 %v2946
    %v2948 = vand.u32 %v200, 4294901760
    %2949 = vmatpush.msra.mxu0 %v2948
    %v2950 = vand.u32 %v199, 4294901760
    %2951 = vmatpush.msra.mxu0 %v2950
    %v2952 = vand.u32 %v198, 4294901760
    %2953 = vmatpush.msra.mxu0 %v2952
    %v2954 = vand.u32 %v197, 4294901760
    %2955 = vmatpush.msra.mxu0 %v2954
    %v2956 = vand.u32 %v196, 4294901760
    %2957 = vmatpush.msra.mxu0 %v2956
    %v2958 = vand.u32 %v195, 4294901760
    %2959 = vmatpush.msra.mxu0 %v2958
    %v2960 = vand.u32 %v194, 4294901760
    %2961 = vmatpush.msra.mxu0 %v2960
    %v2962 = vand.u32 %v193, 4294901760
    %2963 = vmatpush.msra.mxu0 %v2962
    %v2964 = vand.u32 %v192, 4294901760
    %2965 = vmatpush.msra.mxu0 %v2964
    %v2966 = vand.u32 %v191, 4294901760
    %2967 = vmatpush.msra.mxu0 %v2966
    %v2968 = vand.u32 %v190, 4294901760
    %2969 = vmatpush.msra.mxu0 %v2968
    %v2970 = vand.u32 %v189, 4294901760
    %2971 = vmatpush.msra.mxu0 %v2970
    %v2972 = vand.u32 %v188, 4294901760
    %2973 = vmatpush.msra.mxu0 %v2972
    %v2974 = vand.u32 %v187, 4294901760
    %2975 = vmatpush.msra.mxu0 %v2974
    %v2976 = vand.u32 %v186, 4294901760
    %2977 = vmatpush.msra.mxu0 %v2976
    %v2978 = vand.u32 %v56, 4294901760
    %v2979 = vsub.f32 %v56, %v2978
    %v2980 = vand.u32 %v2979, 4294901760
    %v2981 = vsub.f32 %v2979, %v2980
    %v2982 = vand.u32 %v2981, 4294901760
    %2983 = vmatmul.f32.gmra.mxu0 %v2982
    %v2984 = vpop.f32.mrf.mxu0
    %v2985 = vadd.f32 %v2944, %v2984
    %2986 = vdwg.mxu0
    %v2987 = vand.u32 %v201, 4294901760
    %v2988 = vsub.f32 %v201, %v2987
    %v2989 = vand.u32 %v2988, 4294901760
    %v2990 = vsub.f32 %v2988, %v2989
    %v2991 = vand.u32 %v2990, 4294901760
    %2992 = vmatpush.msra.mxu0 %v2991
    %v2993 = vand.u32 %v200, 4294901760
    %v2994 = vsub.f32 %v200, %v2993
    %v2995 = vand.u32 %v2994, 4294901760
    %v2996 = vsub.f32 %v2994, %v2995
    %v2997 = vand.u32 %v2996, 4294901760
    %2998 = vmatpush.msra.mxu0 %v2997
    %v2999 = vand.u32 %v199, 4294901760
    %v3000 = vsub.f32 %v199, %v2999
    %v3001 = vand.u32 %v3000, 4294901760
    %v3002 = vsub.f32 %v3000, %v3001
    %v3003 = vand.u32 %v3002, 4294901760
    %3004 = vmatpush.msra.mxu0 %v3003
    %v3005 = vand.u32 %v198, 4294901760
    %v3006 = vsub.f32 %v198, %v3005
    %v3007 = vand.u32 %v3006, 4294901760
    %v3008 = vsub.f32 %v3006, %v3007
    %v3009 = vand.u32 %v3008, 4294901760
    %3010 = vmatpush.msra.mxu0 %v3009
    %v3011 = vand.u32 %v197, 4294901760
    %v3012 = vsub.f32 %v197, %v3011
    %v3013 = vand.u32 %v3012, 4294901760
    %v3014 = vsub.f32 %v3012, %v3013
    %v3015 = vand.u32 %v3014, 4294901760
    %3016 = vmatpush.msra.mxu0 %v3015
    %v3017 = vand.u32 %v196, 4294901760
    %v3018 = vsub.f32 %v196, %v3017
    %v3019 = vand.u32 %v3018, 4294901760
    %v3020 = vsub.f32 %v3018, %v3019
    %v3021 = vand.u32 %v3020, 4294901760
    %3022 = vmatpush.msra.mxu0 %v3021
    %v3023 = vand.u32 %v195, 4294901760
    %v3024 = vsub.f32 %v195, %v3023
    %v3025 = vand.u32 %v3024, 4294901760
    %v3026 = vsub.f32 %v3024, %v3025
    %v3027 = vand.u32 %v3026, 4294901760
    %3028 = vmatpush.msra.mxu0 %v3027
    %v3029 = vand.u32 %v194, 4294901760
    %v3030 = vsub.f32 %v194, %v3029
    %v3031 = vand.u32 %v3030, 4294901760
    %v3032 = vsub.f32 %v3030, %v3031
    %v3033 = vand.u32 %v3032, 4294901760
    %3034 = vmatpush.msra.mxu0 %v3033
    %v3035 = vand.u32 %v193, 4294901760
    %v3036 = vsub.f32 %v193, %v3035
    %v3037 = vand.u32 %v3036, 4294901760
    %v3038 = vsub.f32 %v3036, %v3037
    %v3039 = vand.u32 %v3038, 4294901760
    %3040 = vmatpush.msra.mxu0 %v3039
    %v3041 = vand.u32 %v192, 4294901760
    %v3042 = vsub.f32 %v192, %v3041
    %v3043 = vand.u32 %v3042, 4294901760
    %v3044 = vsub.f32 %v3042, %v3043
    %v3045 = vand.u32 %v3044, 4294901760
    %3046 = vmatpush.msra.mxu0 %v3045
    %v3047 = vand.u32 %v191, 4294901760
    %v3048 = vsub.f32 %v191, %v3047
    %v3049 = vand.u32 %v3048, 4294901760
    %v3050 = vsub.f32 %v3048, %v3049
    %v3051 = vand.u32 %v3050, 4294901760
    %3052 = vmatpush.msra.mxu0 %v3051
    %v3053 = vand.u32 %v190, 4294901760
    %v3054 = vsub.f32 %v190, %v3053
    %v3055 = vand.u32 %v3054, 4294901760
    %v3056 = vsub.f32 %v3054, %v3055
    %v3057 = vand.u32 %v3056, 4294901760
    %3058 = vmatpush.msra.mxu0 %v3057
    %v3059 = vand.u32 %v189, 4294901760
    %v3060 = vsub.f32 %v189, %v3059
    %v3061 = vand.u32 %v3060, 4294901760
    %v3062 = vsub.f32 %v3060, %v3061
    %v3063 = vand.u32 %v3062, 4294901760
    %3064 = vmatpush.msra.mxu0 %v3063
    %v3065 = vand.u32 %v188, 4294901760
    %v3066 = vsub.f32 %v188, %v3065
    %v3067 = vand.u32 %v3066, 4294901760
    %v3068 = vsub.f32 %v3066, %v3067
    %v3069 = vand.u32 %v3068, 4294901760
    %3070 = vmatpush.msra.mxu0 %v3069
    %v3071 = vand.u32 %v187, 4294901760
    %v3072 = vsub.f32 %v187, %v3071
    %v3073 = vand.u32 %v3072, 4294901760
    %v3074 = vsub.f32 %v3072, %v3073
    %v3075 = vand.u32 %v3074, 4294901760
    %3076 = vmatpush.msra.mxu0 %v3075
    %v3077 = vand.u32 %v186, 4294901760
    %v3078 = vsub.f32 %v186, %v3077
    %v3079 = vand.u32 %v3078, 4294901760
    %v3080 = vsub.f32 %v3078, %v3079
    %v3081 = vand.u32 %v3080, 4294901760
    %3082 = vmatpush.msra.mxu0 %v3081
    %v3083 = vand.u32 %v56, 4294901760
    %3084 = vmatmul.f32.gmra.mxu0 %v3083
    %v3085 = vpop.f32.mrf.mxu0
    %v3086 = vadd.f32 %v2985, %v3085
    %3087 = vdwg.mxu0
    %v3088 = vand.u32 %v201, 4294901760
    %v3089 = vsub.f32 %v201, %v3088
    %3090 = vmatpush.msra.mxu0 %v3089
    %v3091 = vand.u32 %v200, 4294901760
    %v3092 = vsub.f32 %v200, %v3091
    %3093 = vmatpush.msra.mxu0 %v3092
    %v3094 = vand.u32 %v199, 4294901760
    %v3095 = vsub.f32 %v199, %v3094
    %3096 = vmatpush.msra.mxu0 %v3095
    %v3097 = vand.u32 %v198, 4294901760
    %v3098 = vsub.f32 %v198, %v3097
    %3099 = vmatpush.msra.mxu0 %v3098
    %v3100 = vand.u32 %v197, 4294901760
    %v3101 = vsub.f32 %v197, %v3100
    %3102 = vmatpush.msra.mxu0 %v3101
    %v3103 = vand.u32 %v196, 4294901760
    %v3104 = vsub.f32 %v196, %v3103
    %3105 = vmatpush.msra.mxu0 %v3104
    %v3106 = vand.u32 %v195, 4294901760
    %v3107 = vsub.f32 %v195, %v3106
    %3108 = vmatpush.msra.mxu0 %v3107
    %v3109 = vand.u32 %v194, 4294901760
    %v3110 = vsub.f32 %v194, %v3109
    %3111 = vmatpush.msra.mxu0 %v3110
    %v3112 = vand.u32 %v193, 4294901760
    %v3113 = vsub.f32 %v193, %v3112
    %3114 = vmatpush.msra.mxu0 %v3113
    %v3115 = vand.u32 %v192, 4294901760
    %v3116 = vsub.f32 %v192, %v3115
    %3117 = vmatpush.msra.mxu0 %v3116
    %v3118 = vand.u32 %v191, 4294901760
    %v3119 = vsub.f32 %v191, %v3118
    %3120 = vmatpush.msra.mxu0 %v3119
    %v3121 = vand.u32 %v190, 4294901760
    %v3122 = vsub.f32 %v190, %v3121
    %3123 = vmatpush.msra.mxu0 %v3122
    %v3124 = vand.u32 %v189, 4294901760
    %v3125 = vsub.f32 %v189, %v3124
    %3126 = vmatpush.msra.mxu0 %v3125
    %v3127 = vand.u32 %v188, 4294901760
    %v3128 = vsub.f32 %v188, %v3127
    %3129 = vmatpush.msra.mxu0 %v3128
    %v3130 = vand.u32 %v187, 4294901760
    %v3131 = vsub.f32 %v187, %v3130
    %3132 = vmatpush.msra.mxu0 %v3131
    %v3133 = vand.u32 %v186, 4294901760
    %v3134 = vsub.f32 %v186, %v3133
    %3135 = vmatpush.msra.mxu0 %v3134
    %v3136 = vand.u32 %v56, 4294901760
    %v3137 = vsub.f32 %v56, %v3136
    %3138 = vmatmul.f32.gmra.mxu0 %v3137
    %v3139 = vpop.f32.mrf.mxu0
    %v3140 = vadd.f32 %v3086, %v3139
    %3141 = vdwg.mxu0
    %v3142 = vand.u32 %v201, 4294901760
    %3143 = vmatpush.msra.mxu0 %v3142
    %v3144 = vand.u32 %v200, 4294901760
    %3145 = vmatpush.msra.mxu0 %v3144
    %v3146 = vand.u32 %v199, 4294901760
    %3147 = vmatpush.msra.mxu0 %v3146
    %v3148 = vand.u32 %v198, 4294901760
    %3149 = vmatpush.msra.mxu0 %v3148
    %v3150 = vand.u32 %v197, 4294901760
    %3151 = vmatpush.msra.mxu0 %v3150
    %v3152 = vand.u32 %v196, 4294901760
    %3153 = vmatpush.msra.mxu0 %v3152
    %v3154 = vand.u32 %v195, 4294901760
    %3155 = vmatpush.msra.mxu0 %v3154
    %v3156 = vand.u32 %v194, 4294901760
    %3157 = vmatpush.msra.mxu0 %v3156
    %v3158 = vand.u32 %v193, 4294901760
    %3159 = vmatpush.msra.mxu0 %v3158
    %v3160 = vand.u32 %v192, 4294901760
    %3161 = vmatpush.msra.mxu0 %v3160
    %v3162 = vand.u32 %v191, 4294901760
    %3163 = vmatpush.msra.mxu0 %v3162
    %v3164 = vand.u32 %v190, 4294901760
    %3165 = vmatpush.msra.mxu0 %v3164
    %v3166 = vand.u32 %v189, 4294901760
    %3167 = vmatpush.msra.mxu0 %v3166
    %v3168 = vand.u32 %v188, 4294901760
    %3169 = vmatpush.msra.mxu0 %v3168
    %v3170 = vand.u32 %v187, 4294901760
    %3171 = vmatpush.msra.mxu0 %v3170
    %v3172 = vand.u32 %v186, 4294901760
    %3173 = vmatpush.msra.mxu0 %v3172
    %v3174 = vand.u32 %v56, 4294901760
    %v3175 = vsub.f32 %v56, %v3174
    %v3176 = vand.u32 %v3175, 4294901760
    %3177 = vmatmul.f32.gmra.mxu0 %v3176
    %v3178 = vpop.f32.mrf.mxu0
    %v3179 = vadd.f32 %v3140, %v3178
    %3180 = vdwg.mxu0
    %v3181 = vand.u32 %v201, 4294901760
    %v3182 = vsub.f32 %v201, %v3181
    %v3183 = vand.u32 %v3182, 4294901760
    %3184 = vmatpush.msra.mxu0 %v3183
    %v3185 = vand.u32 %v200, 4294901760
    %v3186 = vsub.f32 %v200, %v3185
    %v3187 = vand.u32 %v3186, 4294901760
    %3188 = vmatpush.msra.mxu0 %v3187
    %v3189 = vand.u32 %v199, 4294901760
    %v3190 = vsub.f32 %v199, %v3189
    %v3191 = vand.u32 %v3190, 4294901760
    %3192 = vmatpush.msra.mxu0 %v3191
    %v3193 = vand.u32 %v198, 4294901760
    %v3194 = vsub.f32 %v198, %v3193
    %v3195 = vand.u32 %v3194, 4294901760
    %3196 = vmatpush.msra.mxu0 %v3195
    %v3197 = vand.u32 %v197, 4294901760
    %v3198 = vsub.f32 %v197, %v3197
    %v3199 = vand.u32 %v3198, 4294901760
    %3200 = vmatpush.msra.mxu0 %v3199
    %v3201 = vand.u32 %v196, 4294901760
    %v3202 = vsub.f32 %v196, %v3201
    %v3203 = vand.u32 %v3202, 4294901760
    %3204 = vmatpush.msra.mxu0 %v3203
    %v3205 = vand.u32 %v195, 4294901760
    %v3206 = vsub.f32 %v195, %v3205
    %v3207 = vand.u32 %v3206, 4294901760
    %3208 = vmatpush.msra.mxu0 %v3207
    %v3209 = vand.u32 %v194, 4294901760
    %v3210 = vsub.f32 %v194, %v3209
    %v3211 = vand.u32 %v3210, 4294901760
    %3212 = vmatpush.msra.mxu0 %v3211
    %v3213 = vand.u32 %v193, 4294901760
    %v3214 = vsub.f32 %v193, %v3213
    %v3215 = vand.u32 %v3214, 4294901760
    %3216 = vmatpush.msra.mxu0 %v3215
    %v3217 = vand.u32 %v192, 4294901760
    %v3218 = vsub.f32 %v192, %v3217
    %v3219 = vand.u32 %v3218, 4294901760
    %3220 = vmatpush.msra.mxu0 %v3219
    %v3221 = vand.u32 %v191, 4294901760
    %v3222 = vsub.f32 %v191, %v3221
    %v3223 = vand.u32 %v3222, 4294901760
    %3224 = vmatpush.msra.mxu0 %v3223
    %v3225 = vand.u32 %v190, 4294901760
    %v3226 = vsub.f32 %v190, %v3225
    %v3227 = vand.u32 %v3226, 4294901760
    %3228 = vmatpush.msra.mxu0 %v3227
    %v3229 = vand.u32 %v189, 4294901760
    %v3230 = vsub.f32 %v189, %v3229
    %v3231 = vand.u32 %v3230, 4294901760
    %3232 = vmatpush.msra.mxu0 %v3231
    %v3233 = vand.u32 %v188, 4294901760
    %v3234 = vsub.f32 %v188, %v3233
    %v3235 = vand.u32 %v3234, 4294901760
    %3236 = vmatpush.msra.mxu0 %v3235
    %v3237 = vand.u32 %v187, 4294901760
    %v3238 = vsub.f32 %v187, %v3237
    %v3239 = vand.u32 %v3238, 4294901760
    %3240 = vmatpush.msra.mxu0 %v3239
    %v3241 = vand.u32 %v186, 4294901760
    %v3242 = vsub.f32 %v186, %v3241
    %v3243 = vand.u32 %v3242, 4294901760
    %3244 = vmatpush.msra.mxu0 %v3243
    %v3245 = vand.u32 %v56, 4294901760
    %3246 = vmatmul.f32.gmra.mxu0 %v3245
    %v3247 = vpop.f32.mrf.mxu0
    %v3248 = vadd.f32 %v3179, %v3247
    %3249 = vdwg.mxu0
    %v3250 = vand.u32 %v201, 4294901760
    %3251 = vmatpush.msra.mxu0 %v3250
    %v3252 = vand.u32 %v200, 4294901760
    %3253 = vmatpush.msra.mxu0 %v3252
    %v3254 = vand.u32 %v199, 4294901760
    %3255 = vmatpush.msra.mxu0 %v3254
    %v3256 = vand.u32 %v198, 4294901760
    %3257 = vmatpush.msra.mxu0 %v3256
    %v3258 = vand.u32 %v197, 4294901760
    %3259 = vmatpush.msra.mxu0 %v3258
    %v3260 = vand.u32 %v196, 4294901760
    %3261 = vmatpush.msra.mxu0 %v3260
    %v3262 = vand.u32 %v195, 4294901760
    %3263 = vmatpush.msra.mxu0 %v3262
    %v3264 = vand.u32 %v194, 4294901760
    %3265 = vmatpush.msra.mxu0 %v3264
    %v3266 = vand.u32 %v193, 4294901760
    %3267 = vmatpush.msra.mxu0 %v3266
    %v3268 = vand.u32 %v192, 4294901760
    %3269 = vmatpush.msra.mxu0 %v3268
    %v3270 = vand.u32 %v191, 4294901760
    %3271 = vmatpush.msra.mxu0 %v3270
    %v3272 = vand.u32 %v190, 4294901760
    %3273 = vmatpush.msra.mxu0 %v3272
    %v3274 = vand.u32 %v189, 4294901760
    %3275 = vmatpush.msra.mxu0 %v3274
    %v3276 = vand.u32 %v188, 4294901760
    %3277 = vmatpush.msra.mxu0 %v3276
    %v3278 = vand.u32 %v187, 4294901760
    %3279 = vmatpush.msra.mxu0 %v3278
    %v3280 = vand.u32 %v186, 4294901760
    %3281 = vmatpush.msra.mxu0 %v3280
    %v3282 = vand.u32 %v56, 4294901760
    %3283 = vmatmul.f32.gmra.mxu0 %v3282
    %v3284 = vpop.f32.mrf.mxu0
    %v3285 = vadd.f32 %v3248, %v3284
    %3286 = vdwg.mxu0
    %v3287 = vand.u32 %v217, 4294901760
    %3288 = vmatpush.msra.mxu0 %v3287
    %v3289 = vand.u32 %v216, 4294901760
    %3290 = vmatpush.msra.mxu0 %v3289
    %v3291 = vand.u32 %v215, 4294901760
    %3292 = vmatpush.msra.mxu0 %v3291
    %v3293 = vand.u32 %v214, 4294901760
    %3294 = vmatpush.msra.mxu0 %v3293
    %v3295 = vand.u32 %v213, 4294901760
    %3296 = vmatpush.msra.mxu0 %v3295
    %v3297 = vand.u32 %v212, 4294901760
    %3298 = vmatpush.msra.mxu0 %v3297
    %v3299 = vand.u32 %v211, 4294901760
    %3300 = vmatpush.msra.mxu0 %v3299
    %v3301 = vand.u32 %v210, 4294901760
    %3302 = vmatpush.msra.mxu0 %v3301
    %v3303 = vand.u32 %v209, 4294901760
    %3304 = vmatpush.msra.mxu0 %v3303
    %v3305 = vand.u32 %v208, 4294901760
    %3306 = vmatpush.msra.mxu0 %v3305
    %v3307 = vand.u32 %v207, 4294901760
    %3308 = vmatpush.msra.mxu0 %v3307
    %v3309 = vand.u32 %v206, 4294901760
    %3310 = vmatpush.msra.mxu0 %v3309
    %v3311 = vand.u32 %v205, 4294901760
    %3312 = vmatpush.msra.mxu0 %v3311
    %v3313 = vand.u32 %v204, 4294901760
    %3314 = vmatpush.msra.mxu0 %v3313
    %v3315 = vand.u32 %v203, 4294901760
    %3316 = vmatpush.msra.mxu0 %v3315
    %v3317 = vand.u32 %v202, 4294901760
    %3318 = vmatpush.msra.mxu0 %v3317
    %v3319 = vand.u32 %v57, 4294901760
    %v3320 = vsub.f32 %v57, %v3319
    %v3321 = vand.u32 %v3320, 4294901760
    %v3322 = vsub.f32 %v3320, %v3321
    %v3323 = vand.u32 %v3322, 4294901760
    %3324 = vmatmul.f32.gmra.mxu0 %v3323
    %v3325 = vpop.f32.mrf.mxu0
    %v3326 = vadd.f32 %v3285, %v3325
    %3327 = vdwg.mxu0
    %v3328 = vand.u32 %v217, 4294901760
    %v3329 = vsub.f32 %v217, %v3328
    %v3330 = vand.u32 %v3329, 4294901760
    %v3331 = vsub.f32 %v3329, %v3330
    %v3332 = vand.u32 %v3331, 4294901760
    %3333 = vmatpush.msra.mxu0 %v3332
    %v3334 = vand.u32 %v216, 4294901760
    %v3335 = vsub.f32 %v216, %v3334
    %v3336 = vand.u32 %v3335, 4294901760
    %v3337 = vsub.f32 %v3335, %v3336
    %v3338 = vand.u32 %v3337, 4294901760
    %3339 = vmatpush.msra.mxu0 %v3338
    %v3340 = vand.u32 %v215, 4294901760
    %v3341 = vsub.f32 %v215, %v3340
    %v3342 = vand.u32 %v3341, 4294901760
    %v3343 = vsub.f32 %v3341, %v3342
    %v3344 = vand.u32 %v3343, 4294901760
    %3345 = vmatpush.msra.mxu0 %v3344
    %v3346 = vand.u32 %v214, 4294901760
    %v3347 = vsub.f32 %v214, %v3346
    %v3348 = vand.u32 %v3347, 4294901760
    %v3349 = vsub.f32 %v3347, %v3348
    %v3350 = vand.u32 %v3349, 4294901760
    %3351 = vmatpush.msra.mxu0 %v3350
    %v3352 = vand.u32 %v213, 4294901760
    %v3353 = vsub.f32 %v213, %v3352
    %v3354 = vand.u32 %v3353, 4294901760
    %v3355 = vsub.f32 %v3353, %v3354
    %v3356 = vand.u32 %v3355, 4294901760
    %3357 = vmatpush.msra.mxu0 %v3356
    %v3358 = vand.u32 %v212, 4294901760
    %v3359 = vsub.f32 %v212, %v3358
    %v3360 = vand.u32 %v3359, 4294901760
    %v3361 = vsub.f32 %v3359, %v3360
    %v3362 = vand.u32 %v3361, 4294901760
    %3363 = vmatpush.msra.mxu0 %v3362
    %v3364 = vand.u32 %v211, 4294901760
    %v3365 = vsub.f32 %v211, %v3364
    %v3366 = vand.u32 %v3365, 4294901760
    %v3367 = vsub.f32 %v3365, %v3366
    %v3368 = vand.u32 %v3367, 4294901760
    %3369 = vmatpush.msra.mxu0 %v3368
    %v3370 = vand.u32 %v210, 4294901760
    %v3371 = vsub.f32 %v210, %v3370
    %v3372 = vand.u32 %v3371, 4294901760
    %v3373 = vsub.f32 %v3371, %v3372
    %v3374 = vand.u32 %v3373, 4294901760
    %3375 = vmatpush.msra.mxu0 %v3374
    %v3376 = vand.u32 %v209, 4294901760
    %v3377 = vsub.f32 %v209, %v3376
    %v3378 = vand.u32 %v3377, 4294901760
    %v3379 = vsub.f32 %v3377, %v3378
    %v3380 = vand.u32 %v3379, 4294901760
    %3381 = vmatpush.msra.mxu0 %v3380
    %v3382 = vand.u32 %v208, 4294901760
    %v3383 = vsub.f32 %v208, %v3382
    %v3384 = vand.u32 %v3383, 4294901760
    %v3385 = vsub.f32 %v3383, %v3384
    %v3386 = vand.u32 %v3385, 4294901760
    %3387 = vmatpush.msra.mxu0 %v3386
    %v3388 = vand.u32 %v207, 4294901760
    %v3389 = vsub.f32 %v207, %v3388
    %v3390 = vand.u32 %v3389, 4294901760
    %v3391 = vsub.f32 %v3389, %v3390
    %v3392 = vand.u32 %v3391, 4294901760
    %3393 = vmatpush.msra.mxu0 %v3392
    %v3394 = vand.u32 %v206, 4294901760
    %v3395 = vsub.f32 %v206, %v3394
    %v3396 = vand.u32 %v3395, 4294901760
    %v3397 = vsub.f32 %v3395, %v3396
    %v3398 = vand.u32 %v3397, 4294901760
    %3399 = vmatpush.msra.mxu0 %v3398
    %v3400 = vand.u32 %v205, 4294901760
    %v3401 = vsub.f32 %v205, %v3400
    %v3402 = vand.u32 %v3401, 4294901760
    %v3403 = vsub.f32 %v3401, %v3402
    %v3404 = vand.u32 %v3403, 4294901760
    %3405 = vmatpush.msra.mxu0 %v3404
    %v3406 = vand.u32 %v204, 4294901760
    %v3407 = vsub.f32 %v204, %v3406
    %v3408 = vand.u32 %v3407, 4294901760
    %v3409 = vsub.f32 %v3407, %v3408
    %v3410 = vand.u32 %v3409, 4294901760
    %3411 = vmatpush.msra.mxu0 %v3410
    %v3412 = vand.u32 %v203, 4294901760
    %v3413 = vsub.f32 %v203, %v3412
    %v3414 = vand.u32 %v3413, 4294901760
    %v3415 = vsub.f32 %v3413, %v3414
    %v3416 = vand.u32 %v3415, 4294901760
    %3417 = vmatpush.msra.mxu0 %v3416
    %v3418 = vand.u32 %v202, 4294901760
    %v3419 = vsub.f32 %v202, %v3418
    %v3420 = vand.u32 %v3419, 4294901760
    %v3421 = vsub.f32 %v3419, %v3420
    %v3422 = vand.u32 %v3421, 4294901760
    %3423 = vmatpush.msra.mxu0 %v3422
    %v3424 = vand.u32 %v57, 4294901760
    %3425 = vmatmul.f32.gmra.mxu0 %v3424
    %v3426 = vpop.f32.mrf.mxu0
    %v3427 = vadd.f32 %v3326, %v3426
    %3428 = vdwg.mxu0
    %v3429 = vand.u32 %v217, 4294901760
    %v3430 = vsub.f32 %v217, %v3429
    %3431 = vmatpush.msra.mxu0 %v3430
    %v3432 = vand.u32 %v216, 4294901760
    %v3433 = vsub.f32 %v216, %v3432
    %3434 = vmatpush.msra.mxu0 %v3433
    %v3435 = vand.u32 %v215, 4294901760
    %v3436 = vsub.f32 %v215, %v3435
    %3437 = vmatpush.msra.mxu0 %v3436
    %v3438 = vand.u32 %v214, 4294901760
    %v3439 = vsub.f32 %v214, %v3438
    %3440 = vmatpush.msra.mxu0 %v3439
    %v3441 = vand.u32 %v213, 4294901760
    %v3442 = vsub.f32 %v213, %v3441
    %3443 = vmatpush.msra.mxu0 %v3442
    %v3444 = vand.u32 %v212, 4294901760
    %v3445 = vsub.f32 %v212, %v3444
    %3446 = vmatpush.msra.mxu0 %v3445
    %v3447 = vand.u32 %v211, 4294901760
    %v3448 = vsub.f32 %v211, %v3447
    %3449 = vmatpush.msra.mxu0 %v3448
    %v3450 = vand.u32 %v210, 4294901760
    %v3451 = vsub.f32 %v210, %v3450
    %3452 = vmatpush.msra.mxu0 %v3451
    %v3453 = vand.u32 %v209, 4294901760
    %v3454 = vsub.f32 %v209, %v3453
    %3455 = vmatpush.msra.mxu0 %v3454
    %v3456 = vand.u32 %v208, 4294901760
    %v3457 = vsub.f32 %v208, %v3456
    %3458 = vmatpush.msra.mxu0 %v3457
    %v3459 = vand.u32 %v207, 4294901760
    %v3460 = vsub.f32 %v207, %v3459
    %3461 = vmatpush.msra.mxu0 %v3460
    %v3462 = vand.u32 %v206, 4294901760
    %v3463 = vsub.f32 %v206, %v3462
    %3464 = vmatpush.msra.mxu0 %v3463
    %v3465 = vand.u32 %v205, 4294901760
    %v3466 = vsub.f32 %v205, %v3465
    %3467 = vmatpush.msra.mxu0 %v3466
    %v3468 = vand.u32 %v204, 4294901760
    %v3469 = vsub.f32 %v204, %v3468
    %3470 = vmatpush.msra.mxu0 %v3469
    %v3471 = vand.u32 %v203, 4294901760
    %v3472 = vsub.f32 %v203, %v3471
    %3473 = vmatpush.msra.mxu0 %v3472
    %v3474 = vand.u32 %v202, 4294901760
    %v3475 = vsub.f32 %v202, %v3474
    %3476 = vmatpush.msra.mxu0 %v3475
    %v3477 = vand.u32 %v57, 4294901760
    %v3478 = vsub.f32 %v57, %v3477
    %3479 = vmatmul.f32.gmra.mxu0 %v3478
    %v3480 = vpop.f32.mrf.mxu0
    %v3481 = vadd.f32 %v3427, %v3480
    %3482 = vdwg.mxu0
    %v3483 = vand.u32 %v217, 4294901760
    %3484 = vmatpush.msra.mxu0 %v3483
    %v3485 = vand.u32 %v216, 4294901760
    %3486 = vmatpush.msra.mxu0 %v3485
    %v3487 = vand.u32 %v215, 4294901760
    %3488 = vmatpush.msra.mxu0 %v3487
    %v3489 = vand.u32 %v214, 4294901760
    %3490 = vmatpush.msra.mxu0 %v3489
    %v3491 = vand.u32 %v213, 4294901760
    %3492 = vmatpush.msra.mxu0 %v3491
    %v3493 = vand.u32 %v212, 4294901760
    %3494 = vmatpush.msra.mxu0 %v3493
    %v3495 = vand.u32 %v211, 4294901760
    %3496 = vmatpush.msra.mxu0 %v3495
    %v3497 = vand.u32 %v210, 4294901760
    %3498 = vmatpush.msra.mxu0 %v3497
    %v3499 = vand.u32 %v209, 4294901760
    %3500 = vmatpush.msra.mxu0 %v3499
    %v3501 = vand.u32 %v208, 4294901760
    %3502 = vmatpush.msra.mxu0 %v3501
    %v3503 = vand.u32 %v207, 4294901760
    %3504 = vmatpush.msra.mxu0 %v3503
    %v3505 = vand.u32 %v206, 4294901760
    %3506 = vmatpush.msra.mxu0 %v3505
    %v3507 = vand.u32 %v205, 4294901760
    %3508 = vmatpush.msra.mxu0 %v3507
    %v3509 = vand.u32 %v204, 4294901760
    %3510 = vmatpush.msra.mxu0 %v3509
    %v3511 = vand.u32 %v203, 4294901760
    %3512 = vmatpush.msra.mxu0 %v3511
    %v3513 = vand.u32 %v202, 4294901760
    %3514 = vmatpush.msra.mxu0 %v3513
    %v3515 = vand.u32 %v57, 4294901760
    %v3516 = vsub.f32 %v57, %v3515
    %v3517 = vand.u32 %v3516, 4294901760
    %3518 = vmatmul.f32.gmra.mxu0 %v3517
    %v3519 = vpop.f32.mrf.mxu0
    %v3520 = vadd.f32 %v3481, %v3519
    %3521 = vdwg.mxu0
    %v3522 = vand.u32 %v217, 4294901760
    %v3523 = vsub.f32 %v217, %v3522
    %v3524 = vand.u32 %v3523, 4294901760
    %3525 = vmatpush.msra.mxu0 %v3524
    %v3526 = vand.u32 %v216, 4294901760
    %v3527 = vsub.f32 %v216, %v3526
    %v3528 = vand.u32 %v3527, 4294901760
    %3529 = vmatpush.msra.mxu0 %v3528
    %v3530 = vand.u32 %v215, 4294901760
    %v3531 = vsub.f32 %v215, %v3530
    %v3532 = vand.u32 %v3531, 4294901760
    %3533 = vmatpush.msra.mxu0 %v3532
    %v3534 = vand.u32 %v214, 4294901760
    %v3535 = vsub.f32 %v214, %v3534
    %v3536 = vand.u32 %v3535, 4294901760
    %3537 = vmatpush.msra.mxu0 %v3536
    %v3538 = vand.u32 %v213, 4294901760
    %v3539 = vsub.f32 %v213, %v3538
    %v3540 = vand.u32 %v3539, 4294901760
    %3541 = vmatpush.msra.mxu0 %v3540
    %v3542 = vand.u32 %v212, 4294901760
    %v3543 = vsub.f32 %v212, %v3542
    %v3544 = vand.u32 %v3543, 4294901760
    %3545 = vmatpush.msra.mxu0 %v3544
    %v3546 = vand.u32 %v211, 4294901760
    %v3547 = vsub.f32 %v211, %v3546
    %v3548 = vand.u32 %v3547, 4294901760
    %3549 = vmatpush.msra.mxu0 %v3548
    %v3550 = vand.u32 %v210, 4294901760
    %v3551 = vsub.f32 %v210, %v3550
    %v3552 = vand.u32 %v3551, 4294901760
    %3553 = vmatpush.msra.mxu0 %v3552
    %v3554 = vand.u32 %v209, 4294901760
    %v3555 = vsub.f32 %v209, %v3554
    %v3556 = vand.u32 %v3555, 4294901760
    %3557 = vmatpush.msra.mxu0 %v3556
    %v3558 = vand.u32 %v208, 4294901760
    %v3559 = vsub.f32 %v208, %v3558
    %v3560 = vand.u32 %v3559, 4294901760
    %3561 = vmatpush.msra.mxu0 %v3560
    %v3562 = vand.u32 %v207, 4294901760
    %v3563 = vsub.f32 %v207, %v3562
    %v3564 = vand.u32 %v3563, 4294901760
    %3565 = vmatpush.msra.mxu0 %v3564
    %v3566 = vand.u32 %v206, 4294901760
    %v3567 = vsub.f32 %v206, %v3566
    %v3568 = vand.u32 %v3567, 4294901760
    %3569 = vmatpush.msra.mxu0 %v3568
    %v3570 = vand.u32 %v205, 4294901760
    %v3571 = vsub.f32 %v205, %v3570
    %v3572 = vand.u32 %v3571, 4294901760
    %3573 = vmatpush.msra.mxu0 %v3572
    %v3574 = vand.u32 %v204, 4294901760
    %v3575 = vsub.f32 %v204, %v3574
    %v3576 = vand.u32 %v3575, 4294901760
    %3577 = vmatpush.msra.mxu0 %v3576
    %v3578 = vand.u32 %v203, 4294901760
    %v3579 = vsub.f32 %v203, %v3578
    %v3580 = vand.u32 %v3579, 4294901760
    %3581 = vmatpush.msra.mxu0 %v3580
    %v3582 = vand.u32 %v202, 4294901760
    %v3583 = vsub.f32 %v202, %v3582
    %v3584 = vand.u32 %v3583, 4294901760
    %3585 = vmatpush.msra.mxu0 %v3584
    %v3586 = vand.u32 %v57, 4294901760
    %3587 = vmatmul.f32.gmra.mxu0 %v3586
    %v3588 = vpop.f32.mrf.mxu0
    %v3589 = vadd.f32 %v3520, %v3588
    %3590 = vdwg.mxu0
    %v3591 = vand.u32 %v217, 4294901760
    %3592 = vmatpush.msra.mxu0 %v3591
    %v3593 = vand.u32 %v216, 4294901760
    %3594 = vmatpush.msra.mxu0 %v3593
    %v3595 = vand.u32 %v215, 4294901760
    %3596 = vmatpush.msra.mxu0 %v3595
    %v3597 = vand.u32 %v214, 4294901760
    %3598 = vmatpush.msra.mxu0 %v3597
    %v3599 = vand.u32 %v213, 4294901760
    %3600 = vmatpush.msra.mxu0 %v3599
    %v3601 = vand.u32 %v212, 4294901760
    %3602 = vmatpush.msra.mxu0 %v3601
    %v3603 = vand.u32 %v211, 4294901760
    %3604 = vmatpush.msra.mxu0 %v3603
    %v3605 = vand.u32 %v210, 4294901760
    %3606 = vmatpush.msra.mxu0 %v3605
    %v3607 = vand.u32 %v209, 4294901760
    %3608 = vmatpush.msra.mxu0 %v3607
    %v3609 = vand.u32 %v208, 4294901760
    %3610 = vmatpush.msra.mxu0 %v3609
    %v3611 = vand.u32 %v207, 4294901760
    %3612 = vmatpush.msra.mxu0 %v3611
    %v3613 = vand.u32 %v206, 4294901760
    %3614 = vmatpush.msra.mxu0 %v3613
    %v3615 = vand.u32 %v205, 4294901760
    %3616 = vmatpush.msra.mxu0 %v3615
    %v3617 = vand.u32 %v204, 4294901760
    %3618 = vmatpush.msra.mxu0 %v3617
    %v3619 = vand.u32 %v203, 4294901760
    %3620 = vmatpush.msra.mxu0 %v3619
    %v3621 = vand.u32 %v202, 4294901760
    %3622 = vmatpush.msra.mxu0 %v3621
    %v3623 = vand.u32 %v57, 4294901760
    %3624 = vmatmul.f32.gmra.mxu0 %v3623
    %v3625 = vpop.f32.mrf.mxu0
    %v3626 = vadd.f32 %v3589, %v3625
    %3627 = vdwg.mxu0
    %v3628 = vadd.f32 %v47, %v3626
    %3629 = vst [vmem:[#allocation2] sm:$0xff] %v3628
    // Predicated region
    $region22: #{tpu_custom_call.1} parent=1 // pred_check
      %p3630 = pneg %p42
    $region23: #{tpu_custom_call.1} parent=1 // pred_check_branch
      %3632 = sbr.rel (%p3630) target = $region25
    $region24: #{tpu_custom_call.1} parent=1 // pred_region
      %v3633 = vld [vmem:[#allocation2] sm:$0xff]
      %v3634 = vmul.f32 %v3633, 0.1
      %3635 = vst [vmem:[#allocation8] sm:$0xff] %v3634
    $region25: #{tpu_custom_call.1} parent=1 // pred_fallthru
      _
    // Predicated region
    $region26: #{tpu_custom_call.1} parent=1 // pred_check
      _
    $region27: #{tpu_custom_call.1} parent=1 // pred_check_branch
      %3637 = sbr.rel (0) target = $region29
    $region28: #{tpu_custom_call.1} parent=1 // pred_region
      %3639 = vsyncadd [#allocation5], 0
      %s3641 = sshll.u32 [#allocation8], 4
      %s3642 = int_to_ptr.vmem [resolvable:$true] %s3641
      %s3643 = sshll.u32 %s2, 4
      %s3644 = int_to_ptr.hbm [resolvable:$true] %s3643
      %3646 = dma.vmem_to_hbm [thread:$0]  %s3642, 128, %s3644, [#allocation5]
    $region29: #{tpu_custom_call.1} parent=1 // pred_fallthru
      _
    // Predicated region
    $region30: #{tpu_custom_call.1} parent=1 // pred_check
      _
    $region31: #{tpu_custom_call.1} parent=1 // pred_check_branch
      %3648 = sbr.rel (0) target = $region33
    $region32: #{tpu_custom_call.1} parent=1 // pred_region
      %3650 = dma.done [#allocation5], 128
    $region33: #{tpu_custom_call.1} parent=1 // pred_fallthru
      _
    %3651 = vsyncpa [#allocation4], 1
    %3652 = vsyncpa [#allocation7], 1
    %3653 = vsyncpa [#allocation5], 1

// kernel: tpu_custom_call.1
$region0: #{tpu_custom_call.1}
  #allocation0 [shape = 'u32[]', space=smem, size = 0x4, offset = 0x4, fixed_abs, tag = 'smem constant byte address 0x4 - core index']
  #allocation1 [shape = 'u32[72,128]{1,0:T(1,128)}', space=vmem, size = 0x9000, scoped, tag = 'internal scratch']
  #allocation2 [shape = 'f32[8,128]{1,0:T(8,128)}', space=vmem, size = 0x1000, scoped, tag = 'scratch operand']
  %s0 = inlined_call_operand.hbm [shape: f32[8,1280], index: 0, kind: input, shape index: {}]
  %s1 = inlined_call_operand.hbm [shape: f32[1280,128], index: 1, kind: input, shape index: {}]
  %s2 = inlined_call_operand.hbm [shape: f32[8,128], index: 2, kind: output, shape index: {}]
  %s3 = sld [smem:[#allocation0]]
  $region34: #{tpu_custom_call.1} parent=0
    _
  %s5 = ssub.s32 1, %s3
  %s6 = scalar_select 0, %s5, %s3
  $region1: #{tpu_custom_call.1} parent=0
    #allocation3 [shape = 'u8[40960]{0}', space=vmem, size = 0xa000, scoped, tag = 'input window, operand 0, single buffered']
    #allocation4 [shape = 's32[1]{0}', space=sflag, size = 0x4, scoped, tag = 'scoped memory for tpu_custom_call.1']
    #allocation5 [shape = 's32[1]{0}', space=sflag, size = 0x4, scoped, tag = 'scoped memory for tpu_custom_call.1']
    #allocation6 [shape = 'u8[655360]{0}', space=vmem, size = 0xa0000, scoped, tag = 'input window, operand 1, single buffered']
    #allocation7 [shape = 's32[1]{0}', space=sflag, size = 0x4, scoped, tag = 'scoped memory for tpu_custom_call.1']
    #allocation8 [shape = 'u8[4096]{0}', space=vmem, size = 0x1000, scoped, tag = 'output window, operand 0, single buffered']
    %7 = vsyncpa [#allocation4], 0
    %8 = vsyncpa [#allocation7], 0
    %9 = vsyncpa [#allocation5], 0
    // Predicated region
    $region2: #{tpu_custom_call.1} parent=1 // pred_check
      _
    $region3: #{tpu_custom_call.1} parent=1 // pred_check_branch
      %11 = sbr.rel (0) target = $region5
    $region4: #{tpu_custom_call.1} parent=1 // pred_region
      %13 = vsyncadd [#allocation4], 0
      %s15 = sshll.u32 %s0, 4
      %s16 = int_to_ptr.hbm [resolvable:$true] %s15
      %s17 = sshll.u32 [#allocation3], 4
      %s18 = int_to_ptr.vmem [resolvable:$true] %s17
      %20 = dma.hbm_to_vmem [thread:$0]  %s16, 1280, %s18, [#allocation4]
    $region5: #{tpu_custom_call.1} parent=1 // pred_fallthru
      _
    // Predicated region
    $region6: #{tpu_custom_call.1} parent=1 // pred_check
      _
    $region7: #{tpu_custom_call.1} parent=1 // pred_check_branch
      %22 = sbr.rel (0) target = $region9
    $region8: #{tpu_custom_call.1} parent=1 // pred_region
      %24 = vsyncadd [#allocation7], 0
      %s25 = sshll.u32 %s1, 4
      %s26 = int_to_ptr.hbm [resolvable:$true] %s25
      %s27 = sshll.u32 [#allocation6], 4
      %s28 = int_to_ptr.vmem [resolvable:$true] %s27
      %33 = dma.hbm_to_vmem [thread:$0]  %s26, 20480, %s28, [#allocation7], 128, 128, 8
    $region9: #{tpu_custom_call.1} parent=1 // pred_fallthru
      _
    // Predicated region
    $region10: #{tpu_custom_call.1} parent=1 // pred_check
      _
    $region11: #{tpu_custom_call.1} parent=1 // pred_check_branch
      %35 = sbr.rel (0) target = $region13
    $region12: #{tpu_custom_call.1} parent=1 // pred_region
      %37 = dma.done [#allocation4], 1280
    $region13: #{tpu_custom_call.1} parent=1 // pred_fallthru
      _
    // Predicated region
    $region14: #{tpu_custom_call.1} parent=1 // pred_check
      _
    $region15: #{tpu_custom_call.1} parent=1 // pred_check_branch
      %39 = sbr.rel (0) target = $region17
    $region16: #{tpu_custom_call.1} parent=1 // pred_region
      %41 = dma.done [#allocation7], 20480
    $region17: #{tpu_custom_call.1} parent=1 // pred_fallthru
      _
    %p42 = scmp.eq.s32.totalorder 0, 0
    // Predicated region
    $region18: #{tpu_custom_call.1} parent=1 // pred_check
      %p43 = pneg %p42
    $region19: #{tpu_custom_call.1} parent=1 // pred_check_branch
      %45 = sbr.rel (%p43) target = $region21
    $region20: #{tpu_custom_call.1} parent=1 // pred_region
      %46 = vst [vmem:[#allocation2] sm:$0xff] 0.0
    $region21: #{tpu_custom_call.1} parent=1 // pred_fallthru
      _
    %v47 = vld [vmem:[#allocation2] sm:$0xff]
    %v48 = vld [vmem:[#allocation3] sm:$0xff]
    %v49 = vld [vmem:[#allocation3 + $0x8] sm:$0xff]
    %v50 = vld [vmem:[#allocation3 + $0x10] sm:$0xff]
    %v51 = vld [vmem:[#allocation3 + $0x18] sm:$0xff]
    %v52 = vld [vmem:[#allocation3 + $0x20] sm:$0xff]
    %v53 = vld [vmem:[#allocation3 + $0x28] sm:$0xff]
    %v54 = vld [vmem:[#allocation3 + $0x30] sm:$0xff]
    %v55 = vld [vmem:[#allocation3 + $0x38] sm:$0xff]
    %v56 = vld [vmem:[#allocation3 + $0x40] sm:$0xff]
    %v57 = vld [vmem:[#allocation3 + $0x48] sm:$0xff]
    %v58 = vld [vmem:[#allocation6] sm:$0xff]
    %v59 = vld [vmem:[#allocation6 + $0x8] sm:$0xff]
    %v60 = vld [vmem:[#allocation6 + $0x10] sm:$0xff]
    %v61 = vld [vmem:[#allocation6 + $0x18] sm:$0xff]
    %v62 = vld [vmem:[#allocation6 + $0x20] sm:$0xff]
    %v63 = vld [vmem:[#allocation6 + $0x28] sm:$0xff]
    %v64 = vld [vmem:[#allocation6 + $0x30] sm:$0xff]
    %v65 = vld [vmem:[#allocation6 + $0x38] sm:$0xff]
    %v66 = vld [vmem:[#allocation6 + $0x40] sm:$0xff]
    %v67 = vld [vmem:[#allocation6 + $0x48] sm:$0xff]
    %v68 = vld [vmem:[#allocation6 + $0x50] sm:$0xff]
    %v69 = vld [vmem:[#allocation6 + $0x58] sm:$0xff]
    %v70 = vld [vmem:[#allocation6 + $0x60] sm:$0xff]
    %v71 = vld [vmem:[#allocation6 + $0x68] sm:$0xff]
    %v72 = vld [vmem:[#allocation6 + $0x70] sm:$0xff]
    %v73 = vld [vmem:[#allocation6 + $0x78] sm:$0xff]
    %v74 = vld [vmem:[#allocation6 + $0x80] sm:$0xff]
    %v75 = vld [vmem:[#allocation6 + $0x88] sm:$0xff]
    %v76 = vld [vmem:[#allocation6 + $0x90] sm:$0xff]
    %v77 = vld [vmem:[#allocation6 + $0x98] sm:$0xff]
    %v78 = vld [vmem:[#allocation6 + $0xa0] sm:$0xff]
    %v79 = vld [vmem:[#allocation6 + $0xa8] sm:$0xff]
    %v80 = vld [vmem:[#allocation6 + $0xb0] sm:$0xff]
    %v81 = vld [vmem:[#allocation6 + $0xb8] sm:$0xff]
    %v82 = vld [vmem:[#allocation6 + $0xc0] sm:$0xff]
    %v83 = vld [vmem:[#allocation6 + $0xc8] sm:$0xff]
    %v84 = vld [vmem:[#allocation6 + $0xd0] sm:$0xff]
    %v85 = vld [vmem:[#allocation6 + $0xd8] sm:$0xff]
    %v86 = vld [vmem:[#allocation6 + $0xe0] sm:$0xff]
    %v87 = vld [vmem:[#allocation6 + $0xe8] sm:$0xff]
    %v88 = vld [vmem:[#allocation6 + $0xf0] sm:$0xff]
    %v89 = vld [vmem:[#allocation6 + $0xf8] sm:$0xff]
    %v90 = vld [vmem:[#allocation6 + $0x100] sm:$0xff]
    %v91 = vld [vmem:[#allocation6 + $0x108] sm:$0xff]
    %v92 = vld [vmem:[#allocation6 + $0x110] sm:$0xff]
    %v93 = vld [vmem:[#allocation6 + $0x118] sm:$0xff]
    %v94 = vld [vmem:[#allocation6 + $0x120] sm:$0xff]
    %v95 = vld [vmem:[#allocation6 + $0x128] sm:$0xff]
    %v96 = vld [vmem:[#allocation6 + $0x130] sm:$0xff]
    %v97 = vld [vmem:[#allocation6 + $0x138] sm:$0xff]
    %v98 = vld [vmem:[#allocation6 + $0x140] sm:$0xff]
    %v99 = vld [vmem:[#allocation6 + $0x148] sm:$0xff]
    %v100 = vld [vmem:[#allocation6 + $0x150] sm:$0xff]
    %v101 = vld [vmem:[#allocation6 + $0x158] sm:$0xff]
    %v102 = vld [vmem:[#allocation6 + $0x160] sm:$0xff]
    %v103 = vld [vmem:[#allocation6 + $0x168] sm:$0xff]
    %v104 = vld [vmem:[#allocation6 + $0x170] sm:$0xff]
    %v105 = vld [vmem:[#allocation6 + $0x178] sm:$0xff]
    %v106 = vld [vmem:[#allocation6 + $0x180] sm:$0xff]
    %v107 = vld [vmem:[#allocation6 + $0x188] sm:$0xff]
    %v108 = vld [vmem:[#allocation6 + $0x190] sm:$0xff]
    %v109 = vld [vmem:[#allocation6 + $0x198] sm:$0xff]
    %v110 = vld [vmem:[#allocation6 + $0x1a0] sm:$0xff]
    %v111 = vld [vmem:[#allocation6 + $0x1a8] sm:$0xff]
    %v112 = vld [vmem:[#allocation6 + $0x1b0] sm:$0xff]
    %v113 = vld [vmem:[#allocation6 + $0x1b8] sm:$0xff]
    %v114 = vld [vmem:[#allocation6 + $0x1c0] sm:$0xff]
    %v115 = vld [vmem:[#allocation6 + $0x1c8] sm:$0xff]
    %v116 = vld [vmem:[#allocation6 + $0x1d0] sm:$0xff]
    %v117 = vld [vmem:[#allocation6 + $0x1d8] sm:$0xff]
    %v118 = vld [vmem:[#allocation6 + $0x1e0] sm:$0xff]
    %v119 = vld [vmem:[#allocation6 + $0x1e8] sm:$0xff]
    %v120 = vld [vmem:[#allocation6 + $0x1f0] sm:$0xff]
    %v121 = vld [vmem:[#allocation6 + $0x1f8] sm:$0xff]
    %v122 = vld [vmem:[#allocation6 + $0x200] sm:$0xff]
    %v123 = vld [vmem:[#allocation6 + $0x208] sm:$0xff]
    %v124 = vld [vmem:[#allocation6 + $0x210] sm:$0xff]
    %v125 = vld [vmem:[#allocation6 + $0x218] sm:$0xff]
    %v126 = vld [vmem:[#allocation6 + $0x220] sm:$0xff]
    %v127 = vld [vmem:[#allocation6 + $0x228] sm:$0xff]
    %v128 = vld [vmem:[#allocation6 + $0x230] sm:$0xff]
    %v129 = vld [vmem:[#allocation6 + $0x238] sm:$0xff]
    %v130 = vld [vmem:[#allocation6 + $0x240] sm:$0xff]
    %v131 = vld [vmem:[#allocation6 + $0x248] sm:$0xff]
    %v132 = vld [vmem:[#allocation6 + $0x250] sm:$0xff]
    %v133 = vld [vmem:[#allocation6 + $0x258] sm:$0xff]
    %v134 = vld [vmem:[#allocation6 + $0x260] sm:$0xff]
    %v135 = vld [vmem:[#allocation6 + $0x268] sm:$0xff]
    %v136 = vld [vmem:[#allocation6 + $0x270] sm:$0xff]
    %v137 = vld [vmem:[#allocation6 + $0x278] sm:$0xff]
    %v138 = vld [vmem:[#allocation6 + $0x280] sm:$0xff]
    %v139 = vld [vmem:[#allocation6 + $0x288] sm:$0xff]
    %v140 = vld [vmem:[#allocation6 + $0x290] sm:$0xff]
    %v141 = vld [vmem:[#allocation6 + $0x298] sm:$0xff]
    %v142 = vld [vmem:[#allocation6 + $0x2a0] sm:$0xff]
    %v143 = vld [vmem:[#allocation6 + $0x2a8] sm:$0xff]
    %v144 = vld [vmem:[#allocation6 + $0x2b0] sm:$0xff]
    %v145 = vld [vmem:[#allocation6 + $0x2b8] sm:$0xff]
    %v146 = vld [vmem:[#allocation6 + $0x2c0] sm:$0xff]
    %v147 = vld [vmem:[#allocation6 + $0x2c8] sm:$0xff]
    %v148 = vld [vmem:[#allocation6 + $0x2d0] sm:$0xff]
    %v149 = vld [vmem:[#allocation6 + $0x2d8] sm:$0xff]
    %v150 = vld [vmem:[#allocation6 + $0x2e0] sm:$0xff]
    %v151 = vld [vmem:[#allocation6 + $0x2e8] sm:$0xff]
    %v152 = vld [vmem:[#allocation6 + $0x2f0] sm:$0xff]
    %v153 = vld [vmem:[#allocation6 + $0x2f8] sm:$0xff]
    %v154 = vld [vmem:[#allocation6 + $0x300] sm:$0xff]
    %v155 = vld [vmem:[#allocation6 + $0x308] sm:$0xff]
    %v156 = vld [vmem:[#allocation6 + $0x310] sm:$0xff]
    %v157 = vld [vmem:[#allocation6 + $0x318] sm:$0xff]
    %v158 = vld [vmem:[#allocation6 + $0x320] sm:$0xff]
    %v159 = vld [vmem:[#allocation6 + $0x328] sm:$0xff]
    %v160 = vld [vmem:[#allocation6 + $0x330] sm:$0xff]
    %v161 = vld [vmem:[#allocation6 + $0x338] sm:$0xff]
    %v162 = vld [vmem:[#allocation6 + $0x340] sm:$0xff]
    %v163 = vld [vmem:[#allocation6 + $0x348] sm:$0xff]
    %v164 = vld [vmem:[#allocation6 + $0x350] sm:$0xff]
    %v165 = vld [vmem:[#allocation6 + $0x358] sm:$0xff]
    %v166 = vld [vmem:[#allocation6 + $0x360] sm:$0xff]
    %v167 = vld [vmem:[#allocation6 + $0x368] sm:$0xff]
    %v168 = vld [vmem:[#allocation6 + $0x370] sm:$0xff]
    %v169 = vld [vmem:[#allocation6 + $0x378] sm:$0xff]
    %v170 = vld [vmem:[#allocation6 + $0x380] sm:$0xff]
    %v171 = vld [vmem:[#allocation6 + $0x388] sm:$0xff]
    %v172 = vld [vmem:[#allocation6 + $0x390] sm:$0xff]
    %v173 = vld [vmem:[#allocation6 + $0x398] sm:$0xff]
    %v174 = vld [vmem:[#allocation6 + $0x3a0] sm:$0xff]
    %v175 = vld [vmem:[#allocation6 + $0x3a8] sm:$0xff]
    %v176 = vld [vmem:[#allocation6 + $0x3b0] sm:$0xff]
    %v177 = vld [vmem:[#allocation6 + $0x3b8] sm:$0xff]
    %v178 = vld [vmem:[#allocation6 + $0x3c0] sm:$0xff]
    %v179 = vld [vmem:[#allocation6 + $0x3c8] sm:$0xff]
    %v180 = vld [vmem:[#allocation6 + $0x3d0] sm:$0xff]
    %v181 = vld [vmem:[#allocation6 + $0x3d8] sm:$0xff]
    %v182 = vld [vmem:[#allocation6 + $0x3e0] sm:$0xff]
    %v183 = vld [vmem:[#allocation6 + $0x3e8] sm:$0xff]
    %v184 = vld [vmem:[#allocation6 + $0x3f0] sm:$0xff]
    %v185 = vld [vmem:[#allocation6 + $0x3f8] sm:$0xff]
    %v186 = vld [vmem:[#allocation6 + $0x400] sm:$0xff]
    %v187 = vld [vmem:[#allocation6 + $0x408] sm:$0xff]
    %v188 = vld [vmem:[#allocation6 + $0x410] sm:$0xff]
    %v189 = vld [vmem:[#allocation6 + $0x418] sm:$0xff]
    %v190 = vld [vmem:[#allocation6 + $0x420] sm:$0xff]
    %v191 = vld [vmem:[#allocation6 + $0x428] sm:$0xff]
    %v192 = vld [vmem:[#allocation6 + $0x430] sm:$0xff]
    %v193 = vld [vmem:[#allocation6 + $0x438] sm:$0xff]
    %v194 = vld [vmem:[#allocation6 + $0x440] sm:$0xff]
    %v195 = vld [vmem:[#allocation6 + $0x448] sm:$0xff]
    %v196 = vld [vmem:[#allocation6 + $0x450] sm:$0xff]
    %v197 = vld [vmem:[#allocation6 + $0x458] sm:$0xff]
    %v198 = vld [vmem:[#allocation6 + $0x460] sm:$0xff]
    %v199 = vld [vmem:[#allocation6 + $0x468] sm:$0xff]
    %v200 = vld [vmem:[#allocation6 + $0x470] sm:$0xff]
    %v201 = vld [vmem:[#allocation6 + $0x478] sm:$0xff]
    %v202 = vld [vmem:[#allocation6 + $0x480] sm:$0xff]
    %v203 = vld [vmem:[#allocation6 + $0x488] sm:$0xff]
    %v204 = vld [vmem:[#allocation6 + $0x490] sm:$0xff]
    %v205 = vld [vmem:[#allocation6 + $0x498] sm:$0xff]
    %v206 = vld [vmem:[#allocation6 + $0x4a0] sm:$0xff]
    %v207 = vld [vmem:[#allocation6 + $0x4a8] sm:$0xff]
    %v208 = vld [vmem:[#allocation6 + $0x4b0] sm:$0xff]
    %v209 = vld [vmem:[#allocation6 + $0x4b8] sm:$0xff]
    %v210 = vld [vmem:[#allocation6 + $0x4c0] sm:$0xff]
    %v211 = vld [vmem:[#allocation6 + $0x4c8] sm:$0xff]
    %v212 = vld [vmem:[#allocation6 + $0x4d0] sm:$0xff]
    %v213 = vld [vmem:[#allocation6 + $0x4d8] sm:$0xff]
    %v214 = vld [vmem:[#allocation6 + $0x4e0] sm:$0xff]
    %v215 = vld [vmem:[#allocation6 + $0x4e8] sm:$0xff]
    %v216 = vld [vmem:[#allocation6 + $0x4f0] sm:$0xff]
    %v217 = vld [vmem:[#allocation6 + $0x4f8] sm:$0xff]
    %v218 = vand.u32 %v73, 4294901760
    %219 = vmatpush.msra.mxu0 %v218
    %v220 = vand.u32 %v72, 4294901760
    %221 = vmatpush.msra.mxu0 %v220
    %v222 = vand.u32 %v71, 4294901760
    %223 = vmatpush.msra.mxu0 %v222
    %v224 = vand.u32 %v70, 4294901760
    %225 = vmatpush.msra.mxu0 %v224
    %v226 = vand.u32 %v69, 4294901760
    %227 = vmatpush.msra.mxu0 %v226
    %v228 = vand.u32 %v68, 4294901760
    %229 = vmatpush.msra.mxu0 %v228
    %v230 = vand.u32 %v67, 4294901760
    %231 = vmatpush.msra.mxu0 %v230
    %v232 = vand.u32 %v66, 4294901760
    %233 = vmatpush.msra.mxu0 %v232
    %v234 = vand.u32 %v65, 4294901760
    %235 = vmatpush.msra.mxu0 %v234
    %v236 = vand.u32 %v64, 4294901760
    %237 = vmatpush.msra.mxu0 %v236
    %v238 = vand.u32 %v63, 4294901760
    %239 = vmatpush.msra.mxu0 %v238
    %v240 = vand.u32 %v62, 4294901760
    %241 = vmatpush.msra.mxu0 %v240
    %v242 = vand.u32 %v61, 4294901760
    %243 = vmatpush.msra.mxu0 %v242
    %v244 = vand.u32 %v60, 4294901760
    %245 = vmatpush.msra.mxu0 %v244
    %v246 = vand.u32 %v59, 4294901760
    %247 = vmatpush.msra.mxu0 %v246
    %v248 = vand.u32 %v58, 4294901760
    %249 = vmatpush.msra.mxu0 %v248
    %v250 = vand.u32 %v48, 4294901760
    %v251 = vsub.f32 %v48, %v250
    %v252 = vand.u32 %v251, 4294901760
    %v253 = vsub.f32 %v251, %v252
    %v254 = vand.u32 %v253, 4294901760
    %255 = vmatmul.f32.gmra.mxu0 %v254
    %v256 = vpop.f32.mrf.mxu0
    %v257 = vadd.f32 0.0, %v256
    %258 = vdwg.mxu0
    %v259 = vand.u32 %v73, 4294901760
    %v260 = vsub.f32 %v73, %v259
    %v261 = vand.u32 %v260, 4294901760
    %v262 = vsub.f32 %v260, %v261
    %v263 = vand.u32 %v262, 4294901760
    %264 = vmatpush.msra.mxu0 %v263
    %v265 = vand.u32 %v72, 4294901760
    %v266 = vsub.f32 %v72, %v265
    %v267 = vand.u32 %v266, 4294901760
    %v268 = vsub.f32 %v266, %v267
    %v269 = vand.u32 %v268, 4294901760
    %270 = vmatpush.msra.mxu0 %v269
    %v271 = vand.u32 %v71, 4294901760
    %v272 = vsub.f32 %v71, %v271
    %v273 = vand.u32 %v272, 4294901760
    %v274 = vsub.f32 %v272, %v273
    %v275 = vand.u32 %v274, 4294901760
    %276 = vmatpush.msra.mxu0 %v275
    %v277 = vand.u32 %v70, 4294901760
    %v278 = vsub.f32 %v70, %v277
    %v279 = vand.u32 %v278, 4294901760
    %v280 = vsub.f32 %v278, %v279
    %v281 = vand.u32 %v280, 4294901760
    %282 = vmatpush.msra.mxu0 %v281
    %v283 = vand.u32 %v69, 4294901760
    %v284 = vsub.f32 %v69, %v283
    %v285 = vand.u32 %v284, 4294901760
    %v286 = vsub.f32 %v284, %v285
    %v287 = vand.u32 %v286, 4294901760
    %288 = vmatpush.msra.mxu0 %v287
    %v289 = vand.u32 %v68, 4294901760
    %v290 = vsub.f32 %v68, %v289
    %v291 = vand.u32 %v290, 4294901760
    %v292 = vsub.f32 %v290, %v291
    %v293 = vand.u32 %v292, 4294901760
    %294 = vmatpush.msra.mxu0 %v293
    %v295 = vand.u32 %v67, 4294901760
    %v296 = vsub.f32 %v67, %v295
    %v297 = vand.u32 %v296, 4294901760
    %v298 = vsub.f32 %v296, %v297
    %v299 = vand.u32 %v298, 4294901760
    %300 = vmatpush.msra.mxu0 %v299
    %v301 = vand.u32 %v66, 4294901760
    %v302 = vsub.f32 %v66, %v301
    %v303 = vand.u32 %v302, 4294901760
    %v304 = vsub.f32 %v302, %v303
    %v305 = vand.u32 %v304, 4294901760
    %306 = vmatpush.msra.mxu0 %v305
    %v307 = vand.u32 %v65, 4294901760
    %v308 = vsub.f32 %v65, %v307
    %v309 = vand.u32 %v308, 4294901760
    %v310 = vsub.f32 %v308, %v309
    %v311 = vand.u32 %v310, 4294901760
    %312 = vmatpush.msra.mxu0 %v311
    %v313 = vand.u32 %v64, 4294901760
    %v314 = vsub.f32 %v64, %v313
    %v315 = vand.u32 %v314, 4294901760
    %v316 = vsub.f32 %v314, %v315
    %v317 = vand.u32 %v316, 4294901760
    %318 = vmatpush.msra.mxu0 %v317
    %v319 = vand.u32 %v63, 4294901760
    %v320 = vsub.f32 %v63, %v319
    %v321 = vand.u32 %v320, 4294901760
    %v322 = vsub.f32 %v320, %v321
    %v323 = vand.u32 %v322, 4294901760
    %324 = vmatpush.msra.mxu0 %v323
    %v325 = vand.u32 %v62, 4294901760
    %v326 = vsub.f32 %v62, %v325
    %v327 = vand.u32 %v326, 4294901760
    %v328 = vsub.f32 %v326, %v327
    %v329 = vand.u32 %v328, 4294901760
    %330 = vmatpush.msra.mxu0 %v329
    %v331 = vand.u32 %v61, 4294901760
    %v332 = vsub.f32 %v61, %v331
    %v333 = vand.u32 %v332, 4294901760
    %v334 = vsub.f32 %v332, %v333
    %v335 = vand.u32 %v334, 4294901760
    %336 = vmatpush.msra.mxu0 %v335
    %v337 = vand.u32 %v60, 4294901760
    %v338 = vsub.f32 %v60, %v337
    %v339 = vand.u32 %v338, 4294901760
    %v340 = vsub.f32 %v338, %v339
    %v341 = vand.u32 %v340, 4294901760
    %342 = vmatpush.msra.mxu0 %v341
    %v343 = vand.u32 %v59, 4294901760
    %v344 = vsub.f32 %v59, %v343
    %v345 = vand.u32 %v344, 4294901760
    %v346 = vsub.f32 %v344, %v345
    %v347 = vand.u32 %v346, 4294901760
    %348 = vmatpush.msra.mxu0 %v347
    %v349 = vand.u32 %v58, 4294901760
    %v350 = vsub.f32 %v58, %v349
    %v351 = vand.u32 %v350, 4294901760
    %v352 = vsub.f32 %v350, %v351
    %v353 = vand.u32 %v352, 4294901760
    %354 = vmatpush.msra.mxu0 %v353
    %v355 = vand.u32 %v48, 4294901760
    %356 = vmatmul.f32.gmra.mxu0 %v355
    %v357 = vpop.f32.mrf.mxu0
    %v358 = vadd.f32 %v257, %v357
    %359 = vdwg.mxu0
    %v360 = vand.u32 %v73, 4294901760
    %v361 = vsub.f32 %v73, %v360
    %362 = vmatpush.msra.mxu0 %v361
    %v363 = vand.u32 %v72, 4294901760
    %v364 = vsub.f32 %v72, %v363
    %365 = vmatpush.msra.mxu0 %v364
    %v366 = vand.u32 %v71, 4294901760
    %v367 = vsub.f32 %v71, %v366
    %368 = vmatpush.msra.mxu0 %v367
    %v369 = vand.u32 %v70, 4294901760
    %v370 = vsub.f32 %v70, %v369
    %371 = vmatpush.msra.mxu0 %v370
    %v372 = vand.u32 %v69, 4294901760
    %v373 = vsub.f32 %v69, %v372
    %374 = vmatpush.msra.mxu0 %v373
    %v375 = vand.u32 %v68, 4294901760
    %v376 = vsub.f32 %v68, %v375
    %377 = vmatpush.msra.mxu0 %v376
    %v378 = vand.u32 %v67, 4294901760
    %v379 = vsub.f32 %v67, %v378
    %380 = vmatpush.msra.mxu0 %v379
    %v381 = vand.u32 %v66, 4294901760
    %v382 = vsub.f32 %v66, %v381
    %383 = vmatpush.msra.mxu0 %v382
    %v384 = vand.u32 %v65, 4294901760
    %v385 = vsub.f32 %v65, %v384
    %386 = vmatpush.msra.mxu0 %v385
    %v387 = vand.u32 %v64, 4294901760
    %v388 = vsub.f32 %v64, %v387
    %389 = vmatpush.msra.mxu0 %v388
    %v390 = vand.u32 %v63, 4294901760
    %v391 = vsub.f32 %v63, %v390
    %392 = vmatpush.msra.mxu0 %v391
    %v393 = vand.u32 %v62, 4294901760
    %v394 = vsub.f32 %v62, %v393
    %395 = vmatpush.msra.mxu0 %v394
    %v396 = vand.u32 %v61, 4294901760
    %v397 = vsub.f32 %v61, %v396
    %398 = vmatpush.msra.mxu0 %v397
    %v399 = vand.u32 %v60, 4294901760
    %v400 = vsub.f32 %v60, %v399
    %401 = vmatpush.msra.mxu0 %v400
    %v402 = vand.u32 %v59, 4294901760
    %v403 = vsub.f32 %v59, %v402
    %404 = vmatpush.msra.mxu0 %v403
    %v405 = vand.u32 %v58, 4294901760
    %v406 = vsub.f32 %v58, %v405
    %407 = vmatpush.msra.mxu0 %v406
    %v408 = vand.u32 %v48, 4294901760
    %v409 = vsub.f32 %v48, %v408
    %410 = vmatmul.f32.gmra.mxu0 %v409
    %v411 = vpop.f32.mrf.mxu0
    %v412 = vadd.f32 %v358, %v411
    %413 = vdwg.mxu0
    %v414 = vand.u32 %v73, 4294901760
    %415 = vmatpush.msra.mxu0 %v414
    %v416 = vand.u32 %v72, 4294901760
    %417 = vmatpush.msra.mxu0 %v416
    %v418 = vand.u32 %v71, 4294901760
    %419 = vmatpush.msra.mxu0 %v418
    %v420 = vand.u32 %v70, 4294901760
    %421 = vmatpush.msra.mxu0 %v420
    %v422 = vand.u32 %v69, 4294901760
    %423 = vmatpush.msra.mxu0 %v422
    %v424 = vand.u32 %v68, 4294901760
    %425 = vmatpush.msra.mxu0 %v424
    %v426 = vand.u32 %v67, 4294901760
    %427 = vmatpush.msra.mxu0 %v426
    %v428 = vand.u32 %v66, 4294901760
    %429 = vmatpush.msra.mxu0 %v428
    %v430 = vand.u32 %v65, 4294901760
    %431 = vmatpush.msra.mxu0 %v430
    %v432 = vand.u32 %v64, 4294901760
    %433 = vmatpush.msra.mxu0 %v432
    %v434 = vand.u32 %v63, 4294901760
    %435 = vmatpush.msra.mxu0 %v434
    %v436 = vand.u32 %v62, 4294901760
    %437 = vmatpush.msra.mxu0 %v436
    %v438 = vand.u32 %v61, 4294901760
    %439 = vmatpush.msra.mxu0 %v438
    %v440 = vand.u32 %v60, 4294901760
    %441 = vmatpush.msra.mxu0 %v440
    %v442 = vand.u32 %v59, 4294901760
    %443 = vmatpush.msra.mxu0 %v442
    %v444 = vand.u32 %v58, 4294901760
    %445 = vmatpush.msra.mxu0 %v444
    %v446 = vand.u32 %v48, 4294901760
    %v447 = vsub.f32 %v48, %v446
    %v448 = vand.u32 %v447, 4294901760
    %449 = vmatmul.f32.gmra.mxu0 %v448
    %v450 = vpop.f32.mrf.mxu0
    %v451 = vadd.f32 %v412, %v450
    %452 = vdwg.mxu0
    %v453 = vand.u32 %v73, 4294901760
    %v454 = vsub.f32 %v73, %v453
    %v455 = vand.u32 %v454, 4294901760
    %456 = vmatpush.msra.mxu0 %v455
    %v457 = vand.u32 %v72, 4294901760
    %v458 = vsub.f32 %v72, %v457
    %v459 = vand.u32 %v458, 4294901760
    %460 = vmatpush.msra.mxu0 %v459
    %v461 = vand.u32 %v71, 4294901760
    %v462 = vsub.f32 %v71, %v461
    %v463 = vand.u32 %v462, 4294901760
    %464 = vmatpush.msra.mxu0 %v463
    %v465 = vand.u32 %v70, 4294901760
    %v466 = vsub.f32 %v70, %v465
    %v467 = vand.u32 %v466, 4294901760
    %468 = vmatpush.msra.mxu0 %v467
    %v469 = vand.u32 %v69, 4294901760
    %v470 = vsub.f32 %v69, %v469
    %v471 = vand.u32 %v470, 4294901760
    %472 = vmatpush.msra.mxu0 %v471
    %v473 = vand.u32 %v68, 4294901760
    %v474 = vsub.f32 %v68, %v473
    %v475 = vand.u32 %v474, 4294901760
    %476 = vmatpush.msra.mxu0 %v475
    %v477 = vand.u32 %v67, 4294901760
    %v478 = vsub.f32 %v67, %v477
    %v479 = vand.u32 %v478, 4294901760
    %480 = vmatpush.msra.mxu0 %v479
    %v481 = vand.u32 %v66, 4294901760
    %v482 = vsub.f32 %v66, %v481
    %v483 = vand.u32 %v482, 4294901760
    %484 = vmatpush.msra.mxu0 %v483
    %v485 = vand.u32 %v65, 4294901760
    %v486 = vsub.f32 %v65, %v485
    %v487 = vand.u32 %v486, 4294901760
    %488 = vmatpush.msra.mxu0 %v487
    %v489 = vand.u32 %v64, 4294901760
    %v490 = vsub.f32 %v64, %v489
    %v491 = vand.u32 %v490, 4294901760
    %492 = vmatpush.msra.mxu0 %v491
    %v493 = vand.u32 %v63, 4294901760
    %v494 = vsub.f32 %v63, %v493
    %v495 = vand.u32 %v494, 4294901760
    %496 = vmatpush.msra.mxu0 %v495
    %v497 = vand.u32 %v62, 4294901760
    %v498 = vsub.f32 %v62, %v497
    %v499 = vand.u32 %v498, 4294901760
    %500 = vmatpush.msra.mxu0 %v499
    %v501 = vand.u32 %v61, 4294901760
    %v502 = vsub.f32 %v61, %v501
    %v503 = vand.u32 %v502, 4294901760
    %504 = vmatpush.msra.mxu0 %v503
    %v505 = vand.u32 %v60, 4294901760
    %v506 = vsub.f32 %v60, %v505
    %v507 = vand.u32 %v506, 4294901760
    %508 = vmatpush.msra.mxu0 %v507
    %v509 = vand.u32 %v59, 4294901760
    %v510 = vsub.f32 %v59, %v509
    %v511 = vand.u32 %v510, 4294901760
    %512 = vmatpush.msra.mxu0 %v511
    %v513 = vand.u32 %v58, 4294901760
    %v514 = vsub.f32 %v58, %v513
    %v515 = vand.u32 %v514, 4294901760
    %516 = vmatpush.msra.mxu0 %v515
    %v517 = vand.u32 %v48, 4294901760
    %518 = vmatmul.f32.gmra.mxu0 %v517
    %v519 = vpop.f32.mrf.mxu0
    %v520 = vadd.f32 %v451, %v519
    %521 = vdwg.mxu0
    %v522 = vand.u32 %v73, 4294901760
    %523 = vmatpush.msra.mxu0 %v522
    %v524 = vand.u32 %v72, 4294901760
    %525 = vmatpush.msra.mxu0 %v524
    %v526 = vand.u32 %v71, 4294901760
    %527 = vmatpush.msra.mxu0 %v526
    %v528 = vand.u32 %v70, 4294901760
    %529 = vmatpush.msra.mxu0 %v528
    %v530 = vand.u32 %v69, 4294901760
    %531 = vmatpush.msra.mxu0 %v530
    %v532 = vand.u32 %v68, 4294901760
    %533 = vmatpush.msra.mxu0 %v532
    %v534 = vand.u32 %v67, 4294901760
    %535 = vmatpush.msra.mxu0 %v534
    %v536 = vand.u32 %v66, 4294901760
    %537 = vmatpush.msra.mxu0 %v536
    %v538 = vand.u32 %v65, 4294901760
    %539 = vmatpush.msra.mxu0 %v538
    %v540 = vand.u32 %v64, 4294901760
    %541 = vmatpush.msra.mxu0 %v540
    %v542 = vand.u32 %v63, 4294901760
    %543 = vmatpush.msra.mxu0 %v542
    %v544 = vand.u32 %v62, 4294901760
    %545 = vmatpush.msra.mxu0 %v544
    %v546 = vand.u32 %v61, 4294901760
    %547 = vmatpush.msra.mxu0 %v546
    %v548 = vand.u32 %v60, 4294901760
    %549 = vmatpush.msra.mxu0 %v548
    %v550 = vand.u32 %v59, 4294901760
    %551 = vmatpush.msra.mxu0 %v550
    %v552 = vand.u32 %v58, 4294901760
    %553 = vmatpush.msra.mxu0 %v552
    %v554 = vand.u32 %v48, 4294901760
    %555 = vmatmul.f32.gmra.mxu0 %v554
    %v556 = vpop.f32.mrf.mxu0
    %v557 = vadd.f32 %v520, %v556
    %558 = vdwg.mxu0
    %v559 = vand.u32 %v89, 4294901760
    %560 = vmatpush.msra.mxu0 %v559
    %v561 = vand.u32 %v88, 4294901760
    %562 = vmatpush.msra.mxu0 %v561
    %v563 = vand.u32 %v87, 4294901760
    %564 = vmatpush.msra.mxu0 %v563
    %v565 = vand.u32 %v86, 4294901760
    %566 = vmatpush.msra.mxu0 %v565
    %v567 = vand.u32 %v85, 4294901760
    %568 = vmatpush.msra.mxu0 %v567
    %v569 = vand.u32 %v84, 4294901760
    %570 = vmatpush.msra.mxu0 %v569
    %v571 = vand.u32 %v83, 4294901760
    %572 = vmatpush.msra.mxu0 %v571
    %v573 = vand.u32 %v82, 4294901760
    %574 = vmatpush.msra.mxu0 %v573
    %v575 = vand.u32 %v81, 4294901760
    %576 = vmatpush.msra.mxu0 %v575
    %v577 = vand.u32 %v80, 4294901760
    %578 = vmatpush.msra.mxu0 %v577
    %v579 = vand.u32 %v79, 4294901760
    %580 = vmatpush.msra.mxu0 %v579
    %v581 = vand.u32 %v78, 4294901760
    %582 = vmatpush.msra.mxu0 %v581
    %v583 = vand.u32 %v77, 4294901760
    %584 = vmatpush.msra.mxu0 %v583
    %v585 = vand.u32 %v76, 4294901760
    %586 = vmatpush.msra.mxu0 %v585
    %v587 = vand.u32 %v75, 4294901760
    %588 = vmatpush.msra.mxu0 %v587
    %v589 = vand.u32 %v74, 4294901760
    %590 = vmatpush.msra.mxu0 %v589
    %v591 = vand.u32 %v49, 4294901760
    %v592 = vsub.f32 %v49, %v591
    %v593 = vand.u32 %v592, 4294901760
    %v594 = vsub.f32 %v592, %v593
    %v595 = vand.u32 %v594, 4294901760
    %596 = vmatmul.f32.gmra.mxu0 %v595
    %v597 = vpop.f32.mrf.mxu0
    %v598 = vadd.f32 %v557, %v597
    %599 = vdwg.mxu0
    %v600 = vand.u32 %v89, 4294901760
    %v601 = vsub.f32 %v89, %v600
    %v602 = vand.u32 %v601, 4294901760
    %v603 = vsub.f32 %v601, %v602
    %v604 = vand.u32 %v603, 4294901760
    %605 = vmatpush.msra.mxu0 %v604
    %v606 = vand.u32 %v88, 4294901760
    %v607 = vsub.f32 %v88, %v606
    %v608 = vand.u32 %v607, 4294901760
    %v609 = vsub.f32 %v607, %v608
    %v610 = vand.u32 %v609, 4294901760
    %611 = vmatpush.msra.mxu0 %v610
    %v612 = vand.u32 %v87, 4294901760
    %v613 = vsub.f32 %v87, %v612
    %v614 = vand.u32 %v613, 4294901760
    %v615 = vsub.f32 %v613, %v614
    %v616 = vand.u32 %v615, 4294901760
    %617 = vmatpush.msra.mxu0 %v616
    %v618 = vand.u32 %v86, 4294901760
    %v619 = vsub.f32 %v86, %v618
    %v620 = vand.u32 %v619, 4294901760
    %v621 = vsub.f32 %v619, %v620
    %v622 = vand.u32 %v621, 4294901760
    %623 = vmatpush.msra.mxu0 %v622
    %v624 = vand.u32 %v85, 4294901760
    %v625 = vsub.f32 %v85, %v624
    %v626 = vand.u32 %v625, 4294901760
    %v627 = vsub.f32 %v625, %v626
    %v628 = vand.u32 %v627, 4294901760
    %629 = vmatpush.msra.mxu0 %v628
    %v630 = vand.u32 %v84, 4294901760
    %v631 = vsub.f32 %v84, %v630
    %v632 = vand.u32 %v631, 4294901760
    %v633 = vsub.f32 %v631, %v632
    %v634 = vand.u32 %v633, 4294901760
    %635 = vmatpush.msra.mxu0 %v634
    %v636 = vand.u32 %v83, 4294901760
    %v637 = vsub.f32 %v83, %v636
    %v638 = vand.u32 %v637, 4294901760
    %v639 = vsub.f32 %v637, %v638
    %v640 = vand.u32 %v639, 4294901760
    %641 = vmatpush.msra.mxu0 %v640
    %v642 = vand.u32 %v82, 4294901760
    %v643 = vsub.f32 %v82, %v642
    %v644 = vand.u32 %v643, 4294901760
    %v645 = vsub.f32 %v643, %v644
    %v646 = vand.u32 %v645, 4294901760
    %647 = vmatpush.msra.mxu0 %v646
    %v648 = vand.u32 %v81, 4294901760
    %v649 = vsub.f32 %v81, %v648
    %v650 = vand.u32 %v649, 4294901760
    %v651 = vsub.f32 %v649, %v650
    %v652 = vand.u32 %v651, 4294901760
    %653 = vmatpush.msra.mxu0 %v652
    %v654 = vand.u32 %v80, 4294901760
    %v655 = vsub.f32 %v80, %v654
    %v656 = vand.u32 %v655, 4294901760
    %v657 = vsub.f32 %v655, %v656
    %v658 = vand.u32 %v657, 4294901760
    %659 = vmatpush.msra.mxu0 %v658
    %v660 = vand.u32 %v79, 4294901760
    %v661 = vsub.f32 %v79, %v660
    %v662 = vand.u32 %v661, 4294901760
    %v663 = vsub.f32 %v661, %v662
    %v664 = vand.u32 %v663, 4294901760
    %665 = vmatpush.msra.mxu0 %v664
    %v666 = vand.u32 %v78, 4294901760
    %v667 = vsub.f32 %v78, %v666
    %v668 = vand.u32 %v667, 4294901760
    %v669 = vsub.f32 %v667, %v668
    %v670 = vand.u32 %v669, 4294901760
    %671 = vmatpush.msra.mxu0 %v670
    %v672 = vand.u32 %v77, 4294901760
    %v673 = vsub.f32 %v77, %v672
    %v674 = vand.u32 %v673, 4294901760
    %v675 = vsub.f32 %v673, %v674
    %v676 = vand.u32 %v675, 4294901760
    %677 = vmatpush.msra.mxu0 %v676
    %v678 = vand.u32 %v76, 4294901760
    %v679 = vsub.f32 %v76, %v678
    %v680 = vand.u32 %v679, 4294901760
    %v681 = vsub.f32 %v679, %v680
    %v682 = vand.u32 %v681, 4294901760
    %683 = vmatpush.msra.mxu0 %v682
    %v684 = vand.u32 %v75, 4294901760
    %v685 = vsub.f32 %v75, %v684
    %v686 = vand.u32 %v685, 4294901760
    %v687 = vsub.f32 %v685, %v686
    %v688 = vand.u32 %v687, 4294901760
    %689 = vmatpush.msra.mxu0 %v688
    %v690 = vand.u32 %v74, 4294901760
    %v691 = vsub.f32 %v74, %v690
    %v692 = vand.u32 %v691, 4294901760
    %v693 = vsub.f32 %v691, %v692
    %v694 = vand.u32 %v693, 4294901760
    %695 = vmatpush.msra.mxu0 %v694
    %v696 = vand.u32 %v49, 4294901760
    %697 = vmatmul.f32.gmra.mxu0 %v696
    %v698 = vpop.f32.mrf.mxu0
    %v699 = vadd.f32 %v598, %v698
    %700 = vdwg.mxu0
    %v701 = vand.u32 %v89, 4294901760
    %v702 = vsub.f32 %v89, %v701
    %703 = vmatpush.msra.mxu0 %v702
    %v704 = vand.u32 %v88, 4294901760
    %v705 = vsub.f32 %v88, %v704
    %706 = vmatpush.msra.mxu0 %v705
    %v707 = vand.u32 %v87, 4294901760
    %v708 = vsub.f32 %v87, %v707
    %709 = vmatpush.msra.mxu0 %v708
    %v710 = vand.u32 %v86, 4294901760
    %v711 = vsub.f32 %v86, %v710
    %712 = vmatpush.msra.mxu0 %v711
    %v713 = vand.u32 %v85, 4294901760
    %v714 = vsub.f32 %v85, %v713
    %715 = vmatpush.msra.mxu0 %v714
    %v716 = vand.u32 %v84, 4294901760
    %v717 = vsub.f32 %v84, %v716
    %718 = vmatpush.msra.mxu0 %v717
    %v719 = vand.u32 %v83, 4294901760
    %v720 = vsub.f32 %v83, %v719
    %721 = vmatpush.msra.mxu0 %v720
    %v722 = vand.u32 %v82, 4294901760
    %v723 = vsub.f32 %v82, %v722
    %724 = vmatpush.msra.mxu0 %v723
    %v725 = vand.u32 %v81, 4294901760
    %v726 = vsub.f32 %v81, %v725
    %727 = vmatpush.msra.mxu0 %v726
    %v728 = vand.u32 %v80, 4294901760
    %v729 = vsub.f32 %v80, %v728
    %730 = vmatpush.msra.mxu0 %v729
    %v731 = vand.u32 %v79, 4294901760
    %v732 = vsub.f32 %v79, %v731
    %733 = vmatpush.msra.mxu0 %v732
    %v734 = vand.u32 %v78, 4294901760
    %v735 = vsub.f32 %v78, %v734
    %736 = vmatpush.msra.mxu0 %v735
    %v737 = vand.u32 %v77, 4294901760
    %v738 = vsub.f32 %v77, %v737
    %739 = vmatpush.msra.mxu0 %v738
    %v740 = vand.u32 %v76, 4294901760
    %v741 = vsub.f32 %v76, %v740
    %742 = vmatpush.msra.mxu0 %v741
    %v743 = vand.u32 %v75, 4294901760
    %v744 = vsub.f32 %v75, %v743
    %745 = vmatpush.msra.mxu0 %v744
    %v746 = vand.u32 %v74, 4294901760
    %v747 = vsub.f32 %v74, %v746
    %748 = vmatpush.msra.mxu0 %v747
    %v749 = vand.u32 %v49, 4294901760
    %v750 = vsub.f32 %v49, %v749
    %751 = vmatmul.f32.gmra.mxu0 %v750
    %v752 = vpop.f32.mrf.mxu0
    %v753 = vadd.f32 %v699, %v752
    %754 = vdwg.mxu0
    %v755 = vand.u32 %v89, 4294901760
    %756 = vmatpush.msra.mxu0 %v755
    %v757 = vand.u32 %v88, 4294901760
    %758 = vmatpush.msra.mxu0 %v757
    %v759 = vand.u32 %v87, 4294901760
    %760 = vmatpush.msra.mxu0 %v759
    %v761 = vand.u32 %v86, 4294901760
    %762 = vmatpush.msra.mxu0 %v761
    %v763 = vand.u32 %v85, 4294901760
    %764 = vmatpush.msra.mxu0 %v763
    %v765 = vand.u32 %v84, 4294901760
    %766 = vmatpush.msra.mxu0 %v765
    %v767 = vand.u32 %v83, 4294901760
    %768 = vmatpush.msra.mxu0 %v767
    %v769 = vand.u32 %v82, 4294901760
    %770 = vmatpush.msra.mxu0 %v769
    %v771 = vand.u32 %v81, 4294901760
    %772 = vmatpush.msra.mxu0 %v771
    %v773 = vand.u32 %v80, 4294901760
    %774 = vmatpush.msra.mxu0 %v773
    %v775 = vand.u32 %v79, 4294901760
    %776 = vmatpush.msra.mxu0 %v775
    %v777 = vand.u32 %v78, 4294901760
    %778 = vmatpush.msra.mxu0 %v777
    %v779 = vand.u32 %v77, 4294901760
    %780 = vmatpush.msra.mxu0 %v779
    %v781 = vand.u32 %v76, 4294901760
    %782 = vmatpush.msra.mxu0 %v781
    %v783 = vand.u32 %v75, 4294901760
    %784 = vmatpush.msra.mxu0 %v783
    %v785 = vand.u32 %v74, 4294901760
    %786 = vmatpush.msra.mxu0 %v785
    %v787 = vand.u32 %v49, 4294901760
    %v788 = vsub.f32 %v49, %v787
    %v789 = vand.u32 %v788, 4294901760
    %790 = vmatmul.f32.gmra.mxu0 %v789
    %v791 = vpop.f32.mrf.mxu0
    %v792 = vadd.f32 %v753, %v791
    %793 = vdwg.mxu0
    %v794 = vand.u32 %v89, 4294901760
    %v795 = vsub.f32 %v89, %v794
    %v796 = vand.u32 %v795, 4294901760
    %797 = vmatpush.msra.mxu0 %v796
    %v798 = vand.u32 %v88, 4294901760
    %v799 = vsub.f32 %v88, %v798
    %v800 = vand.u32 %v799, 4294901760
    %801 = vmatpush.msra.mxu0 %v800
    %v802 = vand.u32 %v87, 4294901760
    %v803 = vsub.f32 %v87, %v802
    %v804 = vand.u32 %v803, 4294901760
    %805 = vmatpush.msra.mxu0 %v804
    %v806 = vand.u32 %v86, 4294901760
    %v807 = vsub.f32 %v86, %v806
    %v808 = vand.u32 %v807, 4294901760
    %809 = vmatpush.msra.mxu0 %v808
    %v810 = vand.u32 %v85, 4294901760
    %v811 = vsub.f32 %v85, %v810
    %v812 = vand.u32 %v811, 4294901760
    %813 = vmatpush.msra.mxu0 %v812
    %v814 = vand.u32 %v84, 4294901760
    %v815 = vsub.f32 %v84, %v814
    %v816 = vand.u32 %v815, 4294901760
    %817 = vmatpush.msra.mxu0 %v816
    %v818 = vand.u32 %v83, 4294901760
    %v819 = vsub.f32 %v83, %v818
    %v820 = vand.u32 %v819, 4294901760
    %821 = vmatpush.msra.mxu0 %v820
    %v822 = vand.u32 %v82, 4294901760
    %v823 = vsub.f32 %v82, %v822
    %v824 = vand.u32 %v823, 4294901760
    %825 = vmatpush.msra.mxu0 %v824
    %v826 = vand.u32 %v81, 4294901760
    %v827 = vsub.f32 %v81, %v826
    %v828 = vand.u32 %v827, 4294901760
    %829 = vmatpush.msra.mxu0 %v828
    %v830 = vand.u32 %v80, 4294901760
    %v831 = vsub.f32 %v80, %v830
    %v832 = vand.u32 %v831, 4294901760
    %833 = vmatpush.msra.mxu0 %v832
    %v834 = vand.u32 %v79, 4294901760
    %v835 = vsub.f32 %v79, %v834
    %v836 = vand.u32 %v835, 4294901760
    %837 = vmatpush.msra.mxu0 %v836
    %v838 = vand.u32 %v78, 4294901760
    %v839 = vsub.f32 %v78, %v838
    %v840 = vand.u32 %v839, 4294901760
    %841 = vmatpush.msra.mxu0 %v840
    %v842 = vand.u32 %v77, 4294901760
    %v843 = vsub.f32 %v77, %v842
    %v844 = vand.u32 %v843, 4294901760
    %845 = vmatpush.msra.mxu0 %v844
    %v846 = vand.u32 %v76, 4294901760
    %v847 = vsub.f32 %v76, %v846
    %v848 = vand.u32 %v847, 4294901760
    %849 = vmatpush.msra.mxu0 %v848
    %v850 = vand.u32 %v75, 4294901760
    %v851 = vsub.f32 %v75, %v850
    %v852 = vand.u32 %v851, 4294901760
    %853 = vmatpush.msra.mxu0 %v852
    %v854 = vand.u32 %v74, 4294901760
    %v855 = vsub.f32 %v74, %v854
    %v856 = vand.u32 %v855, 4294901760
    %857 = vmatpush.msra.mxu0 %v856
    %v858 = vand.u32 %v49, 4294901760
    %859 = vmatmul.f32.gmra.mxu0 %v858
    %v860 = vpop.f32.mrf.mxu0
    %v861 = vadd.f32 %v792, %v860
    %862 = vdwg.mxu0
    %v863 = vand.u32 %v89, 4294901760
    %864 = vmatpush.msra.mxu0 %v863
    %v865 = vand.u32 %v88, 4294901760
    %866 = vmatpush.msra.mxu0 %v865
    %v867 = vand.u32 %v87, 4294901760
    %868 = vmatpush.msra.mxu0 %v867
    %v869 = vand.u32 %v86, 4294901760
    %870 = vmatpush.msra.mxu0 %v869
    %v871 = vand.u32 %v85, 4294901760
    %872 = vmatpush.msra.mxu0 %v871
    %v873 = vand.u32 %v84, 4294901760
    %874 = vmatpush.msra.mxu0 %v873
    %v875 = vand.u32 %v83, 4294901760
    %876 = vmatpush.msra.mxu0 %v875
    %v877 = vand.u32 %v82, 4294901760
    %878 = vmatpush.msra.mxu0 %v877
    %v879 = vand.u32 %v81, 4294901760
    %880 = vmatpush.msra.mxu0 %v879
    %v881 = vand.u32 %v80, 4294901760
    %882 = vmatpush.msra.mxu0 %v881
    %v883 = vand.u32 %v79, 4294901760
    %884 = vmatpush.msra.mxu0 %v883
    %v885 = vand.u32 %v78, 4294901760
    %886 = vmatpush.msra.mxu0 %v885
    %v887 = vand.u32 %v77, 4294901760
    %888 = vmatpush.msra.mxu0 %v887
    %v889 = vand.u32 %v76, 4294901760
    %890 = vmatpush.msra.mxu0 %v889
    %v891 = vand.u32 %v75, 4294901760
    %892 = vmatpush.msra.mxu0 %v891
    %v893 = vand.u32 %v74, 4294901760
    %894 = vmatpush.msra.mxu0 %v893
    %v895 = vand.u32 %v49, 4294901760
    %896 = vmatmul.f32.gmra.mxu0 %v895
    %v897 = vpop.f32.mrf.mxu0
    %v898 = vadd.f32 %v861, %v897
    %899 = vdwg.mxu0
    %v900 = vand.u32 %v105, 4294901760
    %901 = vmatpush.msra.mxu0 %v900
    %v902 = vand.u32 %v104, 4294901760
    %903 = vmatpush.msra.mxu0 %v902
    %v904 = vand.u32 %v103, 4294901760
    %905 = vmatpush.msra.mxu0 %v904
    %v906 = vand.u32 %v102, 4294901760
    %907 = vmatpush.msra.mxu0 %v906
    %v908 = vand.u32 %v101, 4294901760
    %909 = vmatpush.msra.mxu0 %v908
    %v910 = vand.u32 %v100, 4294901760
    %911 = vmatpush.msra.mxu0 %v910
    %v912 = vand.u32 %v99, 4294901760
    %913 = vmatpush.msra.mxu0 %v912
    %v914 = vand.u32 %v98, 4294901760
    %915 = vmatpush.msra.mxu0 %v914
    %v916 = vand.u32 %v97, 4294901760
    %917 = vmatpush.msra.mxu0 %v916
    %v918 = vand.u32 %v96, 4294901760
    %919 = vmatpush.msra.mxu0 %v918
    %v920 = vand.u32 %v95, 4294901760
    %921 = vmatpush.msra.mxu0 %v920
    %v922 = vand.u32 %v94, 4294901760
    %923 = vmatpush.msra.mxu0 %v922
    %v924 = vand.u32 %v93, 4294901760
    %925 = vmatpush.msra.mxu0 %v924
    %v926 = vand.u32 %v92, 4294901760
    %927 = vmatpush.msra.mxu0 %v926
    %v928 = vand.u32 %v91, 4294901760
    %929 = vmatpush.msra.mxu0 %v928
    %v930 = vand.u32 %v90, 4294901760
    %931 = vmatpush.msra.mxu0 %v930
    %v932 = vand.u32 %v50, 4294901760
    %v933 = vsub.f32 %v50, %v932
    %v934 = vand.u32 %v933, 4294901760
    %v935 = vsub.f32 %v933, %v934
    %v936 = vand.u32 %v935, 4294901760
    %937 = vmatmul.f32.gmra.mxu0 %v936
    %v938 = vpop.f32.mrf.mxu0
    %v939 = vadd.f32 %v898, %v938
    %940 = vdwg.mxu0
    %v941 = vand.u32 %v105, 4294901760
    %v942 = vsub.f32 %v105, %v941
    %v943 = vand.u32 %v942, 4294901760
    %v944 = vsub.f32 %v942, %v943
    %v945 = vand.u32 %v944, 4294901760
    %946 = vmatpush.msra.mxu0 %v945
    %v947 = vand.u32 %v104, 4294901760
    %v948 = vsub.f32 %v104, %v947
    %v949 = vand.u32 %v948, 4294901760
    %v950 = vsub.f32 %v948, %v949
    %v951 = vand.u32 %v950, 4294901760
    %952 = vmatpush.msra.mxu0 %v951
    %v953 = vand.u32 %v103, 4294901760
    %v954 = vsub.f32 %v103, %v953
    %v955 = vand.u32 %v954, 4294901760
    %v956 = vsub.f32 %v954, %v955
    %v957 = vand.u32 %v956, 4294901760
    %958 = vmatpush.msra.mxu0 %v957
    %v959 = vand.u32 %v102, 4294901760
    %v960 = vsub.f32 %v102, %v959
    %v961 = vand.u32 %v960, 4294901760
    %v962 = vsub.f32 %v960, %v961
    %v963 = vand.u32 %v962, 4294901760
    %964 = vmatpush.msra.mxu0 %v963
    %v965 = vand.u32 %v101, 4294901760
    %v966 = vsub.f32 %v101, %v965
    %v967 = vand.u32 %v966, 4294901760
    %v968 = vsub.f32 %v966, %v967
    %v969 = vand.u32 %v968, 4294901760
    %970 = vmatpush.msra.mxu0 %v969
    %v971 = vand.u32 %v100, 4294901760
    %v972 = vsub.f32 %v100, %v971
    %v973 = vand.u32 %v972, 4294901760
    %v974 = vsub.f32 %v972, %v973
    %v975 = vand.u32 %v974, 4294901760
    %976 = vmatpush.msra.mxu0 %v975
    %v977 = vand.u32 %v99, 4294901760
    %v978 = vsub.f32 %v99, %v977
    %v979 = vand.u32 %v978, 4294901760
    %v980 = vsub.f32 %v978, %v979
    %v981 = vand.u32 %v980, 4294901760
    %982 = vmatpush.msra.mxu0 %v981
    %v983 = vand.u32 %v98, 4294901760
    %v984 = vsub.f32 %v98, %v983
    %v985 = vand.u32 %v984, 4294901760
    %v986 = vsub.f32 %v984, %v985
    %v987 = vand.u32 %v986, 4294901760
    %988 = vmatpush.msra.mxu0 %v987
    %v989 = vand.u32 %v97, 4294901760
    %v990 = vsub.f32 %v97, %v989
    %v991 = vand.u32 %v990, 4294901760
    %v992 = vsub.f32 %v990, %v991
    %v993 = vand.u32 %v992, 4294901760
    %994 = vmatpush.msra.mxu0 %v993
    %v995 = vand.u32 %v96, 4294901760
    %v996 = vsub.f32 %v96, %v995
    %v997 = vand.u32 %v996, 4294901760
    %v998 = vsub.f32 %v996, %v997
    %v999 = vand.u32 %v998, 4294901760
    %1000 = vmatpush.msra.mxu0 %v999
    %v1001 = vand.u32 %v95, 4294901760
    %v1002 = vsub.f32 %v95, %v1001
    %v1003 = vand.u32 %v1002, 4294901760
    %v1004 = vsub.f32 %v1002, %v1003
    %v1005 = vand.u32 %v1004, 4294901760
    %1006 = vmatpush.msra.mxu0 %v1005
    %v1007 = vand.u32 %v94, 4294901760
    %v1008 = vsub.f32 %v94, %v1007
    %v1009 = vand.u32 %v1008, 4294901760
    %v1010 = vsub.f32 %v1008, %v1009
    %v1011 = vand.u32 %v1010, 4294901760
    %1012 = vmatpush.msra.mxu0 %v1011
    %v1013 = vand.u32 %v93, 4294901760
    %v1014 = vsub.f32 %v93, %v1013
    %v1015 = vand.u32 %v1014, 4294901760
    %v1016 = vsub.f32 %v1014, %v1015
    %v1017 = vand.u32 %v1016, 4294901760
    %1018 = vmatpush.msra.mxu0 %v1017
    %v1019 = vand.u32 %v92, 4294901760
    %v1020 = vsub.f32 %v92, %v1019
    %v1021 = vand.u32 %v1020, 4294901760
    %v1022 = vsub.f32 %v1020, %v1021
    %v1023 = vand.u32 %v1022, 4294901760
    %1024 = vmatpush.msra.mxu0 %v1023
    %v1025 = vand.u32 %v91, 4294901760
    %v1026 = vsub.f32 %v91, %v1025
    %v1027 = vand.u32 %v1026, 4294901760
    %v1028 = vsub.f32 %v1026, %v1027
    %v1029 = vand.u32 %v1028, 4294901760
    %1030 = vmatpush.msra.mxu0 %v1029
    %v1031 = vand.u32 %v90, 4294901760
    %v1032 = vsub.f32 %v90, %v1031
    %v1033 = vand.u32 %v1032, 4294901760
    %v1034 = vsub.f32 %v1032, %v1033
    %v1035 = vand.u32 %v1034, 4294901760
    %1036 = vmatpush.msra.mxu0 %v1035
    %v1037 = vand.u32 %v50, 4294901760
    %1038 = vmatmul.f32.gmra.mxu0 %v1037
    %v1039 = vpop.f32.mrf.mxu0
    %v1040 = vadd.f32 %v939, %v1039
    %1041 = vdwg.mxu0
    %v1042 = vand.u32 %v105, 4294901760
    %v1043 = vsub.f32 %v105, %v1042
    %1044 = vmatpush.msra.mxu0 %v1043
    %v1045 = vand.u32 %v104, 4294901760
    %v1046 = vsub.f32 %v104, %v1045
    %1047 = vmatpush.msra.mxu0 %v1046
    %v1048 = vand.u32 %v103, 4294901760
    %v1049 = vsub.f32 %v103, %v1048
    %1050 = vmatpush.msra.mxu0 %v1049
    %v1051 = vand.u32 %v102, 4294901760
    %v1052 = vsub.f32 %v102, %v1051
    %1053 = vmatpush.msra.mxu0 %v1052
    %v1054 = vand.u32 %v101, 4294901760
    %v1055 = vsub.f32 %v101, %v1054
    %1056 = vmatpush.msra.mxu0 %v1055
    %v1057 = vand.u32 %v100, 4294901760
    %v1058 = vsub.f32 %v100, %v1057
    %1059 = vmatpush.msra.mxu0 %v1058
    %v1060 = vand.u32 %v99, 4294901760
    %v1061 = vsub.f32 %v99, %v1060
    %1062 = vmatpush.msra.mxu0 %v1061
    %v1063 = vand.u32 %v98, 4294901760
    %v1064 = vsub.f32 %v98, %v1063
    %1065 = vmatpush.msra.mxu0 %v1064
    %v1066 = vand.u32 %v97, 4294901760
    %v1067 = vsub.f32 %v97, %v1066
    %1068 = vmatpush.msra.mxu0 %v1067
    %v1069 = vand.u32 %v96, 4294901760
    %v1070 = vsub.f32 %v96, %v1069
    %1071 = vmatpush.msra.mxu0 %v1070
    %v1072 = vand.u32 %v95, 4294901760
    %v1073 = vsub.f32 %v95, %v1072
    %1074 = vmatpush.msra.mxu0 %v1073
    %v1075 = vand.u32 %v94, 4294901760
    %v1076 = vsub.f32 %v94, %v1075
    %1077 = vmatpush.msra.mxu0 %v1076
    %v1078 = vand.u32 %v93, 4294901760
    %v1079 = vsub.f32 %v93, %v1078
    %1080 = vmatpush.msra.mxu0 %v1079
    %v1081 = vand.u32 %v92, 4294901760
    %v1082 = vsub.f32 %v92, %v1081
    %1083 = vmatpush.msra.mxu0 %v1082
    %v1084 = vand.u32 %v91, 4294901760
    %v1085 = vsub.f32 %v91, %v1084
    %1086 = vmatpush.msra.mxu0 %v1085
    %v1087 = vand.u32 %v90, 4294901760
    %v1088 = vsub.f32 %v90, %v1087
    %1089 = vmatpush.msra.mxu0 %v1088
    %v1090 = vand.u32 %v50, 4294901760
    %v1091 = vsub.f32 %v50, %v1090
    %1092 = vmatmul.f32.gmra.mxu0 %v1091
    %v1093 = vpop.f32.mrf.mxu0
    %v1094 = vadd.f32 %v1040, %v1093
    %1095 = vdwg.mxu0
    %v1096 = vand.u32 %v105, 4294901760
    %1097 = vmatpush.msra.mxu0 %v1096
    %v1098 = vand.u32 %v104, 4294901760
    %1099 = vmatpush.msra.mxu0 %v1098
    %v1100 = vand.u32 %v103, 4294901760
    %1101 = vmatpush.msra.mxu0 %v1100
    %v1102 = vand.u32 %v102, 4294901760
    %1103 = vmatpush.msra.mxu0 %v1102
    %v1104 = vand.u32 %v101, 4294901760
    %1105 = vmatpush.msra.mxu0 %v1104
    %v1106 = vand.u32 %v100, 4294901760
    %1107 = vmatpush.msra.mxu0 %v1106
    %v1108 = vand.u32 %v99, 4294901760
    %1109 = vmatpush.msra.mxu0 %v1108
    %v1110 = vand.u32 %v98, 4294901760
    %1111 = vmatpush.msra.mxu0 %v1110
    %v1112 = vand.u32 %v97, 4294901760
    %1113 = vmatpush.msra.mxu0 %v1112
    %v1114 = vand.u32 %v96, 4294901760
    %1115 = vmatpush.msra.mxu0 %v1114
    %v1116 = vand.u32 %v95, 4294901760
    %1117 = vmatpush.msra.mxu0 %v1116
    %v1118 = vand.u32 %v94, 4294901760
    %1119 = vmatpush.msra.mxu0 %v1118
    %v1120 = vand.u32 %v93, 4294901760
    %1121 = vmatpush.msra.mxu0 %v1120
    %v1122 = vand.u32 %v92, 4294901760
    %1123 = vmatpush.msra.mxu0 %v1122
    %v1124 = vand.u32 %v91, 4294901760
    %1125 = vmatpush.msra.mxu0 %v1124
    %v1126 = vand.u32 %v90, 4294901760
    %1127 = vmatpush.msra.mxu0 %v1126
    %v1128 = vand.u32 %v50, 4294901760
    %v1129 = vsub.f32 %v50, %v1128
    %v1130 = vand.u32 %v1129, 4294901760
    %1131 = vmatmul.f32.gmra.mxu0 %v1130
    %v1132 = vpop.f32.mrf.mxu0
    %v1133 = vadd.f32 %v1094, %v1132
    %1134 = vdwg.mxu0
    %v1135 = vand.u32 %v105, 4294901760
    %v1136 = vsub.f32 %v105, %v1135
    %v1137 = vand.u32 %v1136, 4294901760
    %1138 = vmatpush.msra.mxu0 %v1137
    %v1139 = vand.u32 %v104, 4294901760
    %v1140 = vsub.f32 %v104, %v1139
    %v1141 = vand.u32 %v1140, 4294901760
    %1142 = vmatpush.msra.mxu0 %v1141
    %v1143 = vand.u32 %v103, 4294901760
    %v1144 = vsub.f32 %v103, %v1143
    %v1145 = vand.u32 %v1144, 4294901760
    %1146 = vmatpush.msra.mxu0 %v1145
    %v1147 = vand.u32 %v102, 4294901760
    %v1148 = vsub.f32 %v102, %v1147
    %v1149 = vand.u32 %v1148, 4294901760
    %1150 = vmatpush.msra.mxu0 %v1149
    %v1151 = vand.u32 %v101, 4294901760
    %v1152 = vsub.f32 %v101, %v1151
    %v1153 = vand.u32 %v1152, 4294901760
    %1154 = vmatpush.msra.mxu0 %v1153
    %v1155 = vand.u32 %v100, 4294901760
    %v1156 = vsub.f32 %v100, %v1155
    %v1157 = vand.u32 %v1156, 4294901760
    %1158 = vmatpush.msra.mxu0 %v1157
    %v1159 = vand.u32 %v99, 4294901760
    %v1160 = vsub.f32 %v99, %v1159
    %v1161 = vand.u32 %v1160, 4294901760
    %1162 = vmatpush.msra.mxu0 %v1161
    %v1163 = vand.u32 %v98, 4294901760
    %v1164 = vsub.f32 %v98, %v1163
    %v1165 = vand.u32 %v1164, 4294901760
    %1166 = vmatpush.msra.mxu0 %v1165
    %v1167 = vand.u32 %v97, 4294901760
    %v1168 = vsub.f32 %v97, %v1167
    %v1169 = vand.u32 %v1168, 4294901760
    %1170 = vmatpush.msra.mxu0 %v1169
    %v1171 = vand.u32 %v96, 4294901760
    %v1172 = vsub.f32 %v96, %v1171
    %v1173 = vand.u32 %v1172, 4294901760
    %1174 = vmatpush.msra.mxu0 %v1173
    %v1175 = vand.u32 %v95, 4294901760
    %v1176 = vsub.f32 %v95, %v1175
    %v1177 = vand.u32 %v1176, 4294901760
    %1178 = vmatpush.msra.mxu0 %v1177
    %v1179 = vand.u32 %v94, 4294901760
    %v1180 = vsub.f32 %v94, %v1179
    %v1181 = vand.u32 %v1180, 4294901760
    %1182 = vmatpush.msra.mxu0 %v1181
    %v1183 = vand.u32 %v93, 4294901760
    %v1184 = vsub.f32 %v93, %v1183
    %v1185 = vand.u32 %v1184, 4294901760
    %1186 = vmatpush.msra.mxu0 %v1185
    %v1187 = vand.u32 %v92, 4294901760
    %v1188 = vsub.f32 %v92, %v1187
    %v1189 = vand.u32 %v1188, 4294901760
    %1190 = vmatpush.msra.mxu0 %v1189
    %v1191 = vand.u32 %v91, 4294901760
    %v1192 = vsub.f32 %v91, %v1191
    %v1193 = vand.u32 %v1192, 4294901760
    %1194 = vmatpush.msra.mxu0 %v1193
    %v1195 = vand.u32 %v90, 4294901760
    %v1196 = vsub.f32 %v90, %v1195
    %v1197 = vand.u32 %v1196, 4294901760
    %1198 = vmatpush.msra.mxu0 %v1197
    %v1199 = vand.u32 %v50, 4294901760
    %1200 = vmatmul.f32.gmra.mxu0 %v1199
    %v1201 = vpop.f32.mrf.mxu0
    %v1202 = vadd.f32 %v1133, %v1201
    %1203 = vdwg.mxu0
    %v1204 = vand.u32 %v105, 4294901760
    %1205 = vmatpush.msra.mxu0 %v1204
    %v1206 = vand.u32 %v104, 4294901760
    %1207 = vmatpush.msra.mxu0 %v1206
    %v1208 = vand.u32 %v103, 4294901760
    %1209 = vmatpush.msra.mxu0 %v1208
    %v1210 = vand.u32 %v102, 4294901760
    %1211 = vmatpush.msra.mxu0 %v1210
    %v1212 = vand.u32 %v101, 4294901760
    %1213 = vmatpush.msra.mxu0 %v1212
    %v1214 = vand.u32 %v100, 4294901760
    %1215 = vmatpush.msra.mxu0 %v1214
    %v1216 = vand.u32 %v99, 4294901760
    %1217 = vmatpush.msra.mxu0 %v1216
    %v1218 = vand.u32 %v98, 4294901760
    %1219 = vmatpush.msra.mxu0 %v1218
    %v1220 = vand.u32 %v97, 4294901760
    %1221 = vmatpush.msra.mxu0 %v1220
    %v1222 = vand.u32 %v96, 4294901760
    %1223 = vmatpush.msra.mxu0 %v1222
    %v1224 = vand.u32 %v95, 4294901760
    %1225 = vmatpush.msra.mxu0 %v1224
    %v1226 = vand.u32 %v94, 4294901760
    %1227 = vmatpush.msra.mxu0 %v1226
    %v1228 = vand.u32 %v93, 4294901760
    %1229 = vmatpush.msra.mxu0 %v1228
    %v1230 = vand.u32 %v92, 4294901760
    %1231 = vmatpush.msra.mxu0 %v1230
    %v1232 = vand.u32 %v91, 4294901760
    %1233 = vmatpush.msra.mxu0 %v1232
    %v1234 = vand.u32 %v90, 4294901760
    %1235 = vmatpush.msra.mxu0 %v1234
    %v1236 = vand.u32 %v50, 4294901760
    %1237 = vmatmul.f32.gmra.mxu0 %v1236
    %v1238 = vpop.f32.mrf.mxu0
    %v1239 = vadd.f32 %v1202, %v1238
    %1240 = vdwg.mxu0
    %v1241 = vand.u32 %v121, 4294901760
    %1242 = vmatpush.msra.mxu0 %v1241
    %v1243 = vand.u32 %v120, 4294901760
    %1244 = vmatpush.msra.mxu0 %v1243
    %v1245 = vand.u32 %v119, 4294901760
    %1246 = vmatpush.msra.mxu0 %v1245
    %v1247 = vand.u32 %v118, 4294901760
    %1248 = vmatpush.msra.mxu0 %v1247
    %v1249 = vand.u32 %v117, 4294901760
    %1250 = vmatpush.msra.mxu0 %v1249
    %v1251 = vand.u32 %v116, 4294901760
    %1252 = vmatpush.msra.mxu0 %v1251
    %v1253 = vand.u32 %v115, 4294901760
    %1254 = vmatpush.msra.mxu0 %v1253
    %v1255 = vand.u32 %v114, 4294901760
    %1256 = vmatpush.msra.mxu0 %v1255
    %v1257 = vand.u32 %v113, 4294901760
    %1258 = vmatpush.msra.mxu0 %v1257
    %v1259 = vand.u32 %v112, 4294901760
    %1260 = vmatpush.msra.mxu0 %v1259
    %v1261 = vand.u32 %v111, 4294901760
    %1262 = vmatpush.msra.mxu0 %v1261
    %v1263 = vand.u32 %v110, 4294901760
    %1264 = vmatpush.msra.mxu0 %v1263
    %v1265 = vand.u32 %v109, 4294901760
    %1266 = vmatpush.msra.mxu0 %v1265
    %v1267 = vand.u32 %v108, 4294901760
    %1268 = vmatpush.msra.mxu0 %v1267
    %v1269 = vand.u32 %v107, 4294901760
    %1270 = vmatpush.msra.mxu0 %v1269
    %v1271 = vand.u32 %v106, 4294901760
    %1272 = vmatpush.msra.mxu0 %v1271
    %v1273 = vand.u32 %v51, 4294901760
    %v1274 = vsub.f32 %v51, %v1273
    %v1275 = vand.u32 %v1274, 4294901760
    %v1276 = vsub.f32 %v1274, %v1275
    %v1277 = vand.u32 %v1276, 4294901760
    %1278 = vmatmul.f32.gmra.mxu0 %v1277
    %v1279 = vpop.f32.mrf.mxu0
    %v1280 = vadd.f32 %v1239, %v1279
    %1281 = vdwg.mxu0
    %v1282 = vand.u32 %v121, 4294901760
    %v1283 = vsub.f32 %v121, %v1282
    %v1284 = vand.u32 %v1283, 4294901760
    %v1285 = vsub.f32 %v1283, %v1284
    %v1286 = vand.u32 %v1285, 4294901760
    %1287 = vmatpush.msra.mxu0 %v1286
    %v1288 = vand.u32 %v120, 4294901760
    %v1289 = vsub.f32 %v120, %v1288
    %v1290 = vand.u32 %v1289, 4294901760
    %v1291 = vsub.f32 %v1289, %v1290
    %v1292 = vand.u32 %v1291, 4294901760
    %1293 = vmatpush.msra.mxu0 %v1292
    %v1294 = vand.u32 %v119, 4294901760
    %v1295 = vsub.f32 %v119, %v1294
    %v1296 = vand.u32 %v1295, 4294901760
    %v1297 = vsub.f32 %v1295, %v1296
    %v1298 = vand.u32 %v1297, 4294901760
    %1299 = vmatpush.msra.mxu0 %v1298
    %v1300 = vand.u32 %v118, 4294901760
    %v1301 = vsub.f32 %v118, %v1300
    %v1302 = vand.u32 %v1301, 4294901760
    %v1303 = vsub.f32 %v1301, %v1302
    %v1304 = vand.u32 %v1303, 4294901760
    %1305 = vmatpush.msra.mxu0 %v1304
    %v1306 = vand.u32 %v117, 4294901760
    %v1307 = vsub.f32 %v117, %v1306
    %v1308 = vand.u32 %v1307, 4294901760
    %v1309 = vsub.f32 %v1307, %v1308
    %v1310 = vand.u32 %v1309, 4294901760
    %1311 = vmatpush.msra.mxu0 %v1310
    %v1312 = vand.u32 %v116, 4294901760
    %v1313 = vsub.f32 %v116, %v1312
    %v1314 = vand.u32 %v1313, 4294901760
    %v1315 = vsub.f32 %v1313, %v1314
    %v1316 = vand.u32 %v1315, 4294901760
    %1317 = vmatpush.msra.mxu0 %v1316
    %v1318 = vand.u32 %v115, 4294901760
    %v1319 = vsub.f32 %v115, %v1318
    %v1320 = vand.u32 %v1319, 4294901760
    %v1321 = vsub.f32 %v1319, %v1320
    %v1322 = vand.u32 %v1321, 4294901760
    %1323 = vmatpush.msra.mxu0 %v1322
    %v1324 = vand.u32 %v114, 4294901760
    %v1325 = vsub.f32 %v114, %v1324
    %v1326 = vand.u32 %v1325, 4294901760
    %v1327 = vsub.f32 %v1325, %v1326
    %v1328 = vand.u32 %v1327, 4294901760
    %1329 = vmatpush.msra.mxu0 %v1328
    %v1330 = vand.u32 %v113, 4294901760
    %v1331 = vsub.f32 %v113, %v1330
    %v1332 = vand.u32 %v1331, 4294901760
    %v1333 = vsub.f32 %v1331, %v1332
    %v1334 = vand.u32 %v1333, 4294901760
    %1335 = vmatpush.msra.mxu0 %v1334
    %v1336 = vand.u32 %v112, 4294901760
    %v1337 = vsub.f32 %v112, %v1336
    %v1338 = vand.u32 %v1337, 4294901760
    %v1339 = vsub.f32 %v1337, %v1338
    %v1340 = vand.u32 %v1339, 4294901760
    %1341 = vmatpush.msra.mxu0 %v1340
    %v1342 = vand.u32 %v111, 4294901760
    %v1343 = vsub.f32 %v111, %v1342
    %v1344 = vand.u32 %v1343, 4294901760
    %v1345 = vsub.f32 %v1343, %v1344
    %v1346 = vand.u32 %v1345, 4294901760
    %1347 = vmatpush.msra.mxu0 %v1346
    %v1348 = vand.u32 %v110, 4294901760
    %v1349 = vsub.f32 %v110, %v1348
    %v1350 = vand.u32 %v1349, 4294901760
    %v1351 = vsub.f32 %v1349, %v1350
    %v1352 = vand.u32 %v1351, 4294901760
    %1353 = vmatpush.msra.mxu0 %v1352
    %v1354 = vand.u32 %v109, 4294901760
    %v1355 = vsub.f32 %v109, %v1354
    %v1356 = vand.u32 %v1355, 4294901760
    %v1357 = vsub.f32 %v1355, %v1356
    %v1358 = vand.u32 %v1357, 4294901760
    %1359 = vmatpush.msra.mxu0 %v1358
    %v1360 = vand.u32 %v108, 4294901760
    %v1361 = vsub.f32 %v108, %v1360
    %v1362 = vand.u32 %v1361, 4294901760
    %v1363 = vsub.f32 %v1361, %v1362
    %v1364 = vand.u32 %v1363, 4294901760
    %1365 = vmatpush.msra.mxu0 %v1364
    %v1366 = vand.u32 %v107, 4294901760
    %v1367 = vsub.f32 %v107, %v1366
    %v1368 = vand.u32 %v1367, 4294901760
    %v1369 = vsub.f32 %v1367, %v1368
    %v1370 = vand.u32 %v1369, 4294901760
    %1371 = vmatpush.msra.mxu0 %v1370
    %v1372 = vand.u32 %v106, 4294901760
    %v1373 = vsub.f32 %v106, %v1372
    %v1374 = vand.u32 %v1373, 4294901760
    %v1375 = vsub.f32 %v1373, %v1374
    %v1376 = vand.u32 %v1375, 4294901760
    %1377 = vmatpush.msra.mxu0 %v1376
    %v1378 = vand.u32 %v51, 4294901760
    %1379 = vmatmul.f32.gmra.mxu0 %v1378
    %v1380 = vpop.f32.mrf.mxu0
    %v1381 = vadd.f32 %v1280, %v1380
    %1382 = vdwg.mxu0
    %v1383 = vand.u32 %v121, 4294901760
    %v1384 = vsub.f32 %v121, %v1383
    %1385 = vmatpush.msra.mxu0 %v1384
    %v1386 = vand.u32 %v120, 4294901760
    %v1387 = vsub.f32 %v120, %v1386
    %1388 = vmatpush.msra.mxu0 %v1387
    %v1389 = vand.u32 %v119, 4294901760
    %v1390 = vsub.f32 %v119, %v1389
    %1391 = vmatpush.msra.mxu0 %v1390
    %v1392 = vand.u32 %v118, 4294901760
    %v1393 = vsub.f32 %v118, %v1392
    %1394 = vmatpush.msra.mxu0 %v1393
    %v1395 = vand.u32 %v117, 4294901760
    %v1396 = vsub.f32 %v117, %v1395
    %1397 = vmatpush.msra.mxu0 %v1396
    %v1398 = vand.u32 %v116, 4294901760
    %v1399 = vsub.f32 %v116, %v1398
    %1400 = vmatpush.msra.mxu0 %v1399
    %v1401 = vand.u32 %v115, 4294901760
    %v1402 = vsub.f32 %v115, %v1401
    %1403 = vmatpush.msra.mxu0 %v1402
    %v1404 = vand.u32 %v114, 4294901760
    %v1405 = vsub.f32 %v114, %v1404
    %1406 = vmatpush.msra.mxu0 %v1405
    %v1407 = vand.u32 %v113, 4294901760
    %v1408 = vsub.f32 %v113, %v1407
    %1409 = vmatpush.msra.mxu0 %v1408
    %v1410 = vand.u32 %v112, 4294901760
    %v1411 = vsub.f32 %v112, %v1410
    %1412 = vmatpush.msra.mxu0 %v1411
    %v1413 = vand.u32 %v111, 4294901760
    %v1414 = vsub.f32 %v111, %v1413
    %1415 = vmatpush.msra.mxu0 %v1414
    %v1416 = vand.u32 %v110, 4294901760
    %v1417 = vsub.f32 %v110, %v1416
    %1418 = vmatpush.msra.mxu0 %v1417
    %v1419 = vand.u32 %v109, 4294901760
    %v1420 = vsub.f32 %v109, %v1419
    %1421 = vmatpush.msra.mxu0 %v1420
    %v1422 = vand.u32 %v108, 4294901760
    %v1423 = vsub.f32 %v108, %v1422
    %1424 = vmatpush.msra.mxu0 %v1423
    %v1425 = vand.u32 %v107, 4294901760
    %v1426 = vsub.f32 %v107, %v1425
    %1427 = vmatpush.msra.mxu0 %v1426
    %v1428 = vand.u32 %v106, 4294901760
    %v1429 = vsub.f32 %v106, %v1428
    %1430 = vmatpush.msra.mxu0 %v1429
    %v1431 = vand.u32 %v51, 4294901760
    %v1432 = vsub.f32 %v51, %v1431
    %1433 = vmatmul.f32.gmra.mxu0 %v1432
    %v1434 = vpop.f32.mrf.mxu0
    %v1435 = vadd.f32 %v1381, %v1434
    %1436 = vdwg.mxu0
    %v1437 = vand.u32 %v121, 4294901760
    %1438 = vmatpush.msra.mxu0 %v1437
    %v1439 = vand.u32 %v120, 4294901760
    %1440 = vmatpush.msra.mxu0 %v1439
    %v1441 = vand.u32 %v119, 4294901760
    %1442 = vmatpush.msra.mxu0 %v1441
    %v1443 = vand.u32 %v118, 4294901760
    %1444 = vmatpush.msra.mxu0 %v1443
    %v1445 = vand.u32 %v117, 4294901760
    %1446 = vmatpush.msra.mxu0 %v1445
    %v1447 = vand.u32 %v116, 4294901760
    %1448 = vmatpush.msra.mxu0 %v1447
    %v1449 = vand.u32 %v115, 4294901760
    %1450 = vmatpush.msra.mxu0 %v1449
    %v1451 = vand.u32 %v114, 4294901760
    %1452 = vmatpush.msra.mxu0 %v1451
    %v1453 = vand.u32 %v113, 4294901760
    %1454 = vmatpush.msra.mxu0 %v1453
    %v1455 = vand.u32 %v112, 4294901760
    %1456 = vmatpush.msra.mxu0 %v1455
    %v1457 = vand.u32 %v111, 4294901760
    %1458 = vmatpush.msra.mxu0 %v1457
    %v1459 = vand.u32 %v110, 4294901760
    %1460 = vmatpush.msra.mxu0 %v1459
    %v1461 = vand.u32 %v109, 4294901760
    %1462 = vmatpush.msra.mxu0 %v1461
    %v1463 = vand.u32 %v108, 4294901760
    %1464 = vmatpush.msra.mxu0 %v1463
    %v1465 = vand.u32 %v107, 4294901760
    %1466 = vmatpush.msra.mxu0 %v1465
    %v1467 = vand.u32 %v106, 4294901760
    %1468 = vmatpush.msra.mxu0 %v1467
    %v1469 = vand.u32 %v51, 4294901760
    %v1470 = vsub.f32 %v51, %v1469
    %v1471 = vand.u32 %v1470, 4294901760
    %1472 = vmatmul.f32.gmra.mxu0 %v1471
    %v1473 = vpop.f32.mrf.mxu0
    %v1474 = vadd.f32 %v1435, %v1473
    %1475 = vdwg.mxu0
    %v1476 = vand.u32 %v121, 4294901760
    %v1477 = vsub.f32 %v121, %v1476
    %v1478 = vand.u32 %v1477, 4294901760
    %1479 = vmatpush.msra.mxu0 %v1478
    %v1480 = vand.u32 %v120, 4294901760
    %v1481 = vsub.f32 %v120, %v1480
    %v1482 = vand.u32 %v1481, 4294901760
    %1483 = vmatpush.msra.mxu0 %v1482
    %v1484 = vand.u32 %v119, 4294901760
    %v1485 = vsub.f32 %v119, %v1484
    %v1486 = vand.u32 %v1485, 4294901760
    %1487 = vmatpush.msra.mxu0 %v1486
    %v1488 = vand.u32 %v118, 4294901760
    %v1489 = vsub.f32 %v118, %v1488
    %v1490 = vand.u32 %v1489, 4294901760
    %1491 = vmatpush.msra.mxu0 %v1490
    %v1492 = vand.u32 %v117, 4294901760
    %v1493 = vsub.f32 %v117, %v1492
    %v1494 = vand.u32 %v1493, 4294901760
    %1495 = vmatpush.msra.mxu0 %v1494
    %v1496 = vand.u32 %v116, 4294901760
    %v1497 = vsub.f32 %v116, %v1496
    %v1498 = vand.u32 %v1497, 4294901760
    %1499 = vmatpush.msra.mxu0 %v1498
    %v1500 = vand.u32 %v115, 4294901760
    %v1501 = vsub.f32 %v115, %v1500
    %v1502 = vand.u32 %v1501, 4294901760
    %1503 = vmatpush.msra.mxu0 %v1502
    %v1504 = vand.u32 %v114, 4294901760
    %v1505 = vsub.f32 %v114, %v1504
    %v1506 = vand.u32 %v1505, 4294901760
    %1507 = vmatpush.msra.mxu0 %v1506
    %v1508 = vand.u32 %v113, 4294901760
    %v1509 = vsub.f32 %v113, %v1508
    %v1510 = vand.u32 %v1509, 4294901760
    %1511 = vmatpush.msra.mxu0 %v1510
    %v1512 = vand.u32 %v112, 4294901760
    %v1513 = vsub.f32 %v112, %v1512
    %v1514 = vand.u32 %v1513, 4294901760
    %1515 = vmatpush.msra.mxu0 %v1514
    %v1516 = vand.u32 %v111, 4294901760
    %v1517 = vsub.f32 %v111, %v1516
    %v1518 = vand.u32 %v1517, 4294901760
    %1519 = vmatpush.msra.mxu0 %v1518
    %v1520 = vand.u32 %v110, 4294901760
    %v1521 = vsub.f32 %v110, %v1520
    %v1522 = vand.u32 %v1521, 4294901760
    %1523 = vmatpush.msra.mxu0 %v1522
    %v1524 = vand.u32 %v109, 4294901760
    %v1525 = vsub.f32 %v109, %v1524
    %v1526 = vand.u32 %v1525, 4294901760
    %1527 = vmatpush.msra.mxu0 %v1526
    %v1528 = vand.u32 %v108, 4294901760
    %v1529 = vsub.f32 %v108, %v1528
    %v1530 = vand.u32 %v1529, 4294901760
    %1531 = vmatpush.msra.mxu0 %v1530
    %v1532 = vand.u32 %v107, 4294901760
    %v1533 = vsub.f32 %v107, %v1532
    %v1534 = vand.u32 %v1533, 4294901760
    %1535 = vmatpush.msra.mxu0 %v1534
    %v1536 = vand.u32 %v106, 4294901760
    %v1537 = vsub.f32 %v106, %v1536
    %v1538 = vand.u32 %v1537, 4294901760
    %1539 = vmatpush.msra.mxu0 %v1538
    %v1540 = vand.u32 %v51, 4294901760
    %1541 = vmatmul.f32.gmra.mxu0 %v1540
    %v1542 = vpop.f32.mrf.mxu0
    %v1543 = vadd.f32 %v1474, %v1542
    %1544 = vdwg.mxu0
    %v1545 = vand.u32 %v121, 4294901760
    %1546 = vmatpush.msra.mxu0 %v1545
    %v1547 = vand.u32 %v120, 4294901760
    %1548 = vmatpush.msra.mxu0 %v1547
    %v1549 = vand.u32 %v119, 4294901760
    %1550 = vmatpush.msra.mxu0 %v1549
    %v1551 = vand.u32 %v118, 4294901760
    %1552 = vmatpush.msra.mxu0 %v1551
    %v1553 = vand.u32 %v117, 4294901760
    %1554 = vmatpush.msra.mxu0 %v1553
    %v1555 = vand.u32 %v116, 4294901760
    %1556 = vmatpush.msra.mxu0 %v1555
    %v1557 = vand.u32 %v115, 4294901760
    %1558 = vmatpush.msra.mxu0 %v1557
    %v1559 = vand.u32 %v114, 4294901760
    %1560 = vmatpush.msra.mxu0 %v1559
    %v1561 = vand.u32 %v113, 4294901760
    %1562 = vmatpush.msra.mxu0 %v1561
    %v1563 = vand.u32 %v112, 4294901760
    %1564 = vmatpush.msra.mxu0 %v1563
    %v1565 = vand.u32 %v111, 4294901760
    %1566 = vmatpush.msra.mxu0 %v1565
    %v1567 = vand.u32 %v110, 4294901760
    %1568 = vmatpush.msra.mxu0 %v1567
    %v1569 = vand.u32 %v109, 4294901760
    %1570 = vmatpush.msra.mxu0 %v1569
    %v1571 = vand.u32 %v108, 4294901760
    %1572 = vmatpush.msra.mxu0 %v1571
    %v1573 = vand.u32 %v107, 4294901760
    %1574 = vmatpush.msra.mxu0 %v1573
    %v1575 = vand.u32 %v106, 4294901760
    %1576 = vmatpush.msra.mxu0 %v1575
    %v1577 = vand.u32 %v51, 4294901760
    %1578 = vmatmul.f32.gmra.mxu0 %v1577
    %v1579 = vpop.f32.mrf.mxu0
    %v1580 = vadd.f32 %v1543, %v1579
    %1581 = vdwg.mxu0
    %v1582 = vand.u32 %v137, 4294901760
    %1583 = vmatpush.msra.mxu0 %v1582
    %v1584 = vand.u32 %v136, 4294901760
    %1585 = vmatpush.msra.mxu0 %v1584
    %v1586 = vand.u32 %v135, 4294901760
    %1587 = vmatpush.msra.mxu0 %v1586
    %v1588 = vand.u32 %v134, 4294901760
    %1589 = vmatpush.msra.mxu0 %v1588
    %v1590 = vand.u32 %v133, 4294901760
    %1591 = vmatpush.msra.mxu0 %v1590
    %v1592 = vand.u32 %v132, 4294901760
    %1593 = vmatpush.msra.mxu0 %v1592
    %v1594 = vand.u32 %v131, 4294901760
    %1595 = vmatpush.msra.mxu0 %v1594
    %v1596 = vand.u32 %v130, 4294901760
    %1597 = vmatpush.msra.mxu0 %v1596
    %v1598 = vand.u32 %v129, 4294901760
    %1599 = vmatpush.msra.mxu0 %v1598
    %v1600 = vand.u32 %v128, 4294901760
    %1601 = vmatpush.msra.mxu0 %v1600
    %v1602 = vand.u32 %v127, 4294901760
    %1603 = vmatpush.msra.mxu0 %v1602
    %v1604 = vand.u32 %v126, 4294901760
    %1605 = vmatpush.msra.mxu0 %v1604
    %v1606 = vand.u32 %v125, 4294901760
    %1607 = vmatpush.msra.mxu0 %v1606
    %v1608 = vand.u32 %v124, 4294901760
    %1609 = vmatpush.msra.mxu0 %v1608
    %v1610 = vand.u32 %v123, 4294901760
    %1611 = vmatpush.msra.mxu0 %v1610
    %v1612 = vand.u32 %v122, 4294901760
    %1613 = vmatpush.msra.mxu0 %v1612
    %v1614 = vand.u32 %v52, 4294901760
    %v1615 = vsub.f32 %v52, %v1614
    %v1616 = vand.u32 %v1615, 4294901760
    %v1617 = vsub.f32 %v1615, %v1616
    %v1618 = vand.u32 %v1617, 4294901760
    %1619 = vmatmul.f32.gmra.mxu0 %v1618
    %v1620 = vpop.f32.mrf.mxu0
    %v1621 = vadd.f32 %v1580, %v1620
    %1622 = vdwg.mxu0
    %v1623 = vand.u32 %v137, 4294901760
    %v1624 = vsub.f32 %v137, %v1623
    %v1625 = vand.u32 %v1624, 4294901760
    %v1626 = vsub.f32 %v1624, %v1625
    %v1627 = vand.u32 %v1626, 4294901760
    %1628 = vmatpush.msra.mxu0 %v1627
    %v1629 = vand.u32 %v136, 4294901760
    %v1630 = vsub.f32 %v136, %v1629
    %v1631 = vand.u32 %v1630, 4294901760
    %v1632 = vsub.f32 %v1630, %v1631
    %v1633 = vand.u32 %v1632, 4294901760
    %1634 = vmatpush.msra.mxu0 %v1633
    %v1635 = vand.u32 %v135, 4294901760
    %v1636 = vsub.f32 %v135, %v1635
    %v1637 = vand.u32 %v1636, 4294901760
    %v1638 = vsub.f32 %v1636, %v1637
    %v1639 = vand.u32 %v1638, 4294901760
    %1640 = vmatpush.msra.mxu0 %v1639
    %v1641 = vand.u32 %v134, 4294901760
    %v1642 = vsub.f32 %v134, %v1641
    %v1643 = vand.u32 %v1642, 4294901760
    %v1644 = vsub.f32 %v1642, %v1643
    %v1645 = vand.u32 %v1644, 4294901760
    %1646 = vmatpush.msra.mxu0 %v1645
    %v1647 = vand.u32 %v133, 4294901760
    %v1648 = vsub.f32 %v133, %v1647
    %v1649 = vand.u32 %v1648, 4294901760
    %v1650 = vsub.f32 %v1648, %v1649
    %v1651 = vand.u32 %v1650, 4294901760
    %1652 = vmatpush.msra.mxu0 %v1651
    %v1653 = vand.u32 %v132, 4294901760
    %v1654 = vsub.f32 %v132, %v1653
    %v1655 = vand.u32 %v1654, 4294901760
    %v1656 = vsub.f32 %v1654, %v1655
    %v1657 = vand.u32 %v1656, 4294901760
    %1658 = vmatpush.msra.mxu0 %v1657
    %v1659 = vand.u32 %v131, 4294901760
    %v1660 = vsub.f32 %v131, %v1659
    %v1661 = vand.u32 %v1660, 4294901760
    %v1662 = vsub.f32 %v1660, %v1661
    %v1663 = vand.u32 %v1662, 4294901760
    %1664 = vmatpush.msra.mxu0 %v1663
    %v1665 = vand.u32 %v130, 4294901760
    %v1666 = vsub.f32 %v130, %v1665
    %v1667 = vand.u32 %v1666, 4294901760
    %v1668 = vsub.f32 %v1666, %v1667
    %v1669 = vand.u32 %v1668, 4294901760
    %1670 = vmatpush.msra.mxu0 %v1669
    %v1671 = vand.u32 %v129, 4294901760
    %v1672 = vsub.f32 %v129, %v1671
    %v1673 = vand.u32 %v1672, 4294901760
    %v1674 = vsub.f32 %v1672, %v1673
    %v1675 = vand.u32 %v1674, 4294901760
    %1676 = vmatpush.msra.mxu0 %v1675
    %v1677 = vand.u32 %v128, 4294901760
    %v1678 = vsub.f32 %v128, %v1677
    %v1679 = vand.u32 %v1678, 4294901760
    %v1680 = vsub.f32 %v1678, %v1679
    %v1681 = vand.u32 %v1680, 4294901760
    %1682 = vmatpush.msra.mxu0 %v1681
    %v1683 = vand.u32 %v127, 4294901760
    %v1684 = vsub.f32 %v127, %v1683
    %v1685 = vand.u32 %v1684, 4294901760
    %v1686 = vsub.f32 %v1684, %v1685
    %v1687 = vand.u32 %v1686, 4294901760
    %1688 = vmatpush.msra.mxu0 %v1687
    %v1689 = vand.u32 %v126, 4294901760
    %v1690 = vsub.f32 %v126, %v1689
    %v1691 = vand.u32 %v1690, 4294901760
    %v1692 = vsub.f32 %v1690, %v1691
    %v1693 = vand.u32 %v1692, 4294901760
    %1694 = vmatpush.msra.mxu0 %v1693
    %v1695 = vand.u32 %v125, 4294901760
    %v1696 = vsub.f32 %v125, %v1695
    %v1697 = vand.u32 %v1696, 4294901760
    %v1698 = vsub.f32 %v1696, %v1697
    %v1699 = vand.u32 %v1698, 4294901760
    %1700 = vmatpush.msra.mxu0 %v1699
    %v1701 = vand.u32 %v124, 4294901760
    %v1702 = vsub.f32 %v124, %v1701
    %v1703 = vand.u32 %v1702, 4294901760
    %v1704 = vsub.f32 %v1702, %v1703
    %v1705 = vand.u32 %v1704, 4294901760
    %1706 = vmatpush.msra.mxu0 %v1705
    %v1707 = vand.u32 %v123, 4294901760
    %v1708 = vsub.f32 %v123, %v1707
    %v1709 = vand.u32 %v1708, 4294901760
    %v1710 = vsub.f32 %v1708, %v1709
    %v1711 = vand.u32 %v1710, 4294901760
    %1712 = vmatpush.msra.mxu0 %v1711
    %v1713 = vand.u32 %v122, 4294901760
    %v1714 = vsub.f32 %v122, %v1713
    %v1715 = vand.u32 %v1714, 4294901760
    %v1716 = vsub.f32 %v1714, %v1715
    %v1717 = vand.u32 %v1716, 4294901760
    %1718 = vmatpush.msra.mxu0 %v1717
    %v1719 = vand.u32 %v52, 4294901760
    %1720 = vmatmul.f32.gmra.mxu0 %v1719
    %v1721 = vpop.f32.mrf.mxu0
    %v1722 = vadd.f32 %v1621, %v1721
    %1723 = vdwg.mxu0
    %v1724 = vand.u32 %v137, 4294901760
    %v1725 = vsub.f32 %v137, %v1724
    %1726 = vmatpush.msra.mxu0 %v1725
    %v1727 = vand.u32 %v136, 4294901760
    %v1728 = vsub.f32 %v136, %v1727
    %1729 = vmatpush.msra.mxu0 %v1728
    %v1730 = vand.u32 %v135, 4294901760
    %v1731 = vsub.f32 %v135, %v1730
    %1732 = vmatpush.msra.mxu0 %v1731
    %v1733 = vand.u32 %v134, 4294901760
    %v1734 = vsub.f32 %v134, %v1733
    %1735 = vmatpush.msra.mxu0 %v1734
    %v1736 = vand.u32 %v133, 4294901760
    %v1737 = vsub.f32 %v133, %v1736
    %1738 = vmatpush.msra.mxu0 %v1737
    %v1739 = vand.u32 %v132, 4294901760
    %v1740 = vsub.f32 %v132, %v1739
    %1741 = vmatpush.msra.mxu0 %v1740
    %v1742 = vand.u32 %v131, 4294901760
    %v1743 = vsub.f32 %v131, %v1742
    %1744 = vmatpush.msra.mxu0 %v1743
    %v1745 = vand.u32 %v130, 4294901760
    %v1746 = vsub.f32 %v130, %v1745
    %1747 = vmatpush.msra.mxu0 %v1746
    %v1748 = vand.u32 %v129, 4294901760
    %v1749 = vsub.f32 %v129, %v1748
    %1750 = vmatpush.msra.mxu0 %v1749
    %v1751 = vand.u32 %v128, 4294901760
    %v1752 = vsub.f32 %v128, %v1751
    %1753 = vmatpush.msra.mxu0 %v1752
    %v1754 = vand.u32 %v127, 4294901760
    %v1755 = vsub.f32 %v127, %v1754
    %1756 = vmatpush.msra.mxu0 %v1755
    %v1757 = vand.u32 %v126, 4294901760
    %v1758 = vsub.f32 %v126, %v1757
    %1759 = vmatpush.msra.mxu0 %v1758
    %v1760 = vand.u32 %v125, 4294901760
    %v1761 = vsub.f32 %v125, %v1760
    %1762 = vmatpush.msra.mxu0 %v1761
    %v1763 = vand.u32 %v124, 4294901760
    %v1764 = vsub.f32 %v124, %v1763
    %1765 = vmatpush.msra.mxu0 %v1764
    %v1766 = vand.u32 %v123, 4294901760
    %v1767 = vsub.f32 %v123, %v1766
    %1768 = vmatpush.msra.mxu0 %v1767
    %v1769 = vand.u32 %v122, 4294901760
    %v1770 = vsub.f32 %v122, %v1769
    %1771 = vmatpush.msra.mxu0 %v1770
    %v1772 = vand.u32 %v52, 4294901760
    %v1773 = vsub.f32 %v52, %v1772
    %1774 = vmatmul.f32.gmra.mxu0 %v1773
    %v1775 = vpop.f32.mrf.mxu0
    %v1776 = vadd.f32 %v1722, %v1775
    %1777 = vdwg.mxu0
    %v1778 = vand.u32 %v137, 4294901760
    %1779 = vmatpush.msra.mxu0 %v1778
    %v1780 = vand.u32 %v136, 4294901760
    %1781 = vmatpush.msra.mxu0 %v1780
    %v1782 = vand.u32 %v135, 4294901760
    %1783 = vmatpush.msra.mxu0 %v1782
    %v1784 = vand.u32 %v134, 4294901760
    %1785 = vmatpush.msra.mxu0 %v1784
    %v1786 = vand.u32 %v133, 4294901760
    %1787 = vmatpush.msra.mxu0 %v1786
    %v1788 = vand.u32 %v132, 4294901760
    %1789 = vmatpush.msra.mxu0 %v1788
    %v1790 = vand.u32 %v131, 4294901760
    %1791 = vmatpush.msra.mxu0 %v1790
    %v1792 = vand.u32 %v130, 4294901760
    %1793 = vmatpush.msra.mxu0 %v1792
    %v1794 = vand.u32 %v129, 4294901760
    %1795 = vmatpush.msra.mxu0 %v1794
    %v1796 = vand.u32 %v128, 4294901760
    %1797 = vmatpush.msra.mxu0 %v1796
    %v1798 = vand.u32 %v127, 4294901760
    %1799 = vmatpush.msra.mxu0 %v1798
    %v1800 = vand.u32 %v126, 4294901760
    %1801 = vmatpush.msra.mxu0 %v1800
    %v1802 = vand.u32 %v125, 4294901760
    %1803 = vmatpush.msra.mxu0 %v1802
    %v1804 = vand.u32 %v124, 4294901760
    %1805 = vmatpush.msra.mxu0 %v1804
    %v1806 = vand.u32 %v123, 4294901760
    %1807 = vmatpush.msra.mxu0 %v1806
    %v1808 = vand.u32 %v122, 4294901760
    %1809 = vmatpush.msra.mxu0 %v1808
    %v1810 = vand.u32 %v52, 4294901760
    %v1811 = vsub.f32 %v52, %v1810
    %v1812 = vand.u32 %v1811, 4294901760
    %1813 = vmatmul.f32.gmra.mxu0 %v1812
    %v1814 = vpop.f32.mrf.mxu0
    %v1815 = vadd.f32 %v1776, %v1814
    %1816 = vdwg.mxu0
    %v1817 = vand.u32 %v137, 4294901760
    %v1818 = vsub.f32 %v137, %v1817
    %v1819 = vand.u32 %v1818, 4294901760
    %1820 = vmatpush.msra.mxu0 %v1819
    %v1821 = vand.u32 %v136, 4294901760
    %v1822 = vsub.f32 %v136, %v1821
    %v1823 = vand.u32 %v1822, 4294901760
    %1824 = vmatpush.msra.mxu0 %v1823
    %v1825 = vand.u32 %v135, 4294901760
    %v1826 = vsub.f32 %v135, %v1825
    %v1827 = vand.u32 %v1826, 4294901760
    %1828 = vmatpush.msra.mxu0 %v1827
    %v1829 = vand.u32 %v134, 4294901760
    %v1830 = vsub.f32 %v134, %v1829
    %v1831 = vand.u32 %v1830, 4294901760
    %1832 = vmatpush.msra.mxu0 %v1831
    %v1833 = vand.u32 %v133, 4294901760
    %v1834 = vsub.f32 %v133, %v1833
    %v1835 = vand.u32 %v1834, 4294901760
    %1836 = vmatpush.msra.mxu0 %v1835
    %v1837 = vand.u32 %v132, 4294901760
    %v1838 = vsub.f32 %v132, %v1837
    %v1839 = vand.u32 %v1838, 4294901760
    %1840 = vmatpush.msra.mxu0 %v1839
    %v1841 = vand.u32 %v131, 4294901760
    %v1842 = vsub.f32 %v131, %v1841
    %v1843 = vand.u32 %v1842, 4294901760
    %1844 = vmatpush.msra.mxu0 %v1843
    %v1845 = vand.u32 %v130, 4294901760
    %v1846 = vsub.f32 %v130, %v1845
    %v1847 = vand.u32 %v1846, 4294901760
    %1848 = vmatpush.msra.mxu0 %v1847
    %v1849 = vand.u32 %v129, 4294901760
    %v1850 = vsub.f32 %v129, %v1849
    %v1851 = vand.u32 %v1850, 4294901760
    %1852 = vmatpush.msra.mxu0 %v1851
    %v1853 = vand.u32 %v128, 4294901760
    %v1854 = vsub.f32 %v128, %v1853
    %v1855 = vand.u32 %v1854, 4294901760
    %1856 = vmatpush.msra.mxu0 %v1855
    %v1857 = vand.u32 %v127, 4294901760
    %v1858 = vsub.f32 %v127, %v1857
    %v1859 = vand.u32 %v1858, 4294901760
    %1860 = vmatpush.msra.mxu0 %v1859
    %v1861 = vand.u32 %v126, 4294901760
    %v1862 = vsub.f32 %v126, %v1861
    %v1863 = vand.u32 %v1862, 4294901760
    %1864 = vmatpush.msra.mxu0 %v1863
    %v1865 = vand.u32 %v125, 4294901760
    %v1866 = vsub.f32 %v125, %v1865
    %v1867 = vand.u32 %v1866, 4294901760
    %1868 = vmatpush.msra.mxu0 %v1867
    %v1869 = vand.u32 %v124, 4294901760
    %v1870 = vsub.f32 %v124, %v1869
    %v1871 = vand.u32 %v1870, 4294901760
    %1872 = vmatpush.msra.mxu0 %v1871
    %v1873 = vand.u32 %v123, 4294901760
    %v1874 = vsub.f32 %v123, %v1873
    %v1875 = vand.u32 %v1874, 4294901760
    %1876 = vmatpush.msra.mxu0 %v1875
    %v1877 = vand.u32 %v122, 4294901760
    %v1878 = vsub.f32 %v122, %v1877
    %v1879 = vand.u32 %v1878, 4294901760
    %1880 = vmatpush.msra.mxu0 %v1879
    %v1881 = vand.u32 %v52, 4294901760
    %1882 = vmatmul.f32.gmra.mxu0 %v1881
    %v1883 = vpop.f32.mrf.mxu0
    %v1884 = vadd.f32 %v1815, %v1883
    %1885 = vdwg.mxu0
    %v1886 = vand.u32 %v137, 4294901760
    %1887 = vmatpush.msra.mxu0 %v1886
    %v1888 = vand.u32 %v136, 4294901760
    %1889 = vmatpush.msra.mxu0 %v1888
    %v1890 = vand.u32 %v135, 4294901760
    %1891 = vmatpush.msra.mxu0 %v1890
    %v1892 = vand.u32 %v134, 4294901760
    %1893 = vmatpush.msra.mxu0 %v1892
    %v1894 = vand.u32 %v133, 4294901760
    %1895 = vmatpush.msra.mxu0 %v1894
    %v1896 = vand.u32 %v132, 4294901760
    %1897 = vmatpush.msra.mxu0 %v1896
    %v1898 = vand.u32 %v131, 4294901760
    %1899 = vmatpush.msra.mxu0 %v1898
    %v1900 = vand.u32 %v130, 4294901760
    %1901 = vmatpush.msra.mxu0 %v1900
    %v1902 = vand.u32 %v129, 4294901760
    %1903 = vmatpush.msra.mxu0 %v1902
    %v1904 = vand.u32 %v128, 4294901760
    %1905 = vmatpush.msra.mxu0 %v1904
    %v1906 = vand.u32 %v127, 4294901760
    %1907 = vmatpush.msra.mxu0 %v1906
    %v1908 = vand.u32 %v126, 4294901760
    %1909 = vmatpush.msra.mxu0 %v1908
    %v1910 = vand.u32 %v125, 4294901760
    %1911 = vmatpush.msra.mxu0 %v1910
    %v1912 = vand.u32 %v124, 4294901760
    %1913 = vmatpush.msra.mxu0 %v1912
    %v1914 = vand.u32 %v123, 4294901760
    %1915 = vmatpush.msra.mxu0 %v1914
    %v1916 = vand.u32 %v122, 4294901760
    %1917 = vmatpush.msra.mxu0 %v1916
    %v1918 = vand.u32 %v52, 4294901760
    %1919 = vmatmul.f32.gmra.mxu0 %v1918
    %v1920 = vpop.f32.mrf.mxu0
    %v1921 = vadd.f32 %v1884, %v1920
    %1922 = vdwg.mxu0
    %v1923 = vand.u32 %v153, 4294901760
    %1924 = vmatpush.msra.mxu0 %v1923
    %v1925 = vand.u32 %v152, 4294901760
    %1926 = vmatpush.msra.mxu0 %v1925
    %v1927 = vand.u32 %v151, 4294901760
    %1928 = vmatpush.msra.mxu0 %v1927
    %v1929 = vand.u32 %v150, 4294901760
    %1930 = vmatpush.msra.mxu0 %v1929
    %v1931 = vand.u32 %v149, 4294901760
    %1932 = vmatpush.msra.mxu0 %v1931
    %v1933 = vand.u32 %v148, 4294901760
    %1934 = vmatpush.msra.mxu0 %v1933
    %v1935 = vand.u32 %v147, 4294901760
    %1936 = vmatpush.msra.mxu0 %v1935
    %v1937 = vand.u32 %v146, 4294901760
    %1938 = vmatpush.msra.mxu0 %v1937
    %v1939 = vand.u32 %v145, 4294901760
    %1940 = vmatpush.msra.mxu0 %v1939
    %v1941 = vand.u32 %v144, 4294901760
    %1942 = vmatpush.msra.mxu0 %v1941
    %v1943 = vand.u32 %v143, 4294901760
    %1944 = vmatpush.msra.mxu0 %v1943
    %v1945 = vand.u32 %v142, 4294901760
    %1946 = vmatpush.msra.mxu0 %v1945
    %v1947 = vand.u32 %v141, 4294901760
    %1948 = vmatpush.msra.mxu0 %v1947
    %v1949 = vand.u32 %v140, 4294901760
    %1950 = vmatpush.msra.mxu0 %v1949
    %v1951 = vand.u32 %v139, 4294901760
    %1952 = vmatpush.msra.mxu0 %v1951
    %v1953 = vand.u32 %v138, 4294901760
    %1954 = vmatpush.msra.mxu0 %v1953
    %v1955 = vand.u32 %v53, 4294901760
    %v1956 = vsub.f32 %v53, %v1955
    %v1957 = vand.u32 %v1956, 4294901760
    %v1958 = vsub.f32 %v1956, %v1957
    %v1959 = vand.u32 %v1958, 4294901760
    %1960 = vmatmul.f32.gmra.mxu0 %v1959
    %v1961 = vpop.f32.mrf.mxu0
    %v1962 = vadd.f32 %v1921, %v1961
    %1963 = vdwg.mxu0
    %v1964 = vand.u32 %v153, 4294901760
    %v1965 = vsub.f32 %v153, %v1964
    %v1966 = vand.u32 %v1965, 4294901760
    %v1967 = vsub.f32 %v1965, %v1966
    %v1968 = vand.u32 %v1967, 4294901760
    %1969 = vmatpush.msra.mxu0 %v1968
    %v1970 = vand.u32 %v152, 4294901760
    %v1971 = vsub.f32 %v152, %v1970
    %v1972 = vand.u32 %v1971, 4294901760
    %v1973 = vsub.f32 %v1971, %v1972
    %v1974 = vand.u32 %v1973, 4294901760
    %1975 = vmatpush.msra.mxu0 %v1974
    %v1976 = vand.u32 %v151, 4294901760
    %v1977 = vsub.f32 %v151, %v1976
    %v1978 = vand.u32 %v1977, 4294901760
    %v1979 = vsub.f32 %v1977, %v1978
    %v1980 = vand.u32 %v1979, 4294901760
    %1981 = vmatpush.msra.mxu0 %v1980
    %v1982 = vand.u32 %v150, 4294901760
    %v1983 = vsub.f32 %v150, %v1982
    %v1984 = vand.u32 %v1983, 4294901760
    %v1985 = vsub.f32 %v1983, %v1984
    %v1986 = vand.u32 %v1985, 4294901760
    %1987 = vmatpush.msra.mxu0 %v1986
    %v1988 = vand.u32 %v149, 4294901760
    %v1989 = vsub.f32 %v149, %v1988
    %v1990 = vand.u32 %v1989, 4294901760
    %v1991 = vsub.f32 %v1989, %v1990
    %v1992 = vand.u32 %v1991, 4294901760
    %1993 = vmatpush.msra.mxu0 %v1992
    %v1994 = vand.u32 %v148, 4294901760
    %v1995 = vsub.f32 %v148, %v1994
    %v1996 = vand.u32 %v1995, 4294901760
    %v1997 = vsub.f32 %v1995, %v1996
    %v1998 = vand.u32 %v1997, 4294901760
    %1999 = vmatpush.msra.mxu0 %v1998
    %v2000 = vand.u32 %v147, 4294901760
    %v2001 = vsub.f32 %v147, %v2000
    %v2002 = vand.u32 %v2001, 4294901760
    %v2003 = vsub.f32 %v2001, %v2002
    %v2004 = vand.u32 %v2003, 4294901760
    %2005 = vmatpush.msra.mxu0 %v2004
    %v2006 = vand.u32 %v146, 4294901760
    %v2007 = vsub.f32 %v146, %v2006
    %v2008 = vand.u32 %v2007, 4294901760
    %v2009 = vsub.f32 %v2007, %v2008
    %v2010 = vand.u32 %v2009, 4294901760
    %2011 = vmatpush.msra.mxu0 %v2010
    %v2012 = vand.u32 %v145, 4294901760
    %v2013 = vsub.f32 %v145, %v2012
    %v2014 = vand.u32 %v2013, 4294901760
    %v2015 = vsub.f32 %v2013, %v2014
    %v2016 = vand.u32 %v2015, 4294901760
    %2017 = vmatpush.msra.mxu0 %v2016
    %v2018 = vand.u32 %v144, 4294901760
    %v2019 = vsub.f32 %v144, %v2018
    %v2020 = vand.u32 %v2019, 4294901760
    %v2021 = vsub.f32 %v2019, %v2020
    %v2022 = vand.u32 %v2021, 4294901760
    %2023 = vmatpush.msra.mxu0 %v2022
    %v2024 = vand.u32 %v143, 4294901760
    %v2025 = vsub.f32 %v143, %v2024
    %v2026 = vand.u32 %v2025, 4294901760
    %v2027 = vsub.f32 %v2025, %v2026
    %v2028 = vand.u32 %v2027, 4294901760
    %2029 = vmatpush.msra.mxu0 %v2028
    %v2030 = vand.u32 %v142, 4294901760
    %v2031 = vsub.f32 %v142, %v2030
    %v2032 = vand.u32 %v2031, 4294901760
    %v2033 = vsub.f32 %v2031, %v2032
    %v2034 = vand.u32 %v2033, 4294901760
    %2035 = vmatpush.msra.mxu0 %v2034
    %v2036 = vand.u32 %v141, 4294901760
    %v2037 = vsub.f32 %v141, %v2036
    %v2038 = vand.u32 %v2037, 4294901760
    %v2039 = vsub.f32 %v2037, %v2038
    %v2040 = vand.u32 %v2039, 4294901760
    %2041 = vmatpush.msra.mxu0 %v2040
    %v2042 = vand.u32 %v140, 4294901760
    %v2043 = vsub.f32 %v140, %v2042
    %v2044 = vand.u32 %v2043, 4294901760
    %v2045 = vsub.f32 %v2043, %v2044
    %v2046 = vand.u32 %v2045, 4294901760
    %2047 = vmatpush.msra.mxu0 %v2046
    %v2048 = vand.u32 %v139, 4294901760
    %v2049 = vsub.f32 %v139, %v2048
    %v2050 = vand.u32 %v2049, 4294901760
    %v2051 = vsub.f32 %v2049, %v2050
    %v2052 = vand.u32 %v2051, 4294901760
    %2053 = vmatpush.msra.mxu0 %v2052
    %v2054 = vand.u32 %v138, 4294901760
    %v2055 = vsub.f32 %v138, %v2054
    %v2056 = vand.u32 %v2055, 4294901760
    %v2057 = vsub.f32 %v2055, %v2056
    %v2058 = vand.u32 %v2057, 4294901760
    %2059 = vmatpush.msra.mxu0 %v2058
    %v2060 = vand.u32 %v53, 4294901760
    %2061 = vmatmul.f32.gmra.mxu0 %v2060
    %v2062 = vpop.f32.mrf.mxu0
    %v2063 = vadd.f32 %v1962, %v2062
    %2064 = vdwg.mxu0
    %v2065 = vand.u32 %v153, 4294901760
    %v2066 = vsub.f32 %v153, %v2065
    %2067 = vmatpush.msra.mxu0 %v2066
    %v2068 = vand.u32 %v152, 4294901760
    %v2069 = vsub.f32 %v152, %v2068
    %2070 = vmatpush.msra.mxu0 %v2069
    %v2071 = vand.u32 %v151, 4294901760
    %v2072 = vsub.f32 %v151, %v2071
    %2073 = vmatpush.msra.mxu0 %v2072
    %v2074 = vand.u32 %v150, 4294901760
    %v2075 = vsub.f32 %v150, %v2074
    %2076 = vmatpush.msra.mxu0 %v2075
    %v2077 = vand.u32 %v149, 4294901760
    %v2078 = vsub.f32 %v149, %v2077
    %2079 = vmatpush.msra.mxu0 %v2078
    %v2080 = vand.u32 %v148, 4294901760
    %v2081 = vsub.f32 %v148, %v2080
    %2082 = vmatpush.msra.mxu0 %v2081
    %v2083 = vand.u32 %v147, 4294901760
    %v2084 = vsub.f32 %v147, %v2083
    %2085 = vmatpush.msra.mxu0 %v2084
    %v2086 = vand.u32 %v146, 4294901760
    %v2087 = vsub.f32 %v146, %v2086
    %2088 = vmatpush.msra.mxu0 %v2087
    %v2089 = vand.u32 %v145, 4294901760
    %v2090 = vsub.f32 %v145, %v2089
    %2091 = vmatpush.msra.mxu0 %v2090
    %v2092 = vand.u32 %v144, 4294901760
    %v2093 = vsub.f32 %v144, %v2092
    %2094 = vmatpush.msra.mxu0 %v2093
    %v2095 = vand.u32 %v143, 4294901760
    %v2096 = vsub.f32 %v143, %v2095
    %2097 = vmatpush.msra.mxu0 %v2096
    %v2098 = vand.u32 %v142, 4294901760
    %v2099 = vsub.f32 %v142, %v2098
    %2100 = vmatpush.msra.mxu0 %v2099
    %v2101 = vand.u32 %v141, 4294901760
    %v2102 = vsub.f32 %v141, %v2101
    %2103 = vmatpush.msra.mxu0 %v2102
    %v2104 = vand.u32 %v140, 4294901760
    %v2105 = vsub.f32 %v140, %v2104
    %2106 = vmatpush.msra.mxu0 %v2105
    %v2107 = vand.u32 %v139, 4294901760
    %v2108 = vsub.f32 %v139, %v2107
    %2109 = vmatpush.msra.mxu0 %v2108
    %v2110 = vand.u32 %v138, 4294901760
    %v2111 = vsub.f32 %v138, %v2110
    %2112 = vmatpush.msra.mxu0 %v2111
    %v2113 = vand.u32 %v53, 4294901760
    %v2114 = vsub.f32 %v53, %v2113
    %2115 = vmatmul.f32.gmra.mxu0 %v2114
    %v2116 = vpop.f32.mrf.mxu0
    %v2117 = vadd.f32 %v2063, %v2116
    %2118 = vdwg.mxu0
    %v2119 = vand.u32 %v153, 4294901760
    %2120 = vmatpush.msra.mxu0 %v2119
    %v2121 = vand.u32 %v152, 4294901760
    %2122 = vmatpush.msra.mxu0 %v2121
    %v2123 = vand.u32 %v151, 4294901760
    %2124 = vmatpush.msra.mxu0 %v2123
    %v2125 = vand.u32 %v150, 4294901760
    %2126 = vmatpush.msra.mxu0 %v2125
    %v2127 = vand.u32 %v149, 4294901760
    %2128 = vmatpush.msra.mxu0 %v2127
    %v2129 = vand.u32 %v148, 4294901760
    %2130 = vmatpush.msra.mxu0 %v2129
    %v2131 = vand.u32 %v147, 4294901760
    %2132 = vmatpush.msra.mxu0 %v2131
    %v2133 = vand.u32 %v146, 4294901760
    %2134 = vmatpush.msra.mxu0 %v2133
    %v2135 = vand.u32 %v145, 4294901760
    %2136 = vmatpush.msra.mxu0 %v2135
    %v2137 = vand.u32 %v144, 4294901760
    %2138 = vmatpush.msra.mxu0 %v2137
    %v2139 = vand.u32 %v143, 4294901760
    %2140 = vmatpush.msra.mxu0 %v2139
    %v2141 = vand.u32 %v142, 4294901760
    %2142 = vmatpush.msra.mxu0 %v2141
    %v2143 = vand.u32 %v141, 4294901760
    %2144 = vmatpush.msra.mxu0 %v2143
    %v2145 = vand.u32 %v140, 4294901760
    %2146 = vmatpush.msra.mxu0 %v2145
    %v2147 = vand.u32 %v139, 4294901760
    %2148 = vmatpush.msra.mxu0 %v2147
    %v2149 = vand.u32 %v138, 4294901760
    %2150 = vmatpush.msra.mxu0 %v2149
    %v2151 = vand.u32 %v53, 4294901760
    %v2152 = vsub.f32 %v53, %v2151
    %v2153 = vand.u32 %v2152, 4294901760
    %2154 = vmatmul.f32.gmra.mxu0 %v2153
    %v2155 = vpop.f32.mrf.mxu0
    %v2156 = vadd.f32 %v2117, %v2155
    %2157 = vdwg.mxu0
    %v2158 = vand.u32 %v153, 4294901760
    %v2159 = vsub.f32 %v153, %v2158
    %v2160 = vand.u32 %v2159, 4294901760
    %2161 = vmatpush.msra.mxu0 %v2160
    %v2162 = vand.u32 %v152, 4294901760
    %v2163 = vsub.f32 %v152, %v2162
    %v2164 = vand.u32 %v2163, 4294901760
    %2165 = vmatpush.msra.mxu0 %v2164
    %v2166 = vand.u32 %v151, 4294901760
    %v2167 = vsub.f32 %v151, %v2166
    %v2168 = vand.u32 %v2167, 4294901760
    %2169 = vmatpush.msra.mxu0 %v2168
    %v2170 = vand.u32 %v150, 4294901760
    %v2171 = vsub.f32 %v150, %v2170
    %v2172 = vand.u32 %v2171, 4294901760
    %2173 = vmatpush.msra.mxu0 %v2172
    %v2174 = vand.u32 %v149, 4294901760
    %v2175 = vsub.f32 %v149, %v2174
    %v2176 = vand.u32 %v2175, 4294901760
    %2177 = vmatpush.msra.mxu0 %v2176
    %v2178 = vand.u32 %v148, 4294901760
    %v2179 = vsub.f32 %v148, %v2178
    %v2180 = vand.u32 %v2179, 4294901760
    %2181 = vmatpush.msra.mxu0 %v2180
    %v2182 = vand.u32 %v147, 4294901760
    %v2183 = vsub.f32 %v147, %v2182
    %v2184 = vand.u32 %v2183, 4294901760
    %2185 = vmatpush.msra.mxu0 %v2184
    %v2186 = vand.u32 %v146, 4294901760
    %v2187 = vsub.f32 %v146, %v2186
    %v2188 = vand.u32 %v2187, 4294901760
    %2189 = vmatpush.msra.mxu0 %v2188
    %v2190 = vand.u32 %v145, 4294901760
    %v2191 = vsub.f32 %v145, %v2190
    %v2192 = vand.u32 %v2191, 4294901760
    %2193 = vmatpush.msra.mxu0 %v2192
    %v2194 = vand.u32 %v144, 4294901760
    %v2195 = vsub.f32 %v144, %v2194
    %v2196 = vand.u32 %v2195, 4294901760
    %2197 = vmatpush.msra.mxu0 %v2196
    %v2198 = vand.u32 %v143, 4294901760
    %v2199 = vsub.f32 %v143, %v2198
    %v2200 = vand.u32 %v2199, 4294901760
    %2201 = vmatpush.msra.mxu0 %v2200
    %v2202 = vand.u32 %v142, 4294901760
    %v2203 = vsub.f32 %v142, %v2202
    %v2204 = vand.u32 %v2203, 4294901760
    %2205 = vmatpush.msra.mxu0 %v2204
    %v2206 = vand.u32 %v141, 4294901760
    %v2207 = vsub.f32 %v141, %v2206
    %v2208 = vand.u32 %v2207, 4294901760
    %2209 = vmatpush.msra.mxu0 %v2208
    %v2210 = vand.u32 %v140, 4294901760
    %v2211 = vsub.f32 %v140, %v2210
    %v2212 = vand.u32 %v2211, 4294901760
    %2213 = vmatpush.msra.mxu0 %v2212
    %v2214 = vand.u32 %v139, 4294901760
    %v2215 = vsub.f32 %v139, %v2214
    %v2216 = vand.u32 %v2215, 4294901760
    %2217 = vmatpush.msra.mxu0 %v2216
    %v2218 = vand.u32 %v138, 4294901760
    %v2219 = vsub.f32 %v138, %v2218
    %v2220 = vand.u32 %v2219, 4294901760
    %2221 = vmatpush.msra.mxu0 %v2220
    %v2222 = vand.u32 %v53, 4294901760
    %2223 = vmatmul.f32.gmra.mxu0 %v2222
    %v2224 = vpop.f32.mrf.mxu0
    %v2225 = vadd.f32 %v2156, %v2224
    %2226 = vdwg.mxu0
    %v2227 = vand.u32 %v153, 4294901760
    %2228 = vmatpush.msra.mxu0 %v2227
    %v2229 = vand.u32 %v152, 4294901760
    %2230 = vmatpush.msra.mxu0 %v2229
    %v2231 = vand.u32 %v151, 4294901760
    %2232 = vmatpush.msra.mxu0 %v2231
    %v2233 = vand.u32 %v150, 4294901760
    %2234 = vmatpush.msra.mxu0 %v2233
    %v2235 = vand.u32 %v149, 4294901760
    %2236 = vmatpush.msra.mxu0 %v2235
    %v2237 = vand.u32 %v148, 4294901760
    %2238 = vmatpush.msra.mxu0 %v2237
    %v2239 = vand.u32 %v147, 4294901760
    %2240 = vmatpush.msra.mxu0 %v2239
    %v2241 = vand.u32 %v146, 4294901760
    %2242 = vmatpush.msra.mxu0 %v2241
    %v2243 = vand.u32 %v145, 4294901760
    %2244 = vmatpush.msra.mxu0 %v2243
    %v2245 = vand.u32 %v144, 4294901760
    %2246 = vmatpush.msra.mxu0 %v2245
    %v2247 = vand.u32 %v143, 4294901760
    %2248 = vmatpush.msra.mxu0 %v2247
    %v2249 = vand.u32 %v142, 4294901760
    %2250 = vmatpush.msra.mxu0 %v2249
    %v2251 = vand.u32 %v141, 4294901760
    %2252 = vmatpush.msra.mxu0 %v2251
    %v2253 = vand.u32 %v140, 4294901760
    %2254 = vmatpush.msra.mxu0 %v2253
    %v2255 = vand.u32 %v139, 4294901760
    %2256 = vmatpush.msra.mxu0 %v2255
    %v2257 = vand.u32 %v138, 4294901760
    %2258 = vmatpush.msra.mxu0 %v2257
    %v2259 = vand.u32 %v53, 4294901760
    %2260 = vmatmul.f32.gmra.mxu0 %v2259
    %v2261 = vpop.f32.mrf.mxu0
    %v2262 = vadd.f32 %v2225, %v2261
    %2263 = vdwg.mxu0
    %v2264 = vand.u32 %v169, 4294901760
    %2265 = vmatpush.msra.mxu0 %v2264
    %v2266 = vand.u32 %v168, 4294901760
    %2267 = vmatpush.msra.mxu0 %v2266
    %v2268 = vand.u32 %v167, 4294901760
    %2269 = vmatpush.msra.mxu0 %v2268
    %v2270 = vand.u32 %v166, 4294901760
    %2271 = vmatpush.msra.mxu0 %v2270
    %v2272 = vand.u32 %v165, 4294901760
    %2273 = vmatpush.msra.mxu0 %v2272
    %v2274 = vand.u32 %v164, 4294901760
    %2275 = vmatpush.msra.mxu0 %v2274
    %v2276 = vand.u32 %v163, 4294901760
    %2277 = vmatpush.msra.mxu0 %v2276
    %v2278 = vand.u32 %v162, 4294901760
    %2279 = vmatpush.msra.mxu0 %v2278
    %v2280 = vand.u32 %v161, 4294901760
    %2281 = vmatpush.msra.mxu0 %v2280
    %v2282 = vand.u32 %v160, 4294901760
    %2283 = vmatpush.msra.mxu0 %v2282
    %v2284 = vand.u32 %v159, 4294901760
    %2285 = vmatpush.msra.mxu0 %v2284
    %v2286 = vand.u32 %v158, 4294901760
    %2287 = vmatpush.msra.mxu0 %v2286
    %v2288 = vand.u32 %v157, 4294901760
    %2289 = vmatpush.msra.mxu0 %v2288
    %v2290 = vand.u32 %v156, 4294901760
    %2291 = vmatpush.msra.mxu0 %v2290
    %v2292 = vand.u32 %v155, 4294901760
    %2293 = vmatpush.msra.mxu0 %v2292
    %v2294 = vand.u32 %v154, 4294901760
    %2295 = vmatpush.msra.mxu0 %v2294
    %v2296 = vand.u32 %v54, 4294901760
    %v2297 = vsub.f32 %v54, %v2296
    %v2298 = vand.u32 %v2297, 4294901760
    %v2299 = vsub.f32 %v2297, %v2298
    %v2300 = vand.u32 %v2299, 4294901760
    %2301 = vmatmul.f32.gmra.mxu0 %v2300
    %v2302 = vpop.f32.mrf.mxu0
    %v2303 = vadd.f32 %v2262, %v2302
    %2304 = vdwg.mxu0
    %v2305 = vand.u32 %v169, 4294901760
    %v2306 = vsub.f32 %v169, %v2305
    %v2307 = vand.u32 %v2306, 4294901760
    %v2308 = vsub.f32 %v2306, %v2307
    %v2309 = vand.u32 %v2308, 4294901760
    %2310 = vmatpush.msra.mxu0 %v2309
    %v2311 = vand.u32 %v168, 4294901760
    %v2312 = vsub.f32 %v168, %v2311
    %v2313 = vand.u32 %v2312, 4294901760
    %v2314 = vsub.f32 %v2312, %v2313
    %v2315 = vand.u32 %v2314, 4294901760
    %2316 = vmatpush.msra.mxu0 %v2315
    %v2317 = vand.u32 %v167, 4294901760
    %v2318 = vsub.f32 %v167, %v2317
    %v2319 = vand.u32 %v2318, 4294901760
    %v2320 = vsub.f32 %v2318, %v2319
    %v2321 = vand.u32 %v2320, 4294901760
    %2322 = vmatpush.msra.mxu0 %v2321
    %v2323 = vand.u32 %v166, 4294901760
    %v2324 = vsub.f32 %v166, %v2323
    %v2325 = vand.u32 %v2324, 4294901760
    %v2326 = vsub.f32 %v2324, %v2325
    %v2327 = vand.u32 %v2326, 4294901760
    %2328 = vmatpush.msra.mxu0 %v2327
    %v2329 = vand.u32 %v165, 4294901760
    %v2330 = vsub.f32 %v165, %v2329
    %v2331 = vand.u32 %v2330, 4294901760
    %v2332 = vsub.f32 %v2330, %v2331
    %v2333 = vand.u32 %v2332, 4294901760
    %2334 = vmatpush.msra.mxu0 %v2333
    %v2335 = vand.u32 %v164, 4294901760
    %v2336 = vsub.f32 %v164, %v2335
    %v2337 = vand.u32 %v2336, 4294901760
    %v2338 = vsub.f32 %v2336, %v2337
    %v2339 = vand.u32 %v2338, 4294901760
    %2340 = vmatpush.msra.mxu0 %v2339
    %v2341 = vand.u32 %v163, 4294901760
    %v2342 = vsub.f32 %v163, %v2341
    %v2343 = vand.u32 %v2342, 4294901760
    %v2344 = vsub.f32 %v2342, %v2343
    %v2345 = vand.u32 %v2344, 4294901760
    %2346 = vmatpush.msra.mxu0 %v2345
    %v2347 = vand.u32 %v162, 4294901760
    %v2348 = vsub.f32 %v162, %v2347
    %v2349 = vand.u32 %v2348, 4294901760
    %v2350 = vsub.f32 %v2348, %v2349
    %v2351 = vand.u32 %v2350, 4294901760
    %2352 = vmatpush.msra.mxu0 %v2351
    %v2353 = vand.u32 %v161, 4294901760
    %v2354 = vsub.f32 %v161, %v2353
    %v2355 = vand.u32 %v2354, 4294901760
    %v2356 = vsub.f32 %v2354, %v2355
    %v2357 = vand.u32 %v2356, 4294901760
    %2358 = vmatpush.msra.mxu0 %v2357
    %v2359 = vand.u32 %v160, 4294901760
    %v2360 = vsub.f32 %v160, %v2359
    %v2361 = vand.u32 %v2360, 4294901760
    %v2362 = vsub.f32 %v2360, %v2361
    %v2363 = vand.u32 %v2362, 4294901760
    %2364 = vmatpush.msra.mxu0 %v2363
    %v2365 = vand.u32 %v159, 4294901760
    %v2366 = vsub.f32 %v159, %v2365
    %v2367 = vand.u32 %v2366, 4294901760
    %v2368 = vsub.f32 %v2366, %v2367
    %v2369 = vand.u32 %v2368, 4294901760
    %2370 = vmatpush.msra.mxu0 %v2369
    %v2371 = vand.u32 %v158, 4294901760
    %v2372 = vsub.f32 %v158, %v2371
    %v2373 = vand.u32 %v2372, 4294901760
    %v2374 = vsub.f32 %v2372, %v2373
    %v2375 = vand.u32 %v2374, 4294901760
    %2376 = vmatpush.msra.mxu0 %v2375
    %v2377 = vand.u32 %v157, 4294901760
    %v2378 = vsub.f32 %v157, %v2377
    %v2379 = vand.u32 %v2378, 4294901760
    %v2380 = vsub.f32 %v2378, %v2379
    %v2381 = vand.u32 %v2380, 4294901760
    %2382 = vmatpush.msra.mxu0 %v2381
    %v2383 = vand.u32 %v156, 4294901760
    %v2384 = vsub.f32 %v156, %v2383
    %v2385 = vand.u32 %v2384, 4294901760
    %v2386 = vsub.f32 %v2384, %v2385
    %v2387 = vand.u32 %v2386, 4294901760
    %2388 = vmatpush.msra.mxu0 %v2387
    %v2389 = vand.u32 %v155, 4294901760
    %v2390 = vsub.f32 %v155, %v2389
    %v2391 = vand.u32 %v2390, 4294901760
    %v2392 = vsub.f32 %v2390, %v2391
    %v2393 = vand.u32 %v2392, 4294901760
    %2394 = vmatpush.msra.mxu0 %v2393
    %v2395 = vand.u32 %v154, 4294901760
    %v2396 = vsub.f32 %v154, %v2395
    %v2397 = vand.u32 %v2396, 4294901760
    %v2398 = vsub.f32 %v2396, %v2397
    %v2399 = vand.u32 %v2398, 4294901760
    %2400 = vmatpush.msra.mxu0 %v2399
    %v2401 = vand.u32 %v54, 4294901760
    %2402 = vmatmul.f32.gmra.mxu0 %v2401
    %v2403 = vpop.f32.mrf.mxu0
    %v2404 = vadd.f32 %v2303, %v2403
    %2405 = vdwg.mxu0
    %v2406 = vand.u32 %v169, 4294901760
    %v2407 = vsub.f32 %v169, %v2406
    %2408 = vmatpush.msra.mxu0 %v2407
    %v2409 = vand.u32 %v168, 4294901760
    %v2410 = vsub.f32 %v168, %v2409
    %2411 = vmatpush.msra.mxu0 %v2410
    %v2412 = vand.u32 %v167, 4294901760
    %v2413 = vsub.f32 %v167, %v2412
    %2414 = vmatpush.msra.mxu0 %v2413
    %v2415 = vand.u32 %v166, 4294901760
    %v2416 = vsub.f32 %v166, %v2415
    %2417 = vmatpush.msra.mxu0 %v2416
    %v2418 = vand.u32 %v165, 4294901760
    %v2419 = vsub.f32 %v165, %v2418
    %2420 = vmatpush.msra.mxu0 %v2419
    %v2421 = vand.u32 %v164, 4294901760
    %v2422 = vsub.f32 %v164, %v2421
    %2423 = vmatpush.msra.mxu0 %v2422
    %v2424 = vand.u32 %v163, 4294901760
    %v2425 = vsub.f32 %v163, %v2424
    %2426 = vmatpush.msra.mxu0 %v2425
    %v2427 = vand.u32 %v162, 4294901760
    %v2428 = vsub.f32 %v162, %v2427
    %2429 = vmatpush.msra.mxu0 %v2428
    %v2430 = vand.u32 %v161, 4294901760
    %v2431 = vsub.f32 %v161, %v2430
    %2432 = vmatpush.msra.mxu0 %v2431
    %v2433 = vand.u32 %v160, 4294901760
    %v2434 = vsub.f32 %v160, %v2433
    %2435 = vmatpush.msra.mxu0 %v2434
    %v2436 = vand.u32 %v159, 4294901760
    %v2437 = vsub.f32 %v159, %v2436
    %2438 = vmatpush.msra.mxu0 %v2437
    %v2439 = vand.u32 %v158, 4294901760
    %v2440 = vsub.f32 %v158, %v2439
    %2441 = vmatpush.msra.mxu0 %v2440
    %v2442 = vand.u32 %v157, 4294901760
    %v2443 = vsub.f32 %v157, %v2442
    %2444 = vmatpush.msra.mxu0 %v2443
    %v2445 = vand.u32 %v156, 4294901760
    %v2446 = vsub.f32 %v156, %v2445
    %2447 = vmatpush.msra.mxu0 %v2446
    %v2448 = vand.u32 %v155, 4294901760
    %v2449 = vsub.f32 %v155, %v2448
    %2450 = vmatpush.msra.mxu0 %v2449
    %v2451 = vand.u32 %v154, 4294901760
    %v2452 = vsub.f32 %v154, %v2451
    %2453 = vmatpush.msra.mxu0 %v2452
    %v2454 = vand.u32 %v54, 4294901760
    %v2455 = vsub.f32 %v54, %v2454
    %2456 = vmatmul.f32.gmra.mxu0 %v2455
    %v2457 = vpop.f32.mrf.mxu0
    %v2458 = vadd.f32 %v2404, %v2457
    %2459 = vdwg.mxu0
    %v2460 = vand.u32 %v169, 4294901760
    %2461 = vmatpush.msra.mxu0 %v2460
    %v2462 = vand.u32 %v168, 4294901760
    %2463 = vmatpush.msra.mxu0 %v2462
    %v2464 = vand.u32 %v167, 4294901760
    %2465 = vmatpush.msra.mxu0 %v2464
    %v2466 = vand.u32 %v166, 4294901760
    %2467 = vmatpush.msra.mxu0 %v2466
    %v2468 = vand.u32 %v165, 4294901760
    %2469 = vmatpush.msra.mxu0 %v2468
    %v2470 = vand.u32 %v164, 4294901760
    %2471 = vmatpush.msra.mxu0 %v2470
    %v2472 = vand.u32 %v163, 4294901760
    %2473 = vmatpush.msra.mxu0 %v2472
    %v2474 = vand.u32 %v162, 4294901760
    %2475 = vmatpush.msra.mxu0 %v2474
    %v2476 = vand.u32 %v161, 4294901760
    %2477 = vmatpush.msra.mxu0 %v2476
    %v2478 = vand.u32 %v160, 4294901760
    %2479 = vmatpush.msra.mxu0 %v2478
    %v2480 = vand.u32 %v159, 4294901760
    %2481 = vmatpush.msra.mxu0 %v2480
    %v2482 = vand.u32 %v158, 4294901760
    %2483 = vmatpush.msra.mxu0 %v2482
    %v2484 = vand.u32 %v157, 4294901760
    %2485 = vmatpush.msra.mxu0 %v2484
    %v2486 = vand.u32 %v156, 4294901760
    %2487 = vmatpush.msra.mxu0 %v2486
    %v2488 = vand.u32 %v155, 4294901760
    %2489 = vmatpush.msra.mxu0 %v2488
    %v2490 = vand.u32 %v154, 4294901760
    %2491 = vmatpush.msra.mxu0 %v2490
    %v2492 = vand.u32 %v54, 4294901760
    %v2493 = vsub.f32 %v54, %v2492
    %v2494 = vand.u32 %v2493, 4294901760
    %2495 = vmatmul.f32.gmra.mxu0 %v2494
    %v2496 = vpop.f32.mrf.mxu0
    %v2497 = vadd.f32 %v2458, %v2496
    %2498 = vdwg.mxu0
    %v2499 = vand.u32 %v169, 4294901760
    %v2500 = vsub.f32 %v169, %v2499
    %v2501 = vand.u32 %v2500, 4294901760
    %2502 = vmatpush.msra.mxu0 %v2501
    %v2503 = vand.u32 %v168, 4294901760
    %v2504 = vsub.f32 %v168, %v2503
    %v2505 = vand.u32 %v2504, 4294901760
    %2506 = vmatpush.msra.mxu0 %v2505
    %v2507 = vand.u32 %v167, 4294901760
    %v2508 = vsub.f32 %v167, %v2507
    %v2509 = vand.u32 %v2508, 4294901760
    %2510 = vmatpush.msra.mxu0 %v2509
    %v2511 = vand.u32 %v166, 4294901760
    %v2512 = vsub.f32 %v166, %v2511
    %v2513 = vand.u32 %v2512, 4294901760
    %2514 = vmatpush.msra.mxu0 %v2513
    %v2515 = vand.u32 %v165, 4294901760
    %v2516 = vsub.f32 %v165, %v2515
    %v2517 = vand.u32 %v2516, 4294901760
    %2518 = vmatpush.msra.mxu0 %v2517
    %v2519 = vand.u32 %v164, 4294901760
    %v2520 = vsub.f32 %v164, %v2519
    %v2521 = vand.u32 %v2520, 4294901760
    %2522 = vmatpush.msra.mxu0 %v2521
    %v2523 = vand.u32 %v163, 4294901760
    %v2524 = vsub.f32 %v163, %v2523
    %v2525 = vand.u32 %v2524, 4294901760
    %2526 = vmatpush.msra.mxu0 %v2525
    %v2527 = vand.u32 %v162, 4294901760
    %v2528 = vsub.f32 %v162, %v2527
    %v2529 = vand.u32 %v2528, 4294901760
    %2530 = vmatpush.msra.mxu0 %v2529
    %v2531 = vand.u32 %v161, 4294901760
    %v2532 = vsub.f32 %v161, %v2531
    %v2533 = vand.u32 %v2532, 4294901760
    %2534 = vmatpush.msra.mxu0 %v2533
    %v2535 = vand.u32 %v160, 4294901760
    %v2536 = vsub.f32 %v160, %v2535
    %v2537 = vand.u32 %v2536, 4294901760
    %2538 = vmatpush.msra.mxu0 %v2537
    %v2539 = vand.u32 %v159, 4294901760
    %v2540 = vsub.f32 %v159, %v2539
    %v2541 = vand.u32 %v2540, 4294901760
    %2542 = vmatpush.msra.mxu0 %v2541
    %v2543 = vand.u32 %v158, 4294901760
    %v2544 = vsub.f32 %v158, %v2543
    %v2545 = vand.u32 %v2544, 4294901760
    %2546 = vmatpush.msra.mxu0 %v2545
    %v2547 = vand.u32 %v157, 4294901760
    %v2548 = vsub.f32 %v157, %v2547
    %v2549 = vand.u32 %v2548, 4294901760
    %2550 = vmatpush.msra.mxu0 %v2549
    %v2551 = vand.u32 %v156, 4294901760
    %v2552 = vsub.f32 %v156, %v2551
    %v2553 = vand.u32 %v2552, 4294901760
    %2554 = vmatpush.msra.mxu0 %v2553
    %v2555 = vand.u32 %v155, 4294901760
    %v2556 = vsub.f32 %v155, %v2555
    %v2557 = vand.u32 %v2556, 4294901760
    %2558 = vmatpush.msra.mxu0 %v2557
    %v2559 = vand.u32 %v154, 4294901760
    %v2560 = vsub.f32 %v154, %v2559
    %v2561 = vand.u32 %v2560, 4294901760
    %2562 = vmatpush.msra.mxu0 %v2561
    %v2563 = vand.u32 %v54, 4294901760
    %2564 = vmatmul.f32.gmra.mxu0 %v2563
    %v2565 = vpop.f32.mrf.mxu0
    %v2566 = vadd.f32 %v2497, %v2565
    %2567 = vdwg.mxu0
    %v2568 = vand.u32 %v169, 4294901760
    %2569 = vmatpush.msra.mxu0 %v2568
    %v2570 = vand.u32 %v168, 4294901760
    %2571 = vmatpush.msra.mxu0 %v2570
    %v2572 = vand.u32 %v167, 4294901760
    %2573 = vmatpush.msra.mxu0 %v2572
    %v2574 = vand.u32 %v166, 4294901760
    %2575 = vmatpush.msra.mxu0 %v2574
    %v2576 = vand.u32 %v165, 4294901760
    %2577 = vmatpush.msra.mxu0 %v2576
    %v2578 = vand.u32 %v164, 4294901760
    %2579 = vmatpush.msra.mxu0 %v2578
    %v2580 = vand.u32 %v163, 4294901760
    %2581 = vmatpush.msra.mxu0 %v2580
    %v2582 = vand.u32 %v162, 4294901760
    %2583 = vmatpush.msra.mxu0 %v2582
    %v2584 = vand.u32 %v161, 4294901760
    %2585 = vmatpush.msra.mxu0 %v2584
    %v2586 = vand.u32 %v160, 4294901760
    %2587 = vmatpush.msra.mxu0 %v2586
    %v2588 = vand.u32 %v159, 4294901760
    %2589 = vmatpush.msra.mxu0 %v2588
    %v2590 = vand.u32 %v158, 4294901760
    %2591 = vmatpush.msra.mxu0 %v2590
    %v2592 = vand.u32 %v157, 4294901760
    %2593 = vmatpush.msra.mxu0 %v2592
    %v2594 = vand.u32 %v156, 4294901760
    %2595 = vmatpush.msra.mxu0 %v2594
    %v2596 = vand.u32 %v155, 4294901760
    %2597 = vmatpush.msra.mxu0 %v2596
    %v2598 = vand.u32 %v154, 4294901760
    %2599 = vmatpush.msra.mxu0 %v2598
    %v2600 = vand.u32 %v54, 4294901760
    %2601 = vmatmul.f32.gmra.mxu0 %v2600
    %v2602 = vpop.f32.mrf.mxu0
    %v2603 = vadd.f32 %v2566, %v2602
    %2604 = vdwg.mxu0
    %v2605 = vand.u32 %v185, 4294901760
    %2606 = vmatpush.msra.mxu0 %v2605
    %v2607 = vand.u32 %v184, 4294901760
    %2608 = vmatpush.msra.mxu0 %v2607
    %v2609 = vand.u32 %v183, 4294901760
    %2610 = vmatpush.msra.mxu0 %v2609
    %v2611 = vand.u32 %v182, 4294901760
    %2612 = vmatpush.msra.mxu0 %v2611
    %v2613 = vand.u32 %v181, 4294901760
    %2614 = vmatpush.msra.mxu0 %v2613
    %v2615 = vand.u32 %v180, 4294901760
    %2616 = vmatpush.msra.mxu0 %v2615
    %v2617 = vand.u32 %v179, 4294901760
    %2618 = vmatpush.msra.mxu0 %v2617
    %v2619 = vand.u32 %v178, 4294901760
    %2620 = vmatpush.msra.mxu0 %v2619
    %v2621 = vand.u32 %v177, 4294901760
    %2622 = vmatpush.msra.mxu0 %v2621
    %v2623 = vand.u32 %v176, 4294901760
    %2624 = vmatpush.msra.mxu0 %v2623
    %v2625 = vand.u32 %v175, 4294901760
    %2626 = vmatpush.msra.mxu0 %v2625
    %v2627 = vand.u32 %v174, 4294901760
    %2628 = vmatpush.msra.mxu0 %v2627
    %v2629 = vand.u32 %v173, 4294901760
    %2630 = vmatpush.msra.mxu0 %v2629
    %v2631 = vand.u32 %v172, 4294901760
    %2632 = vmatpush.msra.mxu0 %v2631
    %v2633 = vand.u32 %v171, 4294901760
    %2634 = vmatpush.msra.mxu0 %v2633
    %v2635 = vand.u32 %v170, 4294901760
    %2636 = vmatpush.msra.mxu0 %v2635
    %v2637 = vand.u32 %v55, 4294901760
    %v2638 = vsub.f32 %v55, %v2637
    %v2639 = vand.u32 %v2638, 4294901760
    %v2640 = vsub.f32 %v2638, %v2639
    %v2641 = vand.u32 %v2640, 4294901760
    %2642 = vmatmul.f32.gmra.mxu0 %v2641
    %v2643 = vpop.f32.mrf.mxu0
    %v2644 = vadd.f32 %v2603, %v2643
    %2645 = vdwg.mxu0
    %v2646 = vand.u32 %v185, 4294901760
    %v2647 = vsub.f32 %v185, %v2646
    %v2648 = vand.u32 %v2647, 4294901760
    %v2649 = vsub.f32 %v2647, %v2648
    %v2650 = vand.u32 %v2649, 4294901760
    %2651 = vmatpush.msra.mxu0 %v2650
    %v2652 = vand.u32 %v184, 4294901760
    %v2653 = vsub.f32 %v184, %v2652
    %v2654 = vand.u32 %v2653, 4294901760
    %v2655 = vsub.f32 %v2653, %v2654
    %v2656 = vand.u32 %v2655, 4294901760
    %2657 = vmatpush.msra.mxu0 %v2656
    %v2658 = vand.u32 %v183, 4294901760
    %v2659 = vsub.f32 %v183, %v2658
    %v2660 = vand.u32 %v2659, 4294901760
    %v2661 = vsub.f32 %v2659, %v2660
    %v2662 = vand.u32 %v2661, 4294901760
    %2663 = vmatpush.msra.mxu0 %v2662
    %v2664 = vand.u32 %v182, 4294901760
    %v2665 = vsub.f32 %v182, %v2664
    %v2666 = vand.u32 %v2665, 4294901760
    %v2667 = vsub.f32 %v2665, %v2666
    %v2668 = vand.u32 %v2667, 4294901760
    %2669 = vmatpush.msra.mxu0 %v2668
    %v2670 = vand.u32 %v181, 4294901760
    %v2671 = vsub.f32 %v181, %v2670
    %v2672 = vand.u32 %v2671, 4294901760
    %v2673 = vsub.f32 %v2671, %v2672
    %v2674 = vand.u32 %v2673, 4294901760
    %2675 = vmatpush.msra.mxu0 %v2674
    %v2676 = vand.u32 %v180, 4294901760
    %v2677 = vsub.f32 %v180, %v2676
    %v2678 = vand.u32 %v2677, 4294901760
    %v2679 = vsub.f32 %v2677, %v2678
    %v2680 = vand.u32 %v2679, 4294901760
    %2681 = vmatpush.msra.mxu0 %v2680
    %v2682 = vand.u32 %v179, 4294901760
    %v2683 = vsub.f32 %v179, %v2682
    %v2684 = vand.u32 %v2683, 4294901760
    %v2685 = vsub.f32 %v2683, %v2684
    %v2686 = vand.u32 %v2685, 4294901760
    %2687 = vmatpush.msra.mxu0 %v2686
    %v2688 = vand.u32 %v178, 4294901760
    %v2689 = vsub.f32 %v178, %v2688
    %v2690 = vand.u32 %v2689, 4294901760
    %v2691 = vsub.f32 %v2689, %v2690
    %v2692 = vand.u32 %v2691, 4294901760
    %2693 = vmatpush.msra.mxu0 %v2692
    %v2694 = vand.u32 %v177, 4294901760
    %v2695 = vsub.f32 %v177, %v2694
    %v2696 = vand.u32 %v2695, 4294901760
    %v2697 = vsub.f32 %v2695, %v2696
    %v2698 = vand.u32 %v2697, 4294901760
    %2699 = vmatpush.msra.mxu0 %v2698
    %v2700 = vand.u32 %v176, 4294901760
    %v2701 = vsub.f32 %v176, %v2700
    %v2702 = vand.u32 %v2701, 4294901760
    %v2703 = vsub.f32 %v2701, %v2702
    %v2704 = vand.u32 %v2703, 4294901760
    %2705 = vmatpush.msra.mxu0 %v2704
    %v2706 = vand.u32 %v175, 4294901760
    %v2707 = vsub.f32 %v175, %v2706
    %v2708 = vand.u32 %v2707, 4294901760
    %v2709 = vsub.f32 %v2707, %v2708
    %v2710 = vand.u32 %v2709, 4294901760
    %2711 = vmatpush.msra.mxu0 %v2710
    %v2712 = vand.u32 %v174, 4294901760
    %v2713 = vsub.f32 %v174, %v2712
    %v2714 = vand.u32 %v2713, 4294901760
    %v2715 = vsub.f32 %v2713, %v2714
    %v2716 = vand.u32 %v2715, 4294901760
    %2717 = vmatpush.msra.mxu0 %v2716
    %v2718 = vand.u32 %v173, 4294901760
    %v2719 = vsub.f32 %v173, %v2718
    %v2720 = vand.u32 %v2719, 4294901760
    %v2721 = vsub.f32 %v2719, %v2720
    %v2722 = vand.u32 %v2721, 4294901760
    %2723 = vmatpush.msra.mxu0 %v2722
    %v2724 = vand.u32 %v172, 4294901760
    %v2725 = vsub.f32 %v172, %v2724
    %v2726 = vand.u32 %v2725, 4294901760
    %v2727 = vsub.f32 %v2725, %v2726
    %v2728 = vand.u32 %v2727, 4294901760
    %2729 = vmatpush.msra.mxu0 %v2728
    %v2730 = vand.u32 %v171, 4294901760
    %v2731 = vsub.f32 %v171, %v2730
    %v2732 = vand.u32 %v2731, 4294901760
    %v2733 = vsub.f32 %v2731, %v2732
    %v2734 = vand.u32 %v2733, 4294901760
    %2735 = vmatpush.msra.mxu0 %v2734
    %v2736 = vand.u32 %v170, 4294901760
    %v2737 = vsub.f32 %v170, %v2736
    %v2738 = vand.u32 %v2737, 4294901760
    %v2739 = vsub.f32 %v2737, %v2738
    %v2740 = vand.u32 %v2739, 4294901760
    %2741 = vmatpush.msra.mxu0 %v2740
    %v2742 = vand.u32 %v55, 4294901760
    %2743 = vmatmul.f32.gmra.mxu0 %v2742
    %v2744 = vpop.f32.mrf.mxu0
    %v2745 = vadd.f32 %v2644, %v2744
    %2746 = vdwg.mxu0
    %v2747 = vand.u32 %v185, 4294901760
    %v2748 = vsub.f32 %v185, %v2747
    %2749 = vmatpush.msra.mxu0 %v2748
    %v2750 = vand.u32 %v184, 4294901760
    %v2751 = vsub.f32 %v184, %v2750
    %2752 = vmatpush.msra.mxu0 %v2751
    %v2753 = vand.u32 %v183, 4294901760
    %v2754 = vsub.f32 %v183, %v2753
    %2755 = vmatpush.msra.mxu0 %v2754
    %v2756 = vand.u32 %v182, 4294901760
    %v2757 = vsub.f32 %v182, %v2756
    %2758 = vmatpush.msra.mxu0 %v2757
    %v2759 = vand.u32 %v181, 4294901760
    %v2760 = vsub.f32 %v181, %v2759
    %2761 = vmatpush.msra.mxu0 %v2760
    %v2762 = vand.u32 %v180, 4294901760
    %v2763 = vsub.f32 %v180, %v2762
    %2764 = vmatpush.msra.mxu0 %v2763
    %v2765 = vand.u32 %v179, 4294901760
    %v2766 = vsub.f32 %v179, %v2765
    %2767 = vmatpush.msra.mxu0 %v2766
    %v2768 = vand.u32 %v178, 4294901760
    %v2769 = vsub.f32 %v178, %v2768
    %2770 = vmatpush.msra.mxu0 %v2769
    %v2771 = vand.u32 %v177, 4294901760
    %v2772 = vsub.f32 %v177, %v2771
    %2773 = vmatpush.msra.mxu0 %v2772
    %v2774 = vand.u32 %v176, 4294901760
    %v2775 = vsub.f32 %v176, %v2774
    %2776 = vmatpush.msra.mxu0 %v2775
    %v2777 = vand.u32 %v175, 4294901760
    %v2778 = vsub.f32 %v175, %v2777
    %2779 = vmatpush.msra.mxu0 %v2778
    %v2780 = vand.u32 %v174, 4294901760
    %v2781 = vsub.f32 %v174, %v2780
    %2782 = vmatpush.msra.mxu0 %v2781
    %v2783 = vand.u32 %v173, 4294901760
    %v2784 = vsub.f32 %v173, %v2783
    %2785 = vmatpush.msra.mxu0 %v2784
    %v2786 = vand.u32 %v172, 4294901760
    %v2787 = vsub.f32 %v172, %v2786
    %2788 = vmatpush.msra.mxu0 %v2787
    %v2789 = vand.u32 %v171, 4294901760
    %v2790 = vsub.f32 %v171, %v2789
    %2791 = vmatpush.msra.mxu0 %v2790
    %v2792 = vand.u32 %v170, 4294901760
    %v2793 = vsub.f32 %v170, %v2792
    %2794 = vmatpush.msra.mxu0 %v2793
    %v2795 = vand.u32 %v55, 4294901760
    %v2796 = vsub.f32 %v55, %v2795
    %2797 = vmatmul.f32.gmra.mxu0 %v2796
    %v2798 = vpop.f32.mrf.mxu0
    %v2799 = vadd.f32 %v2745, %v2798
    %2800 = vdwg.mxu0
    %v2801 = vand.u32 %v185, 4294901760
    %2802 = vmatpush.msra.mxu0 %v2801
    %v2803 = vand.u32 %v184, 4294901760
    %2804 = vmatpush.msra.mxu0 %v2803
    %v2805 = vand.u32 %v183, 4294901760
    %2806 = vmatpush.msra.mxu0 %v2805
    %v2807 = vand.u32 %v182, 4294901760
    %2808 = vmatpush.msra.mxu0 %v2807
    %v2809 = vand.u32 %v181, 4294901760
    %2810 = vmatpush.msra.mxu0 %v2809
    %v2811 = vand.u32 %v180, 4294901760
    %2812 = vmatpush.msra.mxu0 %v2811
    %v2813 = vand.u32 %v179, 4294901760
    %2814 = vmatpush.msra.mxu0 %v2813
    %v2815 = vand.u32 %v178, 4294901760
    %2816 = vmatpush.msra.mxu0 %v2815
    %v2817 = vand.u32 %v177, 4294901760
    %2818 = vmatpush.msra.mxu0 %v2817
    %v2819 = vand.u32 %v176, 4294901760
    %2820 = vmatpush.msra.mxu0 %v2819
    %v2821 = vand.u32 %v175, 4294901760
    %2822 = vmatpush.msra.mxu0 %v2821
    %v2823 = vand.u32 %v174, 4294901760
    %2824 = vmatpush.msra.mxu0 %v2823
    %v2825 = vand.u32 %v173, 4294901760
    %2826 = vmatpush.msra.mxu0 %v2825
    %v2827 = vand.u32 %v172, 4294901760
    %2828 = vmatpush.msra.mxu0 %v2827
    %v2829 = vand.u32 %v171, 4294901760
    %2830 = vmatpush.msra.mxu0 %v2829
    %v2831 = vand.u32 %v170, 4294901760
    %2832 = vmatpush.msra.mxu0 %v2831
    %v2833 = vand.u32 %v55, 4294901760
    %v2834 = vsub.f32 %v55, %v2833
    %v2835 = vand.u32 %v2834, 4294901760
    %2836 = vmatmul.f32.gmra.mxu0 %v2835
    %v2837 = vpop.f32.mrf.mxu0
    %v2838 = vadd.f32 %v2799, %v2837
    %2839 = vdwg.mxu0
    %v2840 = vand.u32 %v185, 4294901760
    %v2841 = vsub.f32 %v185, %v2840
    %v2842 = vand.u32 %v2841, 4294901760
    %2843 = vmatpush.msra.mxu0 %v2842
    %v2844 = vand.u32 %v184, 4294901760
    %v2845 = vsub.f32 %v184, %v2844
    %v2846 = vand.u32 %v2845, 4294901760
    %2847 = vmatpush.msra.mxu0 %v2846
    %v2848 = vand.u32 %v183, 4294901760
    %v2849 = vsub.f32 %v183, %v2848
    %v2850 = vand.u32 %v2849, 4294901760
    %2851 = vmatpush.msra.mxu0 %v2850
    %v2852 = vand.u32 %v182, 4294901760
    %v2853 = vsub.f32 %v182, %v2852
    %v2854 = vand.u32 %v2853, 4294901760
    %2855 = vmatpush.msra.mxu0 %v2854
    %v2856 = vand.u32 %v181, 4294901760
    %v2857 = vsub.f32 %v181, %v2856
    %v2858 = vand.u32 %v2857, 4294901760
    %2859 = vmatpush.msra.mxu0 %v2858
    %v2860 = vand.u32 %v180, 4294901760
    %v2861 = vsub.f32 %v180, %v2860
    %v2862 = vand.u32 %v2861, 4294901760
    %2863 = vmatpush.msra.mxu0 %v2862
    %v2864 = vand.u32 %v179, 4294901760
    %v2865 = vsub.f32 %v179, %v2864
    %v2866 = vand.u32 %v2865, 4294901760
    %2867 = vmatpush.msra.mxu0 %v2866
    %v2868 = vand.u32 %v178, 4294901760
    %v2869 = vsub.f32 %v178, %v2868
    %v2870 = vand.u32 %v2869, 4294901760
    %2871 = vmatpush.msra.mxu0 %v2870
    %v2872 = vand.u32 %v177, 4294901760
    %v2873 = vsub.f32 %v177, %v2872
    %v2874 = vand.u32 %v2873, 4294901760
    %2875 = vmatpush.msra.mxu0 %v2874
    %v2876 = vand.u32 %v176, 4294901760
    %v2877 = vsub.f32 %v176, %v2876
    %v2878 = vand.u32 %v2877, 4294901760
    %2879 = vmatpush.msra.mxu0 %v2878
    %v2880 = vand.u32 %v175, 4294901760
    %v2881 = vsub.f32 %v175, %v2880
    %v2882 = vand.u32 %v2881, 4294901760
    %2883 = vmatpush.msra.mxu0 %v2882
    %v2884 = vand.u32 %v174, 4294901760
    %v2885 = vsub.f32 %v174, %v2884
    %v2886 = vand.u32 %v2885, 4294901760
    %2887 = vmatpush.msra.mxu0 %v2886
    %v2888 = vand.u32 %v173, 4294901760
    %v2889 = vsub.f32 %v173, %v2888
    %v2890 = vand.u32 %v2889, 4294901760
    %2891 = vmatpush.msra.mxu0 %v2890
    %v2892 = vand.u32 %v172, 4294901760
    %v2893 = vsub.f32 %v172, %v2892
    %v2894 = vand.u32 %v2893, 4294901760
    %2895 = vmatpush.msra.mxu0 %v2894
    %v2896 = vand.u32 %v171, 4294901760
    %v2897 = vsub.f32 %v171, %v2896
    %v2898 = vand.u32 %v2897, 4294901760
    %2899 = vmatpush.msra.mxu0 %v2898
    %v2900 = vand.u32 %v170, 4294901760
    %v2901 = vsub.f32 %v170, %v2900
    %v2902 = vand.u32 %v2901, 4294901760
    %2903 = vmatpush.msra.mxu0 %v2902
    %v2904 = vand.u32 %v55, 4294901760
    %2905 = vmatmul.f32.gmra.mxu0 %v2904
    %v2906 = vpop.f32.mrf.mxu0
    %v2907 = vadd.f32 %v2838, %v2906
    %2908 = vdwg.mxu0
    %v2909 = vand.u32 %v185, 4294901760
    %2910 = vmatpush.msra.mxu0 %v2909
    %v2911 = vand.u32 %v184, 4294901760
    %2912 = vmatpush.msra.mxu0 %v2911
    %v2913 = vand.u32 %v183, 4294901760
    %2914 = vmatpush.msra.mxu0 %v2913
    %v2915 = vand.u32 %v182, 4294901760
    %2916 = vmatpush.msra.mxu0 %v2915
    %v2917 = vand.u32 %v181, 4294901760
    %2918 = vmatpush.msra.mxu0 %v2917
    %v2919 = vand.u32 %v180, 4294901760
    %2920 = vmatpush.msra.mxu0 %v2919
    %v2921 = vand.u32 %v179, 4294901760
    %2922 = vmatpush.msra.mxu0 %v2921
    %v2923 = vand.u32 %v178, 4294901760
    %2924 = vmatpush.msra.mxu0 %v2923
    %v2925 = vand.u32 %v177, 4294901760
    %2926 = vmatpush.msra.mxu0 %v2925
    %v2927 = vand.u32 %v176, 4294901760
    %2928 = vmatpush.msra.mxu0 %v2927
    %v2929 = vand.u32 %v175, 4294901760
    %2930 = vmatpush.msra.mxu0 %v2929
    %v2931 = vand.u32 %v174, 4294901760
    %2932 = vmatpush.msra.mxu0 %v2931
    %v2933 = vand.u32 %v173, 4294901760
    %2934 = vmatpush.msra.mxu0 %v2933
    %v2935 = vand.u32 %v172, 4294901760
    %2936 = vmatpush.msra.mxu0 %v2935
    %v2937 = vand.u32 %v171, 4294901760
    %2938 = vmatpush.msra.mxu0 %v2937
    %v2939 = vand.u32 %v170, 4294901760
    %2940 = vmatpush.msra.mxu0 %v2939
    %v2941 = vand.u32 %v55, 4294901760
    %2942 = vmatmul.f32.gmra.mxu0 %v2941
    %v2943 = vpop.f32.mrf.mxu0
    %v2944 = vadd.f32 %v2907, %v2943
    %2945 = vdwg.mxu0
    %v2946 = vand.u32 %v201, 4294901760
    %2947 = vmatpush.msra.mxu0 %v2946
    %v2948 = vand.u32 %v200, 4294901760
    %2949 = vmatpush.msra.mxu0 %v2948
    %v2950 = vand.u32 %v199, 4294901760
    %2951 = vmatpush.msra.mxu0 %v2950
    %v2952 = vand.u32 %v198, 4294901760
    %2953 = vmatpush.msra.mxu0 %v2952
    %v2954 = vand.u32 %v197, 4294901760
    %2955 = vmatpush.msra.mxu0 %v2954
    %v2956 = vand.u32 %v196, 4294901760
    %2957 = vmatpush.msra.mxu0 %v2956
    %v2958 = vand.u32 %v195, 4294901760
    %2959 = vmatpush.msra.mxu0 %v2958
    %v2960 = vand.u32 %v194, 4294901760
    %2961 = vmatpush.msra.mxu0 %v2960
    %v2962 = vand.u32 %v193, 4294901760
    %2963 = vmatpush.msra.mxu0 %v2962
    %v2964 = vand.u32 %v192, 4294901760
    %2965 = vmatpush.msra.mxu0 %v2964
    %v2966 = vand.u32 %v191, 4294901760
    %2967 = vmatpush.msra.mxu0 %v2966
    %v2968 = vand.u32 %v190, 4294901760
    %2969 = vmatpush.msra.mxu0 %v2968
    %v2970 = vand.u32 %v189, 4294901760
    %2971 = vmatpush.msra.mxu0 %v2970
    %v2972 = vand.u32 %v188, 4294901760
    %2973 = vmatpush.msra.mxu0 %v2972
    %v2974 = vand.u32 %v187, 4294901760
    %2975 = vmatpush.msra.mxu0 %v2974
    %v2976 = vand.u32 %v186, 4294901760
    %2977 = vmatpush.msra.mxu0 %v2976
    %v2978 = vand.u32 %v56, 4294901760
    %v2979 = vsub.f32 %v56, %v2978
    %v2980 = vand.u32 %v2979, 4294901760
    %v2981 = vsub.f32 %v2979, %v2980
    %v2982 = vand.u32 %v2981, 4294901760
    %2983 = vmatmul.f32.gmra.mxu0 %v2982
    %v2984 = vpop.f32.mrf.mxu0
    %v2985 = vadd.f32 %v2944, %v2984
    %2986 = vdwg.mxu0
    %v2987 = vand.u32 %v201, 4294901760
    %v2988 = vsub.f32 %v201, %v2987
    %v2989 = vand.u32 %v2988, 4294901760
    %v2990 = vsub.f32 %v2988, %v2989
    %v2991 = vand.u32 %v2990, 4294901760
    %2992 = vmatpush.msra.mxu0 %v2991
    %v2993 = vand.u32 %v200, 4294901760
    %v2994 = vsub.f32 %v200, %v2993
    %v2995 = vand.u32 %v2994, 4294901760
    %v2996 = vsub.f32 %v2994, %v2995
    %v2997 = vand.u32 %v2996, 4294901760
    %2998 = vmatpush.msra.mxu0 %v2997
    %v2999 = vand.u32 %v199, 4294901760
    %v3000 = vsub.f32 %v199, %v2999
    %v3001 = vand.u32 %v3000, 4294901760
    %v3002 = vsub.f32 %v3000, %v3001
    %v3003 = vand.u32 %v3002, 4294901760
    %3004 = vmatpush.msra.mxu0 %v3003
    %v3005 = vand.u32 %v198, 4294901760
    %v3006 = vsub.f32 %v198, %v3005
    %v3007 = vand.u32 %v3006, 4294901760
    %v3008 = vsub.f32 %v3006, %v3007
    %v3009 = vand.u32 %v3008, 4294901760
    %3010 = vmatpush.msra.mxu0 %v3009
    %v3011 = vand.u32 %v197, 4294901760
    %v3012 = vsub.f32 %v197, %v3011
    %v3013 = vand.u32 %v3012, 4294901760
    %v3014 = vsub.f32 %v3012, %v3013
    %v3015 = vand.u32 %v3014, 4294901760
    %3016 = vmatpush.msra.mxu0 %v3015
    %v3017 = vand.u32 %v196, 4294901760
    %v3018 = vsub.f32 %v196, %v3017
    %v3019 = vand.u32 %v3018, 4294901760
    %v3020 = vsub.f32 %v3018, %v3019
    %v3021 = vand.u32 %v3020, 4294901760
    %3022 = vmatpush.msra.mxu0 %v3021
    %v3023 = vand.u32 %v195, 4294901760
    %v3024 = vsub.f32 %v195, %v3023
    %v3025 = vand.u32 %v3024, 4294901760
    %v3026 = vsub.f32 %v3024, %v3025
    %v3027 = vand.u32 %v3026, 4294901760
    %3028 = vmatpush.msra.mxu0 %v3027
    %v3029 = vand.u32 %v194, 4294901760
    %v3030 = vsub.f32 %v194, %v3029
    %v3031 = vand.u32 %v3030, 4294901760
    %v3032 = vsub.f32 %v3030, %v3031
    %v3033 = vand.u32 %v3032, 4294901760
    %3034 = vmatpush.msra.mxu0 %v3033
    %v3035 = vand.u32 %v193, 4294901760
    %v3036 = vsub.f32 %v193, %v3035
    %v3037 = vand.u32 %v3036, 4294901760
    %v3038 = vsub.f32 %v3036, %v3037
    %v3039 = vand.u32 %v3038, 4294901760
    %3040 = vmatpush.msra.mxu0 %v3039
    %v3041 = vand.u32 %v192, 4294901760
    %v3042 = vsub.f32 %v192, %v3041
    %v3043 = vand.u32 %v3042, 4294901760
    %v3044 = vsub.f32 %v3042, %v3043
    %v3045 = vand.u32 %v3044, 4294901760
    %3046 = vmatpush.msra.mxu0 %v3045
    %v3047 = vand.u32 %v191, 4294901760
    %v3048 = vsub.f32 %v191, %v3047
    %v3049 = vand.u32 %v3048, 4294901760
    %v3050 = vsub.f32 %v3048, %v3049
    %v3051 = vand.u32 %v3050, 4294901760
    %3052 = vmatpush.msra.mxu0 %v3051
    %v3053 = vand.u32 %v190, 4294901760
    %v3054 = vsub.f32 %v190, %v3053
    %v3055 = vand.u32 %v3054, 4294901760
    %v3056 = vsub.f32 %v3054, %v3055
    %v3057 = vand.u32 %v3056, 4294901760
    %3058 = vmatpush.msra.mxu0 %v3057
    %v3059 = vand.u32 %v189, 4294901760
    %v3060 = vsub.f32 %v189, %v3059
    %v3061 = vand.u32 %v3060, 4294901760
    %v3062 = vsub.f32 %v3060, %v3061
    %v3063 = vand.u32 %v3062, 4294901760
    %3064 = vmatpush.msra.mxu0 %v3063
    %v3065 = vand.u32 %v188, 4294901760
    %v3066 = vsub.f32 %v188, %v3065
    %v3067 = vand.u32 %v3066, 4294901760
    %v3068 = vsub.f32 %v3066, %v3067
    %v3069 = vand.u32 %v3068, 4294901760
    %3070 = vmatpush.msra.mxu0 %v3069
    %v3071 = vand.u32 %v187, 4294901760
    %v3072 = vsub.f32 %v187, %v3071
    %v3073 = vand.u32 %v3072, 4294901760
    %v3074 = vsub.f32 %v3072, %v3073
    %v3075 = vand.u32 %v3074, 4294901760
    %3076 = vmatpush.msra.mxu0 %v3075
    %v3077 = vand.u32 %v186, 4294901760
    %v3078 = vsub.f32 %v186, %v3077
    %v3079 = vand.u32 %v3078, 4294901760
    %v3080 = vsub.f32 %v3078, %v3079
    %v3081 = vand.u32 %v3080, 4294901760
    %3082 = vmatpush.msra.mxu0 %v3081
    %v3083 = vand.u32 %v56, 4294901760
    %3084 = vmatmul.f32.gmra.mxu0 %v3083
    %v3085 = vpop.f32.mrf.mxu0
    %v3086 = vadd.f32 %v2985, %v3085
    %3087 = vdwg.mxu0
    %v3088 = vand.u32 %v201, 4294901760
    %v3089 = vsub.f32 %v201, %v3088
    %3090 = vmatpush.msra.mxu0 %v3089
    %v3091 = vand.u32 %v200, 4294901760
    %v3092 = vsub.f32 %v200, %v3091
    %3093 = vmatpush.msra.mxu0 %v3092
    %v3094 = vand.u32 %v199, 4294901760
    %v3095 = vsub.f32 %v199, %v3094
    %3096 = vmatpush.msra.mxu0 %v3095
    %v3097 = vand.u32 %v198, 4294901760
    %v3098 = vsub.f32 %v198, %v3097
    %3099 = vmatpush.msra.mxu0 %v3098
    %v3100 = vand.u32 %v197, 4294901760
    %v3101 = vsub.f32 %v197, %v3100
    %3102 = vmatpush.msra.mxu0 %v3101
    %v3103 = vand.u32 %v196, 4294901760
    %v3104 = vsub.f32 %v196, %v3103
    %3105 = vmatpush.msra.mxu0 %v3104
    %v3106 = vand.u32 %v195, 4294901760
    %v3107 = vsub.f32 %v195, %v3106
    %3108 = vmatpush.msra.mxu0 %v3107
    %v3109 = vand.u32 %v194, 4294901760
    %v3110 = vsub.f32 %v194, %v3109
    %3111 = vmatpush.msra.mxu0 %v3110
    %v3112 = vand.u32 %v193, 4294901760
    %v3113 = vsub.f32 %v193, %v3112
    %3114 = vmatpush.msra.mxu0 %v3113
    %v3115 = vand.u32 %v192, 4294901760
    %v3116 = vsub.f32 %v192, %v3115
    %3117 = vmatpush.msra.mxu0 %v3116
    %v3118 = vand.u32 %v191, 4294901760
    %v3119 = vsub.f32 %v191, %v3118
    %3120 = vmatpush.msra.mxu0 %v3119
    %v3121 = vand.u32 %v190, 4294901760
    %v3122 = vsub.f32 %v190, %v3121
    %3123 = vmatpush.msra.mxu0 %v3122
    %v3124 = vand.u32 %v189, 4294901760
    %v3125 = vsub.f32 %v189, %v3124
    %3126 = vmatpush.msra.mxu0 %v3125
    %v3127 = vand.u32 %v188, 4294901760
    %v3128 = vsub.f32 %v188, %v3127
    %3129 = vmatpush.msra.mxu0 %v3128
    %v3130 = vand.u32 %v187, 4294901760
    %v3131 = vsub.f32 %v187, %v3130
    %3132 = vmatpush.msra.mxu0 %v3131
    %v3133 = vand.u32 %v186, 4294901760
    %v3134 = vsub.f32 %v186, %v3133
    %3135 = vmatpush.msra.mxu0 %v3134
    %v3136 = vand.u32 %v56, 4294901760
    %v3137 = vsub.f32 %v56, %v3136
    %3138 = vmatmul.f32.gmra.mxu0 %v3137
    %v3139 = vpop.f32.mrf.mxu0
    %v3140 = vadd.f32 %v3086, %v3139
    %3141 = vdwg.mxu0
    %v3142 = vand.u32 %v201, 4294901760
    %3143 = vmatpush.msra.mxu0 %v3142
    %v3144 = vand.u32 %v200, 4294901760
    %3145 = vmatpush.msra.mxu0 %v3144
    %v3146 = vand.u32 %v199, 4294901760
    %3147 = vmatpush.msra.mxu0 %v3146
    %v3148 = vand.u32 %v198, 4294901760
    %3149 = vmatpush.msra.mxu0 %v3148
    %v3150 = vand.u32 %v197, 4294901760
    %3151 = vmatpush.msra.mxu0 %v3150
    %v3152 = vand.u32 %v196, 4294901760
    %3153 = vmatpush.msra.mxu0 %v3152
    %v3154 = vand.u32 %v195, 4294901760
    %3155 = vmatpush.msra.mxu0 %v3154
    %v3156 = vand.u32 %v194, 4294901760
    %3157 = vmatpush.msra.mxu0 %v3156
    %v3158 = vand.u32 %v193, 4294901760
    %3159 = vmatpush.msra.mxu0 %v3158
    %v3160 = vand.u32 %v192, 4294901760
    %3161 = vmatpush.msra.mxu0 %v3160
    %v3162 = vand.u32 %v191, 4294901760
    %3163 = vmatpush.msra.mxu0 %v3162
    %v3164 = vand.u32 %v190, 4294901760
    %3165 = vmatpush.msra.mxu0 %v3164
    %v3166 = vand.u32 %v189, 4294901760
    %3167 = vmatpush.msra.mxu0 %v3166
    %v3168 = vand.u32 %v188, 4294901760
    %3169 = vmatpush.msra.mxu0 %v3168
    %v3170 = vand.u32 %v187, 4294901760
    %3171 = vmatpush.msra.mxu0 %v3170
    %v3172 = vand.u32 %v186, 4294901760
    %3173 = vmatpush.msra.mxu0 %v3172
    %v3174 = vand.u32 %v56, 4294901760
    %v3175 = vsub.f32 %v56, %v3174
    %v3176 = vand.u32 %v3175, 4294901760
    %3177 = vmatmul.f32.gmra.mxu0 %v3176
    %v3178 = vpop.f32.mrf.mxu0
    %v3179 = vadd.f32 %v3140, %v3178
    %3180 = vdwg.mxu0
    %v3181 = vand.u32 %v201, 4294901760
    %v3182 = vsub.f32 %v201, %v3181
    %v3183 = vand.u32 %v3182, 4294901760
    %3184 = vmatpush.msra.mxu0 %v3183
    %v3185 = vand.u32 %v200, 4294901760
    %v3186 = vsub.f32 %v200, %v3185
    %v3187 = vand.u32 %v3186, 4294901760
    %3188 = vmatpush.msra.mxu0 %v3187
    %v3189 = vand.u32 %v199, 4294901760
    %v3190 = vsub.f32 %v199, %v3189
    %v3191 = vand.u32 %v3190, 4294901760
    %3192 = vmatpush.msra.mxu0 %v3191
    %v3193 = vand.u32 %v198, 4294901760
    %v3194 = vsub.f32 %v198, %v3193
    %v3195 = vand.u32 %v3194, 4294901760
    %3196 = vmatpush.msra.mxu0 %v3195
    %v3197 = vand.u32 %v197, 4294901760
    %v3198 = vsub.f32 %v197, %v3197
    %v3199 = vand.u32 %v3198, 4294901760
    %3200 = vmatpush.msra.mxu0 %v3199
    %v3201 = vand.u32 %v196, 4294901760
    %v3202 = vsub.f32 %v196, %v3201
    %v3203 = vand.u32 %v3202, 4294901760
    %3204 = vmatpush.msra.mxu0 %v3203
    %v3205 = vand.u32 %v195, 4294901760
    %v3206 = vsub.f32 %v195, %v3205
    %v3207 = vand.u32 %v3206, 4294901760
    %3208 = vmatpush.msra.mxu0 %v3207
    %v3209 = vand.u32 %v194, 4294901760
    %v3210 = vsub.f32 %v194, %v3209
    %v3211 = vand.u32 %v3210, 4294901760
    %3212 = vmatpush.msra.mxu0 %v3211
    %v3213 = vand.u32 %v193, 4294901760
    %v3214 = vsub.f32 %v193, %v3213
    %v3215 = vand.u32 %v3214, 4294901760
    %3216 = vmatpush.msra.mxu0 %v3215
    %v3217 = vand.u32 %v192, 4294901760
    %v3218 = vsub.f32 %v192, %v3217
    %v3219 = vand.u32 %v3218, 4294901760
    %3220 = vmatpush.msra.mxu0 %v3219
    %v3221 = vand.u32 %v191, 4294901760
    %v3222 = vsub.f32 %v191, %v3221
    %v3223 = vand.u32 %v3222, 4294901760
    %3224 = vmatpush.msra.mxu0 %v3223
    %v3225 = vand.u32 %v190, 4294901760
    %v3226 = vsub.f32 %v190, %v3225
    %v3227 = vand.u32 %v3226, 4294901760
    %3228 = vmatpush.msra.mxu0 %v3227
    %v3229 = vand.u32 %v189, 4294901760
    %v3230 = vsub.f32 %v189, %v3229
    %v3231 = vand.u32 %v3230, 4294901760
    %3232 = vmatpush.msra.mxu0 %v3231
    %v3233 = vand.u32 %v188, 4294901760
    %v3234 = vsub.f32 %v188, %v3233
    %v3235 = vand.u32 %v3234, 4294901760
    %3236 = vmatpush.msra.mxu0 %v3235
    %v3237 = vand.u32 %v187, 4294901760
    %v3238 = vsub.f32 %v187, %v3237
    %v3239 = vand.u32 %v3238, 4294901760
    %3240 = vmatpush.msra.mxu0 %v3239
    %v3241 = vand.u32 %v186, 4294901760
    %v3242 = vsub.f32 %v186, %v3241
    %v3243 = vand.u32 %v3242, 4294901760
    %3244 = vmatpush.msra.mxu0 %v3243
    %v3245 = vand.u32 %v56, 4294901760
    %3246 = vmatmul.f32.gmra.mxu0 %v3245
    %v3247 = vpop.f32.mrf.mxu0
    %v3248 = vadd.f32 %v3179, %v3247
    %3249 = vdwg.mxu0
    %v3250 = vand.u32 %v201, 4294901760
    %3251 = vmatpush.msra.mxu0 %v3250
    %v3252 = vand.u32 %v200, 4294901760
    %3253 = vmatpush.msra.mxu0 %v3252
    %v3254 = vand.u32 %v199, 4294901760
    %3255 = vmatpush.msra.mxu0 %v3254
    %v3256 = vand.u32 %v198, 4294901760
    %3257 = vmatpush.msra.mxu0 %v3256
    %v3258 = vand.u32 %v197, 4294901760
    %3259 = vmatpush.msra.mxu0 %v3258
    %v3260 = vand.u32 %v196, 4294901760
    %3261 = vmatpush.msra.mxu0 %v3260
    %v3262 = vand.u32 %v195, 4294901760
    %3263 = vmatpush.msra.mxu0 %v3262
    %v3264 = vand.u32 %v194, 4294901760
    %3265 = vmatpush.msra.mxu0 %v3264
    %v3266 = vand.u32 %v193, 4294901760
    %3267 = vmatpush.msra.mxu0 %v3266
    %v3268 = vand.u32 %v192, 4294901760
    %3269 = vmatpush.msra.mxu0 %v3268
    %v3270 = vand.u32 %v191, 4294901760
    %3271 = vmatpush.msra.mxu0 %v3270
    %v3272 = vand.u32 %v190, 4294901760
    %3273 = vmatpush.msra.mxu0 %v3272
    %v3274 = vand.u32 %v189, 4294901760
    %3275 = vmatpush.msra.mxu0 %v3274
    %v3276 = vand.u32 %v188, 4294901760
    %3277 = vmatpush.msra.mxu0 %v3276
    %v3278 = vand.u32 %v187, 4294901760
    %3279 = vmatpush.msra.mxu0 %v3278
    %v3280 = vand.u32 %v186, 4294901760
    %3281 = vmatpush.msra.mxu0 %v3280
    %v3282 = vand.u32 %v56, 4294901760
    %3283 = vmatmul.f32.gmra.mxu0 %v3282
    %v3284 = vpop.f32.mrf.mxu0
    %v3285 = vadd.f32 %v3248, %v3284
    %3286 = vdwg.mxu0
    %v3287 = vand.u32 %v217, 4294901760
    %3288 = vmatpush.msra.mxu0 %v3287
    %v3289 = vand.u32 %v216, 4294901760
    %3290 = vmatpush.msra.mxu0 %v3289
    %v3291 = vand.u32 %v215, 4294901760
    %3292 = vmatpush.msra.mxu0 %v3291
    %v3293 = vand.u32 %v214, 4294901760
    %3294 = vmatpush.msra.mxu0 %v3293
    %v3295 = vand.u32 %v213, 4294901760
    %3296 = vmatpush.msra.mxu0 %v3295
    %v3297 = vand.u32 %v212, 4294901760
    %3298 = vmatpush.msra.mxu0 %v3297
    %v3299 = vand.u32 %v211, 4294901760
    %3300 = vmatpush.msra.mxu0 %v3299
    %v3301 = vand.u32 %v210, 4294901760
    %3302 = vmatpush.msra.mxu0 %v3301
    %v3303 = vand.u32 %v209, 4294901760
    %3304 = vmatpush.msra.mxu0 %v3303
    %v3305 = vand.u32 %v208, 4294901760
    %3306 = vmatpush.msra.mxu0 %v3305
    %v3307 = vand.u32 %v207, 4294901760
    %3308 = vmatpush.msra.mxu0 %v3307
    %v3309 = vand.u32 %v206, 4294901760
    %3310 = vmatpush.msra.mxu0 %v3309
    %v3311 = vand.u32 %v205, 4294901760
    %3312 = vmatpush.msra.mxu0 %v3311
    %v3313 = vand.u32 %v204, 4294901760
    %3314 = vmatpush.msra.mxu0 %v3313
    %v3315 = vand.u32 %v203, 4294901760
    %3316 = vmatpush.msra.mxu0 %v3315
    %v3317 = vand.u32 %v202, 4294901760
    %3318 = vmatpush.msra.mxu0 %v3317
    %v3319 = vand.u32 %v57, 4294901760
    %v3320 = vsub.f32 %v57, %v3319
    %v3321 = vand.u32 %v3320, 4294901760
    %v3322 = vsub.f32 %v3320, %v3321
    %v3323 = vand.u32 %v3322, 4294901760
    %3324 = vmatmul.f32.gmra.mxu0 %v3323
    %v3325 = vpop.f32.mrf.mxu0
    %v3326 = vadd.f32 %v3285, %v3325
    %3327 = vdwg.mxu0
    %v3328 = vand.u32 %v217, 4294901760
    %v3329 = vsub.f32 %v217, %v3328
    %v3330 = vand.u32 %v3329, 4294901760
    %v3331 = vsub.f32 %v3329, %v3330
    %v3332 = vand.u32 %v3331, 4294901760
    %3333 = vmatpush.msra.mxu0 %v3332
    %v3334 = vand.u32 %v216, 4294901760
    %v3335 = vsub.f32 %v216, %v3334
    %v3336 = vand.u32 %v3335, 4294901760
    %v3337 = vsub.f32 %v3335, %v3336
    %v3338 = vand.u32 %v3337, 4294901760
    %3339 = vmatpush.msra.mxu0 %v3338
    %v3340 = vand.u32 %v215, 4294901760
    %v3341 = vsub.f32 %v215, %v3340
    %v3342 = vand.u32 %v3341, 4294901760
    %v3343 = vsub.f32 %v3341, %v3342
    %v3344 = vand.u32 %v3343, 4294901760
    %3345 = vmatpush.msra.mxu0 %v3344
    %v3346 = vand.u32 %v214, 4294901760
    %v3347 = vsub.f32 %v214, %v3346
    %v3348 = vand.u32 %v3347, 4294901760
    %v3349 = vsub.f32 %v3347, %v3348
    %v3350 = vand.u32 %v3349, 4294901760
    %3351 = vmatpush.msra.mxu0 %v3350
    %v3352 = vand.u32 %v213, 4294901760
    %v3353 = vsub.f32 %v213, %v3352
    %v3354 = vand.u32 %v3353, 4294901760
    %v3355 = vsub.f32 %v3353, %v3354
    %v3356 = vand.u32 %v3355, 4294901760
    %3357 = vmatpush.msra.mxu0 %v3356
    %v3358 = vand.u32 %v212, 4294901760
    %v3359 = vsub.f32 %v212, %v3358
    %v3360 = vand.u32 %v3359, 4294901760
    %v3361 = vsub.f32 %v3359, %v3360
    %v3362 = vand.u32 %v3361, 4294901760
    %3363 = vmatpush.msra.mxu0 %v3362
    %v3364 = vand.u32 %v211, 4294901760
    %v3365 = vsub.f32 %v211, %v3364
    %v3366 = vand.u32 %v3365, 4294901760
    %v3367 = vsub.f32 %v3365, %v3366
    %v3368 = vand.u32 %v3367, 4294901760
    %3369 = vmatpush.msra.mxu0 %v3368
    %v3370 = vand.u32 %v210, 4294901760
    %v3371 = vsub.f32 %v210, %v3370
    %v3372 = vand.u32 %v3371, 4294901760
    %v3373 = vsub.f32 %v3371, %v3372
    %v3374 = vand.u32 %v3373, 4294901760
    %3375 = vmatpush.msra.mxu0 %v3374
    %v3376 = vand.u32 %v209, 4294901760
    %v3377 = vsub.f32 %v209, %v3376
    %v3378 = vand.u32 %v3377, 4294901760
    %v3379 = vsub.f32 %v3377, %v3378
    %v3380 = vand.u32 %v3379, 4294901760
    %3381 = vmatpush.msra.mxu0 %v3380
    %v3382 = vand.u32 %v208, 4294901760
    %v3383 = vsub.f32 %v208, %v3382
    %v3384 = vand.u32 %v3383, 4294901760
    %v3385 = vsub.f32 %v3383, %v3384
    %v3386 = vand.u32 %v3385, 4294901760
    %3387 = vmatpush.msra.mxu0 %v3386
    %v3388 = vand.u32 %v207, 4294901760
    %v3389 = vsub.f32 %v207, %v3388
    %v3390 = vand.u32 %v3389, 4294901760
    %v3391 = vsub.f32 %v3389, %v3390
    %v3392 = vand.u32 %v3391, 4294901760
    %3393 = vmatpush.msra.mxu0 %v3392
    %v3394 = vand.u32 %v206, 4294901760
    %v3395 = vsub.f32 %v206, %v3394
    %v3396 = vand.u32 %v3395, 4294901760
    %v3397 = vsub.f32 %v3395, %v3396
    %v3398 = vand.u32 %v3397, 4294901760
    %3399 = vmatpush.msra.mxu0 %v3398
    %v3400 = vand.u32 %v205, 4294901760
    %v3401 = vsub.f32 %v205, %v3400
    %v3402 = vand.u32 %v3401, 4294901760
    %v3403 = vsub.f32 %v3401, %v3402
    %v3404 = vand.u32 %v3403, 4294901760
    %3405 = vmatpush.msra.mxu0 %v3404
    %v3406 = vand.u32 %v204, 4294901760
    %v3407 = vsub.f32 %v204, %v3406
    %v3408 = vand.u32 %v3407, 4294901760
    %v3409 = vsub.f32 %v3407, %v3408
    %v3410 = vand.u32 %v3409, 4294901760
    %3411 = vmatpush.msra.mxu0 %v3410
    %v3412 = vand.u32 %v203, 4294901760
    %v3413 = vsub.f32 %v203, %v3412
    %v3414 = vand.u32 %v3413, 4294901760
    %v3415 = vsub.f32 %v3413, %v3414
    %v3416 = vand.u32 %v3415, 4294901760
    %3417 = vmatpush.msra.mxu0 %v3416
    %v3418 = vand.u32 %v202, 4294901760
    %v3419 = vsub.f32 %v202, %v3418
    %v3420 = vand.u32 %v3419, 4294901760
    %v3421 = vsub.f32 %v3419, %v3420
    %v3422 = vand.u32 %v3421, 4294901760
    %3423 = vmatpush.msra.mxu0 %v3422
    %v3424 = vand.u32 %v57, 4294901760
    %3425 = vmatmul.f32.gmra.mxu0 %v3424
    %v3426 = vpop.f32.mrf.mxu0
    %v3427 = vadd.f32 %v3326, %v3426
    %3428 = vdwg.mxu0
    %v3429 = vand.u32 %v217, 4294901760
    %v3430 = vsub.f32 %v217, %v3429
    %3431 = vmatpush.msra.mxu0 %v3430
    %v3432 = vand.u32 %v216, 4294901760
    %v3433 = vsub.f32 %v216, %v3432
    %3434 = vmatpush.msra.mxu0 %v3433
    %v3435 = vand.u32 %v215, 4294901760
    %v3436 = vsub.f32 %v215, %v3435
    %3437 = vmatpush.msra.mxu0 %v3436
    %v3438 = vand.u32 %v214, 4294901760
    %v3439 = vsub.f32 %v214, %v3438
    %3440 = vmatpush.msra.mxu0 %v3439
    %v3441 = vand.u32 %v213, 4294901760
    %v3442 = vsub.f32 %v213, %v3441
    %3443 = vmatpush.msra.mxu0 %v3442
    %v3444 = vand.u32 %v212, 4294901760
    %v3445 = vsub.f32 %v212, %v3444
    %3446 = vmatpush.msra.mxu0 %v3445
    %v3447 = vand.u32 %v211, 4294901760
    %v3448 = vsub.f32 %v211, %v3447
    %3449 = vmatpush.msra.mxu0 %v3448
    %v3450 = vand.u32 %v210, 4294901760
    %v3451 = vsub.f32 %v210, %v3450
    %3452 = vmatpush.msra.mxu0 %v3451
    %v3453 = vand.u32 %v209, 4294901760
    %v3454 = vsub.f32 %v209, %v3453
    %3455 = vmatpush.msra.mxu0 %v3454
    %v3456 = vand.u32 %v208, 4294901760
    %v3457 = vsub.f32 %v208, %v3456
    %3458 = vmatpush.msra.mxu0 %v3457
    %v3459 = vand.u32 %v207, 4294901760
    %v3460 = vsub.f32 %v207, %v3459
    %3461 = vmatpush.msra.mxu0 %v3460
    %v3462 = vand.u32 %v206, 4294901760
    %v3463 = vsub.f32 %v206, %v3462
    %3464 = vmatpush.msra.mxu0 %v3463
    %v3465 = vand.u32 %v205, 4294901760
    %v3466 = vsub.f32 %v205, %v3465
    %3467 = vmatpush.msra.mxu0 %v3466
    %v3468 = vand.u32 %v204, 4294901760
    %v3469 = vsub.f32 %v204, %v3468
    %3470 = vmatpush.msra.mxu0 %v3469
    %v3471 = vand.u32 %v203, 4294901760
    %v3472 = vsub.f32 %v203, %v3471
    %3473 = vmatpush.msra.mxu0 %v3472
    %v3474 = vand.u32 %v202, 4294901760
    %v3475 = vsub.f32 %v202, %v3474
    %3476 = vmatpush.msra.mxu0 %v3475
    %v3477 = vand.u32 %v57, 4294901760
    %v3478 = vsub.f32 %v57, %v3477
    %3479 = vmatmul.f32.gmra.mxu0 %v3478
    %v3480 = vpop.f32.mrf.mxu0
    %v3481 = vadd.f32 %v3427, %v3480
    %3482 = vdwg.mxu0
    %v3483 = vand.u32 %v217, 4294901760
    %3484 = vmatpush.msra.mxu0 %v3483
    %v3485 = vand.u32 %v216, 4294901760
    %3486 = vmatpush.msra.mxu0 %v3485
    %v3487 = vand.u32 %v215, 4294901760
    %3488 = vmatpush.msra.mxu0 %v3487
    %v3489 = vand.u32 %v214, 4294901760
    %3490 = vmatpush.msra.mxu0 %v3489
    %v3491 = vand.u32 %v213, 4294901760
    %3492 = vmatpush.msra.mxu0 %v3491
    %v3493 = vand.u32 %v212, 4294901760
    %3494 = vmatpush.msra.mxu0 %v3493
    %v3495 = vand.u32 %v211, 4294901760
    %3496 = vmatpush.msra.mxu0 %v3495
    %v3497 = vand.u32 %v210, 4294901760
    %3498 = vmatpush.msra.mxu0 %v3497
    %v3499 = vand.u32 %v209, 4294901760
    %3500 = vmatpush.msra.mxu0 %v3499
    %v3501 = vand.u32 %v208, 4294901760
    %3502 = vmatpush.msra.mxu0 %v3501
    %v3503 = vand.u32 %v207, 4294901760
    %3504 = vmatpush.msra.mxu0 %v3503
    %v3505 = vand.u32 %v206, 4294901760
    %3506 = vmatpush.msra.mxu0 %v3505
    %v3507 = vand.u32 %v205, 4294901760
    %3508 = vmatpush.msra.mxu0 %v3507
    %v3509 = vand.u32 %v204, 4294901760
    %3510 = vmatpush.msra.mxu0 %v3509
    %v3511 = vand.u32 %v203, 4294901760
    %3512 = vmatpush.msra.mxu0 %v3511
    %v3513 = vand.u32 %v202, 4294901760
    %3514 = vmatpush.msra.mxu0 %v3513
    %v3515 = vand.u32 %v57, 4294901760
    %v3516 = vsub.f32 %v57, %v3515
    %v3517 = vand.u32 %v3516, 4294901760
    %3518 = vmatmul.f32.gmra.mxu0 %v3517
    %v3519 = vpop.f32.mrf.mxu0
    %v3520 = vadd.f32 %v3481, %v3519
    %3521 = vdwg.mxu0
    %v3522 = vand.u32 %v217, 4294901760
    %v3523 = vsub.f32 %v217, %v3522
    %v3524 = vand.u32 %v3523, 4294901760
    %3525 = vmatpush.msra.mxu0 %v3524
    %v3526 = vand.u32 %v216, 4294901760
    %v3527 = vsub.f32 %v216, %v3526
    %v3528 = vand.u32 %v3527, 4294901760
    %3529 = vmatpush.msra.mxu0 %v3528
    %v3530 = vand.u32 %v215, 4294901760
    %v3531 = vsub.f32 %v215, %v3530
    %v3532 = vand.u32 %v3531, 4294901760
    %3533 = vmatpush.msra.mxu0 %v3532
    %v3534 = vand.u32 %v214, 4294901760
    %v3535 = vsub.f32 %v214, %v3534
    %v3536 = vand.u32 %v3535, 4294901760
    %3537 = vmatpush.msra.mxu0 %v3536
    %v3538 = vand.u32 %v213, 4294901760
    %v3539 = vsub.f32 %v213, %v3538
    %v3540 = vand.u32 %v3539, 4294901760
    %3541 = vmatpush.msra.mxu0 %v3540
    %v3542 = vand.u32 %v212, 4294901760
    %v3543 = vsub.f32 %v212, %v3542
    %v3544 = vand.u32 %v3543, 4294901760
    %3545 = vmatpush.msra.mxu0 %v3544
    %v3546 = vand.u32 %v211, 4294901760
    %v3547 = vsub.f32 %v211, %v3546
    %v3548 = vand.u32 %v3547, 4294901760
    %3549 = vmatpush.msra.mxu0 %v3548
    %v3550 = vand.u32 %v210, 4294901760
    %v3551 = vsub.f32 %v210, %v3550
    %v3552 = vand.u32 %v3551, 4294901760
    %3553 = vmatpush.msra.mxu0 %v3552
    %v3554 = vand.u32 %v209, 4294901760
    %v3555 = vsub.f32 %v209, %v3554
    %v3556 = vand.u32 %v3555, 4294901760
    %3557 = vmatpush.msra.mxu0 %v3556
    %v3558 = vand.u32 %v208, 4294901760
    %v3559 = vsub.f32 %v208, %v3558
    %v3560 = vand.u32 %v3559, 4294901760
    %3561 = vmatpush.msra.mxu0 %v3560
    %v3562 = vand.u32 %v207, 4294901760
    %v3563 = vsub.f32 %v207, %v3562
    %v3564 = vand.u32 %v3563, 4294901760
    %3565 = vmatpush.msra.mxu0 %v3564
    %v3566 = vand.u32 %v206, 4294901760
    %v3567 = vsub.f32 %v206, %v3566
    %v3568 = vand.u32 %v3567, 4294901760
    %3569 = vmatpush.msra.mxu0 %v3568
    %v3570 = vand.u32 %v205, 4294901760
    %v3571 = vsub.f32 %v205, %v3570
    %v3572 = vand.u32 %v3571, 4294901760
    %3573 = vmatpush.msra.mxu0 %v3572
    %v3574 = vand.u32 %v204, 4294901760
    %v3575 = vsub.f32 %v204, %v3574
    %v3576 = vand.u32 %v3575, 4294901760
    %3577 = vmatpush.msra.mxu0 %v3576
    %v3578 = vand.u32 %v203, 4294901760
    %v3579 = vsub.f32 %v203, %v3578
    %v3580 = vand.u32 %v3579, 4294901760
    %3581 = vmatpush.msra.mxu0 %v3580
    %v3582 = vand.u32 %v202, 4294901760
    %v3583 = vsub.f32 %v202, %v3582
    %v3584 = vand.u32 %v3583, 4294901760
    %3585 = vmatpush.msra.mxu0 %v3584
    %v3586 = vand.u32 %v57, 4294901760
    %3587 = vmatmul.f32.gmra.mxu0 %v3586
    %v3588 = vpop.f32.mrf.mxu0
    %v3589 = vadd.f32 %v3520, %v3588
    %3590 = vdwg.mxu0
    %v3591 = vand.u32 %v217, 4294901760
    %3592 = vmatpush.msra.mxu0 %v3591
    %v3593 = vand.u32 %v216, 4294901760
    %3594 = vmatpush.msra.mxu0 %v3593
    %v3595 = vand.u32 %v215, 4294901760
    %3596 = vmatpush.msra.mxu0 %v3595
    %v3597 = vand.u32 %v214, 4294901760
    %3598 = vmatpush.msra.mxu0 %v3597
    %v3599 = vand.u32 %v213, 4294901760
    %3600 = vmatpush.msra.mxu0 %v3599
    %v3601 = vand.u32 %v212, 4294901760
    %3602 = vmatpush.msra.mxu0 %v3601
    %v3603 = vand.u32 %v211, 4294901760
    %3604 = vmatpush.msra.mxu0 %v3603
    %v3605 = vand.u32 %v210, 4294901760
    %3606 = vmatpush.msra.mxu0 %v3605
    %v3607 = vand.u32 %v209, 4294901760
    %3608 = vmatpush.msra.mxu0 %v3607
    %v3609 = vand.u32 %v208, 4294901760
    %3610 = vmatpush.msra.mxu0 %v3609
    %v3611 = vand.u32 %v207, 4294901760
    %3612 = vmatpush.msra.mxu0 %v3611
    %v3613 = vand.u32 %v206, 4294901760
    %3614 = vmatpush.msra.mxu0 %v3613
    %v3615 = vand.u32 %v205, 4294901760
    %3616 = vmatpush.msra.mxu0 %v3615
    %v3617 = vand.u32 %v204, 4294901760
    %3618 = vmatpush.msra.mxu0 %v3617
    %v3619 = vand.u32 %v203, 4294901760
    %3620 = vmatpush.msra.mxu0 %v3619
    %v3621 = vand.u32 %v202, 4294901760
    %3622 = vmatpush.msra.mxu0 %v3621
    %v3623 = vand.u32 %v57, 4294901760
    %3624 = vmatmul.f32.gmra.mxu0 %v3623
    %v3625 = vpop.f32.mrf.mxu0
    %v3626 = vadd.f32 %v3589, %v3625
    %3627 = vdwg.mxu0
    %v3628 = vadd.f32 %v47, %v3626
    %3629 = vst [vmem:[#allocation2] sm:$0xff] %v3628
    // Predicated region
    $region22: #{tpu_custom_call.1} parent=1 // pred_check
      %p3630 = pneg %p42
    $region23: #{tpu_custom_call.1} parent=1 // pred_check_branch
      %3632 = sbr.rel (%p3630) target = $region25
    $region24: #{tpu_custom_call.1} parent=1 // pred_region
      %v3633 = vld [vmem:[#allocation2] sm:$0xff]
      %v3634 = vmul.f32 %v3633, 0.1
      %3635 = vst [vmem:[#allocation8] sm:$0xff] %v3634
    $region25: #{tpu_custom_call.1} parent=1 // pred_fallthru
      _
    // Predicated region
    $region26: #{tpu_custom_call.1} parent=1 // pred_check
      _
    $region27: #{tpu_custom_call.1} parent=1 // pred_check_branch
      %3637 = sbr.rel (0) target = $region29
    $region28: #{tpu_custom_call.1} parent=1 // pred_region
      %3639 = vsyncadd [#allocation5], 0
      %s3641 = sshll.u32 [#allocation8], 4
      %s3642 = int_to_ptr.vmem [resolvable:$true] %s3641
      %s3643 = sshll.u32 %s2, 4
      %s3644 = int_to_ptr.hbm [resolvable:$true] %s3643
      %3646 = dma.vmem_to_hbm [thread:$0]  %s3642, 128, %s3644, [#allocation5]
    $region29: #{tpu_custom_call.1} parent=1 // pred_fallthru
      _
    // Predicated region
    $region30: #{tpu_custom_call.1} parent=1 // pred_check
      _
    $region31: #{tpu_custom_call.1} parent=1 // pred_check_branch
      %3648 = sbr.rel (0) target = $region33
    $region32: #{tpu_custom_call.1} parent=1 // pred_region
      %3650 = dma.done [#allocation5], 128
    $region33: #{tpu_custom_call.1} parent=1 // pred_fallthru
      _
    %3651 = vsyncpa [#allocation4], 1
    %3652 = vsyncpa [#allocation7], 1
    %3653 = vsyncpa [#allocation5], 1

// kernel: tpu_custom_call.1
$region0: #{tpu_custom_call.1}
  #allocation0 [shape = 'u32[]', space=smem, size = 0x4, offset = 0x4, fixed_abs, tag = 'smem constant byte address 0x4 - core index']
  #allocation1 [shape = 'u32[72,128]{1,0:T(1,128)}', space=vmem, size = 0x9000, scoped, tag = 'internal scratch']
  #allocation2 [shape = 'f32[8,128]{1,0:T(8,128)}', space=vmem, size = 0x1000, scoped, tag = 'scratch operand']
  %s0 = inlined_call_operand.hbm [shape: f32[8,1280], index: 0, kind: input, shape index: {}]
  %s1 = inlined_call_operand.hbm [shape: f32[1280,128], index: 1, kind: input, shape index: {}]
  %s2 = inlined_call_operand.hbm [shape: f32[8,128], index: 2, kind: output, shape index: {}]
  %s3 = sld [smem:[#allocation0]]
  $region34: #{tpu_custom_call.1} parent=0
    _
  %s5 = ssub.s32 1, %s3
  %s6 = scalar_select 0, %s5, %s3
  $region1: #{tpu_custom_call.1} parent=0
    #allocation3 [shape = 'u8[40960]{0}', space=vmem, size = 0xa000, scoped, tag = 'input window, operand 0, single buffered']
    #allocation4 [shape = 's32[1]{0}', space=sflag, size = 0x4, scoped, tag = 'scoped memory for tpu_custom_call.1']
    #allocation5 [shape = 's32[1]{0}', space=sflag, size = 0x4, scoped, tag = 'scoped memory for tpu_custom_call.1']
    #allocation6 [shape = 'u8[655360]{0}', space=vmem, size = 0xa0000, scoped, tag = 'input window, operand 1, single buffered']
    #allocation7 [shape = 's32[1]{0}', space=sflag, size = 0x4, scoped, tag = 'scoped memory for tpu_custom_call.1']
    #allocation8 [shape = 'u8[4096]{0}', space=vmem, size = 0x1000, scoped, tag = 'output window, operand 0, single buffered']
    %7 = vsyncpa [#allocation4], 0
    %8 = vsyncpa [#allocation7], 0
    %9 = vsyncpa [#allocation5], 0
    // Predicated region
    $region2: #{tpu_custom_call.1} parent=1 // pred_check
      _
    $region3: #{tpu_custom_call.1} parent=1 // pred_check_branch
      %11 = sbr.rel (0) target = $region5
    $region4: #{tpu_custom_call.1} parent=1 // pred_region
      %13 = vsyncadd [#allocation4], 0
      %s15 = sshll.u32 %s0, 4
      %s16 = int_to_ptr.hbm [resolvable:$true] %s15
      %s17 = sshll.u32 [#allocation3], 4
      %s18 = int_to_ptr.vmem [resolvable:$true] %s17
      %20 = dma.hbm_to_vmem [thread:$0]  %s16, 1280, %s18, [#allocation4]
    $region5: #{tpu_custom_call.1} parent=1 // pred_fallthru
      _
    // Predicated region
    $region6: #{tpu_custom_call.1} parent=1 // pred_check
      _
    $region7: #{tpu_custom_call.1} parent=1 // pred_check_branch
      %22 = sbr.rel (0) target = $region9
    $region8: #{tpu_custom_call.1} parent=1 // pred_region
      %24 = vsyncadd [#allocation7], 0
      %s25 = sshll.u32 %s1, 4
      %s26 = int_to_ptr.hbm [resolvable:$true] %s25
      %s27 = sshll.u32 [#allocation6], 4
      %s28 = int_to_ptr.vmem [resolvable:$true] %s27
      %33 = dma.hbm_to_vmem [thread:$0]  %s26, 20480, %s28, [#allocation7], 128, 128, 8
    $region9: #{tpu_custom_call.1} parent=1 // pred_fallthru
      _
    // Predicated region
    $region10: #{tpu_custom_call.1} parent=1 // pred_check
      _
    $region11: #{tpu_custom_call.1} parent=1 // pred_check_branch
      %35 = sbr.rel (0) target = $region13
    $region12: #{tpu_custom_call.1} parent=1 // pred_region
      %37 = dma.done [#allocation4], 1280
    $region13: #{tpu_custom_call.1} parent=1 // pred_fallthru
      _
    // Predicated region
    $region14: #{tpu_custom_call.1} parent=1 // pred_check
      _
    $region15: #{tpu_custom_call.1} parent=1 // pred_check_branch
      %39 = sbr.rel (0) target = $region17
    $region16: #{tpu_custom_call.1} parent=1 // pred_region
      %41 = dma.done [#allocation7], 20480
    $region17: #{tpu_custom_call.1} parent=1 // pred_fallthru
      _
    %p42 = scmp.eq.s32.totalorder 0, 0
    // Predicated region
    $region18: #{tpu_custom_call.1} parent=1 // pred_check
      %p43 = pneg %p42
    $region19: #{tpu_custom_call.1} parent=1 // pred_check_branch
      %45 = sbr.rel (%p43) target = $region21
    $region20: #{tpu_custom_call.1} parent=1 // pred_region
      %46 = vst [vmem:[#allocation2] sm:$0xff] 0.0
    $region21: #{tpu_custom_call.1} parent=1 // pred_fallthru
      _
    %v47 = vld [vmem:[#allocation2] sm:$0xff]
    %v48 = vld [vmem:[#allocation3] sm:$0xff]
    %v49 = vld [vmem:[#allocation3 + $0x8] sm:$0xff]
    %v50 = vld [vmem:[#allocation3 + $0x10] sm:$0xff]
    %v51 = vld [vmem:[#allocation3 + $0x18] sm:$0xff]
    %v52 = vld [vmem:[#allocation3 + $0x20] sm:$0xff]
    %v53 = vld [vmem:[#allocation3 + $0x28] sm:$0xff]
    %v54 = vld [vmem:[#allocation3 + $0x30] sm:$0xff]
    %v55 = vld [vmem:[#allocation3 + $0x38] sm:$0xff]
    %v56 = vld [vmem:[#allocation3 + $0x40] sm:$0xff]
    %v57 = vld [vmem:[#allocation3 + $0x48] sm:$0xff]
    %v58 = vld [vmem:[#allocation6] sm:$0xff]
    %v59 = vld [vmem:[#allocation6 + $0x8] sm:$0xff]
    %v60 = vld [vmem:[#allocation6 + $0x10] sm:$0xff]
    %v61 = vld [vmem:[#allocation6 + $0x18] sm:$0xff]
    %v62 = vld [vmem:[#allocation6 + $0x20] sm:$0xff]
    %v63 = vld [vmem:[#allocation6 + $0x28] sm:$0xff]
    %v64 = vld [vmem:[#allocation6 + $0x30] sm:$0xff]
    %v65 = vld [vmem:[#allocation6 + $0x38] sm:$0xff]
    %v66 = vld [vmem:[#allocation6 + $0x40] sm:$0xff]
    %v67 = vld [vmem:[#allocation6 + $0x48] sm:$0xff]
    %v68 = vld [vmem:[#allocation6 + $0x50] sm:$0xff]
    %v69 = vld [vmem:[#allocation6 + $0x58] sm:$0xff]
    %v70 = vld [vmem:[#allocation6 + $0x60] sm:$0xff]
    %v71 = vld [vmem:[#allocation6 + $0x68] sm:$0xff]
    %v72 = vld [vmem:[#allocation6 + $0x70] sm:$0xff]
    %v73 = vld [vmem:[#allocation6 + $0x78] sm:$0xff]
    %v74 = vld [vmem:[#allocation6 + $0x80] sm:$0xff]
    %v75 = vld [vmem:[#allocation6 + $0x88] sm:$0xff]
    %v76 = vld [vmem:[#allocation6 + $0x90] sm:$0xff]
    %v77 = vld [vmem:[#allocation6 + $0x98] sm:$0xff]
    %v78 = vld [vmem:[#allocation6 + $0xa0] sm:$0xff]
    %v79 = vld [vmem:[#allocation6 + $0xa8] sm:$0xff]
    %v80 = vld [vmem:[#allocation6 + $0xb0] sm:$0xff]
    %v81 = vld [vmem:[#allocation6 + $0xb8] sm:$0xff]
    %v82 = vld [vmem:[#allocation6 + $0xc0] sm:$0xff]
    %v83 = vld [vmem:[#allocation6 + $0xc8] sm:$0xff]
    %v84 = vld [vmem:[#allocation6 + $0xd0] sm:$0xff]
    %v85 = vld [vmem:[#allocation6 + $0xd8] sm:$0xff]
    %v86 = vld [vmem:[#allocation6 + $0xe0] sm:$0xff]
    %v87 = vld [vmem:[#allocation6 + $0xe8] sm:$0xff]
    %v88 = vld [vmem:[#allocation6 + $0xf0] sm:$0xff]
    %v89 = vld [vmem:[#allocation6 + $0xf8] sm:$0xff]
    %v90 = vld [vmem:[#allocation6 + $0x100] sm:$0xff]
    %v91 = vld [vmem:[#allocation6 + $0x108] sm:$0xff]
    %v92 = vld [vmem:[#allocation6 + $0x110] sm:$0xff]
    %v93 = vld [vmem:[#allocation6 + $0x118] sm:$0xff]
    %v94 = vld [vmem:[#allocation6 + $0x120] sm:$0xff]
    %v95 = vld [vmem:[#allocation6 + $0x128] sm:$0xff]
    %v96 = vld [vmem:[#allocation6 + $0x130] sm:$0xff]
    %v97 = vld [vmem:[#allocation6 + $0x138] sm:$0xff]
    %v98 = vld [vmem:[#allocation6 + $0x140] sm:$0xff]
    %v99 = vld [vmem:[#allocation6 + $0x148] sm:$0xff]
    %v100 = vld [vmem:[#allocation6 + $0x150] sm:$0xff]
    %v101 = vld [vmem:[#allocation6 + $0x158] sm:$0xff]
    %v102 = vld [vmem:[#allocation6 + $0x160] sm:$0xff]
    %v103 = vld [vmem:[#allocation6 + $0x168] sm:$0xff]
    %v104 = vld [vmem:[#allocation6 + $0x170] sm:$0xff]
    %v105 = vld [vmem:[#allocation6 + $0x178] sm:$0xff]
    %v106 = vld [vmem:[#allocation6 + $0x180] sm:$0xff]
    %v107 = vld [vmem:[#allocation6 + $0x188] sm:$0xff]
    %v108 = vld [vmem:[#allocation6 + $0x190] sm:$0xff]
    %v109 = vld [vmem:[#allocation6 + $0x198] sm:$0xff]
    %v110 = vld [vmem:[#allocation6 + $0x1a0] sm:$0xff]
    %v111 = vld [vmem:[#allocation6 + $0x1a8] sm:$0xff]
    %v112 = vld [vmem:[#allocation6 + $0x1b0] sm:$0xff]
    %v113 = vld [vmem:[#allocation6 + $0x1b8] sm:$0xff]
    %v114 = vld [vmem:[#allocation6 + $0x1c0] sm:$0xff]
    %v115 = vld [vmem:[#allocation6 + $0x1c8] sm:$0xff]
    %v116 = vld [vmem:[#allocation6 + $0x1d0] sm:$0xff]
    %v117 = vld [vmem:[#allocation6 + $0x1d8] sm:$0xff]
    %v118 = vld [vmem:[#allocation6 + $0x1e0] sm:$0xff]
    %v119 = vld [vmem:[#allocation6 + $0x1e8] sm:$0xff]
    %v120 = vld [vmem:[#allocation6 + $0x1f0] sm:$0xff]
    %v121 = vld [vmem:[#allocation6 + $0x1f8] sm:$0xff]
    %v122 = vld [vmem:[#allocation6 + $0x200] sm:$0xff]
    %v123 = vld [vmem:[#allocation6 + $0x208] sm:$0xff]
    %v124 = vld [vmem:[#allocation6 + $0x210] sm:$0xff]
    %v125 = vld [vmem:[#allocation6 + $0x218] sm:$0xff]
    %v126 = vld [vmem:[#allocation6 + $0x220] sm:$0xff]
    %v127 = vld [vmem:[#allocation6 + $0x228] sm:$0xff]
    %v128 = vld [vmem:[#allocation6 + $0x230] sm:$0xff]
    %v129 = vld [vmem:[#allocation6 + $0x238] sm:$0xff]
    %v130 = vld [vmem:[#allocation6 + $0x240] sm:$0xff]
    %v131 = vld [vmem:[#allocation6 + $0x248] sm:$0xff]
    %v132 = vld [vmem:[#allocation6 + $0x250] sm:$0xff]
    %v133 = vld [vmem:[#allocation6 + $0x258] sm:$0xff]
    %v134 = vld [vmem:[#allocation6 + $0x260] sm:$0xff]
    %v135 = vld [vmem:[#allocation6 + $0x268] sm:$0xff]
    %v136 = vld [vmem:[#allocation6 + $0x270] sm:$0xff]
    %v137 = vld [vmem:[#allocation6 + $0x278] sm:$0xff]
    %v138 = vld [vmem:[#allocation6 + $0x280] sm:$0xff]
    %v139 = vld [vmem:[#allocation6 + $0x288] sm:$0xff]
    %v140 = vld [vmem:[#allocation6 + $0x290] sm:$0xff]
    %v141 = vld [vmem:[#allocation6 + $0x298] sm:$0xff]
    %v142 = vld [vmem:[#allocation6 + $0x2a0] sm:$0xff]
    %v143 = vld [vmem:[#allocation6 + $0x2a8] sm:$0xff]
    %v144 = vld [vmem:[#allocation6 + $0x2b0] sm:$0xff]
    %v145 = vld [vmem:[#allocation6 + $0x2b8] sm:$0xff]
    %v146 = vld [vmem:[#allocation6 + $0x2c0] sm:$0xff]
    %v147 = vld [vmem:[#allocation6 + $0x2c8] sm:$0xff]
    %v148 = vld [vmem:[#allocation6 + $0x2d0] sm:$0xff]
    %v149 = vld [vmem:[#allocation6 + $0x2d8] sm:$0xff]
    %v150 = vld [vmem:[#allocation6 + $0x2e0] sm:$0xff]
    %v151 = vld [vmem:[#allocation6 + $0x2e8] sm:$0xff]
    %v152 = vld [vmem:[#allocation6 + $0x2f0] sm:$0xff]
    %v153 = vld [vmem:[#allocation6 + $0x2f8] sm:$0xff]
    %v154 = vld [vmem:[#allocation6 + $0x300] sm:$0xff]
    %v155 = vld [vmem:[#allocation6 + $0x308] sm:$0xff]
    %v156 = vld [vmem:[#allocation6 + $0x310] sm:$0xff]
    %v157 = vld [vmem:[#allocation6 + $0x318] sm:$0xff]
    %v158 = vld [vmem:[#allocation6 + $0x320] sm:$0xff]
    %v159 = vld [vmem:[#allocation6 + $0x328] sm:$0xff]
    %v160 = vld [vmem:[#allocation6 + $0x330] sm:$0xff]
    %v161 = vld [vmem:[#allocation6 + $0x338] sm:$0xff]
    %v162 = vld [vmem:[#allocation6 + $0x340] sm:$0xff]
    %v163 = vld [vmem:[#allocation6 + $0x348] sm:$0xff]
    %v164 = vld [vmem:[#allocation6 + $0x350] sm:$0xff]
    %v165 = vld [vmem:[#allocation6 + $0x358] sm:$0xff]
    %v166 = vld [vmem:[#allocation6 + $0x360] sm:$0xff]
    %v167 = vld [vmem:[#allocation6 + $0x368] sm:$0xff]
    %v168 = vld [vmem:[#allocation6 + $0x370] sm:$0xff]
    %v169 = vld [vmem:[#allocation6 + $0x378] sm:$0xff]
    %v170 = vld [vmem:[#allocation6 + $0x380] sm:$0xff]
    %v171 = vld [vmem:[#allocation6 + $0x388] sm:$0xff]
    %v172 = vld [vmem:[#allocation6 + $0x390] sm:$0xff]
    %v173 = vld [vmem:[#allocation6 + $0x398] sm:$0xff]
    %v174 = vld [vmem:[#allocation6 + $0x3a0] sm:$0xff]
    %v175 = vld [vmem:[#allocation6 + $0x3a8] sm:$0xff]
    %v176 = vld [vmem:[#allocation6 + $0x3b0] sm:$0xff]
    %v177 = vld [vmem:[#allocation6 + $0x3b8] sm:$0xff]
    %v178 = vld [vmem:[#allocation6 + $0x3c0] sm:$0xff]
    %v179 = vld [vmem:[#allocation6 + $0x3c8] sm:$0xff]
    %v180 = vld [vmem:[#allocation6 + $0x3d0] sm:$0xff]
    %v181 = vld [vmem:[#allocation6 + $0x3d8] sm:$0xff]
    %v182 = vld [vmem:[#allocation6 + $0x3e0] sm:$0xff]
    %v183 = vld [vmem:[#allocation6 + $0x3e8] sm:$0xff]
    %v184 = vld [vmem:[#allocation6 + $0x3f0] sm:$0xff]
    %v185 = vld [vmem:[#allocation6 + $0x3f8] sm:$0xff]
    %v186 = vld [vmem:[#allocation6 + $0x400] sm:$0xff]
    %v187 = vld [vmem:[#allocation6 + $0x408] sm:$0xff]
    %v188 = vld [vmem:[#allocation6 + $0x410] sm:$0xff]
    %v189 = vld [vmem:[#allocation6 + $0x418] sm:$0xff]
    %v190 = vld [vmem:[#allocation6 + $0x420] sm:$0xff]
    %v191 = vld [vmem:[#allocation6 + $0x428] sm:$0xff]
    %v192 = vld [vmem:[#allocation6 + $0x430] sm:$0xff]
    %v193 = vld [vmem:[#allocation6 + $0x438] sm:$0xff]
    %v194 = vld [vmem:[#allocation6 + $0x440] sm:$0xff]
    %v195 = vld [vmem:[#allocation6 + $0x448] sm:$0xff]
    %v196 = vld [vmem:[#allocation6 + $0x450] sm:$0xff]
    %v197 = vld [vmem:[#allocation6 + $0x458] sm:$0xff]
    %v198 = vld [vmem:[#allocation6 + $0x460] sm:$0xff]
    %v199 = vld [vmem:[#allocation6 + $0x468] sm:$0xff]
    %v200 = vld [vmem:[#allocation6 + $0x470] sm:$0xff]
    %v201 = vld [vmem:[#allocation6 + $0x478] sm:$0xff]
    %v202 = vld [vmem:[#allocation6 + $0x480] sm:$0xff]
    %v203 = vld [vmem:[#allocation6 + $0x488] sm:$0xff]
    %v204 = vld [vmem:[#allocation6 + $0x490] sm:$0xff]
    %v205 = vld [vmem:[#allocation6 + $0x498] sm:$0xff]
    %v206 = vld [vmem:[#allocation6 + $0x4a0] sm:$0xff]
    %v207 = vld [vmem:[#allocation6 + $0x4a8] sm:$0xff]
    %v208 = vld [vmem:[#allocation6 + $0x4b0] sm:$0xff]
    %v209 = vld [vmem:[#allocation6 + $0x4b8] sm:$0xff]
    %v210 = vld [vmem:[#allocation6 + $0x4c0] sm:$0xff]
    %v211 = vld [vmem:[#allocation6 + $0x4c8] sm:$0xff]
    %v212 = vld [vmem:[#allocation6 + $0x4d0] sm:$0xff]
    %v213 = vld [vmem:[#allocation6 + $0x4d8] sm:$0xff]
    %v214 = vld [vmem:[#allocation6 + $0x4e0] sm:$0xff]
    %v215 = vld [vmem:[#allocation6 + $0x4e8] sm:$0xff]
    %v216 = vld [vmem:[#allocation6 + $0x4f0] sm:$0xff]
    %v217 = vld [vmem:[#allocation6 + $0x4f8] sm:$0xff]
    %218 = vmatpush.msra.mxu0 %v73
    %219 = vmatpush.msra.mxu0 %v72
    %220 = vmatpush.msra.mxu0 %v71
    %221 = vmatpush.msra.mxu0 %v70
    %222 = vmatpush.msra.mxu0 %v69
    %223 = vmatpush.msra.mxu0 %v68
    %224 = vmatpush.msra.mxu0 %v67
    %225 = vmatpush.msra.mxu0 %v66
    %226 = vmatpush.msra.mxu0 %v65
    %227 = vmatpush.msra.mxu0 %v64
    %228 = vmatpush.msra.mxu0 %v63
    %229 = vmatpush.msra.mxu0 %v62
    %230 = vmatpush.msra.mxu0 %v61
    %231 = vmatpush.msra.mxu0 %v60
    %232 = vmatpush.msra.mxu0 %v59
    %233 = vmatpush.msra.mxu0 %v58
    %234 = vmatmul.f32.gmra.mxu0 %v48
    %v235 = vpop.f32.mrf.mxu0
    %v236 = vadd.f32 0.0, %v235
    %237 = vdwg.mxu0
    %238 = vmatpush.msra.mxu0 %v89
    %239 = vmatpush.msra.mxu0 %v88
    %240 = vmatpush.msra.mxu0 %v87
    %241 = vmatpush.msra.mxu0 %v86
    %242 = vmatpush.msra.mxu0 %v85
    %243 = vmatpush.msra.mxu0 %v84
    %244 = vmatpush.msra.mxu0 %v83
    %245 = vmatpush.msra.mxu0 %v82
    %246 = vmatpush.msra.mxu0 %v81
    %247 = vmatpush.msra.mxu0 %v80
    %248 = vmatpush.msra.mxu0 %v79
    %249 = vmatpush.msra.mxu0 %v78
    %250 = vmatpush.msra.mxu0 %v77
    %251 = vmatpush.msra.mxu0 %v76
    %252 = vmatpush.msra.mxu0 %v75
    %253 = vmatpush.msra.mxu0 %v74
    %254 = vmatmul.f32.gmra.mxu0 %v49
    %v255 = vpop.f32.mrf.mxu0
    %v256 = vadd.f32 %v236, %v255
    %257 = vdwg.mxu0
    %258 = vmatpush.msra.mxu0 %v105
    %259 = vmatpush.msra.mxu0 %v104
    %260 = vmatpush.msra.mxu0 %v103
    %261 = vmatpush.msra.mxu0 %v102
    %262 = vmatpush.msra.mxu0 %v101
    %263 = vmatpush.msra.mxu0 %v100
    %264 = vmatpush.msra.mxu0 %v99
    %265 = vmatpush.msra.mxu0 %v98
    %266 = vmatpush.msra.mxu0 %v97
    %267 = vmatpush.msra.mxu0 %v96
    %268 = vmatpush.msra.mxu0 %v95
    %269 = vmatpush.msra.mxu0 %v94
    %270 = vmatpush.msra.mxu0 %v93
    %271 = vmatpush.msra.mxu0 %v92
    %272 = vmatpush.msra.mxu0 %v91
    %273 = vmatpush.msra.mxu0 %v90
    %274 = vmatmul.f32.gmra.mxu0 %v50
    %v275 = vpop.f32.mrf.mxu0
    %v276 = vadd.f32 %v256, %v275
    %277 = vdwg.mxu0
    %278 = vmatpush.msra.mxu0 %v121
    %279 = vmatpush.msra.mxu0 %v120
    %280 = vmatpush.msra.mxu0 %v119
    %281 = vmatpush.msra.mxu0 %v118
    %282 = vmatpush.msra.mxu0 %v117
    %283 = vmatpush.msra.mxu0 %v116
    %284 = vmatpush.msra.mxu0 %v115
    %285 = vmatpush.msra.mxu0 %v114
    %286 = vmatpush.msra.mxu0 %v113
    %287 = vmatpush.msra.mxu0 %v112
    %288 = vmatpush.msra.mxu0 %v111
    %289 = vmatpush.msra.mxu0 %v110
    %290 = vmatpush.msra.mxu0 %v109
    %291 = vmatpush.msra.mxu0 %v108
    %292 = vmatpush.msra.mxu0 %v107
    %293 = vmatpush.msra.mxu0 %v106
    %294 = vmatmul.f32.gmra.mxu0 %v51
    %v295 = vpop.f32.mrf.mxu0
    %v296 = vadd.f32 %v276, %v295
    %297 = vdwg.mxu0
    %298 = vmatpush.msra.mxu0 %v137
    %299 = vmatpush.msra.mxu0 %v136
    %300 = vmatpush.msra.mxu0 %v135
    %301 = vmatpush.msra.mxu0 %v134
    %302 = vmatpush.msra.mxu0 %v133
    %303 = vmatpush.msra.mxu0 %v132
    %304 = vmatpush.msra.mxu0 %v131
    %305 = vmatpush.msra.mxu0 %v130
    %306 = vmatpush.msra.mxu0 %v129
    %307 = vmatpush.msra.mxu0 %v128
    %308 = vmatpush.msra.mxu0 %v127
    %309 = vmatpush.msra.mxu0 %v126
    %310 = vmatpush.msra.mxu0 %v125
    %311 = vmatpush.msra.mxu0 %v124
    %312 = vmatpush.msra.mxu0 %v123
    %313 = vmatpush.msra.mxu0 %v122
    %314 = vmatmul.f32.gmra.mxu0 %v52
    %v315 = vpop.f32.mrf.mxu0
    %v316 = vadd.f32 %v296, %v315
    %317 = vdwg.mxu0
    %318 = vmatpush.msra.mxu0 %v153
    %319 = vmatpush.msra.mxu0 %v152
    %320 = vmatpush.msra.mxu0 %v151
    %321 = vmatpush.msra.mxu0 %v150
    %322 = vmatpush.msra.mxu0 %v149
    %323 = vmatpush.msra.mxu0 %v148
    %324 = vmatpush.msra.mxu0 %v147
    %325 = vmatpush.msra.mxu0 %v146
    %326 = vmatpush.msra.mxu0 %v145
    %327 = vmatpush.msra.mxu0 %v144
    %328 = vmatpush.msra.mxu0 %v143
    %329 = vmatpush.msra.mxu0 %v142
    %330 = vmatpush.msra.mxu0 %v141
    %331 = vmatpush.msra.mxu0 %v140
    %332 = vmatpush.msra.mxu0 %v139
    %333 = vmatpush.msra.mxu0 %v138
    %334 = vmatmul.f32.gmra.mxu0 %v53
    %v335 = vpop.f32.mrf.mxu0
    %v336 = vadd.f32 %v316, %v335
    %337 = vdwg.mxu0
    %338 = vmatpush.msra.mxu0 %v169
    %339 = vmatpush.msra.mxu0 %v168
    %340 = vmatpush.msra.mxu0 %v167
    %341 = vmatpush.msra.mxu0 %v166
    %342 = vmatpush.msra.mxu0 %v165
    %343 = vmatpush.msra.mxu0 %v164
    %344 = vmatpush.msra.mxu0 %v163
    %345 = vmatpush.msra.mxu0 %v162
    %346 = vmatpush.msra.mxu0 %v161
    %347 = vmatpush.msra.mxu0 %v160
    %348 = vmatpush.msra.mxu0 %v159
    %349 = vmatpush.msra.mxu0 %v158
    %350 = vmatpush.msra.mxu0 %v157
    %351 = vmatpush.msra.mxu0 %v156
    %352 = vmatpush.msra.mxu0 %v155
    %353 = vmatpush.msra.mxu0 %v154
    %354 = vmatmul.f32.gmra.mxu0 %v54
    %v355 = vpop.f32.mrf.mxu0
    %v356 = vadd.f32 %v336, %v355
    %357 = vdwg.mxu0
    %358 = vmatpush.msra.mxu0 %v185
    %359 = vmatpush.msra.mxu0 %v184
    %360 = vmatpush.msra.mxu0 %v183
    %361 = vmatpush.msra.mxu0 %v182
    %362 = vmatpush.msra.mxu0 %v181
    %363 = vmatpush.msra.mxu0 %v180
    %364 = vmatpush.msra.mxu0 %v179
    %365 = vmatpush.msra.mxu0 %v178
    %366 = vmatpush.msra.mxu0 %v177
    %367 = vmatpush.msra.mxu0 %v176
    %368 = vmatpush.msra.mxu0 %v175
    %369 = vmatpush.msra.mxu0 %v174
    %370 = vmatpush.msra.mxu0 %v173
    %371 = vmatpush.msra.mxu0 %v172
    %372 = vmatpush.msra.mxu0 %v171
    %373 = vmatpush.msra.mxu0 %v170
    %374 = vmatmul.f32.gmra.mxu0 %v55
    %v375 = vpop.f32.mrf.mxu0
    %v376 = vadd.f32 %v356, %v375
    %377 = vdwg.mxu0
    %378 = vmatpush.msra.mxu0 %v201
    %379 = vmatpush.msra.mxu0 %v200
    %380 = vmatpush.msra.mxu0 %v199
    %381 = vmatpush.msra.mxu0 %v198
    %382 = vmatpush.msra.mxu0 %v197
    %383 = vmatpush.msra.mxu0 %v196
    %384 = vmatpush.msra.mxu0 %v195
    %385 = vmatpush.msra.mxu0 %v194
    %386 = vmatpush.msra.mxu0 %v193
    %387 = vmatpush.msra.mxu0 %v192
    %388 = vmatpush.msra.mxu0 %v191
    %389 = vmatpush.msra.mxu0 %v190
    %390 = vmatpush.msra.mxu0 %v189
    %391 = vmatpush.msra.mxu0 %v188
    %392 = vmatpush.msra.mxu0 %v187
    %393 = vmatpush.msra.mxu0 %v186
    %394 = vmatmul.f32.gmra.mxu0 %v56
    %v395 = vpop.f32.mrf.mxu0
    %v396 = vadd.f32 %v376, %v395
    %397 = vdwg.mxu0
    %398 = vmatpush.msra.mxu0 %v217
    %399 = vmatpush.msra.mxu0 %v216
    %400 = vmatpush.msra.mxu0 %v215
    %401 = vmatpush.msra.mxu0 %v214
    %402 = vmatpush.msra.mxu0 %v213
    %403 = vmatpush.msra.mxu0 %v212
    %404 = vmatpush.msra.mxu0 %v211
    %405 = vmatpush.msra.mxu0 %v210
    %406 = vmatpush.msra.mxu0 %v209
    %407 = vmatpush.msra.mxu0 %v208
    %408 = vmatpush.msra.mxu0 %v207
    %409 = vmatpush.msra.mxu0 %v206
    %410 = vmatpush.msra.mxu0 %v205
    %411 = vmatpush.msra.mxu0 %v204
    %412 = vmatpush.msra.mxu0 %v203
    %413 = vmatpush.msra.mxu0 %v202
    %414 = vmatmul.f32.gmra.mxu0 %v57
    %v415 = vpop.f32.mrf.mxu0
    %v416 = vadd.f32 %v396, %v415
    %417 = vdwg.mxu0
    %v418 = vadd.f32 %v47, %v416
    %419 = vst [vmem:[#allocation2] sm:$0xff] %v418
    // Predicated region
    $region22: #{tpu_custom_call.1} parent=1 // pred_check
      %p420 = pneg %p42
    $region23: #{tpu_custom_call.1} parent=1 // pred_check_branch
      %422 = sbr.rel (%p420) target = $region25
    $region24: #{tpu_custom_call.1} parent=1 // pred_region
      %v423 = vld [vmem:[#allocation2] sm:$0xff]
      %v424 = vmul.f32 %v423, 0.1
      %425 = vst [vmem:[#allocation8] sm:$0xff] %v424
    $region25: #{tpu_custom_call.1} parent=1 // pred_fallthru
      _
    // Predicated region
    $region26: #{tpu_custom_call.1} parent=1 // pred_check
      _
    $region27: #{tpu_custom_call.1} parent=1 // pred_check_branch
      %427 = sbr.rel (0) target = $region29
    $region28: #{tpu_custom_call.1} parent=1 // pred_region
      %429 = vsyncadd [#allocation5], 0
      %s431 = sshll.u32 [#allocation8], 4
      %s432 = int_to_ptr.vmem [resolvable:$true] %s431
      %s433 = sshll.u32 %s2, 4
      %s434 = int_to_ptr.hbm [resolvable:$true] %s433
      %436 = dma.vmem_to_hbm [thread:$0]  %s432, 128, %s434, [#allocation5]
    $region29: #{tpu_custom_call.1} parent=1 // pred_fallthru
      _
    // Predicated region
    $region30: #{tpu_custom_call.1} parent=1 // pred_check
      _
    $region31: #{tpu_custom_call.1} parent=1 // pred_check_branch
      %438 = sbr.rel (0) target = $region33
    $region32: #{tpu_custom_call.1} parent=1 // pred_region
      %440 = dma.done [#allocation5], 128
    $region33: #{tpu_custom_call.1} parent=1 // pred_fallthru
      _
    %441 = vsyncpa [#allocation4], 1
    %442 = vsyncpa [#allocation7], 1
    %443 = vsyncpa [#allocation5], 1

</llo_original>
